<compile_context>
chip_gen: v6e
topology: v6e:2x2x1
jax: 0.10.0
libtpu: 0.0.40
codegen_flags: <defaults>
</compile_context>

<pallas_src>
import math

import jax
import jax.numpy as jnp
from jax import lax
from jax.experimental import pallas as pl
from jax.experimental.pallas import tpu as pltpu

feat_map_channels = 512
anchors_ratios = [0.5, 1, 2]
anchors_scales = [128, 256, 512]
num_anchors = len(anchors_scales) * len(anchors_ratios)  # 9

HIDDEN = 512
CLS_CH = num_anchors * 2        # 18
REG_CH = num_anchors * 4        # 36
HEAD_CH = CLS_CH + REG_CH       # 54  (fused cls || reg head)
HEAD_PAD = 128                  # lane-dense padded head width (unmasked stores)
K_TAPS = 9                      # 3x3 conv taps


def _rpn_kernel(x_ref, w1_ref, b1_ref, wh_ref, bh_ref, out_ref):
    # x_ref:   (TM, 9*Cin)        bf16  collapsed im2col rows for this M block
    # w1_ref:  (9*Cin, HIDDEN)    bf16  full 3x3 conv weight (VMEM-resident)
    # b1_ref:  (1, HIDDEN)        f32
    # wh_ref:  (HIDDEN, HEAD_PAD) bf16  fused [cls | reg | pad] 1x1 weights
    # bh_ref:  (1, HEAD_PAD)      f32
    # out_ref: (TM, HEAD_PAD)     f32
    feat = jnp.dot(x_ref[...], w1_ref[...], preferred_element_type=jnp.float32)
    feat = jnp.maximum(feat + b1_ref[...], 0.0).astype(jnp.bfloat16)
    out_ref[...] = (jnp.dot(feat, wh_ref[...],
                            preferred_element_type=jnp.float32)
                    + bh_ref[...]).astype(out_ref.dtype)


def rpn_forward(x_nchw, params):
    """x_nchw: (B, feat_map_channels, H, W) float32. Returns (cls, reg) as PyTorch."""
    B, C, H, W = x_nchw.shape
    w1, b1, wc, bc, wr, br = params
    m_total = B * H * W
    k_total = K_TAPS * C                                   # 4608 for C=512

    # ---- wrapper-side layout glue (runs once in XLA) ----
    # NCHW -> NHWC, cast to bf16 *before* pad/stack (so the im2col slab is only
    # ever materialized in bf16), zero-pad spatial by 1 (the conv's padding=1).
    x_nhwc = jnp.transpose(x_nchw, (0, 2, 3, 1)).astype(jnp.bfloat16)
    x_pad = jnp.pad(x_nhwc, ((0, 0), (1, 1), (1, 1), (0, 0)))

    # Collapsed im2col: (M, 9*Cin), K ordered (dy, dx, cin).
    taps = jnp.stack(
        [x_pad[:, dy:dy + H, dx:dx + W, :].reshape(m_total, C)
         for dy in range(3) for dx in range(3)],
        axis=1)                                            # (M, 9, Cin)
    x_im2col = taps.reshape(m_total, k_total)              # (M, 9*Cin)

    # M tile: large blocks amortize per-step overhead; keep >=2 blocks once
    # m_total allows so v7x can split the "parallel" axis across its two TCs.
    if m_total >= 1024:
        tm = 512
    elif m_total >= 512:
        tm = 256
    else:
        tm = max(8, ((m_total + 7) // 8) * 8)
    m_pad = ((m_total + tm - 1) // tm) * tm
    if m_pad != m_total:
        x_im2col = jnp.pad(x_im2col, ((0, m_pad - m_total), (0, 0)))

    # Conv1 weight (Cout, Cin, 3, 3) -> (kh, kw, Cin, Cout) -> (9*Cin, Cout) bf16.
    w1_mat = (jnp.transpose(w1, (2, 3, 1, 0))
              .reshape(k_total, HIDDEN).astype(jnp.bfloat16))

    # Fused head: [wc | wr] -> (HIDDEN, 54), lane-padded to 128; biases f32.
    w_head = jnp.concatenate([wc, wr], axis=1)
    w_head = jnp.pad(w_head, ((0, 0), (0, HEAD_PAD - HEAD_CH))).astype(jnp.bfloat16)
    b_head = jnp.pad(jnp.concatenate([bc, br]), (0, HEAD_PAD - HEAD_CH))

    out_flat = pl.pallas_call(
        _rpn_kernel,
        out_shape=jax.ShapeDtypeStruct((m_pad, HEAD_PAD), jnp.float32),
        grid_spec=pltpu.PrefetchScalarGridSpec(
            num_scalar_prefetch=0,
            grid=(m_pad // tm,),                           # M blocks only
            in_specs=[
                pl.BlockSpec((tm, k_total), lambda m: (m, 0)),
                # constant index_maps: weights/biases DMA'd once, VMEM-resident
                pl.BlockSpec((k_total, HIDDEN), lambda m: (0, 0)),
                pl.BlockSpec((1, HIDDEN), lambda m: (0, 0)),
                pl.BlockSpec((HIDDEN, HEAD_PAD), lambda m: (0, 0)),
                pl.BlockSpec((1, HEAD_PAD), lambda m: (0, 0)),
            ],
            out_specs=pl.BlockSpec((tm, HEAD_PAD), lambda m: (m, 0)),
        ),
        compiler_params=pltpu.CompilerParams(
            # Independent M blocks -> shardable across v7x's two TensorCores.
            dimension_semantics=("parallel",),
            # tm=512: ~9 MiB x (double-buffered) + 9 MiB resident weights
            # + small head/out buffers ~ 20 MiB -> 32 MiB fits v5e/v6e/v7x.
            vmem_limit_bytes=32 * 1024 * 1024,
        ),
    )(x_im2col, w1_mat, b1[None, :], w_head, b_head[None, :])

    # Same semantics as: permute(0,2,3,1).contiguous().view(B, -1, 2/4).
    out = out_flat[:m_total, :HEAD_CH].reshape(B, H * W, HEAD_CH)
    cls = out[..., :CLS_CH].reshape(B, H * W * num_anchors, 2)
    reg = out[..., CLS_CH:].reshape(B, H * W * num_anchors, 4)
    return cls, reg


def init_params(key):
    """Deterministic xavier_uniform_ weights + zero biases, matching nn.init."""
    k1, k2, k3 = jax.random.split(key, 3)

    def xavier(k, shape, fan_in, fan_out):
        bound = math.sqrt(6.0 / (fan_in + fan_out))
        return jax.random.uniform(k, shape, jnp.float32, -bound, bound)

    # conv1: (512, 512, 3, 3); fan = C * kh * kw
    w1 = xavier(k1, (HIDDEN, feat_map_channels, 3, 3),
                feat_map_channels * 9, HIDDEN * 9)
    b1 = jnp.zeros((HIDDEN,), jnp.float32)
    # cls: (18, 512, 1, 1) -> stored as (512, 18) for the matmul head
    wc = xavier(k2, (HIDDEN, CLS_CH), HIDDEN, CLS_CH)
    bc = jnp.zeros((CLS_CH,), jnp.float32)
    # reg: (36, 512, 1, 1) -> stored as (512, 36)
    wr = xavier(k3, (HIDDEN, REG_CH), HIDDEN, REG_CH)
    br = jnp.zeros((REG_CH,), jnp.float32)
    return (w1, b1, wc, bc, wr, br)


def rpn_reference(x_nchw, params):
    """Pure-JAX f32 reference (lax.conv) mirroring the PyTorch forward exactly."""
    w1, b1, wc, bc, wr, br = params
    B = x_nchw.shape[0]
    y = lax.conv_general_dilated(x_nchw, w1, (1, 1), "SAME",
                                 dimension_numbers=("NCHW", "OIHW", "NCHW"))
    y = jnp.maximum(y + b1[None, :, None, None], 0.0)
    wc_oihw = jnp.transpose(wc, (1, 0))[:, :, None, None]
    wr_oihw = jnp.transpose(wr, (1, 0))[:, :, None, None]
    cls = lax.conv_general_dilated(y, wc_oihw, (1, 1), "VALID",
                                   dimension_numbers=("NCHW", "OIHW", "NCHW"))
    cls = cls + bc[None, :, None, None]
    reg = lax.conv_general_dilated(y, wr_oihw, (1, 1), "VALID",
                                   dimension_numbers=("NCHW", "OIHW", "NCHW"))
    reg = reg + br[None, :, None, None]
    cls = jnp.transpose(cls, (0, 2, 3, 1)).reshape(B, -1, 2)
    reg = jnp.transpose(reg, (0, 2, 3, 1)).reshape(B, -1, 4)
    return cls, reg


if __name__ == "__main__":
    key = jax.random.PRNGKey(0)
    kx, kp = jax.random.split(key)

    B, H, W = 2, 8, 8  # small spatial; channel count fixed by the module (512)
    x = jax.random.normal(kx, (B, feat_map_channels, H, W), jnp.float32)
    params = init_params(kp)

    cls, reg = jax.block_until_ready(rpn_forward(x, params))

    assert cls.shape == (B, H * W * num_anchors, 2), cls.shape
    assert reg.shape == (B, H * W * num_anchors, 4), reg.shape

    cls_ref, reg_ref = jax.block_until_ready(rpn_reference(x, params))
    # bf16 MXU operands (f32 accumulation) -> looser tolerance than pure f32.
    err_cls = float(jnp.max(jnp.abs(cls - cls_ref)))
    err_reg = float(jnp.max(jnp.abs(reg - reg_ref)))
    assert err_cls < 5e-2, err_cls
    assert err_reg < 5e-2, err_reg

    print("KERNEL_OK")
</pallas_src>

<mosaic_0001>
module attributes {stable_mosaic.version = 11 : i64} {
  func.func @_rpn_kernel(%arg0: i32, %arg1: memref<128x4608xbf16, #tpu.memory_space<vmem>>, %arg2: memref<4608x512xbf16, #tpu.memory_space<vmem>>, %arg3: memref<1x512xf32, #tpu.memory_space<vmem>>, %arg4: memref<512x128xbf16, #tpu.memory_space<vmem>>, %arg5: memref<1x128xf32, #tpu.memory_space<vmem>>, %arg6: memref<128x128xf32, #tpu.memory_space<vmem>>) attributes {dimension_semantics = [#tpu.dimension_semantics<parallel>], iteration_bounds = array<i64: 1>, scalar_prefetch = 0 : i64, scratch_operands = 0 : i64, tpu.core_type = #tpu.core_type<tc>, window_params = [{transform_indices = @transform_0, window_bounds = array<i64: 128, 4608>}, {pipeline_mode = #tpu.pipeline_mode<synchronous>, transform_indices = @transform_1, window_bounds = array<i64: 4608, 512>}, {pipeline_mode = #tpu.pipeline_mode<synchronous>, transform_indices = @transform_2, window_bounds = array<i64: 1, 512>}, {pipeline_mode = #tpu.pipeline_mode<synchronous>, transform_indices = @transform_3, window_bounds = array<i64: 512, 128>}, {pipeline_mode = #tpu.pipeline_mode<synchronous>, transform_indices = @transform_4, window_bounds = array<i64: 1, 128>}, {transform_indices = @transform_5, window_bounds = array<i64: 128, 128>}]} {
    %c0 = arith.constant 0 : index
    %c0_0 = arith.constant 0 : index
    %0 = vector.load %arg1[%c0, %c0_0] : memref<128x4608xbf16, #tpu.memory_space<vmem>>, vector<128x4608xbf16>
    %c0_1 = arith.constant 0 : index
    %c0_2 = arith.constant 0 : index
    %1 = vector.load %arg2[%c0_1, %c0_2] : memref<4608x512xbf16, #tpu.memory_space<vmem>>, vector<4608x512xbf16>
    %cst = arith.constant dense<0.000000e+00> : vector<128x512xf32>
    %2 = tpu.matmul %0, %1, %cst {dimension_numbers = #tpu.dot_dimension_numbers<[1], [0], [0], [1], [0, 0, 1, 1], [], []>} : vector<128x4608xbf16>, vector<4608x512xbf16>, vector<128x512xf32> -> vector<128x512xf32>
    %c0_3 = arith.constant 0 : index
    %c0_4 = arith.constant 0 : index
    %3 = vector.load %arg3[%c0_3, %c0_4] : memref<1x512xf32, #tpu.memory_space<vmem>>, vector<1x512xf32>
    %4 = vector.broadcast %3 : vector<1x512xf32> to vector<128x512xf32>
    %5 = arith.addf %2, %4 : vector<128x512xf32>
    %cst_5 = arith.constant 0.000000e+00 : f32
    %6 = vector.broadcast %cst_5 : f32 to vector<128x512xf32>
    %7 = arith.maximumf %5, %6 : vector<128x512xf32>
    %8 = arith.truncf %7 : vector<128x512xf32> to vector<128x512xbf16>
    %c0_6 = arith.constant 0 : index
    %c0_7 = arith.constant 0 : index
    %9 = vector.load %arg4[%c0_6, %c0_7] : memref<512x128xbf16, #tpu.memory_space<vmem>>, vector<512x128xbf16>
    %cst_8 = arith.constant dense<0.000000e+00> : vector<128x128xf32>
    %10 = tpu.matmul %8, %9, %cst_8 {dimension_numbers = #tpu.dot_dimension_numbers<[1], [0], [0], [1], [0, 0, 1, 1], [], []>} : vector<128x512xbf16>, vector<512x128xbf16>, vector<128x128xf32> -> vector<128x128xf32>
    %c0_9 = arith.constant 0 : index
    %c0_10 = arith.constant 0 : index
    %11 = vector.load %arg5[%c0_9, %c0_10] : memref<1x128xf32, #tpu.memory_space<vmem>>, vector<1x128xf32>
    %12 = vector.broadcast %11 : vector<1x128xf32> to vector<128x128xf32>
    %13 = arith.addf %10, %12 : vector<128x128xf32>
    %c0_11 = arith.constant 0 : index
    %c0_12 = arith.constant 0 : index
    %14 = vector.load %arg6[%c0_11, %c0_12] : memref<128x128xf32, #tpu.memory_space<vmem>>, vector<128x128xf32>
    tpu.vector_store %arg6[%c0_11, %c0_12], %13 {strides = array<i32>} : memref<128x128xf32, #tpu.memory_space<vmem>>, vector<128x128xf32>,
    return
  }
  func.func @transform_0(%arg0: i32) -> (i32, i32) {
    %c0_i32 = arith.constant 0 : i32
    %c0_i32_0 = arith.constant 0 : i32
    return %arg0, %c0_i32 : i32, i32
  }
  func.func @transform_1(%arg0: i32) -> (i32, i32) {
    %c0_i32 = arith.constant 0 : i32
    %c0_i32_0 = arith.constant 0 : i32
    %c0_i32_1 = arith.constant 0 : i32
    return %c0_i32, %c0_i32_0 : i32, i32
  }
  func.func @transform_2(%arg0: i32) -> (i32, i32) {
    %c0_i32 = arith.constant 0 : i32
    %c0_i32_0 = arith.constant 0 : i32
    %c0_i32_1 = arith.constant 0 : i32
    return %c0_i32, %c0_i32_0 : i32, i32
  }
  func.func @transform_3(%arg0: i32) -> (i32, i32) {
    %c0_i32 = arith.constant 0 : i32
    %c0_i32_0 = arith.constant 0 : i32
    %c0_i32_1 = arith.constant 0 : i32
    return %c0_i32, %c0_i32_0 : i32, i32
  }
  func.func @transform_4(%arg0: i32) -> (i32, i32) {
    %c0_i32 = arith.constant 0 : i32
    %c0_i32_0 = arith.constant 0 : i32
    %c0_i32_1 = arith.constant 0 : i32
    return %c0_i32, %c0_i32_0 : i32, i32
  }
  func.func @transform_5(%arg0: i32) -> (i32, i32) {
    %c0_i32 = arith.constant 0 : i32
    %c0_i32_0 = arith.constant 0 : i32
    return %arg0, %c0_i32 : i32, i32
  }
}

</mosaic_0001>

<llo_original>
// kernel: tpu_custom_call.1
$region0: #{tpu_custom_call.1}
  #allocation0 [shape = 'u32[]', space=smem, size = 0x4, offset = 0x4, fixed_abs, tag = 'smem constant byte address 0x4 - core index']
  #allocation1 [shape = 'u32[144,128]{1,0:T(1,128)}', space=vmem, size = 0x12000, scoped, tag = 'internal scratch']
  %s0 = inlined_call_operand.hbm [shape: bf16[128,4608], index: 0, kind: input, shape index: {}]
  %s1 = inlined_call_operand.hbm [shape: bf16[4608,512], index: 1, kind: input, shape index: {}]
  %s2 = inlined_call_operand.hbm [shape: f32[1,512], index: 2, kind: input, shape index: {}]
  %s3 = inlined_call_operand.hbm [shape: bf16[512,128], index: 3, kind: input, shape index: {}]
  %s4 = inlined_call_operand.hbm [shape: f32[1,128], index: 4, kind: input, shape index: {}]
  %s5 = inlined_call_operand.hbm [shape: f32[128,128], index: 5, kind: output, shape index: {}]
  %s6 = sld [smem:[#allocation0]]
  $region50: #{tpu_custom_call.1} parent=0
    _
  %s8 = ssub.s32 1, %s6
  %s9 = scalar_select 0, %s8, %s6
  $region1: #{tpu_custom_call.1} parent=0
    #allocation2 [shape = 'u8[1179648]{0}', space=vmem, size = 0x120000, scoped, tag = 'input window, operand 0, single buffered']
    #allocation3 [shape = 's32[1]{0}', space=sflag, size = 0x4, scoped, tag = 'scoped memory for tpu_custom_call.1']
    #allocation4 [shape = 's32[1]{0}', space=sflag, size = 0x4, scoped, tag = 'scoped memory for tpu_custom_call.1']
    #allocation5 [shape = 'u8[4718592]{0}', space=vmem, size = 0x480000, scoped, tag = 'input window, operand 1, single buffered']
    #allocation6 [shape = 's32[1]{0}', space=sflag, size = 0x4, scoped, tag = 'scoped memory for tpu_custom_call.1']
    #allocation7 [shape = 'u8[2048]{0}', space=vmem, size = 0x800, scoped, tag = 'input window, operand 2, single buffered']
    #allocation8 [shape = 'u8[131072]{0}', space=vmem, size = 0x20000, scoped, tag = 'input window, operand 3, single buffered']
    #allocation9 [shape = 's32[1]{0}', space=sflag, size = 0x4, scoped, tag = 'scoped memory for tpu_custom_call.1']
    #allocation10 [shape = 'u8[512]{0}', space=vmem, size = 0x400, scoped, tag = 'input window, operand 4, single buffered']
    #allocation11 [shape = 'u8[65536]{0}', space=vmem, size = 0x10000, scoped, tag = 'output window, operand 0, single buffered']
    %10 = vsyncpa [#allocation3], 0
    %11 = vsyncpa [#allocation6], 0
    %12 = vsyncpa [#allocation9], 0
    %13 = vsyncpa [#allocation4], 0
    // Predicated region
    $region2: #{tpu_custom_call.1} parent=1 // pred_check
      _
    $region3: #{tpu_custom_call.1} parent=1 // pred_check_branch
      %15 = sbr.rel (0) target = $region5
    $region4: #{tpu_custom_call.1} parent=1 // pred_region
      %s17 = ssub.s32 36864, 36864
      %18 = vsyncadd [#allocation3], %s17
      %s19 = sshll.u32 [#allocation2], 4
      %s20 = int_to_ptr.vmem [resolvable:$true] %s19
      %25 = dma.hbm_to_vmem [thread:$0]  %s0, 36864, %s20, [#allocation3], 2304, 2304, 144
    $region5: #{tpu_custom_call.1} parent=1 // pred_fallthru
      _
    // Predicated region
    $region6: #{tpu_custom_call.1} parent=1 // pred_check
      _
    $region7: #{tpu_custom_call.1} parent=1 // pred_check_branch
      %27 = sbr.rel (0) target = $region9
    $region8: #{tpu_custom_call.1} parent=1 // pred_region
      %s29 = ssub.s32 147456, 147456
      %30 = vsyncadd [#allocation6], %s29
      %s31 = sshll.u32 [#allocation5], 4
      %s32 = int_to_ptr.vmem [resolvable:$true] %s31
      %37 = dma.hbm_to_vmem [thread:$0]  %s1, 147456, %s32, [#allocation6], 256, 256, 16
    $region9: #{tpu_custom_call.1} parent=1 // pred_fallthru
      _
    // Predicated region
    $region10: #{tpu_custom_call.1} parent=1 // pred_check
      _
    $region11: #{tpu_custom_call.1} parent=1 // pred_check_branch
      %39 = sbr.rel (0) target = $region13
    $region12: #{tpu_custom_call.1} parent=1 // pred_region
      %s41 = ssub.s32 64, 64
      %42 = vsyncadd [#allocation6], %s41
      %s44 = sshll.u32 [#allocation7], 4
      %s45 = int_to_ptr.vmem [resolvable:$true] %s44
      %47 = dma.hbm_to_vmem [thread:$0]  %s2, 64, %s45, [#allocation6]
    $region13: #{tpu_custom_call.1} parent=1 // pred_fallthru
      _
    // Predicated region
    $region14: #{tpu_custom_call.1} parent=1 // pred_check
      _
    $region15: #{tpu_custom_call.1} parent=1 // pred_check_branch
      %49 = sbr.rel (0) target = $region17
    $region16: #{tpu_custom_call.1} parent=1 // pred_region
      %s51 = ssub.s32 4096, 4096
      %52 = vsyncadd [#allocation9], %s51
      %s53 = sshll.u32 [#allocation8], 4
      %s54 = int_to_ptr.vmem [resolvable:$true] %s53
      %59 = dma.hbm_to_vmem [thread:$0]  %s3, 4096, %s54, [#allocation9], 64, 64, 4
    $region17: #{tpu_custom_call.1} parent=1 // pred_fallthru
      _
    // Predicated region
    $region18: #{tpu_custom_call.1} parent=1 // pred_check
      _
    $region19: #{tpu_custom_call.1} parent=1 // pred_check_branch
      %61 = sbr.rel (0) target = $region21
    $region20: #{tpu_custom_call.1} parent=1 // pred_region
      %s63 = ssub.s32 16, 16
      %64 = vsyncadd [#allocation9], %s63
      %s66 = sshll.u32 [#allocation10], 4
      %s67 = int_to_ptr.vmem [resolvable:$true] %s66
      %69 = dma.hbm_to_vmem [thread:$0]  %s4, 16, %s67, [#allocation9]
    $region21: #{tpu_custom_call.1} parent=1 // pred_fallthru
      _
    // Predicated region
    $region22: #{tpu_custom_call.1} parent=1 // pred_check
      _
    $region23: #{tpu_custom_call.1} parent=1 // pred_check_branch
      %71 = sbr.rel (0) target = $region25
    $region24: #{tpu_custom_call.1} parent=1 // pred_region
      %72 = dma.done [#allocation3], 36864
    $region25: #{tpu_custom_call.1} parent=1 // pred_fallthru
      _
    // Predicated region
    $region26: #{tpu_custom_call.1} parent=1 // pred_check
      _
    $region27: #{tpu_custom_call.1} parent=1 // pred_check_branch
      %74 = sbr.rel (0) target = $region29
    $region28: #{tpu_custom_call.1} parent=1 // pred_region
      %75 = dma.done [#allocation6], 147456
    $region29: #{tpu_custom_call.1} parent=1 // pred_fallthru
      _
    // Predicated region
    $region30: #{tpu_custom_call.1} parent=1 // pred_check
      _
    $region31: #{tpu_custom_call.1} parent=1 // pred_check_branch
      %77 = sbr.rel (0) target = $region33
    $region32: #{tpu_custom_call.1} parent=1 // pred_region
      %78 = dma.done [#allocation6], 64
    $region33: #{tpu_custom_call.1} parent=1 // pred_fallthru
      _
    // Predicated region
    $region34: #{tpu_custom_call.1} parent=1 // pred_check
      _
    $region35: #{tpu_custom_call.1} parent=1 // pred_check_branch
      %80 = sbr.rel (0) target = $region37
    $region36: #{tpu_custom_call.1} parent=1 // pred_region
      %81 = dma.done [#allocation9], 4096
    $region37: #{tpu_custom_call.1} parent=1 // pred_fallthru
      _
    // Predicated region
    $region38: #{tpu_custom_call.1} parent=1 // pred_check
      _
    $region39: #{tpu_custom_call.1} parent=1 // pred_check_branch
      %83 = sbr.rel (0) target = $region41
    $region40: #{tpu_custom_call.1} parent=1 // pred_region
      %84 = dma.done [#allocation9], 16
    $region41: #{tpu_custom_call.1} parent=1 // pred_fallthru
      _
    %v86 = vld [vmem:[#allocation2] sm:$0xff]
    %v87 = vld [vmem:[#allocation2 + $0x8] sm:$0xff]
    %v88 = vld [vmem:[#allocation2 + $0x10] sm:$0xff]
    %v89 = vld [vmem:[#allocation2 + $0x18] sm:$0xff]
    %v90 = vld [vmem:[#allocation2 + $0x20] sm:$0xff]
    %v91 = vld [vmem:[#allocation2 + $0x28] sm:$0xff]
    %v92 = vld [vmem:[#allocation2 + $0x30] sm:$0xff]
    %v93 = vld [vmem:[#allocation2 + $0x38] sm:$0xff]
    %v94 = vld [vmem:[#allocation2 + $0x40] sm:$0xff]
    %v95 = vld [vmem:[#allocation2 + $0x48] sm:$0xff]
    %v96 = vld [vmem:[#allocation2 + $0x50] sm:$0xff]
    %v97 = vld [vmem:[#allocation2 + $0x58] sm:$0xff]
    %v98 = vld [vmem:[#allocation2 + $0x60] sm:$0xff]
    %v99 = vld [vmem:[#allocation2 + $0x68] sm:$0xff]
    %v100 = vld [vmem:[#allocation2 + $0x70] sm:$0xff]
    %v101 = vld [vmem:[#allocation2 + $0x78] sm:$0xff]
    %v102 = vld [vmem:[#allocation2 + $0x80] sm:$0xff]
    %v103 = vld [vmem:[#allocation2 + $0x88] sm:$0xff]
    %v104 = vld [vmem:[#allocation2 + $0x90] sm:$0xff]
    %v105 = vld [vmem:[#allocation2 + $0x98] sm:$0xff]
    %v106 = vld [vmem:[#allocation2 + $0xa0] sm:$0xff]
    %v107 = vld [vmem:[#allocation2 + $0xa8] sm:$0xff]
    %v108 = vld [vmem:[#allocation2 + $0xb0] sm:$0xff]
    %v109 = vld [vmem:[#allocation2 + $0xb8] sm:$0xff]
    %v110 = vld [vmem:[#allocation2 + $0xc0] sm:$0xff]
    %v111 = vld [vmem:[#allocation2 + $0xc8] sm:$0xff]
    %v112 = vld [vmem:[#allocation2 + $0xd0] sm:$0xff]
    %v113 = vld [vmem:[#allocation2 + $0xd8] sm:$0xff]
    %v114 = vld [vmem:[#allocation2 + $0xe0] sm:$0xff]
    %v115 = vld [vmem:[#allocation2 + $0xe8] sm:$0xff]
    %v116 = vld [vmem:[#allocation2 + $0xf0] sm:$0xff]
    %v117 = vld [vmem:[#allocation2 + $0xf8] sm:$0xff]
    %v118 = vld [vmem:[#allocation2 + $0x100] sm:$0xff]
    %v119 = vld [vmem:[#allocation2 + $0x108] sm:$0xff]
    %v120 = vld [vmem:[#allocation2 + $0x110] sm:$0xff]
    %v121 = vld [vmem:[#allocation2 + $0x118] sm:$0xff]
    %v122 = vld [vmem:[#allocation2 + $0x120] sm:$0xff]
    %v123 = vld [vmem:[#allocation2 + $0x128] sm:$0xff]
    %v124 = vld [vmem:[#allocation2 + $0x130] sm:$0xff]
    %v125 = vld [vmem:[#allocation2 + $0x138] sm:$0xff]
    %v126 = vld [vmem:[#allocation2 + $0x140] sm:$0xff]
    %v127 = vld [vmem:[#allocation2 + $0x148] sm:$0xff]
    %v128 = vld [vmem:[#allocation2 + $0x150] sm:$0xff]
    %v129 = vld [vmem:[#allocation2 + $0x158] sm:$0xff]
    %v130 = vld [vmem:[#allocation2 + $0x160] sm:$0xff]
    %v131 = vld [vmem:[#allocation2 + $0x168] sm:$0xff]
    %v132 = vld [vmem:[#allocation2 + $0x170] sm:$0xff]
    %v133 = vld [vmem:[#allocation2 + $0x178] sm:$0xff]
    %v134 = vld [vmem:[#allocation2 + $0x180] sm:$0xff]
    %v135 = vld [vmem:[#allocation2 + $0x188] sm:$0xff]
    %v136 = vld [vmem:[#allocation2 + $0x190] sm:$0xff]
    %v137 = vld [vmem:[#allocation2 + $0x198] sm:$0xff]
    %v138 = vld [vmem:[#allocation2 + $0x1a0] sm:$0xff]
    %v139 = vld [vmem:[#allocation2 + $0x1a8] sm:$0xff]
    %v140 = vld [vmem:[#allocation2 + $0x1b0] sm:$0xff]
    %v141 = vld [vmem:[#allocation2 + $0x1b8] sm:$0xff]
    %v142 = vld [vmem:[#allocation2 + $0x1c0] sm:$0xff]
    %v143 = vld [vmem:[#allocation2 + $0x1c8] sm:$0xff]
    %v144 = vld [vmem:[#allocation2 + $0x1d0] sm:$0xff]
    %v145 = vld [vmem:[#allocation2 + $0x1d8] sm:$0xff]
    %v146 = vld [vmem:[#allocation2 + $0x1e0] sm:$0xff]
    %v147 = vld [vmem:[#allocation2 + $0x1e8] sm:$0xff]
    %v148 = vld [vmem:[#allocation2 + $0x1f0] sm:$0xff]
    %v149 = vld [vmem:[#allocation2 + $0x1f8] sm:$0xff]
    %v150 = vld [vmem:[#allocation2 + $0x200] sm:$0xff]
    %v151 = vld [vmem:[#allocation2 + $0x208] sm:$0xff]
    %v152 = vld [vmem:[#allocation2 + $0x210] sm:$0xff]
    %v153 = vld [vmem:[#allocation2 + $0x218] sm:$0xff]
    %v154 = vld [vmem:[#allocation2 + $0x220] sm:$0xff]
    %v155 = vld [vmem:[#allocation2 + $0x228] sm:$0xff]
    %v156 = vld [vmem:[#allocation2 + $0x230] sm:$0xff]
    %v157 = vld [vmem:[#allocation2 + $0x238] sm:$0xff]
    %v158 = vld [vmem:[#allocation2 + $0x240] sm:$0xff]
    %v159 = vld [vmem:[#allocation2 + $0x248] sm:$0xff]
    %v160 = vld [vmem:[#allocation2 + $0x250] sm:$0xff]
    %v161 = vld [vmem:[#allocation2 + $0x258] sm:$0xff]
    %v162 = vld [vmem:[#allocation2 + $0x260] sm:$0xff]
    %v163 = vld [vmem:[#allocation2 + $0x268] sm:$0xff]
    %v164 = vld [vmem:[#allocation2 + $0x270] sm:$0xff]
    %v165 = vld [vmem:[#allocation2 + $0x278] sm:$0xff]
    %v166 = vld [vmem:[#allocation2 + $0x280] sm:$0xff]
    %v167 = vld [vmem:[#allocation2 + $0x288] sm:$0xff]
    %v168 = vld [vmem:[#allocation2 + $0x290] sm:$0xff]
    %v169 = vld [vmem:[#allocation2 + $0x298] sm:$0xff]
    %v170 = vld [vmem:[#allocation2 + $0x2a0] sm:$0xff]
    %v171 = vld [vmem:[#allocation2 + $0x2a8] sm:$0xff]
    %v172 = vld [vmem:[#allocation2 + $0x2b0] sm:$0xff]
    %v173 = vld [vmem:[#allocation2 + $0x2b8] sm:$0xff]
    %v174 = vld [vmem:[#allocation2 + $0x2c0] sm:$0xff]
    %v175 = vld [vmem:[#allocation2 + $0x2c8] sm:$0xff]
    %v176 = vld [vmem:[#allocation2 + $0x2d0] sm:$0xff]
    %v177 = vld [vmem:[#allocation2 + $0x2d8] sm:$0xff]
    %v178 = vld [vmem:[#allocation2 + $0x2e0] sm:$0xff]
    %v179 = vld [vmem:[#allocation2 + $0x2e8] sm:$0xff]
    %v180 = vld [vmem:[#allocation2 + $0x2f0] sm:$0xff]
    %v181 = vld [vmem:[#allocation2 + $0x2f8] sm:$0xff]
    %v182 = vld [vmem:[#allocation2 + $0x300] sm:$0xff]
    %v183 = vld [vmem:[#allocation2 + $0x308] sm:$0xff]
    %v184 = vld [vmem:[#allocation2 + $0x310] sm:$0xff]
    %v185 = vld [vmem:[#allocation2 + $0x318] sm:$0xff]
    %v186 = vld [vmem:[#allocation2 + $0x320] sm:$0xff]
    %v187 = vld [vmem:[#allocation2 + $0x328] sm:$0xff]
    %v188 = vld [vmem:[#allocation2 + $0x330] sm:$0xff]
    %v189 = vld [vmem:[#allocation2 + $0x338] sm:$0xff]
    %v190 = vld [vmem:[#allocation2 + $0x340] sm:$0xff]
    %v191 = vld [vmem:[#allocation2 + $0x348] sm:$0xff]
    %v192 = vld [vmem:[#allocation2 + $0x350] sm:$0xff]
    %v193 = vld [vmem:[#allocation2 + $0x358] sm:$0xff]
    %v194 = vld [vmem:[#allocation2 + $0x360] sm:$0xff]
    %v195 = vld [vmem:[#allocation2 + $0x368] sm:$0xff]
    %v196 = vld [vmem:[#allocation2 + $0x370] sm:$0xff]
    %v197 = vld [vmem:[#allocation2 + $0x378] sm:$0xff]
    %v198 = vld [vmem:[#allocation2 + $0x380] sm:$0xff]
    %v199 = vld [vmem:[#allocation2 + $0x388] sm:$0xff]
    %v200 = vld [vmem:[#allocation2 + $0x390] sm:$0xff]
    %v201 = vld [vmem:[#allocation2 + $0x398] sm:$0xff]
    %v202 = vld [vmem:[#allocation2 + $0x3a0] sm:$0xff]
    %v203 = vld [vmem:[#allocation2 + $0x3a8] sm:$0xff]
    %v204 = vld [vmem:[#allocation2 + $0x3b0] sm:$0xff]
    %v205 = vld [vmem:[#allocation2 + $0x3b8] sm:$0xff]
    %v206 = vld [vmem:[#allocation2 + $0x3c0] sm:$0xff]
    %v207 = vld [vmem:[#allocation2 + $0x3c8] sm:$0xff]
    %v208 = vld [vmem:[#allocation2 + $0x3d0] sm:$0xff]
    %v209 = vld [vmem:[#allocation2 + $0x3d8] sm:$0xff]
    %v210 = vld [vmem:[#allocation2 + $0x3e0] sm:$0xff]
    %v211 = vld [vmem:[#allocation2 + $0x3e8] sm:$0xff]
    %v212 = vld [vmem:[#allocation2 + $0x3f0] sm:$0xff]
    %v213 = vld [vmem:[#allocation2 + $0x3f8] sm:$0xff]
    %v214 = vld [vmem:[#allocation2 + $0x400] sm:$0xff]
    %v215 = vld [vmem:[#allocation2 + $0x408] sm:$0xff]
    %v216 = vld [vmem:[#allocation2 + $0x410] sm:$0xff]
    %v217 = vld [vmem:[#allocation2 + $0x418] sm:$0xff]
    %v218 = vld [vmem:[#allocation2 + $0x420] sm:$0xff]
    %v219 = vld [vmem:[#allocation2 + $0x428] sm:$0xff]
    %v220 = vld [vmem:[#allocation2 + $0x430] sm:$0xff]
    %v221 = vld [vmem:[#allocation2 + $0x438] sm:$0xff]
    %v222 = vld [vmem:[#allocation2 + $0x440] sm:$0xff]
    %v223 = vld [vmem:[#allocation2 + $0x448] sm:$0xff]
    %v224 = vld [vmem:[#allocation2 + $0x450] sm:$0xff]
    %v225 = vld [vmem:[#allocation2 + $0x458] sm:$0xff]
    %v226 = vld [vmem:[#allocation2 + $0x460] sm:$0xff]
    %v227 = vld [vmem:[#allocation2 + $0x468] sm:$0xff]
    %v228 = vld [vmem:[#allocation2 + $0x470] sm:$0xff]
    %v229 = vld [vmem:[#allocation2 + $0x478] sm:$0xff]
    %v230 = vld [vmem:[#allocation2 + $0x480] sm:$0xff]
    %v231 = vld [vmem:[#allocation2 + $0x488] sm:$0xff]
    %v232 = vld [vmem:[#allocation2 + $0x490] sm:$0xff]
    %v233 = vld [vmem:[#allocation2 + $0x498] sm:$0xff]
    %v234 = vld [vmem:[#allocation2 + $0x4a0] sm:$0xff]
    %v235 = vld [vmem:[#allocation2 + $0x4a8] sm:$0xff]
    %v236 = vld [vmem:[#allocation2 + $0x4b0] sm:$0xff]
    %v237 = vld [vmem:[#allocation2 + $0x4b8] sm:$0xff]
    %v238 = vld [vmem:[#allocation2 + $0x4c0] sm:$0xff]
    %v239 = vld [vmem:[#allocation2 + $0x4c8] sm:$0xff]
    %v240 = vld [vmem:[#allocation2 + $0x4d0] sm:$0xff]
    %v241 = vld [vmem:[#allocation2 + $0x4d8] sm:$0xff]
    %v242 = vld [vmem:[#allocation2 + $0x4e0] sm:$0xff]
    %v243 = vld [vmem:[#allocation2 + $0x4e8] sm:$0xff]
    %v244 = vld [vmem:[#allocation2 + $0x4f0] sm:$0xff]
    %v245 = vld [vmem:[#allocation2 + $0x4f8] sm:$0xff]
    %v246 = vld [vmem:[#allocation2 + $0x500] sm:$0xff]
    %v247 = vld [vmem:[#allocation2 + $0x508] sm:$0xff]
    %v248 = vld [vmem:[#allocation2 + $0x510] sm:$0xff]
    %v249 = vld [vmem:[#allocation2 + $0x518] sm:$0xff]
    %v250 = vld [vmem:[#allocation2 + $0x520] sm:$0xff]
    %v251 = vld [vmem:[#allocation2 + $0x528] sm:$0xff]
    %v252 = vld [vmem:[#allocation2 + $0x530] sm:$0xff]
    %v253 = vld [vmem:[#allocation2 + $0x538] sm:$0xff]
    %v254 = vld [vmem:[#allocation2 + $0x540] sm:$0xff]
    %v255 = vld [vmem:[#allocation2 + $0x548] sm:$0xff]
    %v256 = vld [vmem:[#allocation2 + $0x550] sm:$0xff]
    %v257 = vld [vmem:[#allocation2 + $0x558] sm:$0xff]
    %v258 = vld [vmem:[#allocation2 + $0x560] sm:$0xff]
    %v259 = vld [vmem:[#allocation2 + $0x568] sm:$0xff]
    %v260 = vld [vmem:[#allocation2 + $0x570] sm:$0xff]
    %v261 = vld [vmem:[#allocation2 + $0x578] sm:$0xff]
    %v262 = vld [vmem:[#allocation2 + $0x580] sm:$0xff]
    %v263 = vld [vmem:[#allocation2 + $0x588] sm:$0xff]
    %v264 = vld [vmem:[#allocation2 + $0x590] sm:$0xff]
    %v265 = vld [vmem:[#allocation2 + $0x598] sm:$0xff]
    %v266 = vld [vmem:[#allocation2 + $0x5a0] sm:$0xff]
    %v267 = vld [vmem:[#allocation2 + $0x5a8] sm:$0xff]
    %v268 = vld [vmem:[#allocation2 + $0x5b0] sm:$0xff]
    %v269 = vld [vmem:[#allocation2 + $0x5b8] sm:$0xff]
    %v270 = vld [vmem:[#allocation2 + $0x5c0] sm:$0xff]
    %v271 = vld [vmem:[#allocation2 + $0x5c8] sm:$0xff]
    %v272 = vld [vmem:[#allocation2 + $0x5d0] sm:$0xff]
    %v273 = vld [vmem:[#allocation2 + $0x5d8] sm:$0xff]
    %v274 = vld [vmem:[#allocation2 + $0x5e0] sm:$0xff]
    %v275 = vld [vmem:[#allocation2 + $0x5e8] sm:$0xff]
    %v276 = vld [vmem:[#allocation2 + $0x5f0] sm:$0xff]
    %v277 = vld [vmem:[#allocation2 + $0x5f8] sm:$0xff]
    %v278 = vld [vmem:[#allocation2 + $0x600] sm:$0xff]
    %v279 = vld [vmem:[#allocation2 + $0x608] sm:$0xff]
    %v280 = vld [vmem:[#allocation2 + $0x610] sm:$0xff]
    %v281 = vld [vmem:[#allocation2 + $0x618] sm:$0xff]
    %v282 = vld [vmem:[#allocation2 + $0x620] sm:$0xff]
    %v283 = vld [vmem:[#allocation2 + $0x628] sm:$0xff]
    %v284 = vld [vmem:[#allocation2 + $0x630] sm:$0xff]
    %v285 = vld [vmem:[#allocation2 + $0x638] sm:$0xff]
    %v286 = vld [vmem:[#allocation2 + $0x640] sm:$0xff]
    %v287 = vld [vmem:[#allocation2 + $0x648] sm:$0xff]
    %v288 = vld [vmem:[#allocation2 + $0x650] sm:$0xff]
    %v289 = vld [vmem:[#allocation2 + $0x658] sm:$0xff]
    %v290 = vld [vmem:[#allocation2 + $0x660] sm:$0xff]
    %v291 = vld [vmem:[#allocation2 + $0x668] sm:$0xff]
    %v292 = vld [vmem:[#allocation2 + $0x670] sm:$0xff]
    %v293 = vld [vmem:[#allocation2 + $0x678] sm:$0xff]
    %v294 = vld [vmem:[#allocation2 + $0x680] sm:$0xff]
    %v295 = vld [vmem:[#allocation2 + $0x688] sm:$0xff]
    %v296 = vld [vmem:[#allocation2 + $0x690] sm:$0xff]
    %v297 = vld [vmem:[#allocation2 + $0x698] sm:$0xff]
    %v298 = vld [vmem:[#allocation2 + $0x6a0] sm:$0xff]
    %v299 = vld [vmem:[#allocation2 + $0x6a8] sm:$0xff]
    %v300 = vld [vmem:[#allocation2 + $0x6b0] sm:$0xff]
    %v301 = vld [vmem:[#allocation2 + $0x6b8] sm:$0xff]
    %v302 = vld [vmem:[#allocation2 + $0x6c0] sm:$0xff]
    %v303 = vld [vmem:[#allocation2 + $0x6c8] sm:$0xff]
    %v304 = vld [vmem:[#allocation2 + $0x6d0] sm:$0xff]
    %v305 = vld [vmem:[#allocation2 + $0x6d8] sm:$0xff]
    %v306 = vld [vmem:[#allocation2 + $0x6e0] sm:$0xff]
    %v307 = vld [vmem:[#allocation2 + $0x6e8] sm:$0xff]
    %v308 = vld [vmem:[#allocation2 + $0x6f0] sm:$0xff]
    %v309 = vld [vmem:[#allocation2 + $0x6f8] sm:$0xff]
    %v310 = vld [vmem:[#allocation2 + $0x700] sm:$0xff]
    %v311 = vld [vmem:[#allocation2 + $0x708] sm:$0xff]
    %v312 = vld [vmem:[#allocation2 + $0x710] sm:$0xff]
    %v313 = vld [vmem:[#allocation2 + $0x718] sm:$0xff]
    %v314 = vld [vmem:[#allocation2 + $0x720] sm:$0xff]
    %v315 = vld [vmem:[#allocation2 + $0x728] sm:$0xff]
    %v316 = vld [vmem:[#allocation2 + $0x730] sm:$0xff]
    %v317 = vld [vmem:[#allocation2 + $0x738] sm:$0xff]
    %v318 = vld [vmem:[#allocation2 + $0x740] sm:$0xff]
    %v319 = vld [vmem:[#allocation2 + $0x748] sm:$0xff]
    %v320 = vld [vmem:[#allocation2 + $0x750] sm:$0xff]
    %v321 = vld [vmem:[#allocation2 + $0x758] sm:$0xff]
    %v322 = vld [vmem:[#allocation2 + $0x760] sm:$0xff]
    %v323 = vld [vmem:[#allocation2 + $0x768] sm:$0xff]
    %v324 = vld [vmem:[#allocation2 + $0x770] sm:$0xff]
    %v325 = vld [vmem:[#allocation2 + $0x778] sm:$0xff]
    %v326 = vld [vmem:[#allocation2 + $0x780] sm:$0xff]
    %v327 = vld [vmem:[#allocation2 + $0x788] sm:$0xff]
    %v328 = vld [vmem:[#allocation2 + $0x790] sm:$0xff]
    %v329 = vld [vmem:[#allocation2 + $0x798] sm:$0xff]
    %v330 = vld [vmem:[#allocation2 + $0x7a0] sm:$0xff]
    %v331 = vld [vmem:[#allocation2 + $0x7a8] sm:$0xff]
    %v332 = vld [vmem:[#allocation2 + $0x7b0] sm:$0xff]
    %v333 = vld [vmem:[#allocation2 + $0x7b8] sm:$0xff]
    %v334 = vld [vmem:[#allocation2 + $0x7c0] sm:$0xff]
    %v335 = vld [vmem:[#allocation2 + $0x7c8] sm:$0xff]
    %v336 = vld [vmem:[#allocation2 + $0x7d0] sm:$0xff]
    %v337 = vld [vmem:[#allocation2 + $0x7d8] sm:$0xff]
    %v338 = vld [vmem:[#allocation2 + $0x7e0] sm:$0xff]
    %v339 = vld [vmem:[#allocation2 + $0x7e8] sm:$0xff]
    %v340 = vld [vmem:[#allocation2 + $0x7f0] sm:$0xff]
    %v341 = vld [vmem:[#allocation2 + $0x7f8] sm:$0xff]
    %v342 = vld [vmem:[#allocation2 + $0x800] sm:$0xff]
    %v343 = vld [vmem:[#allocation2 + $0x808] sm:$0xff]
    %v344 = vld [vmem:[#allocation2 + $0x810] sm:$0xff]
    %v345 = vld [vmem:[#allocation2 + $0x818] sm:$0xff]
    %v346 = vld [vmem:[#allocation2 + $0x820] sm:$0xff]
    %v347 = vld [vmem:[#allocation2 + $0x828] sm:$0xff]
    %v348 = vld [vmem:[#allocation2 + $0x830] sm:$0xff]
    %v349 = vld [vmem:[#allocation2 + $0x838] sm:$0xff]
    %v350 = vld [vmem:[#allocation2 + $0x840] sm:$0xff]
    %v351 = vld [vmem:[#allocation2 + $0x848] sm:$0xff]
    %v352 = vld [vmem:[#allocation2 + $0x850] sm:$0xff]
    %v353 = vld [vmem:[#allocation2 + $0x858] sm:$0xff]
    %v354 = vld [vmem:[#allocation2 + $0x860] sm:$0xff]
    %v355 = vld [vmem:[#allocation2 + $0x868] sm:$0xff]
    %v356 = vld [vmem:[#allocation2 + $0x870] sm:$0xff]
    %v357 = vld [vmem:[#allocation2 + $0x878] sm:$0xff]
    %v358 = vld [vmem:[#allocation2 + $0x880] sm:$0xff]
    %v359 = vld [vmem:[#allocation2 + $0x888] sm:$0xff]
    %v360 = vld [vmem:[#allocation2 + $0x890] sm:$0xff]
    %v361 = vld [vmem:[#allocation2 + $0x898] sm:$0xff]
    %v362 = vld [vmem:[#allocation2 + $0x8a0] sm:$0xff]
    %v363 = vld [vmem:[#allocation2 + $0x8a8] sm:$0xff]
    %v364 = vld [vmem:[#allocation2 + $0x8b0] sm:$0xff]
    %v365 = vld [vmem:[#allocation2 + $0x8b8] sm:$0xff]
    %v366 = vld [vmem:[#allocation2 + $0x8c0] sm:$0xff]
    %v367 = vld [vmem:[#allocation2 + $0x8c8] sm:$0xff]
    %v368 = vld [vmem:[#allocation2 + $0x8d0] sm:$0xff]
    %v369 = vld [vmem:[#allocation2 + $0x8d8] sm:$0xff]
    %v370 = vld [vmem:[#allocation2 + $0x8e0] sm:$0xff]
    %v371 = vld [vmem:[#allocation2 + $0x8e8] sm:$0xff]
    %v372 = vld [vmem:[#allocation2 + $0x8f0] sm:$0xff]
    %v373 = vld [vmem:[#allocation2 + $0x8f8] sm:$0xff]
    %v374 = vld [vmem:[#allocation5] sm:$0xff]
    %v375 = vld [vmem:[#allocation5 + $0x8] sm:$0xff]
    %v376 = vld [vmem:[#allocation5 + $0x10] sm:$0xff]
    %v377 = vld [vmem:[#allocation5 + $0x18] sm:$0xff]
    %v378 = vld [vmem:[#allocation5 + $0x20] sm:$0xff]
    %v379 = vld [vmem:[#allocation5 + $0x28] sm:$0xff]
    %v380 = vld [vmem:[#allocation5 + $0x30] sm:$0xff]
    %v381 = vld [vmem:[#allocation5 + $0x38] sm:$0xff]
    %v382 = vld [vmem:[#allocation5 + $0x40] sm:$0xff]
    %v383 = vld [vmem:[#allocation5 + $0x48] sm:$0xff]
    %v384 = vld [vmem:[#allocation5 + $0x50] sm:$0xff]
    %v385 = vld [vmem:[#allocation5 + $0x58] sm:$0xff]
    %v386 = vld [vmem:[#allocation5 + $0x60] sm:$0xff]
    %v387 = vld [vmem:[#allocation5 + $0x68] sm:$0xff]
    %v388 = vld [vmem:[#allocation5 + $0x70] sm:$0xff]
    %v389 = vld [vmem:[#allocation5 + $0x78] sm:$0xff]
    %v390 = vld [vmem:[#allocation5 + $0x80] sm:$0xff]
    %v391 = vld [vmem:[#allocation5 + $0x88] sm:$0xff]
    %v392 = vld [vmem:[#allocation5 + $0x90] sm:$0xff]
    %v393 = vld [vmem:[#allocation5 + $0x98] sm:$0xff]
    %v394 = vld [vmem:[#allocation5 + $0xa0] sm:$0xff]
    %v395 = vld [vmem:[#allocation5 + $0xa8] sm:$0xff]
    %v396 = vld [vmem:[#allocation5 + $0xb0] sm:$0xff]
    %v397 = vld [vmem:[#allocation5 + $0xb8] sm:$0xff]
    %v398 = vld [vmem:[#allocation5 + $0xc0] sm:$0xff]
    %v399 = vld [vmem:[#allocation5 + $0xc8] sm:$0xff]
    %v400 = vld [vmem:[#allocation5 + $0xd0] sm:$0xff]
    %v401 = vld [vmem:[#allocation5 + $0xd8] sm:$0xff]
    %v402 = vld [vmem:[#allocation5 + $0xe0] sm:$0xff]
    %v403 = vld [vmem:[#allocation5 + $0xe8] sm:$0xff]
    %v404 = vld [vmem:[#allocation5 + $0xf0] sm:$0xff]
    %v405 = vld [vmem:[#allocation5 + $0xf8] sm:$0xff]
    %v406 = vld [vmem:[#allocation5 + $0x100] sm:$0xff]
    %v407 = vld [vmem:[#allocation5 + $0x108] sm:$0xff]
    %v408 = vld [vmem:[#allocation5 + $0x110] sm:$0xff]
    %v409 = vld [vmem:[#allocation5 + $0x118] sm:$0xff]
    %v410 = vld [vmem:[#allocation5 + $0x120] sm:$0xff]
    %v411 = vld [vmem:[#allocation5 + $0x128] sm:$0xff]
    %v412 = vld [vmem:[#allocation5 + $0x130] sm:$0xff]
    %v413 = vld [vmem:[#allocation5 + $0x138] sm:$0xff]
    %v414 = vld [vmem:[#allocation5 + $0x140] sm:$0xff]
    %v415 = vld [vmem:[#allocation5 + $0x148] sm:$0xff]
    %v416 = vld [vmem:[#allocation5 + $0x150] sm:$0xff]
    %v417 = vld [vmem:[#allocation5 + $0x158] sm:$0xff]
    %v418 = vld [vmem:[#allocation5 + $0x160] sm:$0xff]
    %v419 = vld [vmem:[#allocation5 + $0x168] sm:$0xff]
    %v420 = vld [vmem:[#allocation5 + $0x170] sm:$0xff]
    %v421 = vld [vmem:[#allocation5 + $0x178] sm:$0xff]
    %v422 = vld [vmem:[#allocation5 + $0x180] sm:$0xff]
    %v423 = vld [vmem:[#allocation5 + $0x188] sm:$0xff]
    %v424 = vld [vmem:[#allocation5 + $0x190] sm:$0xff]
    %v425 = vld [vmem:[#allocation5 + $0x198] sm:$0xff]
    %v426 = vld [vmem:[#allocation5 + $0x1a0] sm:$0xff]
    %v427 = vld [vmem:[#allocation5 + $0x1a8] sm:$0xff]
    %v428 = vld [vmem:[#allocation5 + $0x1b0] sm:$0xff]
    %v429 = vld [vmem:[#allocation5 + $0x1b8] sm:$0xff]
    %v430 = vld [vmem:[#allocation5 + $0x1c0] sm:$0xff]
    %v431 = vld [vmem:[#allocation5 + $0x1c8] sm:$0xff]
    %v432 = vld [vmem:[#allocation5 + $0x1d0] sm:$0xff]
    %v433 = vld [vmem:[#allocation5 + $0x1d8] sm:$0xff]
    %v434 = vld [vmem:[#allocation5 + $0x1e0] sm:$0xff]
    %v435 = vld [vmem:[#allocation5 + $0x1e8] sm:$0xff]
    %v436 = vld [vmem:[#allocation5 + $0x1f0] sm:$0xff]
    %v437 = vld [vmem:[#allocation5 + $0x1f8] sm:$0xff]
    %v438 = vld [vmem:[#allocation5 + $0x200] sm:$0xff]
    %v439 = vld [vmem:[#allocation5 + $0x208] sm:$0xff]
    %v440 = vld [vmem:[#allocation5 + $0x210] sm:$0xff]
    %v441 = vld [vmem:[#allocation5 + $0x218] sm:$0xff]
    %v442 = vld [vmem:[#allocation5 + $0x220] sm:$0xff]
    %v443 = vld [vmem:[#allocation5 + $0x228] sm:$0xff]
    %v444 = vld [vmem:[#allocation5 + $0x230] sm:$0xff]
    %v445 = vld [vmem:[#allocation5 + $0x238] sm:$0xff]
    %v446 = vld [vmem:[#allocation5 + $0x240] sm:$0xff]
    %v447 = vld [vmem:[#allocation5 + $0x248] sm:$0xff]
    %v448 = vld [vmem:[#allocation5 + $0x250] sm:$0xff]
    %v449 = vld [vmem:[#allocation5 + $0x258] sm:$0xff]
    %v450 = vld [vmem:[#allocation5 + $0x260] sm:$0xff]
    %v451 = vld [vmem:[#allocation5 + $0x268] sm:$0xff]
    %v452 = vld [vmem:[#allocation5 + $0x270] sm:$0xff]
    %v453 = vld [vmem:[#allocation5 + $0x278] sm:$0xff]
    %v454 = vld [vmem:[#allocation5 + $0x280] sm:$0xff]
    %v455 = vld [vmem:[#allocation5 + $0x288] sm:$0xff]
    %v456 = vld [vmem:[#allocation5 + $0x290] sm:$0xff]
    %v457 = vld [vmem:[#allocation5 + $0x298] sm:$0xff]
    %v458 = vld [vmem:[#allocation5 + $0x2a0] sm:$0xff]
    %v459 = vld [vmem:[#allocation5 + $0x2a8] sm:$0xff]
    %v460 = vld [vmem:[#allocation5 + $0x2b0] sm:$0xff]
    %v461 = vld [vmem:[#allocation5 + $0x2b8] sm:$0xff]
    %v462 = vld [vmem:[#allocation5 + $0x2c0] sm:$0xff]
    %v463 = vld [vmem:[#allocation5 + $0x2c8] sm:$0xff]
    %v464 = vld [vmem:[#allocation5 + $0x2d0] sm:$0xff]
    %v465 = vld [vmem:[#allocation5 + $0x2d8] sm:$0xff]
    %v466 = vld [vmem:[#allocation5 + $0x2e0] sm:$0xff]
    %v467 = vld [vmem:[#allocation5 + $0x2e8] sm:$0xff]
    %v468 = vld [vmem:[#allocation5 + $0x2f0] sm:$0xff]
    %v469 = vld [vmem:[#allocation5 + $0x2f8] sm:$0xff]
    %v470 = vld [vmem:[#allocation5 + $0x300] sm:$0xff]
    %v471 = vld [vmem:[#allocation5 + $0x308] sm:$0xff]
    %v472 = vld [vmem:[#allocation5 + $0x310] sm:$0xff]
    %v473 = vld [vmem:[#allocation5 + $0x318] sm:$0xff]
    %v474 = vld [vmem:[#allocation5 + $0x320] sm:$0xff]
    %v475 = vld [vmem:[#allocation5 + $0x328] sm:$0xff]
    %v476 = vld [vmem:[#allocation5 + $0x330] sm:$0xff]
    %v477 = vld [vmem:[#allocation5 + $0x338] sm:$0xff]
    %v478 = vld [vmem:[#allocation5 + $0x340] sm:$0xff]
    %v479 = vld [vmem:[#allocation5 + $0x348] sm:$0xff]
    %v480 = vld [vmem:[#allocation5 + $0x350] sm:$0xff]
    %v481 = vld [vmem:[#allocation5 + $0x358] sm:$0xff]
    %v482 = vld [vmem:[#allocation5 + $0x360] sm:$0xff]
    %v483 = vld [vmem:[#allocation5 + $0x368] sm:$0xff]
    %v484 = vld [vmem:[#allocation5 + $0x370] sm:$0xff]
    %v485 = vld [vmem:[#allocation5 + $0x378] sm:$0xff]
    %v486 = vld [vmem:[#allocation5 + $0x380] sm:$0xff]
    %v487 = vld [vmem:[#allocation5 + $0x388] sm:$0xff]
    %v488 = vld [vmem:[#allocation5 + $0x390] sm:$0xff]
    %v489 = vld [vmem:[#allocation5 + $0x398] sm:$0xff]
    %v490 = vld [vmem:[#allocation5 + $0x3a0] sm:$0xff]
    %v491 = vld [vmem:[#allocation5 + $0x3a8] sm:$0xff]
    %v492 = vld [vmem:[#allocation5 + $0x3b0] sm:$0xff]
    %v493 = vld [vmem:[#allocation5 + $0x3b8] sm:$0xff]
    %v494 = vld [vmem:[#allocation5 + $0x3c0] sm:$0xff]
    %v495 = vld [vmem:[#allocation5 + $0x3c8] sm:$0xff]
    %v496 = vld [vmem:[#allocation5 + $0x3d0] sm:$0xff]
    %v497 = vld [vmem:[#allocation5 + $0x3d8] sm:$0xff]
    %v498 = vld [vmem:[#allocation5 + $0x3e0] sm:$0xff]
    %v499 = vld [vmem:[#allocation5 + $0x3e8] sm:$0xff]
    %v500 = vld [vmem:[#allocation5 + $0x3f0] sm:$0xff]
    %v501 = vld [vmem:[#allocation5 + $0x3f8] sm:$0xff]
    %v502 = vld [vmem:[#allocation5 + $0x400] sm:$0xff]
    %v503 = vld [vmem:[#allocation5 + $0x408] sm:$0xff]
    %v504 = vld [vmem:[#allocation5 + $0x410] sm:$0xff]
    %v505 = vld [vmem:[#allocation5 + $0x418] sm:$0xff]
    %v506 = vld [vmem:[#allocation5 + $0x420] sm:$0xff]
    %v507 = vld [vmem:[#allocation5 + $0x428] sm:$0xff]
    %v508 = vld [vmem:[#allocation5 + $0x430] sm:$0xff]
    %v509 = vld [vmem:[#allocation5 + $0x438] sm:$0xff]
    %v510 = vld [vmem:[#allocation5 + $0x440] sm:$0xff]
    %v511 = vld [vmem:[#allocation5 + $0x448] sm:$0xff]
    %v512 = vld [vmem:[#allocation5 + $0x450] sm:$0xff]
    %v513 = vld [vmem:[#allocation5 + $0x458] sm:$0xff]
    %v514 = vld [vmem:[#allocation5 + $0x460] sm:$0xff]
    %v515 = vld [vmem:[#allocation5 + $0x468] sm:$0xff]
    %v516 = vld [vmem:[#allocation5 + $0x470] sm:$0xff]
    %v517 = vld [vmem:[#allocation5 + $0x478] sm:$0xff]
    %v518 = vld [vmem:[#allocation5 + $0x480] sm:$0xff]
    %v519 = vld [vmem:[#allocation5 + $0x488] sm:$0xff]
    %v520 = vld [vmem:[#allocation5 + $0x490] sm:$0xff]
    %v521 = vld [vmem:[#allocation5 + $0x498] sm:$0xff]
    %v522 = vld [vmem:[#allocation5 + $0x4a0] sm:$0xff]
    %v523 = vld [vmem:[#allocation5 + $0x4a8] sm:$0xff]
    %v524 = vld [vmem:[#allocation5 + $0x4b0] sm:$0xff]
    %v525 = vld [vmem:[#allocation5 + $0x4b8] sm:$0xff]
    %v526 = vld [vmem:[#allocation5 + $0x4c0] sm:$0xff]
    %v527 = vld [vmem:[#allocation5 + $0x4c8] sm:$0xff]
    %v528 = vld [vmem:[#allocation5 + $0x4d0] sm:$0xff]
    %v529 = vld [vmem:[#allocation5 + $0x4d8] sm:$0xff]
    %v530 = vld [vmem:[#allocation5 + $0x4e0] sm:$0xff]
    %v531 = vld [vmem:[#allocation5 + $0x4e8] sm:$0xff]
    %v532 = vld [vmem:[#allocation5 + $0x4f0] sm:$0xff]
    %v533 = vld [vmem:[#allocation5 + $0x4f8] sm:$0xff]
    %v534 = vld [vmem:[#allocation5 + $0x500] sm:$0xff]
    %v535 = vld [vmem:[#allocation5 + $0x508] sm:$0xff]
    %v536 = vld [vmem:[#allocation5 + $0x510] sm:$0xff]
    %v537 = vld [vmem:[#allocation5 + $0x518] sm:$0xff]
    %v538 = vld [vmem:[#allocation5 + $0x520] sm:$0xff]
    %v539 = vld [vmem:[#allocation5 + $0x528] sm:$0xff]
    %v540 = vld [vmem:[#allocation5 + $0x530] sm:$0xff]
    %v541 = vld [vmem:[#allocation5 + $0x538] sm:$0xff]
    %v542 = vld [vmem:[#allocation5 + $0x540] sm:$0xff]
    %v543 = vld [vmem:[#allocation5 + $0x548] sm:$0xff]
    %v544 = vld [vmem:[#allocation5 + $0x550] sm:$0xff]
    %v545 = vld [vmem:[#allocation5 + $0x558] sm:$0xff]
    %v546 = vld [vmem:[#allocation5 + $0x560] sm:$0xff]
    %v547 = vld [vmem:[#allocation5 + $0x568] sm:$0xff]
    %v548 = vld [vmem:[#allocation5 + $0x570] sm:$0xff]
    %v549 = vld [vmem:[#allocation5 + $0x578] sm:$0xff]
    %v550 = vld [vmem:[#allocation5 + $0x580] sm:$0xff]
    %v551 = vld [vmem:[#allocation5 + $0x588] sm:$0xff]
    %v552 = vld [vmem:[#allocation5 + $0x590] sm:$0xff]
    %v553 = vld [vmem:[#allocation5 + $0x598] sm:$0xff]
    %v554 = vld [vmem:[#allocation5 + $0x5a0] sm:$0xff]
    %v555 = vld [vmem:[#allocation5 + $0x5a8] sm:$0xff]
    %v556 = vld [vmem:[#allocation5 + $0x5b0] sm:$0xff]
    %v557 = vld [vmem:[#allocation5 + $0x5b8] sm:$0xff]
    %v558 = vld [vmem:[#allocation5 + $0x5c0] sm:$0xff]
    %v559 = vld [vmem:[#allocation5 + $0x5c8] sm:$0xff]
    %v560 = vld [vmem:[#allocation5 + $0x5d0] sm:$0xff]
    %v561 = vld [vmem:[#allocation5 + $0x5d8] sm:$0xff]
    %v562 = vld [vmem:[#allocation5 + $0x5e0] sm:$0xff]
    %v563 = vld [vmem:[#allocation5 + $0x5e8] sm:$0xff]
    %v564 = vld [vmem:[#allocation5 + $0x5f0] sm:$0xff]
    %v565 = vld [vmem:[#allocation5 + $0x5f8] sm:$0xff]
    %v566 = vld [vmem:[#allocation5 + $0x600] sm:$0xff]
    %v567 = vld [vmem:[#allocation5 + $0x608] sm:$0xff]
    %v568 = vld [vmem:[#allocation5 + $0x610] sm:$0xff]
    %v569 = vld [vmem:[#allocation5 + $0x618] sm:$0xff]
    %v570 = vld [vmem:[#allocation5 + $0x620] sm:$0xff]
    %v571 = vld [vmem:[#allocation5 + $0x628] sm:$0xff]
    %v572 = vld [vmem:[#allocation5 + $0x630] sm:$0xff]
    %v573 = vld [vmem:[#allocation5 + $0x638] sm:$0xff]
    %v574 = vld [vmem:[#allocation5 + $0x640] sm:$0xff]
    %v575 = vld [vmem:[#allocation5 + $0x648] sm:$0xff]
    %v576 = vld [vmem:[#allocation5 + $0x650] sm:$0xff]
    %v577 = vld [vmem:[#allocation5 + $0x658] sm:$0xff]
    %v578 = vld [vmem:[#allocation5 + $0x660] sm:$0xff]
    %v579 = vld [vmem:[#allocation5 + $0x668] sm:$0xff]
    %v580 = vld [vmem:[#allocation5 + $0x670] sm:$0xff]
    %v581 = vld [vmem:[#allocation5 + $0x678] sm:$0xff]
    %v582 = vld [vmem:[#allocation5 + $0x680] sm:$0xff]
    %v583 = vld [vmem:[#allocation5 + $0x688] sm:$0xff]
    %v584 = vld [vmem:[#allocation5 + $0x690] sm:$0xff]
    %v585 = vld [vmem:[#allocation5 + $0x698] sm:$0xff]
    %v586 = vld [vmem:[#allocation5 + $0x6a0] sm:$0xff]
    %v587 = vld [vmem:[#allocation5 + $0x6a8] sm:$0xff]
    %v588 = vld [vmem:[#allocation5 + $0x6b0] sm:$0xff]
    %v589 = vld [vmem:[#allocation5 + $0x6b8] sm:$0xff]
    %v590 = vld [vmem:[#allocation5 + $0x6c0] sm:$0xff]
    %v591 = vld [vmem:[#allocation5 + $0x6c8] sm:$0xff]
    %v592 = vld [vmem:[#allocation5 + $0x6d0] sm:$0xff]
    %v593 = vld [vmem:[#allocation5 + $0x6d8] sm:$0xff]
    %v594 = vld [vmem:[#allocation5 + $0x6e0] sm:$0xff]
    %v595 = vld [vmem:[#allocation5 + $0x6e8] sm:$0xff]
    %v596 = vld [vmem:[#allocation5 + $0x6f0] sm:$0xff]
    %v597 = vld [vmem:[#allocation5 + $0x6f8] sm:$0xff]
    %v598 = vld [vmem:[#allocation5 + $0x700] sm:$0xff]
    %v599 = vld [vmem:[#allocation5 + $0x708] sm:$0xff]
    %v600 = vld [vmem:[#allocation5 + $0x710] sm:$0xff]
    %v601 = vld [vmem:[#allocation5 + $0x718] sm:$0xff]
    %v602 = vld [vmem:[#allocation5 + $0x720] sm:$0xff]
    %v603 = vld [vmem:[#allocation5 + $0x728] sm:$0xff]
    %v604 = vld [vmem:[#allocation5 + $0x730] sm:$0xff]
    %v605 = vld [vmem:[#allocation5 + $0x738] sm:$0xff]
    %v606 = vld [vmem:[#allocation5 + $0x740] sm:$0xff]
    %v607 = vld [vmem:[#allocation5 + $0x748] sm:$0xff]
    %v608 = vld [vmem:[#allocation5 + $0x750] sm:$0xff]
    %v609 = vld [vmem:[#allocation5 + $0x758] sm:$0xff]
    %v610 = vld [vmem:[#allocation5 + $0x760] sm:$0xff]
    %v611 = vld [vmem:[#allocation5 + $0x768] sm:$0xff]
    %v612 = vld [vmem:[#allocation5 + $0x770] sm:$0xff]
    %v613 = vld [vmem:[#allocation5 + $0x778] sm:$0xff]
    %v614 = vld [vmem:[#allocation5 + $0x780] sm:$0xff]
    %v615 = vld [vmem:[#allocation5 + $0x788] sm:$0xff]
    %v616 = vld [vmem:[#allocation5 + $0x790] sm:$0xff]
    %v617 = vld [vmem:[#allocation5 + $0x798] sm:$0xff]
    %v618 = vld [vmem:[#allocation5 + $0x7a0] sm:$0xff]
    %v619 = vld [vmem:[#allocation5 + $0x7a8] sm:$0xff]
    %v620 = vld [vmem:[#allocation5 + $0x7b0] sm:$0xff]
    %v621 = vld [vmem:[#allocation5 + $0x7b8] sm:$0xff]
    %v622 = vld [vmem:[#allocation5 + $0x7c0] sm:$0xff]
    %v623 = vld [vmem:[#allocation5 + $0x7c8] sm:$0xff]
    %v624 = vld [vmem:[#allocation5 + $0x7d0] sm:$0xff]
    %v625 = vld [vmem:[#allocation5 + $0x7d8] sm:$0xff]
    %v626 = vld [vmem:[#allocation5 + $0x7e0] sm:$0xff]
    %v627 = vld [vmem:[#allocation5 + $0x7e8] sm:$0xff]
    %v628 = vld [vmem:[#allocation5 + $0x7f0] sm:$0xff]
    %v629 = vld [vmem:[#allocation5 + $0x7f8] sm:$0xff]
    %v630 = vld [vmem:[#allocation5 + $0x800] sm:$0xff]
    %v631 = vld [vmem:[#allocation5 + $0x808] sm:$0xff]
    %v632 = vld [vmem:[#allocation5 + $0x810] sm:$0xff]
    %v633 = vld [vmem:[#allocation5 + $0x818] sm:$0xff]
    %v634 = vld [vmem:[#allocation5 + $0x820] sm:$0xff]
    %v635 = vld [vmem:[#allocation5 + $0x828] sm:$0xff]
    %v636 = vld [vmem:[#allocation5 + $0x830] sm:$0xff]
    %v637 = vld [vmem:[#allocation5 + $0x838] sm:$0xff]
    %v638 = vld [vmem:[#allocation5 + $0x840] sm:$0xff]
    %v639 = vld [vmem:[#allocation5 + $0x848] sm:$0xff]
    %v640 = vld [vmem:[#allocation5 + $0x850] sm:$0xff]
    %v641 = vld [vmem:[#allocation5 + $0x858] sm:$0xff]
    %v642 = vld [vmem:[#allocation5 + $0x860] sm:$0xff]
    %v643 = vld [vmem:[#allocation5 + $0x868] sm:$0xff]
    %v644 = vld [vmem:[#allocation5 + $0x870] sm:$0xff]
    %v645 = vld [vmem:[#allocation5 + $0x878] sm:$0xff]
    %v646 = vld [vmem:[#allocation5 + $0x880] sm:$0xff]
    %v647 = vld [vmem:[#allocation5 + $0x888] sm:$0xff]
    %v648 = vld [vmem:[#allocation5 + $0x890] sm:$0xff]
    %v649 = vld [vmem:[#allocation5 + $0x898] sm:$0xff]
    %v650 = vld [vmem:[#allocation5 + $0x8a0] sm:$0xff]
    %v651 = vld [vmem:[#allocation5 + $0x8a8] sm:$0xff]
    %v652 = vld [vmem:[#allocation5 + $0x8b0] sm:$0xff]
    %v653 = vld [vmem:[#allocation5 + $0x8b8] sm:$0xff]
    %v654 = vld [vmem:[#allocation5 + $0x8c0] sm:$0xff]
    %v655 = vld [vmem:[#allocation5 + $0x8c8] sm:$0xff]
    %v656 = vld [vmem:[#allocation5 + $0x8d0] sm:$0xff]
    %v657 = vld [vmem:[#allocation5 + $0x8d8] sm:$0xff]
    %v658 = vld [vmem:[#allocation5 + $0x8e0] sm:$0xff]
    %v659 = vld [vmem:[#allocation5 + $0x8e8] sm:$0xff]
    %v660 = vld [vmem:[#allocation5 + $0x8f0] sm:$0xff]
    %v661 = vld [vmem:[#allocation5 + $0x8f8] sm:$0xff]
    %v662 = vld [vmem:[#allocation5 + $0x900] sm:$0xff]
    %v663 = vld [vmem:[#allocation5 + $0x908] sm:$0xff]
    %v664 = vld [vmem:[#allocation5 + $0x910] sm:$0xff]
    %v665 = vld [vmem:[#allocation5 + $0x918] sm:$0xff]
    %v666 = vld [vmem:[#allocation5 + $0x920] sm:$0xff]
    %v667 = vld [vmem:[#allocation5 + $0x928] sm:$0xff]
    %v668 = vld [vmem:[#allocation5 + $0x930] sm:$0xff]
    %v669 = vld [vmem:[#allocation5 + $0x938] sm:$0xff]
    %v670 = vld [vmem:[#allocation5 + $0x940] sm:$0xff]
    %v671 = vld [vmem:[#allocation5 + $0x948] sm:$0xff]
    %v672 = vld [vmem:[#allocation5 + $0x950] sm:$0xff]
    %v673 = vld [vmem:[#allocation5 + $0x958] sm:$0xff]
    %v674 = vld [vmem:[#allocation5 + $0x960] sm:$0xff]
    %v675 = vld [vmem:[#allocation5 + $0x968] sm:$0xff]
    %v676 = vld [vmem:[#allocation5 + $0x970] sm:$0xff]
    %v677 = vld [vmem:[#allocation5 + $0x978] sm:$0xff]
    %v678 = vld [vmem:[#allocation5 + $0x980] sm:$0xff]
    %v679 = vld [vmem:[#allocation5 + $0x988] sm:$0xff]
    %v680 = vld [vmem:[#allocation5 + $0x990] sm:$0xff]
    %v681 = vld [vmem:[#allocation5 + $0x998] sm:$0xff]
    %v682 = vld [vmem:[#allocation5 + $0x9a0] sm:$0xff]
    %v683 = vld [vmem:[#allocation5 + $0x9a8] sm:$0xff]
    %v684 = vld [vmem:[#allocation5 + $0x9b0] sm:$0xff]
    %v685 = vld [vmem:[#allocation5 + $0x9b8] sm:$0xff]
    %v686 = vld [vmem:[#allocation5 + $0x9c0] sm:$0xff]
    %v687 = vld [vmem:[#allocation5 + $0x9c8] sm:$0xff]
    %v688 = vld [vmem:[#allocation5 + $0x9d0] sm:$0xff]
    %v689 = vld [vmem:[#allocation5 + $0x9d8] sm:$0xff]
    %v690 = vld [vmem:[#allocation5 + $0x9e0] sm:$0xff]
    %v691 = vld [vmem:[#allocation5 + $0x9e8] sm:$0xff]
    %v692 = vld [vmem:[#allocation5 + $0x9f0] sm:$0xff]
    %v693 = vld [vmem:[#allocation5 + $0x9f8] sm:$0xff]
    %v694 = vld [vmem:[#allocation5 + $0xa00] sm:$0xff]
    %v695 = vld [vmem:[#allocation5 + $0xa08] sm:$0xff]
    %v696 = vld [vmem:[#allocation5 + $0xa10] sm:$0xff]
    %v697 = vld [vmem:[#allocation5 + $0xa18] sm:$0xff]
    %v698 = vld [vmem:[#allocation5 + $0xa20] sm:$0xff]
    %v699 = vld [vmem:[#allocation5 + $0xa28] sm:$0xff]
    %v700 = vld [vmem:[#allocation5 + $0xa30] sm:$0xff]
    %v701 = vld [vmem:[#allocation5 + $0xa38] sm:$0xff]
    %v702 = vld [vmem:[#allocation5 + $0xa40] sm:$0xff]
    %v703 = vld [vmem:[#allocation5 + $0xa48] sm:$0xff]
    %v704 = vld [vmem:[#allocation5 + $0xa50] sm:$0xff]
    %v705 = vld [vmem:[#allocation5 + $0xa58] sm:$0xff]
    %v706 = vld [vmem:[#allocation5 + $0xa60] sm:$0xff]
    %v707 = vld [vmem:[#allocation5 + $0xa68] sm:$0xff]
    %v708 = vld [vmem:[#allocation5 + $0xa70] sm:$0xff]
    %v709 = vld [vmem:[#allocation5 + $0xa78] sm:$0xff]
    %v710 = vld [vmem:[#allocation5 + $0xa80] sm:$0xff]
    %v711 = vld [vmem:[#allocation5 + $0xa88] sm:$0xff]
    %v712 = vld [vmem:[#allocation5 + $0xa90] sm:$0xff]
    %v713 = vld [vmem:[#allocation5 + $0xa98] sm:$0xff]
    %v714 = vld [vmem:[#allocation5 + $0xaa0] sm:$0xff]
    %v715 = vld [vmem:[#allocation5 + $0xaa8] sm:$0xff]
    %v716 = vld [vmem:[#allocation5 + $0xab0] sm:$0xff]
    %v717 = vld [vmem:[#allocation5 + $0xab8] sm:$0xff]
    %v718 = vld [vmem:[#allocation5 + $0xac0] sm:$0xff]
    %v719 = vld [vmem:[#allocation5 + $0xac8] sm:$0xff]
    %v720 = vld [vmem:[#allocation5 + $0xad0] sm:$0xff]
    %v721 = vld [vmem:[#allocation5 + $0xad8] sm:$0xff]
    %v722 = vld [vmem:[#allocation5 + $0xae0] sm:$0xff]
    %v723 = vld [vmem:[#allocation5 + $0xae8] sm:$0xff]
    %v724 = vld [vmem:[#allocation5 + $0xaf0] sm:$0xff]
    %v725 = vld [vmem:[#allocation5 + $0xaf8] sm:$0xff]
    %v726 = vld [vmem:[#allocation5 + $0xb00] sm:$0xff]
    %v727 = vld [vmem:[#allocation5 + $0xb08] sm:$0xff]
    %v728 = vld [vmem:[#allocation5 + $0xb10] sm:$0xff]
    %v729 = vld [vmem:[#allocation5 + $0xb18] sm:$0xff]
    %v730 = vld [vmem:[#allocation5 + $0xb20] sm:$0xff]
    %v731 = vld [vmem:[#allocation5 + $0xb28] sm:$0xff]
    %v732 = vld [vmem:[#allocation5 + $0xb30] sm:$0xff]
    %v733 = vld [vmem:[#allocation5 + $0xb38] sm:$0xff]
    %v734 = vld [vmem:[#allocation5 + $0xb40] sm:$0xff]
    %v735 = vld [vmem:[#allocation5 + $0xb48] sm:$0xff]
    %v736 = vld [vmem:[#allocation5 + $0xb50] sm:$0xff]
    %v737 = vld [vmem:[#allocation5 + $0xb58] sm:$0xff]
    %v738 = vld [vmem:[#allocation5 + $0xb60] sm:$0xff]
    %v739 = vld [vmem:[#allocation5 + $0xb68] sm:$0xff]
    %v740 = vld [vmem:[#allocation5 + $0xb70] sm:$0xff]
    %v741 = vld [vmem:[#allocation5 + $0xb78] sm:$0xff]
    %v742 = vld [vmem:[#allocation5 + $0xb80] sm:$0xff]
    %v743 = vld [vmem:[#allocation5 + $0xb88] sm:$0xff]
    %v744 = vld [vmem:[#allocation5 + $0xb90] sm:$0xff]
    %v745 = vld [vmem:[#allocation5 + $0xb98] sm:$0xff]
    %v746 = vld [vmem:[#allocation5 + $0xba0] sm:$0xff]
    %v747 = vld [vmem:[#allocation5 + $0xba8] sm:$0xff]
    %v748 = vld [vmem:[#allocation5 + $0xbb0] sm:$0xff]
    %v749 = vld [vmem:[#allocation5 + $0xbb8] sm:$0xff]
    %v750 = vld [vmem:[#allocation5 + $0xbc0] sm:$0xff]
    %v751 = vld [vmem:[#allocation5 + $0xbc8] sm:$0xff]
    %v752 = vld [vmem:[#allocation5 + $0xbd0] sm:$0xff]
    %v753 = vld [vmem:[#allocation5 + $0xbd8] sm:$0xff]
    %v754 = vld [vmem:[#allocation5 + $0xbe0] sm:$0xff]
    %v755 = vld [vmem:[#allocation5 + $0xbe8] sm:$0xff]
    %v756 = vld [vmem:[#allocation5 + $0xbf0] sm:$0xff]
    %v757 = vld [vmem:[#allocation5 + $0xbf8] sm:$0xff]
    %v758 = vld [vmem:[#allocation5 + $0xc00] sm:$0xff]
    %v759 = vld [vmem:[#allocation5 + $0xc08] sm:$0xff]
    %v760 = vld [vmem:[#allocation5 + $0xc10] sm:$0xff]
    %v761 = vld [vmem:[#allocation5 + $0xc18] sm:$0xff]
    %v762 = vld [vmem:[#allocation5 + $0xc20] sm:$0xff]
    %v763 = vld [vmem:[#allocation5 + $0xc28] sm:$0xff]
    %v764 = vld [vmem:[#allocation5 + $0xc30] sm:$0xff]
    %v765 = vld [vmem:[#allocation5 + $0xc38] sm:$0xff]
    %v766 = vld [vmem:[#allocation5 + $0xc40] sm:$0xff]
    %v767 = vld [vmem:[#allocation5 + $0xc48] sm:$0xff]
    %v768 = vld [vmem:[#allocation5 + $0xc50] sm:$0xff]
    %v769 = vld [vmem:[#allocation5 + $0xc58] sm:$0xff]
    %v770 = vld [vmem:[#allocation5 + $0xc60] sm:$0xff]
    %v771 = vld [vmem:[#allocation5 + $0xc68] sm:$0xff]
    %v772 = vld [vmem:[#allocation5 + $0xc70] sm:$0xff]
    %v773 = vld [vmem:[#allocation5 + $0xc78] sm:$0xff]
    %v774 = vld [vmem:[#allocation5 + $0xc80] sm:$0xff]
    %v775 = vld [vmem:[#allocation5 + $0xc88] sm:$0xff]
    %v776 = vld [vmem:[#allocation5 + $0xc90] sm:$0xff]
    %v777 = vld [vmem:[#allocation5 + $0xc98] sm:$0xff]
    %v778 = vld [vmem:[#allocation5 + $0xca0] sm:$0xff]
    %v779 = vld [vmem:[#allocation5 + $0xca8] sm:$0xff]
    %v780 = vld [vmem:[#allocation5 + $0xcb0] sm:$0xff]
    %v781 = vld [vmem:[#allocation5 + $0xcb8] sm:$0xff]
    %v782 = vld [vmem:[#allocation5 + $0xcc0] sm:$0xff]
    %v783 = vld [vmem:[#allocation5 + $0xcc8] sm:$0xff]
    %v784 = vld [vmem:[#allocation5 + $0xcd0] sm:$0xff]
    %v785 = vld [vmem:[#allocation5 + $0xcd8] sm:$0xff]
    %v786 = vld [vmem:[#allocation5 + $0xce0] sm:$0xff]
    %v787 = vld [vmem:[#allocation5 + $0xce8] sm:$0xff]
    %v788 = vld [vmem:[#allocation5 + $0xcf0] sm:$0xff]
    %v789 = vld [vmem:[#allocation5 + $0xcf8] sm:$0xff]
    %v790 = vld [vmem:[#allocation5 + $0xd00] sm:$0xff]
    %v791 = vld [vmem:[#allocation5 + $0xd08] sm:$0xff]
    %v792 = vld [vmem:[#allocation5 + $0xd10] sm:$0xff]
    %v793 = vld [vmem:[#allocation5 + $0xd18] sm:$0xff]
    %v794 = vld [vmem:[#allocation5 + $0xd20] sm:$0xff]
    %v795 = vld [vmem:[#allocation5 + $0xd28] sm:$0xff]
    %v796 = vld [vmem:[#allocation5 + $0xd30] sm:$0xff]
    %v797 = vld [vmem:[#allocation5 + $0xd38] sm:$0xff]
    %v798 = vld [vmem:[#allocation5 + $0xd40] sm:$0xff]
    %v799 = vld [vmem:[#allocation5 + $0xd48] sm:$0xff]
    %v800 = vld [vmem:[#allocation5 + $0xd50] sm:$0xff]
    %v801 = vld [vmem:[#allocation5 + $0xd58] sm:$0xff]
    %v802 = vld [vmem:[#allocation5 + $0xd60] sm:$0xff]
    %v803 = vld [vmem:[#allocation5 + $0xd68] sm:$0xff]
    %v804 = vld [vmem:[#allocation5 + $0xd70] sm:$0xff]
    %v805 = vld [vmem:[#allocation5 + $0xd78] sm:$0xff]
    %v806 = vld [vmem:[#allocation5 + $0xd80] sm:$0xff]
    %v807 = vld [vmem:[#allocation5 + $0xd88] sm:$0xff]
    %v808 = vld [vmem:[#allocation5 + $0xd90] sm:$0xff]
    %v809 = vld [vmem:[#allocation5 + $0xd98] sm:$0xff]
    %v810 = vld [vmem:[#allocation5 + $0xda0] sm:$0xff]
    %v811 = vld [vmem:[#allocation5 + $0xda8] sm:$0xff]
    %v812 = vld [vmem:[#allocation5 + $0xdb0] sm:$0xff]
    %v813 = vld [vmem:[#allocation5 + $0xdb8] sm:$0xff]
    %v814 = vld [vmem:[#allocation5 + $0xdc0] sm:$0xff]
    %v815 = vld [vmem:[#allocation5 + $0xdc8] sm:$0xff]
    %v816 = vld [vmem:[#allocation5 + $0xdd0] sm:$0xff]
    %v817 = vld [vmem:[#allocation5 + $0xdd8] sm:$0xff]
    %v818 = vld [vmem:[#allocation5 + $0xde0] sm:$0xff]
    %v819 = vld [vmem:[#allocation5 + $0xde8] sm:$0xff]
    %v820 = vld [vmem:[#allocation5 + $0xdf0] sm:$0xff]
    %v821 = vld [vmem:[#allocation5 + $0xdf8] sm:$0xff]
    %v822 = vld [vmem:[#allocation5 + $0xe00] sm:$0xff]
    %v823 = vld [vmem:[#allocation5 + $0xe08] sm:$0xff]
    %v824 = vld [vmem:[#allocation5 + $0xe10] sm:$0xff]
    %v825 = vld [vmem:[#allocation5 + $0xe18] sm:$0xff]
    %v826 = vld [vmem:[#allocation5 + $0xe20] sm:$0xff]
    %v827 = vld [vmem:[#allocation5 + $0xe28] sm:$0xff]
    %v828 = vld [vmem:[#allocation5 + $0xe30] sm:$0xff]
    %v829 = vld [vmem:[#allocation5 + $0xe38] sm:$0xff]
    %v830 = vld [vmem:[#allocation5 + $0xe40] sm:$0xff]
    %v831 = vld [vmem:[#allocation5 + $0xe48] sm:$0xff]
    %v832 = vld [vmem:[#allocation5 + $0xe50] sm:$0xff]
    %v833 = vld [vmem:[#allocation5 + $0xe58] sm:$0xff]
    %v834 = vld [vmem:[#allocation5 + $0xe60] sm:$0xff]
    %v835 = vld [vmem:[#allocation5 + $0xe68] sm:$0xff]
    %v836 = vld [vmem:[#allocation5 + $0xe70] sm:$0xff]
    %v837 = vld [vmem:[#allocation5 + $0xe78] sm:$0xff]
    %v838 = vld [vmem:[#allocation5 + $0xe80] sm:$0xff]
    %v839 = vld [vmem:[#allocation5 + $0xe88] sm:$0xff]
    %v840 = vld [vmem:[#allocation5 + $0xe90] sm:$0xff]
    %v841 = vld [vmem:[#allocation5 + $0xe98] sm:$0xff]
    %v842 = vld [vmem:[#allocation5 + $0xea0] sm:$0xff]
    %v843 = vld [vmem:[#allocation5 + $0xea8] sm:$0xff]
    %v844 = vld [vmem:[#allocation5 + $0xeb0] sm:$0xff]
    %v845 = vld [vmem:[#allocation5 + $0xeb8] sm:$0xff]
    %v846 = vld [vmem:[#allocation5 + $0xec0] sm:$0xff]
    %v847 = vld [vmem:[#allocation5 + $0xec8] sm:$0xff]
    %v848 = vld [vmem:[#allocation5 + $0xed0] sm:$0xff]
    %v849 = vld [vmem:[#allocation5 + $0xed8] sm:$0xff]
    %v850 = vld [vmem:[#allocation5 + $0xee0] sm:$0xff]
    %v851 = vld [vmem:[#allocation5 + $0xee8] sm:$0xff]
    %v852 = vld [vmem:[#allocation5 + $0xef0] sm:$0xff]
    %v853 = vld [vmem:[#allocation5 + $0xef8] sm:$0xff]
    %v854 = vld [vmem:[#allocation5 + $0xf00] sm:$0xff]
    %v855 = vld [vmem:[#allocation5 + $0xf08] sm:$0xff]
    %v856 = vld [vmem:[#allocation5 + $0xf10] sm:$0xff]
    %v857 = vld [vmem:[#allocation5 + $0xf18] sm:$0xff]
    %v858 = vld [vmem:[#allocation5 + $0xf20] sm:$0xff]
    %v859 = vld [vmem:[#allocation5 + $0xf28] sm:$0xff]
    %v860 = vld [vmem:[#allocation5 + $0xf30] sm:$0xff]
    %v861 = vld [vmem:[#allocation5 + $0xf38] sm:$0xff]
    %v862 = vld [vmem:[#allocation5 + $0xf40] sm:$0xff]
    %v863 = vld [vmem:[#allocation5 + $0xf48] sm:$0xff]
    %v864 = vld [vmem:[#allocation5 + $0xf50] sm:$0xff]
    %v865 = vld [vmem:[#allocation5 + $0xf58] sm:$0xff]
    %v866 = vld [vmem:[#allocation5 + $0xf60] sm:$0xff]
    %v867 = vld [vmem:[#allocation5 + $0xf68] sm:$0xff]
    %v868 = vld [vmem:[#allocation5 + $0xf70] sm:$0xff]
    %v869 = vld [vmem:[#allocation5 + $0xf78] sm:$0xff]
    %v870 = vld [vmem:[#allocation5 + $0xf80] sm:$0xff]
    %v871 = vld [vmem:[#allocation5 + $0xf88] sm:$0xff]
    %v872 = vld [vmem:[#allocation5 + $0xf90] sm:$0xff]
    %v873 = vld [vmem:[#allocation5 + $0xf98] sm:$0xff]
    %v874 = vld [vmem:[#allocation5 + $0xfa0] sm:$0xff]
    %v875 = vld [vmem:[#allocation5 + $0xfa8] sm:$0xff]
    %v876 = vld [vmem:[#allocation5 + $0xfb0] sm:$0xff]
    %v877 = vld [vmem:[#allocation5 + $0xfb8] sm:$0xff]
    %v878 = vld [vmem:[#allocation5 + $0xfc0] sm:$0xff]
    %v879 = vld [vmem:[#allocation5 + $0xfc8] sm:$0xff]
    %v880 = vld [vmem:[#allocation5 + $0xfd0] sm:$0xff]
    %v881 = vld [vmem:[#allocation5 + $0xfd8] sm:$0xff]
    %v882 = vld [vmem:[#allocation5 + $0xfe0] sm:$0xff]
    %v883 = vld [vmem:[#allocation5 + $0xfe8] sm:$0xff]
    %v884 = vld [vmem:[#allocation5 + $0xff0] sm:$0xff]
    %v885 = vld [vmem:[#allocation5 + $0xff8] sm:$0xff]
    %v886 = vld [vmem:[#allocation5 + $0x1000] sm:$0xff]
    %v887 = vld [vmem:[#allocation5 + $0x1008] sm:$0xff]
    %v888 = vld [vmem:[#allocation5 + $0x1010] sm:$0xff]
    %v889 = vld [vmem:[#allocation5 + $0x1018] sm:$0xff]
    %v890 = vld [vmem:[#allocation5 + $0x1020] sm:$0xff]
    %v891 = vld [vmem:[#allocation5 + $0x1028] sm:$0xff]
    %v892 = vld [vmem:[#allocation5 + $0x1030] sm:$0xff]
    %v893 = vld [vmem:[#allocation5 + $0x1038] sm:$0xff]
    %v894 = vld [vmem:[#allocation5 + $0x1040] sm:$0xff]
    %v895 = vld [vmem:[#allocation5 + $0x1048] sm:$0xff]
    %v896 = vld [vmem:[#allocation5 + $0x1050] sm:$0xff]
    %v897 = vld [vmem:[#allocation5 + $0x1058] sm:$0xff]
    %v898 = vld [vmem:[#allocation5 + $0x1060] sm:$0xff]
    %v899 = vld [vmem:[#allocation5 + $0x1068] sm:$0xff]
    %v900 = vld [vmem:[#allocation5 + $0x1070] sm:$0xff]
    %v901 = vld [vmem:[#allocation5 + $0x1078] sm:$0xff]
    %v902 = vld [vmem:[#allocation5 + $0x1080] sm:$0xff]
    %v903 = vld [vmem:[#allocation5 + $0x1088] sm:$0xff]
    %v904 = vld [vmem:[#allocation5 + $0x1090] sm:$0xff]
    %v905 = vld [vmem:[#allocation5 + $0x1098] sm:$0xff]
    %v906 = vld [vmem:[#allocation5 + $0x10a0] sm:$0xff]
    %v907 = vld [vmem:[#allocation5 + $0x10a8] sm:$0xff]
    %v908 = vld [vmem:[#allocation5 + $0x10b0] sm:$0xff]
    %v909 = vld [vmem:[#allocation5 + $0x10b8] sm:$0xff]
    %v910 = vld [vmem:[#allocation5 + $0x10c0] sm:$0xff]
    %v911 = vld [vmem:[#allocation5 + $0x10c8] sm:$0xff]
    %v912 = vld [vmem:[#allocation5 + $0x10d0] sm:$0xff]
    %v913 = vld [vmem:[#allocation5 + $0x10d8] sm:$0xff]
    %v914 = vld [vmem:[#allocation5 + $0x10e0] sm:$0xff]
    %v915 = vld [vmem:[#allocation5 + $0x10e8] sm:$0xff]
    %v916 = vld [vmem:[#allocation5 + $0x10f0] sm:$0xff]
    %v917 = vld [vmem:[#allocation5 + $0x10f8] sm:$0xff]
    %v918 = vld [vmem:[#allocation5 + $0x1100] sm:$0xff]
    %v919 = vld [vmem:[#allocation5 + $0x1108] sm:$0xff]
    %v920 = vld [vmem:[#allocation5 + $0x1110] sm:$0xff]
    %v921 = vld [vmem:[#allocation5 + $0x1118] sm:$0xff]
    %v922 = vld [vmem:[#allocation5 + $0x1120] sm:$0xff]
    %v923 = vld [vmem:[#allocation5 + $0x1128] sm:$0xff]
    %v924 = vld [vmem:[#allocation5 + $0x1130] sm:$0xff]
    %v925 = vld [vmem:[#allocation5 + $0x1138] sm:$0xff]
    %v926 = vld [vmem:[#allocation5 + $0x1140] sm:$0xff]
    %v927 = vld [vmem:[#allocation5 + $0x1148] sm:$0xff]
    %v928 = vld [vmem:[#allocation5 + $0x1150] sm:$0xff]
    %v929 = vld [vmem:[#allocation5 + $0x1158] sm:$0xff]
    %v930 = vld [vmem:[#allocation5 + $0x1160] sm:$0xff]
    %v931 = vld [vmem:[#allocation5 + $0x1168] sm:$0xff]
    %v932 = vld [vmem:[#allocation5 + $0x1170] sm:$0xff]
    %v933 = vld [vmem:[#allocation5 + $0x1178] sm:$0xff]
    %v934 = vld [vmem:[#allocation5 + $0x1180] sm:$0xff]
    %v935 = vld [vmem:[#allocation5 + $0x1188] sm:$0xff]
    %v936 = vld [vmem:[#allocation5 + $0x1190] sm:$0xff]
    %v937 = vld [vmem:[#allocation5 + $0x1198] sm:$0xff]
    %v938 = vld [vmem:[#allocation5 + $0x11a0] sm:$0xff]
    %v939 = vld [vmem:[#allocation5 + $0x11a8] sm:$0xff]
    %v940 = vld [vmem:[#allocation5 + $0x11b0] sm:$0xff]
    %v941 = vld [vmem:[#allocation5 + $0x11b8] sm:$0xff]
    %v942 = vld [vmem:[#allocation5 + $0x11c0] sm:$0xff]
    %v943 = vld [vmem:[#allocation5 + $0x11c8] sm:$0xff]
    %v944 = vld [vmem:[#allocation5 + $0x11d0] sm:$0xff]
    %v945 = vld [vmem:[#allocation5 + $0x11d8] sm:$0xff]
    %v946 = vld [vmem:[#allocation5 + $0x11e0] sm:$0xff]
    %v947 = vld [vmem:[#allocation5 + $0x11e8] sm:$0xff]
    %v948 = vld [vmem:[#allocation5 + $0x11f0] sm:$0xff]
    %v949 = vld [vmem:[#allocation5 + $0x11f8] sm:$0xff]
    %v950 = vld [vmem:[#allocation5 + $0x1200] sm:$0xff]
    %v951 = vld [vmem:[#allocation5 + $0x1208] sm:$0xff]
    %v952 = vld [vmem:[#allocation5 + $0x1210] sm:$0xff]
    %v953 = vld [vmem:[#allocation5 + $0x1218] sm:$0xff]
    %v954 = vld [vmem:[#allocation5 + $0x1220] sm:$0xff]
    %v955 = vld [vmem:[#allocation5 + $0x1228] sm:$0xff]
    %v956 = vld [vmem:[#allocation5 + $0x1230] sm:$0xff]
    %v957 = vld [vmem:[#allocation5 + $0x1238] sm:$0xff]
    %v958 = vld [vmem:[#allocation5 + $0x1240] sm:$0xff]
    %v959 = vld [vmem:[#allocation5 + $0x1248] sm:$0xff]
    %v960 = vld [vmem:[#allocation5 + $0x1250] sm:$0xff]
    %v961 = vld [vmem:[#allocation5 + $0x1258] sm:$0xff]
    %v962 = vld [vmem:[#allocation5 + $0x1260] sm:$0xff]
    %v963 = vld [vmem:[#allocation5 + $0x1268] sm:$0xff]
    %v964 = vld [vmem:[#allocation5 + $0x1270] sm:$0xff]
    %v965 = vld [vmem:[#allocation5 + $0x1278] sm:$0xff]
    %v966 = vld [vmem:[#allocation5 + $0x1280] sm:$0xff]
    %v967 = vld [vmem:[#allocation5 + $0x1288] sm:$0xff]
    %v968 = vld [vmem:[#allocation5 + $0x1290] sm:$0xff]
    %v969 = vld [vmem:[#allocation5 + $0x1298] sm:$0xff]
    %v970 = vld [vmem:[#allocation5 + $0x12a0] sm:$0xff]
    %v971 = vld [vmem:[#allocation5 + $0x12a8] sm:$0xff]
    %v972 = vld [vmem:[#allocation5 + $0x12b0] sm:$0xff]
    %v973 = vld [vmem:[#allocation5 + $0x12b8] sm:$0xff]
    %v974 = vld [vmem:[#allocation5 + $0x12c0] sm:$0xff]
    %v975 = vld [vmem:[#allocation5 + $0x12c8] sm:$0xff]
    %v976 = vld [vmem:[#allocation5 + $0x12d0] sm:$0xff]
    %v977 = vld [vmem:[#allocation5 + $0x12d8] sm:$0xff]
    %v978 = vld [vmem:[#allocation5 + $0x12e0] sm:$0xff]
    %v979 = vld [vmem:[#allocation5 + $0x12e8] sm:$0xff]
    %v980 = vld [vmem:[#allocation5 + $0x12f0] sm:$0xff]
    %v981 = vld [vmem:[#allocation5 + $0x12f8] sm:$0xff]
    %v982 = vld [vmem:[#allocation5 + $0x1300] sm:$0xff]
    %v983 = vld [vmem:[#allocation5 + $0x1308] sm:$0xff]
    %v984 = vld [vmem:[#allocation5 + $0x1310] sm:$0xff]
    %v985 = vld [vmem:[#allocation5 + $0x1318] sm:$0xff]
    %v986 = vld [vmem:[#allocation5 + $0x1320] sm:$0xff]
    %v987 = vld [vmem:[#allocation5 + $0x1328] sm:$0xff]
    %v988 = vld [vmem:[#allocation5 + $0x1330] sm:$0xff]
    %v989 = vld [vmem:[#allocation5 + $0x1338] sm:$0xff]
    %v990 = vld [vmem:[#allocation5 + $0x1340] sm:$0xff]
    %v991 = vld [vmem:[#allocation5 + $0x1348] sm:$0xff]
    %v992 = vld [vmem:[#allocation5 + $0x1350] sm:$0xff]
    %v993 = vld [vmem:[#allocation5 + $0x1358] sm:$0xff]
    %v994 = vld [vmem:[#allocation5 + $0x1360] sm:$0xff]
    %v995 = vld [vmem:[#allocation5 + $0x1368] sm:$0xff]
    %v996 = vld [vmem:[#allocation5 + $0x1370] sm:$0xff]
    %v997 = vld [vmem:[#allocation5 + $0x1378] sm:$0xff]
    %v998 = vld [vmem:[#allocation5 + $0x1380] sm:$0xff]
    %v999 = vld [vmem:[#allocation5 + $0x1388] sm:$0xff]
    %v1000 = vld [vmem:[#allocation5 + $0x1390] sm:$0xff]
    %v1001 = vld [vmem:[#allocation5 + $0x1398] sm:$0xff]
    %v1002 = vld [vmem:[#allocation5 + $0x13a0] sm:$0xff]
    %v1003 = vld [vmem:[#allocation5 + $0x13a8] sm:$0xff]
    %v1004 = vld [vmem:[#allocation5 + $0x13b0] sm:$0xff]
    %v1005 = vld [vmem:[#allocation5 + $0x13b8] sm:$0xff]
    %v1006 = vld [vmem:[#allocation5 + $0x13c0] sm:$0xff]
    %v1007 = vld [vmem:[#allocation5 + $0x13c8] sm:$0xff]
    %v1008 = vld [vmem:[#allocation5 + $0x13d0] sm:$0xff]
    %v1009 = vld [vmem:[#allocation5 + $0x13d8] sm:$0xff]
    %v1010 = vld [vmem:[#allocation5 + $0x13e0] sm:$0xff]
    %v1011 = vld [vmem:[#allocation5 + $0x13e8] sm:$0xff]
    %v1012 = vld [vmem:[#allocation5 + $0x13f0] sm:$0xff]
    %v1013 = vld [vmem:[#allocation5 + $0x13f8] sm:$0xff]
    %v1014 = vld [vmem:[#allocation5 + $0x1400] sm:$0xff]
    %v1015 = vld [vmem:[#allocation5 + $0x1408] sm:$0xff]
    %v1016 = vld [vmem:[#allocation5 + $0x1410] sm:$0xff]
    %v1017 = vld [vmem:[#allocation5 + $0x1418] sm:$0xff]
    %v1018 = vld [vmem:[#allocation5 + $0x1420] sm:$0xff]
    %v1019 = vld [vmem:[#allocation5 + $0x1428] sm:$0xff]
    %v1020 = vld [vmem:[#allocation5 + $0x1430] sm:$0xff]
    %v1021 = vld [vmem:[#allocation5 + $0x1438] sm:$0xff]
    %v1022 = vld [vmem:[#allocation5 + $0x1440] sm:$0xff]
    %v1023 = vld [vmem:[#allocation5 + $0x1448] sm:$0xff]
    %v1024 = vld [vmem:[#allocation5 + $0x1450] sm:$0xff]
    %v1025 = vld [vmem:[#allocation5 + $0x1458] sm:$0xff]
    %v1026 = vld [vmem:[#allocation5 + $0x1460] sm:$0xff]
    %v1027 = vld [vmem:[#allocation5 + $0x1468] sm:$0xff]
    %v1028 = vld [vmem:[#allocation5 + $0x1470] sm:$0xff]
    %v1029 = vld [vmem:[#allocation5 + $0x1478] sm:$0xff]
    %v1030 = vld [vmem:[#allocation5 + $0x1480] sm:$0xff]
    %v1031 = vld [vmem:[#allocation5 + $0x1488] sm:$0xff]
    %v1032 = vld [vmem:[#allocation5 + $0x1490] sm:$0xff]
    %v1033 = vld [vmem:[#allocation5 + $0x1498] sm:$0xff]
    %v1034 = vld [vmem:[#allocation5 + $0x14a0] sm:$0xff]
    %v1035 = vld [vmem:[#allocation5 + $0x14a8] sm:$0xff]
    %v1036 = vld [vmem:[#allocation5 + $0x14b0] sm:$0xff]
    %v1037 = vld [vmem:[#allocation5 + $0x14b8] sm:$0xff]
    %v1038 = vld [vmem:[#allocation5 + $0x14c0] sm:$0xff]
    %v1039 = vld [vmem:[#allocation5 + $0x14c8] sm:$0xff]
    %v1040 = vld [vmem:[#allocation5 + $0x14d0] sm:$0xff]
    %v1041 = vld [vmem:[#allocation5 + $0x14d8] sm:$0xff]
    %v1042 = vld [vmem:[#allocation5 + $0x14e0] sm:$0xff]
    %v1043 = vld [vmem:[#allocation5 + $0x14e8] sm:$0xff]
    %v1044 = vld [vmem:[#allocation5 + $0x14f0] sm:$0xff]
    %v1045 = vld [vmem:[#allocation5 + $0x14f8] sm:$0xff]
    %v1046 = vld [vmem:[#allocation5 + $0x1500] sm:$0xff]
    %v1047 = vld [vmem:[#allocation5 + $0x1508] sm:$0xff]
    %v1048 = vld [vmem:[#allocation5 + $0x1510] sm:$0xff]
    %v1049 = vld [vmem:[#allocation5 + $0x1518] sm:$0xff]
    %v1050 = vld [vmem:[#allocation5 + $0x1520] sm:$0xff]
    %v1051 = vld [vmem:[#allocation5 + $0x1528] sm:$0xff]
    %v1052 = vld [vmem:[#allocation5 + $0x1530] sm:$0xff]
    %v1053 = vld [vmem:[#allocation5 + $0x1538] sm:$0xff]
    %v1054 = vld [vmem:[#allocation5 + $0x1540] sm:$0xff]
    %v1055 = vld [vmem:[#allocation5 + $0x1548] sm:$0xff]
    %v1056 = vld [vmem:[#allocation5 + $0x1550] sm:$0xff]
    %v1057 = vld [vmem:[#allocation5 + $0x1558] sm:$0xff]
    %v1058 = vld [vmem:[#allocation5 + $0x1560] sm:$0xff]
    %v1059 = vld [vmem:[#allocation5 + $0x1568] sm:$0xff]
    %v1060 = vld [vmem:[#allocation5 + $0x1570] sm:$0xff]
    %v1061 = vld [vmem:[#allocation5 + $0x1578] sm:$0xff]
    %v1062 = vld [vmem:[#allocation5 + $0x1580] sm:$0xff]
    %v1063 = vld [vmem:[#allocation5 + $0x1588] sm:$0xff]
    %v1064 = vld [vmem:[#allocation5 + $0x1590] sm:$0xff]
    %v1065 = vld [vmem:[#allocation5 + $0x1598] sm:$0xff]
    %v1066 = vld [vmem:[#allocation5 + $0x15a0] sm:$0xff]
    %v1067 = vld [vmem:[#allocation5 + $0x15a8] sm:$0xff]
    %v1068 = vld [vmem:[#allocation5 + $0x15b0] sm:$0xff]
    %v1069 = vld [vmem:[#allocation5 + $0x15b8] sm:$0xff]
    %v1070 = vld [vmem:[#allocation5 + $0x15c0] sm:$0xff]
    %v1071 = vld [vmem:[#allocation5 + $0x15c8] sm:$0xff]
    %v1072 = vld [vmem:[#allocation5 + $0x15d0] sm:$0xff]
    %v1073 = vld [vmem:[#allocation5 + $0x15d8] sm:$0xff]
    %v1074 = vld [vmem:[#allocation5 + $0x15e0] sm:$0xff]
    %v1075 = vld [vmem:[#allocation5 + $0x15e8] sm:$0xff]
    %v1076 = vld [vmem:[#allocation5 + $0x15f0] sm:$0xff]
    %v1077 = vld [vmem:[#allocation5 + $0x15f8] sm:$0xff]
    %v1078 = vld [vmem:[#allocation5 + $0x1600] sm:$0xff]
    %v1079 = vld [vmem:[#allocation5 + $0x1608] sm:$0xff]
    %v1080 = vld [vmem:[#allocation5 + $0x1610] sm:$0xff]
    %v1081 = vld [vmem:[#allocation5 + $0x1618] sm:$0xff]
    %v1082 = vld [vmem:[#allocation5 + $0x1620] sm:$0xff]
    %v1083 = vld [vmem:[#allocation5 + $0x1628] sm:$0xff]
    %v1084 = vld [vmem:[#allocation5 + $0x1630] sm:$0xff]
    %v1085 = vld [vmem:[#allocation5 + $0x1638] sm:$0xff]
    %v1086 = vld [vmem:[#allocation5 + $0x1640] sm:$0xff]
    %v1087 = vld [vmem:[#allocation5 + $0x1648] sm:$0xff]
    %v1088 = vld [vmem:[#allocation5 + $0x1650] sm:$0xff]
    %v1089 = vld [vmem:[#allocation5 + $0x1658] sm:$0xff]
    %v1090 = vld [vmem:[#allocation5 + $0x1660] sm:$0xff]
    %v1091 = vld [vmem:[#allocation5 + $0x1668] sm:$0xff]
    %v1092 = vld [vmem:[#allocation5 + $0x1670] sm:$0xff]
    %v1093 = vld [vmem:[#allocation5 + $0x1678] sm:$0xff]
    %v1094 = vld [vmem:[#allocation5 + $0x1680] sm:$0xff]
    %v1095 = vld [vmem:[#allocation5 + $0x1688] sm:$0xff]
    %v1096 = vld [vmem:[#allocation5 + $0x1690] sm:$0xff]
    %v1097 = vld [vmem:[#allocation5 + $0x1698] sm:$0xff]
    %v1098 = vld [vmem:[#allocation5 + $0x16a0] sm:$0xff]
    %v1099 = vld [vmem:[#allocation5 + $0x16a8] sm:$0xff]
    %v1100 = vld [vmem:[#allocation5 + $0x16b0] sm:$0xff]
    %v1101 = vld [vmem:[#allocation5 + $0x16b8] sm:$0xff]
    %v1102 = vld [vmem:[#allocation5 + $0x16c0] sm:$0xff]
    %v1103 = vld [vmem:[#allocation5 + $0x16c8] sm:$0xff]
    %v1104 = vld [vmem:[#allocation5 + $0x16d0] sm:$0xff]
    %v1105 = vld [vmem:[#allocation5 + $0x16d8] sm:$0xff]
    %v1106 = vld [vmem:[#allocation5 + $0x16e0] sm:$0xff]
    %v1107 = vld [vmem:[#allocation5 + $0x16e8] sm:$0xff]
    %v1108 = vld [vmem:[#allocation5 + $0x16f0] sm:$0xff]
    %v1109 = vld [vmem:[#allocation5 + $0x16f8] sm:$0xff]
    %v1110 = vld [vmem:[#allocation5 + $0x1700] sm:$0xff]
    %v1111 = vld [vmem:[#allocation5 + $0x1708] sm:$0xff]
    %v1112 = vld [vmem:[#allocation5 + $0x1710] sm:$0xff]
    %v1113 = vld [vmem:[#allocation5 + $0x1718] sm:$0xff]
    %v1114 = vld [vmem:[#allocation5 + $0x1720] sm:$0xff]
    %v1115 = vld [vmem:[#allocation5 + $0x1728] sm:$0xff]
    %v1116 = vld [vmem:[#allocation5 + $0x1730] sm:$0xff]
    %v1117 = vld [vmem:[#allocation5 + $0x1738] sm:$0xff]
    %v1118 = vld [vmem:[#allocation5 + $0x1740] sm:$0xff]
    %v1119 = vld [vmem:[#allocation5 + $0x1748] sm:$0xff]
    %v1120 = vld [vmem:[#allocation5 + $0x1750] sm:$0xff]
    %v1121 = vld [vmem:[#allocation5 + $0x1758] sm:$0xff]
    %v1122 = vld [vmem:[#allocation5 + $0x1760] sm:$0xff]
    %v1123 = vld [vmem:[#allocation5 + $0x1768] sm:$0xff]
    %v1124 = vld [vmem:[#allocation5 + $0x1770] sm:$0xff]
    %v1125 = vld [vmem:[#allocation5 + $0x1778] sm:$0xff]
    %v1126 = vld [vmem:[#allocation5 + $0x1780] sm:$0xff]
    %v1127 = vld [vmem:[#allocation5 + $0x1788] sm:$0xff]
    %v1128 = vld [vmem:[#allocation5 + $0x1790] sm:$0xff]
    %v1129 = vld [vmem:[#allocation5 + $0x1798] sm:$0xff]
    %v1130 = vld [vmem:[#allocation5 + $0x17a0] sm:$0xff]
    %v1131 = vld [vmem:[#allocation5 + $0x17a8] sm:$0xff]
    %v1132 = vld [vmem:[#allocation5 + $0x17b0] sm:$0xff]
    %v1133 = vld [vmem:[#allocation5 + $0x17b8] sm:$0xff]
    %v1134 = vld [vmem:[#allocation5 + $0x17c0] sm:$0xff]
    %v1135 = vld [vmem:[#allocation5 + $0x17c8] sm:$0xff]
    %v1136 = vld [vmem:[#allocation5 + $0x17d0] sm:$0xff]
    %v1137 = vld [vmem:[#allocation5 + $0x17d8] sm:$0xff]
    %v1138 = vld [vmem:[#allocation5 + $0x17e0] sm:$0xff]
    %v1139 = vld [vmem:[#allocation5 + $0x17e8] sm:$0xff]
    %v1140 = vld [vmem:[#allocation5 + $0x17f0] sm:$0xff]
    %v1141 = vld [vmem:[#allocation5 + $0x17f8] sm:$0xff]
    %v1142 = vld [vmem:[#allocation5 + $0x1800] sm:$0xff]
    %v1143 = vld [vmem:[#allocation5 + $0x1808] sm:$0xff]
    %v1144 = vld [vmem:[#allocation5 + $0x1810] sm:$0xff]
    %v1145 = vld [vmem:[#allocation5 + $0x1818] sm:$0xff]
    %v1146 = vld [vmem:[#allocation5 + $0x1820] sm:$0xff]
    %v1147 = vld [vmem:[#allocation5 + $0x1828] sm:$0xff]
    %v1148 = vld [vmem:[#allocation5 + $0x1830] sm:$0xff]
    %v1149 = vld [vmem:[#allocation5 + $0x1838] sm:$0xff]
    %v1150 = vld [vmem:[#allocation5 + $0x1840] sm:$0xff]
    %v1151 = vld [vmem:[#allocation5 + $0x1848] sm:$0xff]
    %v1152 = vld [vmem:[#allocation5 + $0x1850] sm:$0xff]
    %v1153 = vld [vmem:[#allocation5 + $0x1858] sm:$0xff]
    %v1154 = vld [vmem:[#allocation5 + $0x1860] sm:$0xff]
    %v1155 = vld [vmem:[#allocation5 + $0x1868] sm:$0xff]
    %v1156 = vld [vmem:[#allocation5 + $0x1870] sm:$0xff]
    %v1157 = vld [vmem:[#allocation5 + $0x1878] sm:$0xff]
    %v1158 = vld [vmem:[#allocation5 + $0x1880] sm:$0xff]
    %v1159 = vld [vmem:[#allocation5 + $0x1888] sm:$0xff]
    %v1160 = vld [vmem:[#allocation5 + $0x1890] sm:$0xff]
    %v1161 = vld [vmem:[#allocation5 + $0x1898] sm:$0xff]
    %v1162 = vld [vmem:[#allocation5 + $0x18a0] sm:$0xff]
    %v1163 = vld [vmem:[#allocation5 + $0x18a8] sm:$0xff]
    %v1164 = vld [vmem:[#allocation5 + $0x18b0] sm:$0xff]
    %v1165 = vld [vmem:[#allocation5 + $0x18b8] sm:$0xff]
    %v1166 = vld [vmem:[#allocation5 + $0x18c0] sm:$0xff]
    %v1167 = vld [vmem:[#allocation5 + $0x18c8] sm:$0xff]
    %v1168 = vld [vmem:[#allocation5 + $0x18d0] sm:$0xff]
    %v1169 = vld [vmem:[#allocation5 + $0x18d8] sm:$0xff]
    %v1170 = vld [vmem:[#allocation5 + $0x18e0] sm:$0xff]
    %v1171 = vld [vmem:[#allocation5 + $0x18e8] sm:$0xff]
    %v1172 = vld [vmem:[#allocation5 + $0x18f0] sm:$0xff]
    %v1173 = vld [vmem:[#allocation5 + $0x18f8] sm:$0xff]
    %v1174 = vld [vmem:[#allocation5 + $0x1900] sm:$0xff]
    %v1175 = vld [vmem:[#allocation5 + $0x1908] sm:$0xff]
    %v1176 = vld [vmem:[#allocation5 + $0x1910] sm:$0xff]
    %v1177 = vld [vmem:[#allocation5 + $0x1918] sm:$0xff]
    %v1178 = vld [vmem:[#allocation5 + $0x1920] sm:$0xff]
    %v1179 = vld [vmem:[#allocation5 + $0x1928] sm:$0xff]
    %v1180 = vld [vmem:[#allocation5 + $0x1930] sm:$0xff]
    %v1181 = vld [vmem:[#allocation5 + $0x1938] sm:$0xff]
    %v1182 = vld [vmem:[#allocation5 + $0x1940] sm:$0xff]
    %v1183 = vld [vmem:[#allocation5 + $0x1948] sm:$0xff]
    %v1184 = vld [vmem:[#allocation5 + $0x1950] sm:$0xff]
    %v1185 = vld [vmem:[#allocation5 + $0x1958] sm:$0xff]
    %v1186 = vld [vmem:[#allocation5 + $0x1960] sm:$0xff]
    %v1187 = vld [vmem:[#allocation5 + $0x1968] sm:$0xff]
    %v1188 = vld [vmem:[#allocation5 + $0x1970] sm:$0xff]
    %v1189 = vld [vmem:[#allocation5 + $0x1978] sm:$0xff]
    %v1190 = vld [vmem:[#allocation5 + $0x1980] sm:$0xff]
    %v1191 = vld [vmem:[#allocation5 + $0x1988] sm:$0xff]
    %v1192 = vld [vmem:[#allocation5 + $0x1990] sm:$0xff]
    %v1193 = vld [vmem:[#allocation5 + $0x1998] sm:$0xff]
    %v1194 = vld [vmem:[#allocation5 + $0x19a0] sm:$0xff]
    %v1195 = vld [vmem:[#allocation5 + $0x19a8] sm:$0xff]
    %v1196 = vld [vmem:[#allocation5 + $0x19b0] sm:$0xff]
    %v1197 = vld [vmem:[#allocation5 + $0x19b8] sm:$0xff]
    %v1198 = vld [vmem:[#allocation5 + $0x19c0] sm:$0xff]
    %v1199 = vld [vmem:[#allocation5 + $0x19c8] sm:$0xff]
    %v1200 = vld [vmem:[#allocation5 + $0x19d0] sm:$0xff]
    %v1201 = vld [vmem:[#allocation5 + $0x19d8] sm:$0xff]
    %v1202 = vld [vmem:[#allocation5 + $0x19e0] sm:$0xff]
    %v1203 = vld [vmem:[#allocation5 + $0x19e8] sm:$0xff]
    %v1204 = vld [vmem:[#allocation5 + $0x19f0] sm:$0xff]
    %v1205 = vld [vmem:[#allocation5 + $0x19f8] sm:$0xff]
    %v1206 = vld [vmem:[#allocation5 + $0x1a00] sm:$0xff]
    %v1207 = vld [vmem:[#allocation5 + $0x1a08] sm:$0xff]
    %v1208 = vld [vmem:[#allocation5 + $0x1a10] sm:$0xff]
    %v1209 = vld [vmem:[#allocation5 + $0x1a18] sm:$0xff]
    %v1210 = vld [vmem:[#allocation5 + $0x1a20] sm:$0xff]
    %v1211 = vld [vmem:[#allocation5 + $0x1a28] sm:$0xff]
    %v1212 = vld [vmem:[#allocation5 + $0x1a30] sm:$0xff]
    %v1213 = vld [vmem:[#allocation5 + $0x1a38] sm:$0xff]
    %v1214 = vld [vmem:[#allocation5 + $0x1a40] sm:$0xff]
    %v1215 = vld [vmem:[#allocation5 + $0x1a48] sm:$0xff]
    %v1216 = vld [vmem:[#allocation5 + $0x1a50] sm:$0xff]
    %v1217 = vld [vmem:[#allocation5 + $0x1a58] sm:$0xff]
    %v1218 = vld [vmem:[#allocation5 + $0x1a60] sm:$0xff]
    %v1219 = vld [vmem:[#allocation5 + $0x1a68] sm:$0xff]
    %v1220 = vld [vmem:[#allocation5 + $0x1a70] sm:$0xff]
    %v1221 = vld [vmem:[#allocation5 + $0x1a78] sm:$0xff]
    %v1222 = vld [vmem:[#allocation5 + $0x1a80] sm:$0xff]
    %v1223 = vld [vmem:[#allocation5 + $0x1a88] sm:$0xff]
    %v1224 = vld [vmem:[#allocation5 + $0x1a90] sm:$0xff]
    %v1225 = vld [vmem:[#allocation5 + $0x1a98] sm:$0xff]
    %v1226 = vld [vmem:[#allocation5 + $0x1aa0] sm:$0xff]
    %v1227 = vld [vmem:[#allocation5 + $0x1aa8] sm:$0xff]
    %v1228 = vld [vmem:[#allocation5 + $0x1ab0] sm:$0xff]
    %v1229 = vld [vmem:[#allocation5 + $0x1ab8] sm:$0xff]
    %v1230 = vld [vmem:[#allocation5 + $0x1ac0] sm:$0xff]
    %v1231 = vld [vmem:[#allocation5 + $0x1ac8] sm:$0xff]
    %v1232 = vld [vmem:[#allocation5 + $0x1ad0] sm:$0xff]
    %v1233 = vld [vmem:[#allocation5 + $0x1ad8] sm:$0xff]
    %v1234 = vld [vmem:[#allocation5 + $0x1ae0] sm:$0xff]
    %v1235 = vld [vmem:[#allocation5 + $0x1ae8] sm:$0xff]
    %v1236 = vld [vmem:[#allocation5 + $0x1af0] sm:$0xff]
    %v1237 = vld [vmem:[#allocation5 + $0x1af8] sm:$0xff]
    %v1238 = vld [vmem:[#allocation5 + $0x1b00] sm:$0xff]
    %v1239 = vld [vmem:[#allocation5 + $0x1b08] sm:$0xff]
    %v1240 = vld [vmem:[#allocation5 + $0x1b10] sm:$0xff]
    %v1241 = vld [vmem:[#allocation5 + $0x1b18] sm:$0xff]
    %v1242 = vld [vmem:[#allocation5 + $0x1b20] sm:$0xff]
    %v1243 = vld [vmem:[#allocation5 + $0x1b28] sm:$0xff]
    %v1244 = vld [vmem:[#allocation5 + $0x1b30] sm:$0xff]
    %v1245 = vld [vmem:[#allocation5 + $0x1b38] sm:$0xff]
    %v1246 = vld [vmem:[#allocation5 + $0x1b40] sm:$0xff]
    %v1247 = vld [vmem:[#allocation5 + $0x1b48] sm:$0xff]
    %v1248 = vld [vmem:[#allocation5 + $0x1b50] sm:$0xff]
    %v1249 = vld [vmem:[#allocation5 + $0x1b58] sm:$0xff]
    %v1250 = vld [vmem:[#allocation5 + $0x1b60] sm:$0xff]
    %v1251 = vld [vmem:[#allocation5 + $0x1b68] sm:$0xff]
    %v1252 = vld [vmem:[#allocation5 + $0x1b70] sm:$0xff]
    %v1253 = vld [vmem:[#allocation5 + $0x1b78] sm:$0xff]
    %v1254 = vld [vmem:[#allocation5 + $0x1b80] sm:$0xff]
    %v1255 = vld [vmem:[#allocation5 + $0x1b88] sm:$0xff]
    %v1256 = vld [vmem:[#allocation5 + $0x1b90] sm:$0xff]
    %v1257 = vld [vmem:[#allocation5 + $0x1b98] sm:$0xff]
    %v1258 = vld [vmem:[#allocation5 + $0x1ba0] sm:$0xff]
    %v1259 = vld [vmem:[#allocation5 + $0x1ba8] sm:$0xff]
    %v1260 = vld [vmem:[#allocation5 + $0x1bb0] sm:$0xff]
    %v1261 = vld [vmem:[#allocation5 + $0x1bb8] sm:$0xff]
    %v1262 = vld [vmem:[#allocation5 + $0x1bc0] sm:$0xff]
    %v1263 = vld [vmem:[#allocation5 + $0x1bc8] sm:$0xff]
    %v1264 = vld [vmem:[#allocation5 + $0x1bd0] sm:$0xff]
    %v1265 = vld [vmem:[#allocation5 + $0x1bd8] sm:$0xff]
    %v1266 = vld [vmem:[#allocation5 + $0x1be0] sm:$0xff]
    %v1267 = vld [vmem:[#allocation5 + $0x1be8] sm:$0xff]
    %v1268 = vld [vmem:[#allocation5 + $0x1bf0] sm:$0xff]
    %v1269 = vld [vmem:[#allocation5 + $0x1bf8] sm:$0xff]
    %v1270 = vld [vmem:[#allocation5 + $0x1c00] sm:$0xff]
    %v1271 = vld [vmem:[#allocation5 + $0x1c08] sm:$0xff]
    %v1272 = vld [vmem:[#allocation5 + $0x1c10] sm:$0xff]
    %v1273 = vld [vmem:[#allocation5 + $0x1c18] sm:$0xff]
    %v1274 = vld [vmem:[#allocation5 + $0x1c20] sm:$0xff]
    %v1275 = vld [vmem:[#allocation5 + $0x1c28] sm:$0xff]
    %v1276 = vld [vmem:[#allocation5 + $0x1c30] sm:$0xff]
    %v1277 = vld [vmem:[#allocation5 + $0x1c38] sm:$0xff]
    %v1278 = vld [vmem:[#allocation5 + $0x1c40] sm:$0xff]
    %v1279 = vld [vmem:[#allocation5 + $0x1c48] sm:$0xff]
    %v1280 = vld [vmem:[#allocation5 + $0x1c50] sm:$0xff]
    %v1281 = vld [vmem:[#allocation5 + $0x1c58] sm:$0xff]
    %v1282 = vld [vmem:[#allocation5 + $0x1c60] sm:$0xff]
    %v1283 = vld [vmem:[#allocation5 + $0x1c68] sm:$0xff]
    %v1284 = vld [vmem:[#allocation5 + $0x1c70] sm:$0xff]
    %v1285 = vld [vmem:[#allocation5 + $0x1c78] sm:$0xff]
    %v1286 = vld [vmem:[#allocation5 + $0x1c80] sm:$0xff]
    %v1287 = vld [vmem:[#allocation5 + $0x1c88] sm:$0xff]
    %v1288 = vld [vmem:[#allocation5 + $0x1c90] sm:$0xff]
    %v1289 = vld [vmem:[#allocation5 + $0x1c98] sm:$0xff]
    %v1290 = vld [vmem:[#allocation5 + $0x1ca0] sm:$0xff]
    %v1291 = vld [vmem:[#allocation5 + $0x1ca8] sm:$0xff]
    %v1292 = vld [vmem:[#allocation5 + $0x1cb0] sm:$0xff]
    %v1293 = vld [vmem:[#allocation5 + $0x1cb8] sm:$0xff]
    %v1294 = vld [vmem:[#allocation5 + $0x1cc0] sm:$0xff]
    %v1295 = vld [vmem:[#allocation5 + $0x1cc8] sm:$0xff]
    %v1296 = vld [vmem:[#allocation5 + $0x1cd0] sm:$0xff]
    %v1297 = vld [vmem:[#allocation5 + $0x1cd8] sm:$0xff]
    %v1298 = vld [vmem:[#allocation5 + $0x1ce0] sm:$0xff]
    %v1299 = vld [vmem:[#allocation5 + $0x1ce8] sm:$0xff]
    %v1300 = vld [vmem:[#allocation5 + $0x1cf0] sm:$0xff]
    %v1301 = vld [vmem:[#allocation5 + $0x1cf8] sm:$0xff]
    %v1302 = vld [vmem:[#allocation5 + $0x1d00] sm:$0xff]
    %v1303 = vld [vmem:[#allocation5 + $0x1d08] sm:$0xff]
    %v1304 = vld [vmem:[#allocation5 + $0x1d10] sm:$0xff]
    %v1305 = vld [vmem:[#allocation5 + $0x1d18] sm:$0xff]
    %v1306 = vld [vmem:[#allocation5 + $0x1d20] sm:$0xff]
    %v1307 = vld [vmem:[#allocation5 + $0x1d28] sm:$0xff]
    %v1308 = vld [vmem:[#allocation5 + $0x1d30] sm:$0xff]
    %v1309 = vld [vmem:[#allocation5 + $0x1d38] sm:$0xff]
    %v1310 = vld [vmem:[#allocation5 + $0x1d40] sm:$0xff]
    %v1311 = vld [vmem:[#allocation5 + $0x1d48] sm:$0xff]
    %v1312 = vld [vmem:[#allocation5 + $0x1d50] sm:$0xff]
    %v1313 = vld [vmem:[#allocation5 + $0x1d58] sm:$0xff]
    %v1314 = vld [vmem:[#allocation5 + $0x1d60] sm:$0xff]
    %v1315 = vld [vmem:[#allocation5 + $0x1d68] sm:$0xff]
    %v1316 = vld [vmem:[#allocation5 + $0x1d70] sm:$0xff]
    %v1317 = vld [vmem:[#allocation5 + $0x1d78] sm:$0xff]
    %v1318 = vld [vmem:[#allocation5 + $0x1d80] sm:$0xff]
    %v1319 = vld [vmem:[#allocation5 + $0x1d88] sm:$0xff]
    %v1320 = vld [vmem:[#allocation5 + $0x1d90] sm:$0xff]
    %v1321 = vld [vmem:[#allocation5 + $0x1d98] sm:$0xff]
    %v1322 = vld [vmem:[#allocation5 + $0x1da0] sm:$0xff]
    %v1323 = vld [vmem:[#allocation5 + $0x1da8] sm:$0xff]
    %v1324 = vld [vmem:[#allocation5 + $0x1db0] sm:$0xff]
    %v1325 = vld [vmem:[#allocation5 + $0x1db8] sm:$0xff]
    %v1326 = vld [vmem:[#allocation5 + $0x1dc0] sm:$0xff]
    %v1327 = vld [vmem:[#allocation5 + $0x1dc8] sm:$0xff]
    %v1328 = vld [vmem:[#allocation5 + $0x1dd0] sm:$0xff]
    %v1329 = vld [vmem:[#allocation5 + $0x1dd8] sm:$0xff]
    %v1330 = vld [vmem:[#allocation5 + $0x1de0] sm:$0xff]
    %v1331 = vld [vmem:[#allocation5 + $0x1de8] sm:$0xff]
    %v1332 = vld [vmem:[#allocation5 + $0x1df0] sm:$0xff]
    %v1333 = vld [vmem:[#allocation5 + $0x1df8] sm:$0xff]
    %v1334 = vld [vmem:[#allocation5 + $0x1e00] sm:$0xff]
    %v1335 = vld [vmem:[#allocation5 + $0x1e08] sm:$0xff]
    %v1336 = vld [vmem:[#allocation5 + $0x1e10] sm:$0xff]
    %v1337 = vld [vmem:[#allocation5 + $0x1e18] sm:$0xff]
    %v1338 = vld [vmem:[#allocation5 + $0x1e20] sm:$0xff]
    %v1339 = vld [vmem:[#allocation5 + $0x1e28] sm:$0xff]
    %v1340 = vld [vmem:[#allocation5 + $0x1e30] sm:$0xff]
    %v1341 = vld [vmem:[#allocation5 + $0x1e38] sm:$0xff]
    %v1342 = vld [vmem:[#allocation5 + $0x1e40] sm:$0xff]
    %v1343 = vld [vmem:[#allocation5 + $0x1e48] sm:$0xff]
    %v1344 = vld [vmem:[#allocation5 + $0x1e50] sm:$0xff]
    %v1345 = vld [vmem:[#allocation5 + $0x1e58] sm:$0xff]
    %v1346 = vld [vmem:[#allocation5 + $0x1e60] sm:$0xff]
    %v1347 = vld [vmem:[#allocation5 + $0x1e68] sm:$0xff]
    %v1348 = vld [vmem:[#allocation5 + $0x1e70] sm:$0xff]
    %v1349 = vld [vmem:[#allocation5 + $0x1e78] sm:$0xff]
    %v1350 = vld [vmem:[#allocation5 + $0x1e80] sm:$0xff]
    %v1351 = vld [vmem:[#allocation5 + $0x1e88] sm:$0xff]
    %v1352 = vld [vmem:[#allocation5 + $0x1e90] sm:$0xff]
    %v1353 = vld [vmem:[#allocation5 + $0x1e98] sm:$0xff]
    %v1354 = vld [vmem:[#allocation5 + $0x1ea0] sm:$0xff]
    %v1355 = vld [vmem:[#allocation5 + $0x1ea8] sm:$0xff]
    %v1356 = vld [vmem:[#allocation5 + $0x1eb0] sm:$0xff]
    %v1357 = vld [vmem:[#allocation5 + $0x1eb8] sm:$0xff]
    %v1358 = vld [vmem:[#allocation5 + $0x1ec0] sm:$0xff]
    %v1359 = vld [vmem:[#allocation5 + $0x1ec8] sm:$0xff]
    %v1360 = vld [vmem:[#allocation5 + $0x1ed0] sm:$0xff]
    %v1361 = vld [vmem:[#allocation5 + $0x1ed8] sm:$0xff]
    %v1362 = vld [vmem:[#allocation5 + $0x1ee0] sm:$0xff]
    %v1363 = vld [vmem:[#allocation5 + $0x1ee8] sm:$0xff]
    %v1364 = vld [vmem:[#allocation5 + $0x1ef0] sm:$0xff]
    %v1365 = vld [vmem:[#allocation5 + $0x1ef8] sm:$0xff]
    %v1366 = vld [vmem:[#allocation5 + $0x1f00] sm:$0xff]
    %v1367 = vld [vmem:[#allocation5 + $0x1f08] sm:$0xff]
    %v1368 = vld [vmem:[#allocation5 + $0x1f10] sm:$0xff]
    %v1369 = vld [vmem:[#allocation5 + $0x1f18] sm:$0xff]
    %v1370 = vld [vmem:[#allocation5 + $0x1f20] sm:$0xff]
    %v1371 = vld [vmem:[#allocation5 + $0x1f28] sm:$0xff]
    %v1372 = vld [vmem:[#allocation5 + $0x1f30] sm:$0xff]
    %v1373 = vld [vmem:[#allocation5 + $0x1f38] sm:$0xff]
    %v1374 = vld [vmem:[#allocation5 + $0x1f40] sm:$0xff]
    %v1375 = vld [vmem:[#allocation5 + $0x1f48] sm:$0xff]
    %v1376 = vld [vmem:[#allocation5 + $0x1f50] sm:$0xff]
    %v1377 = vld [vmem:[#allocation5 + $0x1f58] sm:$0xff]
    %v1378 = vld [vmem:[#allocation5 + $0x1f60] sm:$0xff]
    %v1379 = vld [vmem:[#allocation5 + $0x1f68] sm:$0xff]
    %v1380 = vld [vmem:[#allocation5 + $0x1f70] sm:$0xff]
    %v1381 = vld [vmem:[#allocation5 + $0x1f78] sm:$0xff]
    %v1382 = vld [vmem:[#allocation5 + $0x1f80] sm:$0xff]
    %v1383 = vld [vmem:[#allocation5 + $0x1f88] sm:$0xff]
    %v1384 = vld [vmem:[#allocation5 + $0x1f90] sm:$0xff]
    %v1385 = vld [vmem:[#allocation5 + $0x1f98] sm:$0xff]
    %v1386 = vld [vmem:[#allocation5 + $0x1fa0] sm:$0xff]
    %v1387 = vld [vmem:[#allocation5 + $0x1fa8] sm:$0xff]
    %v1388 = vld [vmem:[#allocation5 + $0x1fb0] sm:$0xff]
    %v1389 = vld [vmem:[#allocation5 + $0x1fb8] sm:$0xff]
    %v1390 = vld [vmem:[#allocation5 + $0x1fc0] sm:$0xff]
    %v1391 = vld [vmem:[#allocation5 + $0x1fc8] sm:$0xff]
    %v1392 = vld [vmem:[#allocation5 + $0x1fd0] sm:$0xff]
    %v1393 = vld [vmem:[#allocation5 + $0x1fd8] sm:$0xff]
    %v1394 = vld [vmem:[#allocation5 + $0x1fe0] sm:$0xff]
    %v1395 = vld [vmem:[#allocation5 + $0x1fe8] sm:$0xff]
    %v1396 = vld [vmem:[#allocation5 + $0x1ff0] sm:$0xff]
    %v1397 = vld [vmem:[#allocation5 + $0x1ff8] sm:$0xff]
    %v1398 = vld [vmem:[#allocation5 + $0x2000] sm:$0xff]
    %v1399 = vld [vmem:[#allocation5 + $0x2008] sm:$0xff]
    %v1400 = vld [vmem:[#allocation5 + $0x2010] sm:$0xff]
    %v1401 = vld [vmem:[#allocation5 + $0x2018] sm:$0xff]
    %v1402 = vld [vmem:[#allocation5 + $0x2020] sm:$0xff]
    %v1403 = vld [vmem:[#allocation5 + $0x2028] sm:$0xff]
    %v1404 = vld [vmem:[#allocation5 + $0x2030] sm:$0xff]
    %v1405 = vld [vmem:[#allocation5 + $0x2038] sm:$0xff]
    %v1406 = vld [vmem:[#allocation5 + $0x2040] sm:$0xff]
    %v1407 = vld [vmem:[#allocation5 + $0x2048] sm:$0xff]
    %v1408 = vld [vmem:[#allocation5 + $0x2050] sm:$0xff]
    %v1409 = vld [vmem:[#allocation5 + $0x2058] sm:$0xff]
    %v1410 = vld [vmem:[#allocation5 + $0x2060] sm:$0xff]
    %v1411 = vld [vmem:[#allocation5 + $0x2068] sm:$0xff]
    %v1412 = vld [vmem:[#allocation5 + $0x2070] sm:$0xff]
    %v1413 = vld [vmem:[#allocation5 + $0x2078] sm:$0xff]
    %v1414 = vld [vmem:[#allocation5 + $0x2080] sm:$0xff]
    %v1415 = vld [vmem:[#allocation5 + $0x2088] sm:$0xff]
    %v1416 = vld [vmem:[#allocation5 + $0x2090] sm:$0xff]
    %v1417 = vld [vmem:[#allocation5 + $0x2098] sm:$0xff]
    %v1418 = vld [vmem:[#allocation5 + $0x20a0] sm:$0xff]
    %v1419 = vld [vmem:[#allocation5 + $0x20a8] sm:$0xff]
    %v1420 = vld [vmem:[#allocation5 + $0x20b0] sm:$0xff]
    %v1421 = vld [vmem:[#allocation5 + $0x20b8] sm:$0xff]
    %v1422 = vld [vmem:[#allocation5 + $0x20c0] sm:$0xff]
    %v1423 = vld [vmem:[#allocation5 + $0x20c8] sm:$0xff]
    %v1424 = vld [vmem:[#allocation5 + $0x20d0] sm:$0xff]
    %v1425 = vld [vmem:[#allocation5 + $0x20d8] sm:$0xff]
    %v1426 = vld [vmem:[#allocation5 + $0x20e0] sm:$0xff]
    %v1427 = vld [vmem:[#allocation5 + $0x20e8] sm:$0xff]
    %v1428 = vld [vmem:[#allocation5 + $0x20f0] sm:$0xff]
    %v1429 = vld [vmem:[#allocation5 + $0x20f8] sm:$0xff]
    %v1430 = vld [vmem:[#allocation5 + $0x2100] sm:$0xff]
    %v1431 = vld [vmem:[#allocation5 + $0x2108] sm:$0xff]
    %v1432 = vld [vmem:[#allocation5 + $0x2110] sm:$0xff]
    %v1433 = vld [vmem:[#allocation5 + $0x2118] sm:$0xff]
    %v1434 = vld [vmem:[#allocation5 + $0x2120] sm:$0xff]
    %v1435 = vld [vmem:[#allocation5 + $0x2128] sm:$0xff]
    %v1436 = vld [vmem:[#allocation5 + $0x2130] sm:$0xff]
    %v1437 = vld [vmem:[#allocation5 + $0x2138] sm:$0xff]
    %v1438 = vld [vmem:[#allocation5 + $0x2140] sm:$0xff]
    %v1439 = vld [vmem:[#allocation5 + $0x2148] sm:$0xff]
    %v1440 = vld [vmem:[#allocation5 + $0x2150] sm:$0xff]
    %v1441 = vld [vmem:[#allocation5 + $0x2158] sm:$0xff]
    %v1442 = vld [vmem:[#allocation5 + $0x2160] sm:$0xff]
    %v1443 = vld [vmem:[#allocation5 + $0x2168] sm:$0xff]
    %v1444 = vld [vmem:[#allocation5 + $0x2170] sm:$0xff]
    %v1445 = vld [vmem:[#allocation5 + $0x2178] sm:$0xff]
    %v1446 = vld [vmem:[#allocation5 + $0x2180] sm:$0xff]
    %v1447 = vld [vmem:[#allocation5 + $0x2188] sm:$0xff]
    %v1448 = vld [vmem:[#allocation5 + $0x2190] sm:$0xff]
    %v1449 = vld [vmem:[#allocation5 + $0x2198] sm:$0xff]
    %v1450 = vld [vmem:[#allocation5 + $0x21a0] sm:$0xff]
    %v1451 = vld [vmem:[#allocation5 + $0x21a8] sm:$0xff]
    %v1452 = vld [vmem:[#allocation5 + $0x21b0] sm:$0xff]
    %v1453 = vld [vmem:[#allocation5 + $0x21b8] sm:$0xff]
    %v1454 = vld [vmem:[#allocation5 + $0x21c0] sm:$0xff]
    %v1455 = vld [vmem:[#allocation5 + $0x21c8] sm:$0xff]
    %v1456 = vld [vmem:[#allocation5 + $0x21d0] sm:$0xff]
    %v1457 = vld [vmem:[#allocation5 + $0x21d8] sm:$0xff]
    %v1458 = vld [vmem:[#allocation5 + $0x21e0] sm:$0xff]
    %v1459 = vld [vmem:[#allocation5 + $0x21e8] sm:$0xff]
    %v1460 = vld [vmem:[#allocation5 + $0x21f0] sm:$0xff]
    %v1461 = vld [vmem:[#allocation5 + $0x21f8] sm:$0xff]
    %v1462 = vld [vmem:[#allocation5 + $0x2200] sm:$0xff]
    %v1463 = vld [vmem:[#allocation5 + $0x2208] sm:$0xff]
    %v1464 = vld [vmem:[#allocation5 + $0x2210] sm:$0xff]
    %v1465 = vld [vmem:[#allocation5 + $0x2218] sm:$0xff]
    %v1466 = vld [vmem:[#allocation5 + $0x2220] sm:$0xff]
    %v1467 = vld [vmem:[#allocation5 + $0x2228] sm:$0xff]
    %v1468 = vld [vmem:[#allocation5 + $0x2230] sm:$0xff]
    %v1469 = vld [vmem:[#allocation5 + $0x2238] sm:$0xff]
    %v1470 = vld [vmem:[#allocation5 + $0x2240] sm:$0xff]
    %v1471 = vld [vmem:[#allocation5 + $0x2248] sm:$0xff]
    %v1472 = vld [vmem:[#allocation5 + $0x2250] sm:$0xff]
    %v1473 = vld [vmem:[#allocation5 + $0x2258] sm:$0xff]
    %v1474 = vld [vmem:[#allocation5 + $0x2260] sm:$0xff]
    %v1475 = vld [vmem:[#allocation5 + $0x2268] sm:$0xff]
    %v1476 = vld [vmem:[#allocation5 + $0x2270] sm:$0xff]
    %v1477 = vld [vmem:[#allocation5 + $0x2278] sm:$0xff]
    %v1478 = vld [vmem:[#allocation5 + $0x2280] sm:$0xff]
    %v1479 = vld [vmem:[#allocation5 + $0x2288] sm:$0xff]
    %v1480 = vld [vmem:[#allocation5 + $0x2290] sm:$0xff]
    %v1481 = vld [vmem:[#allocation5 + $0x2298] sm:$0xff]
    %v1482 = vld [vmem:[#allocation5 + $0x22a0] sm:$0xff]
    %v1483 = vld [vmem:[#allocation5 + $0x22a8] sm:$0xff]
    %v1484 = vld [vmem:[#allocation5 + $0x22b0] sm:$0xff]
    %v1485 = vld [vmem:[#allocation5 + $0x22b8] sm:$0xff]
    %v1486 = vld [vmem:[#allocation5 + $0x22c0] sm:$0xff]
    %v1487 = vld [vmem:[#allocation5 + $0x22c8] sm:$0xff]
    %v1488 = vld [vmem:[#allocation5 + $0x22d0] sm:$0xff]
    %v1489 = vld [vmem:[#allocation5 + $0x22d8] sm:$0xff]
    %v1490 = vld [vmem:[#allocation5 + $0x22e0] sm:$0xff]
    %v1491 = vld [vmem:[#allocation5 + $0x22e8] sm:$0xff]
    %v1492 = vld [vmem:[#allocation5 + $0x22f0] sm:$0xff]
    %v1493 = vld [vmem:[#allocation5 + $0x22f8] sm:$0xff]
    %v1494 = vld [vmem:[#allocation5 + $0x2300] sm:$0xff]
    %v1495 = vld [vmem:[#allocation5 + $0x2308] sm:$0xff]
    %v1496 = vld [vmem:[#allocation5 + $0x2310] sm:$0xff]
    %v1497 = vld [vmem:[#allocation5 + $0x2318] sm:$0xff]
    %v1498 = vld [vmem:[#allocation5 + $0x2320] sm:$0xff]
    %v1499 = vld [vmem:[#allocation5 + $0x2328] sm:$0xff]
    %v1500 = vld [vmem:[#allocation5 + $0x2330] sm:$0xff]
    %v1501 = vld [vmem:[#allocation5 + $0x2338] sm:$0xff]
    %v1502 = vld [vmem:[#allocation5 + $0x2340] sm:$0xff]
    %v1503 = vld [vmem:[#allocation5 + $0x2348] sm:$0xff]
    %v1504 = vld [vmem:[#allocation5 + $0x2350] sm:$0xff]
    %v1505 = vld [vmem:[#allocation5 + $0x2358] sm:$0xff]
    %v1506 = vld [vmem:[#allocation5 + $0x2360] sm:$0xff]
    %v1507 = vld [vmem:[#allocation5 + $0x2368] sm:$0xff]
    %v1508 = vld [vmem:[#allocation5 + $0x2370] sm:$0xff]
    %v1509 = vld [vmem:[#allocation5 + $0x2378] sm:$0xff]
    %v1510 = vld [vmem:[#allocation5 + $0x2380] sm:$0xff]
    %v1511 = vld [vmem:[#allocation5 + $0x2388] sm:$0xff]
    %v1512 = vld [vmem:[#allocation5 + $0x2390] sm:$0xff]
    %v1513 = vld [vmem:[#allocation5 + $0x2398] sm:$0xff]
    %v1514 = vld [vmem:[#allocation5 + $0x23a0] sm:$0xff]
    %v1515 = vld [vmem:[#allocation5 + $0x23a8] sm:$0xff]
    %v1516 = vld [vmem:[#allocation5 + $0x23b0] sm:$0xff]
    %v1517 = vld [vmem:[#allocation5 + $0x23b8] sm:$0xff]
    %v1518 = vld [vmem:[#allocation5 + $0x23c0] sm:$0xff]
    %v1519 = vld [vmem:[#allocation5 + $0x23c8] sm:$0xff]
    %v1520 = vld [vmem:[#allocation5 + $0x23d0] sm:$0xff]
    %v1521 = vld [vmem:[#allocation5 + $0x23d8] sm:$0xff]
    %v1522 = vld [vmem:[#allocation5 + $0x23e0] sm:$0xff]
    %v1523 = vld [vmem:[#allocation5 + $0x23e8] sm:$0xff]
    %v1524 = vld [vmem:[#allocation5 + $0x23f0] sm:$0xff]
    %v1525 = vld [vmem:[#allocation5 + $0x23f8] sm:$0xff]
    %v1526 = vld [vmem:[#allocation7] sm:$0xf]
    %v1528 = vlaneseq
    %v1529 = vshrl.u32 %v1528, 7
    %v1530 = vsub.s32 0, %v1529
    %v1531 = vrot.slane %v1526, %v1530
    %v1532 = vlaneseq
    %v1533 = vshrl.u32 %v1532, 7
    %v1534 = vsub.s32 1, %v1533
    %v1535 = vrot.slane %v1526, %v1534
    %v1536 = vlaneseq
    %v1537 = vshrl.u32 %v1536, 7
    %v1538 = vsub.s32 2, %v1537
    %v1539 = vrot.slane %v1526, %v1538
    %v1540 = vlaneseq
    %v1541 = vshrl.u32 %v1540, 7
    %v1542 = vsub.s32 3, %v1541
    %v1543 = vrot.slane %v1526, %v1542
    %v1836 = vunpack.c.l.b16 %v86
    %v1837 = vunpack.c.h.b16 %v86
    %v1838 = vunpack.c.l.b16 %v87
    %v1839 = vunpack.c.h.b16 %v87
    %v1840 = vunpack.c.l.b16 %v88
    %v1841 = vunpack.c.h.b16 %v88
    %v1842 = vunpack.c.l.b16 %v89
    %v1843 = vunpack.c.h.b16 %v89
    %v1844 = vunpack.c.l.b16 %v90
    %v1845 = vunpack.c.h.b16 %v90
    %v1846 = vunpack.c.l.b16 %v91
    %v1847 = vunpack.c.h.b16 %v91
    %v1848 = vunpack.c.l.b16 %v92
    %v1849 = vunpack.c.h.b16 %v92
    %v1850 = vunpack.c.l.b16 %v93
    %v1851 = vunpack.c.h.b16 %v93
    %v1852 = vunpack.c.l.b16 %v94
    %v1853 = vunpack.c.h.b16 %v94
    %v1854 = vunpack.c.l.b16 %v95
    %v1855 = vunpack.c.h.b16 %v95
    %v1856 = vunpack.c.l.b16 %v96
    %v1857 = vunpack.c.h.b16 %v96
    %v1858 = vunpack.c.l.b16 %v97
    %v1859 = vunpack.c.h.b16 %v97
    %v1860 = vunpack.c.l.b16 %v98
    %v1861 = vunpack.c.h.b16 %v98
    %v1862 = vunpack.c.l.b16 %v99
    %v1863 = vunpack.c.h.b16 %v99
    %v1864 = vunpack.c.l.b16 %v100
    %v1865 = vunpack.c.h.b16 %v100
    %v1866 = vunpack.c.l.b16 %v101
    %v1867 = vunpack.c.h.b16 %v101
    %v1868 = vunpack.c.l.b16 %v102
    %v1869 = vunpack.c.h.b16 %v102
    %v1870 = vunpack.c.l.b16 %v103
    %v1871 = vunpack.c.h.b16 %v103
    %v1872 = vunpack.c.l.b16 %v104
    %v1873 = vunpack.c.h.b16 %v104
    %v1874 = vunpack.c.l.b16 %v105
    %v1875 = vunpack.c.h.b16 %v105
    %v1876 = vunpack.c.l.b16 %v106
    %v1877 = vunpack.c.h.b16 %v106
    %v1878 = vunpack.c.l.b16 %v107
    %v1879 = vunpack.c.h.b16 %v107
    %v1880 = vunpack.c.l.b16 %v108
    %v1881 = vunpack.c.h.b16 %v108
    %v1882 = vunpack.c.l.b16 %v109
    %v1883 = vunpack.c.h.b16 %v109
    %v1884 = vunpack.c.l.b16 %v110
    %v1885 = vunpack.c.h.b16 %v110
    %v1886 = vunpack.c.l.b16 %v111
    %v1887 = vunpack.c.h.b16 %v111
    %v1888 = vunpack.c.l.b16 %v112
    %v1889 = vunpack.c.h.b16 %v112
    %v1890 = vunpack.c.l.b16 %v113
    %v1891 = vunpack.c.h.b16 %v113
    %v1892 = vunpack.c.l.b16 %v114
    %v1893 = vunpack.c.h.b16 %v114
    %v1894 = vunpack.c.l.b16 %v115
    %v1895 = vunpack.c.h.b16 %v115
    %v1896 = vunpack.c.l.b16 %v116
    %v1897 = vunpack.c.h.b16 %v116
    %v1898 = vunpack.c.l.b16 %v117
    %v1899 = vunpack.c.h.b16 %v117
    %v1900 = vunpack.c.l.b16 %v118
    %v1901 = vunpack.c.h.b16 %v118
    %v1902 = vunpack.c.l.b16 %v119
    %v1903 = vunpack.c.h.b16 %v119
    %v1904 = vunpack.c.l.b16 %v120
    %v1905 = vunpack.c.h.b16 %v120
    %v1906 = vunpack.c.l.b16 %v121
    %v1907 = vunpack.c.h.b16 %v121
    %v1908 = vunpack.c.l.b16 %v122
    %v1909 = vunpack.c.h.b16 %v122
    %v1910 = vunpack.c.l.b16 %v123
    %v1911 = vunpack.c.h.b16 %v123
    %v1912 = vunpack.c.l.b16 %v124
    %v1913 = vunpack.c.h.b16 %v124
    %v1914 = vunpack.c.l.b16 %v125
    %v1915 = vunpack.c.h.b16 %v125
    %v1916 = vunpack.c.l.b16 %v126
    %v1917 = vunpack.c.h.b16 %v126
    %v1918 = vunpack.c.l.b16 %v127
    %v1919 = vunpack.c.h.b16 %v127
    %v1920 = vunpack.c.l.b16 %v128
    %v1921 = vunpack.c.h.b16 %v128
    %v1922 = vunpack.c.l.b16 %v129
    %v1923 = vunpack.c.h.b16 %v129
    %v1924 = vunpack.c.l.b16 %v130
    %v1925 = vunpack.c.h.b16 %v130
    %v1926 = vunpack.c.l.b16 %v131
    %v1927 = vunpack.c.h.b16 %v131
    %v1928 = vunpack.c.l.b16 %v132
    %v1929 = vunpack.c.h.b16 %v132
    %v1930 = vunpack.c.l.b16 %v133
    %v1931 = vunpack.c.h.b16 %v133
    %v1932 = vunpack.c.l.b16 %v134
    %v1933 = vunpack.c.h.b16 %v134
    %v1934 = vunpack.c.l.b16 %v135
    %v1935 = vunpack.c.h.b16 %v135
    %v1936 = vunpack.c.l.b16 %v136
    %v1937 = vunpack.c.h.b16 %v136
    %v1938 = vunpack.c.l.b16 %v137
    %v1939 = vunpack.c.h.b16 %v137
    %v1940 = vunpack.c.l.b16 %v138
    %v1941 = vunpack.c.h.b16 %v138
    %v1942 = vunpack.c.l.b16 %v139
    %v1943 = vunpack.c.h.b16 %v139
    %v1944 = vunpack.c.l.b16 %v140
    %v1945 = vunpack.c.h.b16 %v140
    %v1946 = vunpack.c.l.b16 %v141
    %v1947 = vunpack.c.h.b16 %v141
    %v1948 = vunpack.c.l.b16 %v142
    %v1949 = vunpack.c.h.b16 %v142
    %v1950 = vunpack.c.l.b16 %v143
    %v1951 = vunpack.c.h.b16 %v143
    %v1952 = vunpack.c.l.b16 %v144
    %v1953 = vunpack.c.h.b16 %v144
    %v1954 = vunpack.c.l.b16 %v145
    %v1955 = vunpack.c.h.b16 %v145
    %v1956 = vunpack.c.l.b16 %v146
    %v1957 = vunpack.c.h.b16 %v146
    %v1958 = vunpack.c.l.b16 %v147
    %v1959 = vunpack.c.h.b16 %v147
    %v1960 = vunpack.c.l.b16 %v148
    %v1961 = vunpack.c.h.b16 %v148
    %v1962 = vunpack.c.l.b16 %v149
    %v1963 = vunpack.c.h.b16 %v149
    %v1964 = vunpack.c.l.b16 %v150
    %v1965 = vunpack.c.h.b16 %v150
    %v1966 = vunpack.c.l.b16 %v151
    %v1967 = vunpack.c.h.b16 %v151
    %v1968 = vunpack.c.l.b16 %v152
    %v1969 = vunpack.c.h.b16 %v152
    %v1970 = vunpack.c.l.b16 %v153
    %v1971 = vunpack.c.h.b16 %v153
    %v1972 = vunpack.c.l.b16 %v154
    %v1973 = vunpack.c.h.b16 %v154
    %v1974 = vunpack.c.l.b16 %v155
    %v1975 = vunpack.c.h.b16 %v155
    %v1976 = vunpack.c.l.b16 %v156
    %v1977 = vunpack.c.h.b16 %v156
    %v1978 = vunpack.c.l.b16 %v157
    %v1979 = vunpack.c.h.b16 %v157
    %v1980 = vunpack.c.l.b16 %v158
    %v1981 = vunpack.c.h.b16 %v158
    %v1982 = vunpack.c.l.b16 %v159
    %v1983 = vunpack.c.h.b16 %v159
    %v1984 = vunpack.c.l.b16 %v160
    %v1985 = vunpack.c.h.b16 %v160
    %v1986 = vunpack.c.l.b16 %v161
    %v1987 = vunpack.c.h.b16 %v161
    %v1988 = vunpack.c.l.b16 %v162
    %v1989 = vunpack.c.h.b16 %v162
    %v1990 = vunpack.c.l.b16 %v163
    %v1991 = vunpack.c.h.b16 %v163
    %v1992 = vunpack.c.l.b16 %v164
    %v1993 = vunpack.c.h.b16 %v164
    %v1994 = vunpack.c.l.b16 %v165
    %v1995 = vunpack.c.h.b16 %v165
    %v1996 = vunpack.c.l.b16 %v166
    %v1997 = vunpack.c.h.b16 %v166
    %v1998 = vunpack.c.l.b16 %v167
    %v1999 = vunpack.c.h.b16 %v167
    %v2000 = vunpack.c.l.b16 %v168
    %v2001 = vunpack.c.h.b16 %v168
    %v2002 = vunpack.c.l.b16 %v169
    %v2003 = vunpack.c.h.b16 %v169
    %v2004 = vunpack.c.l.b16 %v170
    %v2005 = vunpack.c.h.b16 %v170
    %v2006 = vunpack.c.l.b16 %v171
    %v2007 = vunpack.c.h.b16 %v171
    %v2008 = vunpack.c.l.b16 %v172
    %v2009 = vunpack.c.h.b16 %v172
    %v2010 = vunpack.c.l.b16 %v173
    %v2011 = vunpack.c.h.b16 %v173
    %v2012 = vunpack.c.l.b16 %v174
    %v2013 = vunpack.c.h.b16 %v174
    %v2014 = vunpack.c.l.b16 %v175
    %v2015 = vunpack.c.h.b16 %v175
    %v2016 = vunpack.c.l.b16 %v176
    %v2017 = vunpack.c.h.b16 %v176
    %v2018 = vunpack.c.l.b16 %v177
    %v2019 = vunpack.c.h.b16 %v177
    %v2020 = vunpack.c.l.b16 %v178
    %v2021 = vunpack.c.h.b16 %v178
    %v2022 = vunpack.c.l.b16 %v179
    %v2023 = vunpack.c.h.b16 %v179
    %v2024 = vunpack.c.l.b16 %v180
    %v2025 = vunpack.c.h.b16 %v180
    %v2026 = vunpack.c.l.b16 %v181
    %v2027 = vunpack.c.h.b16 %v181
    %v2028 = vunpack.c.l.b16 %v182
    %v2029 = vunpack.c.h.b16 %v182
    %v2030 = vunpack.c.l.b16 %v183
    %v2031 = vunpack.c.h.b16 %v183
    %v2032 = vunpack.c.l.b16 %v184
    %v2033 = vunpack.c.h.b16 %v184
    %v2034 = vunpack.c.l.b16 %v185
    %v2035 = vunpack.c.h.b16 %v185
    %v2036 = vunpack.c.l.b16 %v186
    %v2037 = vunpack.c.h.b16 %v186
    %v2038 = vunpack.c.l.b16 %v187
    %v2039 = vunpack.c.h.b16 %v187
    %v2040 = vunpack.c.l.b16 %v188
    %v2041 = vunpack.c.h.b16 %v188
    %v2042 = vunpack.c.l.b16 %v189
    %v2043 = vunpack.c.h.b16 %v189
    %v2044 = vunpack.c.l.b16 %v190
    %v2045 = vunpack.c.h.b16 %v190
    %v2046 = vunpack.c.l.b16 %v191
    %v2047 = vunpack.c.h.b16 %v191
    %v2048 = vunpack.c.l.b16 %v192
    %v2049 = vunpack.c.h.b16 %v192
    %v2050 = vunpack.c.l.b16 %v193
    %v2051 = vunpack.c.h.b16 %v193
    %v2052 = vunpack.c.l.b16 %v194
    %v2053 = vunpack.c.h.b16 %v194
    %v2054 = vunpack.c.l.b16 %v195
    %v2055 = vunpack.c.h.b16 %v195
    %v2056 = vunpack.c.l.b16 %v196
    %v2057 = vunpack.c.h.b16 %v196
    %v2058 = vunpack.c.l.b16 %v197
    %v2059 = vunpack.c.h.b16 %v197
    %v2060 = vunpack.c.l.b16 %v198
    %v2061 = vunpack.c.h.b16 %v198
    %v2062 = vunpack.c.l.b16 %v199
    %v2063 = vunpack.c.h.b16 %v199
    %v2064 = vunpack.c.l.b16 %v200
    %v2065 = vunpack.c.h.b16 %v200
    %v2066 = vunpack.c.l.b16 %v201
    %v2067 = vunpack.c.h.b16 %v201
    %v2068 = vunpack.c.l.b16 %v202
    %v2069 = vunpack.c.h.b16 %v202
    %v2070 = vunpack.c.l.b16 %v203
    %v2071 = vunpack.c.h.b16 %v203
    %v2072 = vunpack.c.l.b16 %v204
    %v2073 = vunpack.c.h.b16 %v204
    %v2074 = vunpack.c.l.b16 %v205
    %v2075 = vunpack.c.h.b16 %v205
    %v2076 = vunpack.c.l.b16 %v206
    %v2077 = vunpack.c.h.b16 %v206
    %v2078 = vunpack.c.l.b16 %v207
    %v2079 = vunpack.c.h.b16 %v207
    %v2080 = vunpack.c.l.b16 %v208
    %v2081 = vunpack.c.h.b16 %v208
    %v2082 = vunpack.c.l.b16 %v209
    %v2083 = vunpack.c.h.b16 %v209
    %v2084 = vunpack.c.l.b16 %v210
    %v2085 = vunpack.c.h.b16 %v210
    %v2086 = vunpack.c.l.b16 %v211
    %v2087 = vunpack.c.h.b16 %v211
    %v2088 = vunpack.c.l.b16 %v212
    %v2089 = vunpack.c.h.b16 %v212
    %v2090 = vunpack.c.l.b16 %v213
    %v2091 = vunpack.c.h.b16 %v213
    %v2092 = vunpack.c.l.b16 %v214
    %v2093 = vunpack.c.h.b16 %v214
    %v2094 = vunpack.c.l.b16 %v215
    %v2095 = vunpack.c.h.b16 %v215
    %v2096 = vunpack.c.l.b16 %v216
    %v2097 = vunpack.c.h.b16 %v216
    %v2098 = vunpack.c.l.b16 %v217
    %v2099 = vunpack.c.h.b16 %v217
    %v2100 = vunpack.c.l.b16 %v218
    %v2101 = vunpack.c.h.b16 %v218
    %v2102 = vunpack.c.l.b16 %v219
    %v2103 = vunpack.c.h.b16 %v219
    %v2104 = vunpack.c.l.b16 %v220
    %v2105 = vunpack.c.h.b16 %v220
    %v2106 = vunpack.c.l.b16 %v221
    %v2107 = vunpack.c.h.b16 %v221
    %v2108 = vunpack.c.l.b16 %v222
    %v2109 = vunpack.c.h.b16 %v222
    %v2110 = vunpack.c.l.b16 %v223
    %v2111 = vunpack.c.h.b16 %v223
    %v2112 = vunpack.c.l.b16 %v224
    %v2113 = vunpack.c.h.b16 %v224
    %v2114 = vunpack.c.l.b16 %v225
    %v2115 = vunpack.c.h.b16 %v225
    %v2116 = vunpack.c.l.b16 %v226
    %v2117 = vunpack.c.h.b16 %v226
    %v2118 = vunpack.c.l.b16 %v227
    %v2119 = vunpack.c.h.b16 %v227
    %v2120 = vunpack.c.l.b16 %v228
    %v2121 = vunpack.c.h.b16 %v228
    %v2122 = vunpack.c.l.b16 %v229
    %v2123 = vunpack.c.h.b16 %v229
    %v2124 = vunpack.c.l.b16 %v230
    %v2125 = vunpack.c.h.b16 %v230
    %v2126 = vunpack.c.l.b16 %v231
    %v2127 = vunpack.c.h.b16 %v231
    %v2128 = vunpack.c.l.b16 %v232
    %v2129 = vunpack.c.h.b16 %v232
    %v2130 = vunpack.c.l.b16 %v233
    %v2131 = vunpack.c.h.b16 %v233
    %v2132 = vunpack.c.l.b16 %v234
    %v2133 = vunpack.c.h.b16 %v234
    %v2134 = vunpack.c.l.b16 %v235
    %v2135 = vunpack.c.h.b16 %v235
    %v2136 = vunpack.c.l.b16 %v236
    %v2137 = vunpack.c.h.b16 %v236
    %v2138 = vunpack.c.l.b16 %v237
    %v2139 = vunpack.c.h.b16 %v237
    %v2140 = vunpack.c.l.b16 %v238
    %v2141 = vunpack.c.h.b16 %v238
    %v2142 = vunpack.c.l.b16 %v239
    %v2143 = vunpack.c.h.b16 %v239
    %v2144 = vunpack.c.l.b16 %v240
    %v2145 = vunpack.c.h.b16 %v240
    %v2146 = vunpack.c.l.b16 %v241
    %v2147 = vunpack.c.h.b16 %v241
    %v2148 = vunpack.c.l.b16 %v242
    %v2149 = vunpack.c.h.b16 %v242
    %v2150 = vunpack.c.l.b16 %v243
    %v2151 = vunpack.c.h.b16 %v243
    %v2152 = vunpack.c.l.b16 %v244
    %v2153 = vunpack.c.h.b16 %v244
    %v2154 = vunpack.c.l.b16 %v245
    %v2155 = vunpack.c.h.b16 %v245
    %v2156 = vunpack.c.l.b16 %v246
    %v2157 = vunpack.c.h.b16 %v246
    %v2158 = vunpack.c.l.b16 %v247
    %v2159 = vunpack.c.h.b16 %v247
    %v2160 = vunpack.c.l.b16 %v248
    %v2161 = vunpack.c.h.b16 %v248
    %v2162 = vunpack.c.l.b16 %v249
    %v2163 = vunpack.c.h.b16 %v249
    %v2164 = vunpack.c.l.b16 %v250
    %v2165 = vunpack.c.h.b16 %v250
    %v2166 = vunpack.c.l.b16 %v251
    %v2167 = vunpack.c.h.b16 %v251
    %v2168 = vunpack.c.l.b16 %v252
    %v2169 = vunpack.c.h.b16 %v252
    %v2170 = vunpack.c.l.b16 %v253
    %v2171 = vunpack.c.h.b16 %v253
    %v2172 = vunpack.c.l.b16 %v254
    %v2173 = vunpack.c.h.b16 %v254
    %v2174 = vunpack.c.l.b16 %v255
    %v2175 = vunpack.c.h.b16 %v255
    %v2176 = vunpack.c.l.b16 %v256
    %v2177 = vunpack.c.h.b16 %v256
    %v2178 = vunpack.c.l.b16 %v257
    %v2179 = vunpack.c.h.b16 %v257
    %v2180 = vunpack.c.l.b16 %v258
    %v2181 = vunpack.c.h.b16 %v258
    %v2182 = vunpack.c.l.b16 %v259
    %v2183 = vunpack.c.h.b16 %v259
    %v2184 = vunpack.c.l.b16 %v260
    %v2185 = vunpack.c.h.b16 %v260
    %v2186 = vunpack.c.l.b16 %v261
    %v2187 = vunpack.c.h.b16 %v261
    %v2188 = vunpack.c.l.b16 %v262
    %v2189 = vunpack.c.h.b16 %v262
    %v2190 = vunpack.c.l.b16 %v263
    %v2191 = vunpack.c.h.b16 %v263
    %v2192 = vunpack.c.l.b16 %v264
    %v2193 = vunpack.c.h.b16 %v264
    %v2194 = vunpack.c.l.b16 %v265
    %v2195 = vunpack.c.h.b16 %v265
    %v2196 = vunpack.c.l.b16 %v266
    %v2197 = vunpack.c.h.b16 %v266
    %v2198 = vunpack.c.l.b16 %v267
    %v2199 = vunpack.c.h.b16 %v267
    %v2200 = vunpack.c.l.b16 %v268
    %v2201 = vunpack.c.h.b16 %v268
    %v2202 = vunpack.c.l.b16 %v269
    %v2203 = vunpack.c.h.b16 %v269
    %v2204 = vunpack.c.l.b16 %v270
    %v2205 = vunpack.c.h.b16 %v270
    %v2206 = vunpack.c.l.b16 %v271
    %v2207 = vunpack.c.h.b16 %v271
    %v2208 = vunpack.c.l.b16 %v272
    %v2209 = vunpack.c.h.b16 %v272
    %v2210 = vunpack.c.l.b16 %v273
    %v2211 = vunpack.c.h.b16 %v273
    %v2212 = vunpack.c.l.b16 %v274
    %v2213 = vunpack.c.h.b16 %v274
    %v2214 = vunpack.c.l.b16 %v275
    %v2215 = vunpack.c.h.b16 %v275
    %v2216 = vunpack.c.l.b16 %v276
    %v2217 = vunpack.c.h.b16 %v276
    %v2218 = vunpack.c.l.b16 %v277
    %v2219 = vunpack.c.h.b16 %v277
    %v2220 = vunpack.c.l.b16 %v278
    %v2221 = vunpack.c.h.b16 %v278
    %v2222 = vunpack.c.l.b16 %v279
    %v2223 = vunpack.c.h.b16 %v279
    %v2224 = vunpack.c.l.b16 %v280
    %v2225 = vunpack.c.h.b16 %v280
    %v2226 = vunpack.c.l.b16 %v281
    %v2227 = vunpack.c.h.b16 %v281
    %v2228 = vunpack.c.l.b16 %v282
    %v2229 = vunpack.c.h.b16 %v282
    %v2230 = vunpack.c.l.b16 %v283
    %v2231 = vunpack.c.h.b16 %v283
    %v2232 = vunpack.c.l.b16 %v284
    %v2233 = vunpack.c.h.b16 %v284
    %v2234 = vunpack.c.l.b16 %v285
    %v2235 = vunpack.c.h.b16 %v285
    %v2236 = vunpack.c.l.b16 %v286
    %v2237 = vunpack.c.h.b16 %v286
    %v2238 = vunpack.c.l.b16 %v287
    %v2239 = vunpack.c.h.b16 %v287
    %v2240 = vunpack.c.l.b16 %v288
    %v2241 = vunpack.c.h.b16 %v288
    %v2242 = vunpack.c.l.b16 %v289
    %v2243 = vunpack.c.h.b16 %v289
    %v2244 = vunpack.c.l.b16 %v290
    %v2245 = vunpack.c.h.b16 %v290
    %v2246 = vunpack.c.l.b16 %v291
    %v2247 = vunpack.c.h.b16 %v291
    %v2248 = vunpack.c.l.b16 %v292
    %v2249 = vunpack.c.h.b16 %v292
    %v2250 = vunpack.c.l.b16 %v293
    %v2251 = vunpack.c.h.b16 %v293
    %v2252 = vunpack.c.l.b16 %v294
    %v2253 = vunpack.c.h.b16 %v294
    %v2254 = vunpack.c.l.b16 %v295
    %v2255 = vunpack.c.h.b16 %v295
    %v2256 = vunpack.c.l.b16 %v296
    %v2257 = vunpack.c.h.b16 %v296
    %v2258 = vunpack.c.l.b16 %v297
    %v2259 = vunpack.c.h.b16 %v297
    %v2260 = vunpack.c.l.b16 %v298
    %v2261 = vunpack.c.h.b16 %v298
    %v2262 = vunpack.c.l.b16 %v299
    %v2263 = vunpack.c.h.b16 %v299
    %v2264 = vunpack.c.l.b16 %v300
    %v2265 = vunpack.c.h.b16 %v300
    %v2266 = vunpack.c.l.b16 %v301
    %v2267 = vunpack.c.h.b16 %v301
    %v2268 = vunpack.c.l.b16 %v302
    %v2269 = vunpack.c.h.b16 %v302
    %v2270 = vunpack.c.l.b16 %v303
    %v2271 = vunpack.c.h.b16 %v303
    %v2272 = vunpack.c.l.b16 %v304
    %v2273 = vunpack.c.h.b16 %v304
    %v2274 = vunpack.c.l.b16 %v305
    %v2275 = vunpack.c.h.b16 %v305
    %v2276 = vunpack.c.l.b16 %v306
    %v2277 = vunpack.c.h.b16 %v306
    %v2278 = vunpack.c.l.b16 %v307
    %v2279 = vunpack.c.h.b16 %v307
    %v2280 = vunpack.c.l.b16 %v308
    %v2281 = vunpack.c.h.b16 %v308
    %v2282 = vunpack.c.l.b16 %v309
    %v2283 = vunpack.c.h.b16 %v309
    %v2284 = vunpack.c.l.b16 %v310
    %v2285 = vunpack.c.h.b16 %v310
    %v2286 = vunpack.c.l.b16 %v311
    %v2287 = vunpack.c.h.b16 %v311
    %v2288 = vunpack.c.l.b16 %v312
    %v2289 = vunpack.c.h.b16 %v312
    %v2290 = vunpack.c.l.b16 %v313
    %v2291 = vunpack.c.h.b16 %v313
    %v2292 = vunpack.c.l.b16 %v314
    %v2293 = vunpack.c.h.b16 %v314
    %v2294 = vunpack.c.l.b16 %v315
    %v2295 = vunpack.c.h.b16 %v315
    %v2296 = vunpack.c.l.b16 %v316
    %v2297 = vunpack.c.h.b16 %v316
    %v2298 = vunpack.c.l.b16 %v317
    %v2299 = vunpack.c.h.b16 %v317
    %v2300 = vunpack.c.l.b16 %v318
    %v2301 = vunpack.c.h.b16 %v318
    %v2302 = vunpack.c.l.b16 %v319
    %v2303 = vunpack.c.h.b16 %v319
    %v2304 = vunpack.c.l.b16 %v320
    %v2305 = vunpack.c.h.b16 %v320
    %v2306 = vunpack.c.l.b16 %v321
    %v2307 = vunpack.c.h.b16 %v321
    %v2308 = vunpack.c.l.b16 %v322
    %v2309 = vunpack.c.h.b16 %v322
    %v2310 = vunpack.c.l.b16 %v323
    %v2311 = vunpack.c.h.b16 %v323
    %v2312 = vunpack.c.l.b16 %v324
    %v2313 = vunpack.c.h.b16 %v324
    %v2314 = vunpack.c.l.b16 %v325
    %v2315 = vunpack.c.h.b16 %v325
    %v2316 = vunpack.c.l.b16 %v326
    %v2317 = vunpack.c.h.b16 %v326
    %v2318 = vunpack.c.l.b16 %v327
    %v2319 = vunpack.c.h.b16 %v327
    %v2320 = vunpack.c.l.b16 %v328
    %v2321 = vunpack.c.h.b16 %v328
    %v2322 = vunpack.c.l.b16 %v329
    %v2323 = vunpack.c.h.b16 %v329
    %v2324 = vunpack.c.l.b16 %v330
    %v2325 = vunpack.c.h.b16 %v330
    %v2326 = vunpack.c.l.b16 %v331
    %v2327 = vunpack.c.h.b16 %v331
    %v2328 = vunpack.c.l.b16 %v332
    %v2329 = vunpack.c.h.b16 %v332
    %v2330 = vunpack.c.l.b16 %v333
    %v2331 = vunpack.c.h.b16 %v333
    %v2332 = vunpack.c.l.b16 %v334
    %v2333 = vunpack.c.h.b16 %v334
    %v2334 = vunpack.c.l.b16 %v335
    %v2335 = vunpack.c.h.b16 %v335
    %v2336 = vunpack.c.l.b16 %v336
    %v2337 = vunpack.c.h.b16 %v336
    %v2338 = vunpack.c.l.b16 %v337
    %v2339 = vunpack.c.h.b16 %v337
    %v2340 = vunpack.c.l.b16 %v338
    %v2341 = vunpack.c.h.b16 %v338
    %v2342 = vunpack.c.l.b16 %v339
    %v2343 = vunpack.c.h.b16 %v339
    %v2344 = vunpack.c.l.b16 %v340
    %v2345 = vunpack.c.h.b16 %v340
    %v2346 = vunpack.c.l.b16 %v341
    %v2347 = vunpack.c.h.b16 %v341
    %v2348 = vunpack.c.l.b16 %v342
    %v2349 = vunpack.c.h.b16 %v342
    %v2350 = vunpack.c.l.b16 %v343
    %v2351 = vunpack.c.h.b16 %v343
    %v2352 = vunpack.c.l.b16 %v344
    %v2353 = vunpack.c.h.b16 %v344
    %v2354 = vunpack.c.l.b16 %v345
    %v2355 = vunpack.c.h.b16 %v345
    %v2356 = vunpack.c.l.b16 %v346
    %v2357 = vunpack.c.h.b16 %v346
    %v2358 = vunpack.c.l.b16 %v347
    %v2359 = vunpack.c.h.b16 %v347
    %v2360 = vunpack.c.l.b16 %v348
    %v2361 = vunpack.c.h.b16 %v348
    %v2362 = vunpack.c.l.b16 %v349
    %v2363 = vunpack.c.h.b16 %v349
    %v2364 = vunpack.c.l.b16 %v350
    %v2365 = vunpack.c.h.b16 %v350
    %v2366 = vunpack.c.l.b16 %v351
    %v2367 = vunpack.c.h.b16 %v351
    %v2368 = vunpack.c.l.b16 %v352
    %v2369 = vunpack.c.h.b16 %v352
    %v2370 = vunpack.c.l.b16 %v353
    %v2371 = vunpack.c.h.b16 %v353
    %v2372 = vunpack.c.l.b16 %v354
    %v2373 = vunpack.c.h.b16 %v354
    %v2374 = vunpack.c.l.b16 %v355
    %v2375 = vunpack.c.h.b16 %v355
    %v2376 = vunpack.c.l.b16 %v356
    %v2377 = vunpack.c.h.b16 %v356
    %v2378 = vunpack.c.l.b16 %v357
    %v2379 = vunpack.c.h.b16 %v357
    %v2380 = vunpack.c.l.b16 %v358
    %v2381 = vunpack.c.h.b16 %v358
    %v2382 = vunpack.c.l.b16 %v359
    %v2383 = vunpack.c.h.b16 %v359
    %v2384 = vunpack.c.l.b16 %v360
    %v2385 = vunpack.c.h.b16 %v360
    %v2386 = vunpack.c.l.b16 %v361
    %v2387 = vunpack.c.h.b16 %v361
    %v2388 = vunpack.c.l.b16 %v362
    %v2389 = vunpack.c.h.b16 %v362
    %v2390 = vunpack.c.l.b16 %v363
    %v2391 = vunpack.c.h.b16 %v363
    %v2392 = vunpack.c.l.b16 %v364
    %v2393 = vunpack.c.h.b16 %v364
    %v2394 = vunpack.c.l.b16 %v365
    %v2395 = vunpack.c.h.b16 %v365
    %v2396 = vunpack.c.l.b16 %v366
    %v2397 = vunpack.c.h.b16 %v366
    %v2398 = vunpack.c.l.b16 %v367
    %v2399 = vunpack.c.h.b16 %v367
    %v2400 = vunpack.c.l.b16 %v368
    %v2401 = vunpack.c.h.b16 %v368
    %v2402 = vunpack.c.l.b16 %v369
    %v2403 = vunpack.c.h.b16 %v369
    %v2404 = vunpack.c.l.b16 %v370
    %v2405 = vunpack.c.h.b16 %v370
    %v2406 = vunpack.c.l.b16 %v371
    %v2407 = vunpack.c.h.b16 %v371
    %v2408 = vunpack.c.l.b16 %v372
    %v2409 = vunpack.c.h.b16 %v372
    %v2410 = vunpack.c.l.b16 %v373
    %v2411 = vunpack.c.h.b16 %v373
    %v2412 = vpack.c.b16 %v1872, %v1836
    %v2413 = vpack.c.b16 %v1873, %v1837
    %v2414 = vpack.c.b16 %v1874, %v1838
    %v2415 = vpack.c.b16 %v1875, %v1839
    %v2416 = vpack.c.b16 %v1876, %v1840
    %v2417 = vpack.c.b16 %v1877, %v1841
    %v2418 = vpack.c.b16 %v1878, %v1842
    %v2419 = vpack.c.b16 %v1879, %v1843
    %v2420 = vpack.c.b16 %v1880, %v1844
    %v2421 = vpack.c.b16 %v1881, %v1845
    %v2422 = vpack.c.b16 %v1882, %v1846
    %v2423 = vpack.c.b16 %v1883, %v1847
    %v2424 = vpack.c.b16 %v1884, %v1848
    %v2425 = vpack.c.b16 %v1885, %v1849
    %v2426 = vpack.c.b16 %v1886, %v1850
    %v2427 = vpack.c.b16 %v1887, %v1851
    %v2428 = vpack.c.b16 %v1888, %v1852
    %v2429 = vpack.c.b16 %v1889, %v1853
    %v2430 = vpack.c.b16 %v1890, %v1854
    %v2431 = vpack.c.b16 %v1891, %v1855
    %v2432 = vpack.c.b16 %v1892, %v1856
    %v2433 = vpack.c.b16 %v1893, %v1857
    %v2434 = vpack.c.b16 %v1894, %v1858
    %v2435 = vpack.c.b16 %v1895, %v1859
    %v2436 = vpack.c.b16 %v1896, %v1860
    %v2437 = vpack.c.b16 %v1897, %v1861
    %v2438 = vpack.c.b16 %v1898, %v1862
    %v2439 = vpack.c.b16 %v1899, %v1863
    %v2440 = vpack.c.b16 %v1900, %v1864
    %v2441 = vpack.c.b16 %v1901, %v1865
    %v2442 = vpack.c.b16 %v1902, %v1866
    %v2443 = vpack.c.b16 %v1903, %v1867
    %v2444 = vpack.c.b16 %v1904, %v1868
    %v2445 = vpack.c.b16 %v1905, %v1869
    %v2446 = vpack.c.b16 %v1906, %v1870
    %v2447 = vpack.c.b16 %v1907, %v1871
    %v2448 = vpack.c.b16 %v1944, %v1908
    %v2449 = vpack.c.b16 %v1945, %v1909
    %v2450 = vpack.c.b16 %v1946, %v1910
    %v2451 = vpack.c.b16 %v1947, %v1911
    %v2452 = vpack.c.b16 %v1948, %v1912
    %v2453 = vpack.c.b16 %v1949, %v1913
    %v2454 = vpack.c.b16 %v1950, %v1914
    %v2455 = vpack.c.b16 %v1951, %v1915
    %v2456 = vpack.c.b16 %v1952, %v1916
    %v2457 = vpack.c.b16 %v1953, %v1917
    %v2458 = vpack.c.b16 %v1954, %v1918
    %v2459 = vpack.c.b16 %v1955, %v1919
    %v2460 = vpack.c.b16 %v1956, %v1920
    %v2461 = vpack.c.b16 %v1957, %v1921
    %v2462 = vpack.c.b16 %v1958, %v1922
    %v2463 = vpack.c.b16 %v1959, %v1923
    %v2464 = vpack.c.b16 %v1960, %v1924
    %v2465 = vpack.c.b16 %v1961, %v1925
    %v2466 = vpack.c.b16 %v1962, %v1926
    %v2467 = vpack.c.b16 %v1963, %v1927
    %v2468 = vpack.c.b16 %v1964, %v1928
    %v2469 = vpack.c.b16 %v1965, %v1929
    %v2470 = vpack.c.b16 %v1966, %v1930
    %v2471 = vpack.c.b16 %v1967, %v1931
    %v2472 = vpack.c.b16 %v1968, %v1932
    %v2473 = vpack.c.b16 %v1969, %v1933
    %v2474 = vpack.c.b16 %v1970, %v1934
    %v2475 = vpack.c.b16 %v1971, %v1935
    %v2476 = vpack.c.b16 %v1972, %v1936
    %v2477 = vpack.c.b16 %v1973, %v1937
    %v2478 = vpack.c.b16 %v1974, %v1938
    %v2479 = vpack.c.b16 %v1975, %v1939
    %v2480 = vpack.c.b16 %v1976, %v1940
    %v2481 = vpack.c.b16 %v1977, %v1941
    %v2482 = vpack.c.b16 %v1978, %v1942
    %v2483 = vpack.c.b16 %v1979, %v1943
    %v2484 = vpack.c.b16 %v2016, %v1980
    %v2485 = vpack.c.b16 %v2017, %v1981
    %v2486 = vpack.c.b16 %v2018, %v1982
    %v2487 = vpack.c.b16 %v2019, %v1983
    %v2488 = vpack.c.b16 %v2020, %v1984
    %v2489 = vpack.c.b16 %v2021, %v1985
    %v2490 = vpack.c.b16 %v2022, %v1986
    %v2491 = vpack.c.b16 %v2023, %v1987
    %v2492 = vpack.c.b16 %v2024, %v1988
    %v2493 = vpack.c.b16 %v2025, %v1989
    %v2494 = vpack.c.b16 %v2026, %v1990
    %v2495 = vpack.c.b16 %v2027, %v1991
    %v2496 = vpack.c.b16 %v2028, %v1992
    %v2497 = vpack.c.b16 %v2029, %v1993
    %v2498 = vpack.c.b16 %v2030, %v1994
    %v2499 = vpack.c.b16 %v2031, %v1995
    %v2500 = vpack.c.b16 %v2032, %v1996
    %v2501 = vpack.c.b16 %v2033, %v1997
    %v2502 = vpack.c.b16 %v2034, %v1998
    %v2503 = vpack.c.b16 %v2035, %v1999
    %v2504 = vpack.c.b16 %v2036, %v2000
    %v2505 = vpack.c.b16 %v2037, %v2001
    %v2506 = vpack.c.b16 %v2038, %v2002
    %v2507 = vpack.c.b16 %v2039, %v2003
    %v2508 = vpack.c.b16 %v2040, %v2004
    %v2509 = vpack.c.b16 %v2041, %v2005
    %v2510 = vpack.c.b16 %v2042, %v2006
    %v2511 = vpack.c.b16 %v2043, %v2007
    %v2512 = vpack.c.b16 %v2044, %v2008
    %v2513 = vpack.c.b16 %v2045, %v2009
    %v2514 = vpack.c.b16 %v2046, %v2010
    %v2515 = vpack.c.b16 %v2047, %v2011
    %v2516 = vpack.c.b16 %v2048, %v2012
    %v2517 = vpack.c.b16 %v2049, %v2013
    %v2518 = vpack.c.b16 %v2050, %v2014
    %v2519 = vpack.c.b16 %v2051, %v2015
    %v2520 = vpack.c.b16 %v2088, %v2052
    %v2521 = vpack.c.b16 %v2089, %v2053
    %v2522 = vpack.c.b16 %v2090, %v2054
    %v2523 = vpack.c.b16 %v2091, %v2055
    %v2524 = vpack.c.b16 %v2092, %v2056
    %v2525 = vpack.c.b16 %v2093, %v2057
    %v2526 = vpack.c.b16 %v2094, %v2058
    %v2527 = vpack.c.b16 %v2095, %v2059
    %v2528 = vpack.c.b16 %v2096, %v2060
    %v2529 = vpack.c.b16 %v2097, %v2061
    %v2530 = vpack.c.b16 %v2098, %v2062
    %v2531 = vpack.c.b16 %v2099, %v2063
    %v2532 = vpack.c.b16 %v2100, %v2064
    %v2533 = vpack.c.b16 %v2101, %v2065
    %v2534 = vpack.c.b16 %v2102, %v2066
    %v2535 = vpack.c.b16 %v2103, %v2067
    %v2536 = vpack.c.b16 %v2104, %v2068
    %v2537 = vpack.c.b16 %v2105, %v2069
    %v2538 = vpack.c.b16 %v2106, %v2070
    %v2539 = vpack.c.b16 %v2107, %v2071
    %v2540 = vpack.c.b16 %v2108, %v2072
    %v2541 = vpack.c.b16 %v2109, %v2073
    %v2542 = vpack.c.b16 %v2110, %v2074
    %v2543 = vpack.c.b16 %v2111, %v2075
    %v2544 = vpack.c.b16 %v2112, %v2076
    %v2545 = vpack.c.b16 %v2113, %v2077
    %v2546 = vpack.c.b16 %v2114, %v2078
    %v2547 = vpack.c.b16 %v2115, %v2079
    %v2548 = vpack.c.b16 %v2116, %v2080
    %v2549 = vpack.c.b16 %v2117, %v2081
    %v2550 = vpack.c.b16 %v2118, %v2082
    %v2551 = vpack.c.b16 %v2119, %v2083
    %v2552 = vpack.c.b16 %v2120, %v2084
    %v2553 = vpack.c.b16 %v2121, %v2085
    %v2554 = vpack.c.b16 %v2122, %v2086
    %v2555 = vpack.c.b16 %v2123, %v2087
    %v2556 = vpack.c.b16 %v2160, %v2124
    %v2557 = vpack.c.b16 %v2161, %v2125
    %v2558 = vpack.c.b16 %v2162, %v2126
    %v2559 = vpack.c.b16 %v2163, %v2127
    %v2560 = vpack.c.b16 %v2164, %v2128
    %v2561 = vpack.c.b16 %v2165, %v2129
    %v2562 = vpack.c.b16 %v2166, %v2130
    %v2563 = vpack.c.b16 %v2167, %v2131
    %v2564 = vpack.c.b16 %v2168, %v2132
    %v2565 = vpack.c.b16 %v2169, %v2133
    %v2566 = vpack.c.b16 %v2170, %v2134
    %v2567 = vpack.c.b16 %v2171, %v2135
    %v2568 = vpack.c.b16 %v2172, %v2136
    %v2569 = vpack.c.b16 %v2173, %v2137
    %v2570 = vpack.c.b16 %v2174, %v2138
    %v2571 = vpack.c.b16 %v2175, %v2139
    %v2572 = vpack.c.b16 %v2176, %v2140
    %v2573 = vpack.c.b16 %v2177, %v2141
    %v2574 = vpack.c.b16 %v2178, %v2142
    %v2575 = vpack.c.b16 %v2179, %v2143
    %v2576 = vpack.c.b16 %v2180, %v2144
    %v2577 = vpack.c.b16 %v2181, %v2145
    %v2578 = vpack.c.b16 %v2182, %v2146
    %v2579 = vpack.c.b16 %v2183, %v2147
    %v2580 = vpack.c.b16 %v2184, %v2148
    %v2581 = vpack.c.b16 %v2185, %v2149
    %v2582 = vpack.c.b16 %v2186, %v2150
    %v2583 = vpack.c.b16 %v2187, %v2151
    %v2584 = vpack.c.b16 %v2188, %v2152
    %v2585 = vpack.c.b16 %v2189, %v2153
    %v2586 = vpack.c.b16 %v2190, %v2154
    %v2587 = vpack.c.b16 %v2191, %v2155
    %v2588 = vpack.c.b16 %v2192, %v2156
    %v2589 = vpack.c.b16 %v2193, %v2157
    %v2590 = vpack.c.b16 %v2194, %v2158
    %v2591 = vpack.c.b16 %v2195, %v2159
    %v2592 = vpack.c.b16 %v2232, %v2196
    %v2593 = vpack.c.b16 %v2233, %v2197
    %v2594 = vpack.c.b16 %v2234, %v2198
    %v2595 = vpack.c.b16 %v2235, %v2199
    %v2596 = vpack.c.b16 %v2236, %v2200
    %v2597 = vpack.c.b16 %v2237, %v2201
    %v2598 = vpack.c.b16 %v2238, %v2202
    %v2599 = vpack.c.b16 %v2239, %v2203
    %v2600 = vpack.c.b16 %v2240, %v2204
    %v2601 = vpack.c.b16 %v2241, %v2205
    %v2602 = vpack.c.b16 %v2242, %v2206
    %v2603 = vpack.c.b16 %v2243, %v2207
    %v2604 = vpack.c.b16 %v2244, %v2208
    %v2605 = vpack.c.b16 %v2245, %v2209
    %v2606 = vpack.c.b16 %v2246, %v2210
    %v2607 = vpack.c.b16 %v2247, %v2211
    %v2608 = vpack.c.b16 %v2248, %v2212
    %v2609 = vpack.c.b16 %v2249, %v2213
    %v2610 = vpack.c.b16 %v2250, %v2214
    %v2611 = vpack.c.b16 %v2251, %v2215
    %v2612 = vpack.c.b16 %v2252, %v2216
    %v2613 = vpack.c.b16 %v2253, %v2217
    %v2614 = vpack.c.b16 %v2254, %v2218
    %v2615 = vpack.c.b16 %v2255, %v2219
    %v2616 = vpack.c.b16 %v2256, %v2220
    %v2617 = vpack.c.b16 %v2257, %v2221
    %v2618 = vpack.c.b16 %v2258, %v2222
    %v2619 = vpack.c.b16 %v2259, %v2223
    %v2620 = vpack.c.b16 %v2260, %v2224
    %v2621 = vpack.c.b16 %v2261, %v2225
    %v2622 = vpack.c.b16 %v2262, %v2226
    %v2623 = vpack.c.b16 %v2263, %v2227
    %v2624 = vpack.c.b16 %v2264, %v2228
    %v2625 = vpack.c.b16 %v2265, %v2229
    %v2626 = vpack.c.b16 %v2266, %v2230
    %v2627 = vpack.c.b16 %v2267, %v2231
    %v2628 = vpack.c.b16 %v2304, %v2268
    %v2629 = vpack.c.b16 %v2305, %v2269
    %v2630 = vpack.c.b16 %v2306, %v2270
    %v2631 = vpack.c.b16 %v2307, %v2271
    %v2632 = vpack.c.b16 %v2308, %v2272
    %v2633 = vpack.c.b16 %v2309, %v2273
    %v2634 = vpack.c.b16 %v2310, %v2274
    %v2635 = vpack.c.b16 %v2311, %v2275
    %v2636 = vpack.c.b16 %v2312, %v2276
    %v2637 = vpack.c.b16 %v2313, %v2277
    %v2638 = vpack.c.b16 %v2314, %v2278
    %v2639 = vpack.c.b16 %v2315, %v2279
    %v2640 = vpack.c.b16 %v2316, %v2280
    %v2641 = vpack.c.b16 %v2317, %v2281
    %v2642 = vpack.c.b16 %v2318, %v2282
    %v2643 = vpack.c.b16 %v2319, %v2283
    %v2644 = vpack.c.b16 %v2320, %v2284
    %v2645 = vpack.c.b16 %v2321, %v2285
    %v2646 = vpack.c.b16 %v2322, %v2286
    %v2647 = vpack.c.b16 %v2323, %v2287
    %v2648 = vpack.c.b16 %v2324, %v2288
    %v2649 = vpack.c.b16 %v2325, %v2289
    %v2650 = vpack.c.b16 %v2326, %v2290
    %v2651 = vpack.c.b16 %v2327, %v2291
    %v2652 = vpack.c.b16 %v2328, %v2292
    %v2653 = vpack.c.b16 %v2329, %v2293
    %v2654 = vpack.c.b16 %v2330, %v2294
    %v2655 = vpack.c.b16 %v2331, %v2295
    %v2656 = vpack.c.b16 %v2332, %v2296
    %v2657 = vpack.c.b16 %v2333, %v2297
    %v2658 = vpack.c.b16 %v2334, %v2298
    %v2659 = vpack.c.b16 %v2335, %v2299
    %v2660 = vpack.c.b16 %v2336, %v2300
    %v2661 = vpack.c.b16 %v2337, %v2301
    %v2662 = vpack.c.b16 %v2338, %v2302
    %v2663 = vpack.c.b16 %v2339, %v2303
    %v2664 = vpack.c.b16 %v2376, %v2340
    %v2665 = vpack.c.b16 %v2377, %v2341
    %v2666 = vpack.c.b16 %v2378, %v2342
    %v2667 = vpack.c.b16 %v2379, %v2343
    %v2668 = vpack.c.b16 %v2380, %v2344
    %v2669 = vpack.c.b16 %v2381, %v2345
    %v2670 = vpack.c.b16 %v2382, %v2346
    %v2671 = vpack.c.b16 %v2383, %v2347
    %v2672 = vpack.c.b16 %v2384, %v2348
    %v2673 = vpack.c.b16 %v2385, %v2349
    %v2674 = vpack.c.b16 %v2386, %v2350
    %v2675 = vpack.c.b16 %v2387, %v2351
    %v2676 = vpack.c.b16 %v2388, %v2352
    %v2677 = vpack.c.b16 %v2389, %v2353
    %v2678 = vpack.c.b16 %v2390, %v2354
    %v2679 = vpack.c.b16 %v2391, %v2355
    %v2680 = vpack.c.b16 %v2392, %v2356
    %v2681 = vpack.c.b16 %v2393, %v2357
    %v2682 = vpack.c.b16 %v2394, %v2358
    %v2683 = vpack.c.b16 %v2395, %v2359
    %v2684 = vpack.c.b16 %v2396, %v2360
    %v2685 = vpack.c.b16 %v2397, %v2361
    %v2686 = vpack.c.b16 %v2398, %v2362
    %v2687 = vpack.c.b16 %v2399, %v2363
    %v2688 = vpack.c.b16 %v2400, %v2364
    %v2689 = vpack.c.b16 %v2401, %v2365
    %v2690 = vpack.c.b16 %v2402, %v2366
    %v2691 = vpack.c.b16 %v2403, %v2367
    %v2692 = vpack.c.b16 %v2404, %v2368
    %v2693 = vpack.c.b16 %v2405, %v2369
    %v2694 = vpack.c.b16 %v2406, %v2370
    %v2695 = vpack.c.b16 %v2407, %v2371
    %v2696 = vpack.c.b16 %v2408, %v2372
    %v2697 = vpack.c.b16 %v2409, %v2373
    %v2698 = vpack.c.b16 %v2410, %v2374
    %v2699 = vpack.c.b16 %v2411, %v2375
    %v4140 = vunpack.c.l.b16 %v374
    %v4141 = vunpack.c.h.b16 %v374
    %v4142 = vunpack.c.l.b16 %v375
    %v4143 = vunpack.c.h.b16 %v375
    %v4144 = vunpack.c.l.b16 %v376
    %v4145 = vunpack.c.h.b16 %v376
    %v4146 = vunpack.c.l.b16 %v377
    %v4147 = vunpack.c.h.b16 %v377
    %v4148 = vunpack.c.l.b16 %v378
    %v4149 = vunpack.c.h.b16 %v378
    %v4150 = vunpack.c.l.b16 %v379
    %v4151 = vunpack.c.h.b16 %v379
    %v4152 = vunpack.c.l.b16 %v380
    %v4153 = vunpack.c.h.b16 %v380
    %v4154 = vunpack.c.l.b16 %v381
    %v4155 = vunpack.c.h.b16 %v381
    %v4156 = vunpack.c.l.b16 %v382
    %v4157 = vunpack.c.h.b16 %v382
    %v4158 = vunpack.c.l.b16 %v383
    %v4159 = vunpack.c.h.b16 %v383
    %v4160 = vunpack.c.l.b16 %v384
    %v4161 = vunpack.c.h.b16 %v384
    %v4162 = vunpack.c.l.b16 %v385
    %v4163 = vunpack.c.h.b16 %v385
    %v4164 = vunpack.c.l.b16 %v386
    %v4165 = vunpack.c.h.b16 %v386
    %v4166 = vunpack.c.l.b16 %v387
    %v4167 = vunpack.c.h.b16 %v387
    %v4168 = vunpack.c.l.b16 %v388
    %v4169 = vunpack.c.h.b16 %v388
    %v4170 = vunpack.c.l.b16 %v389
    %v4171 = vunpack.c.h.b16 %v389
    %v4172 = vunpack.c.l.b16 %v390
    %v4173 = vunpack.c.h.b16 %v390
    %v4174 = vunpack.c.l.b16 %v391
    %v4175 = vunpack.c.h.b16 %v391
    %v4176 = vunpack.c.l.b16 %v392
    %v4177 = vunpack.c.h.b16 %v392
    %v4178 = vunpack.c.l.b16 %v393
    %v4179 = vunpack.c.h.b16 %v393
    %v4180 = vunpack.c.l.b16 %v394
    %v4181 = vunpack.c.h.b16 %v394
    %v4182 = vunpack.c.l.b16 %v395
    %v4183 = vunpack.c.h.b16 %v395
    %v4184 = vunpack.c.l.b16 %v396
    %v4185 = vunpack.c.h.b16 %v396
    %v4186 = vunpack.c.l.b16 %v397
    %v4187 = vunpack.c.h.b16 %v397
    %v4188 = vunpack.c.l.b16 %v398
    %v4189 = vunpack.c.h.b16 %v398
    %v4190 = vunpack.c.l.b16 %v399
    %v4191 = vunpack.c.h.b16 %v399
    %v4192 = vunpack.c.l.b16 %v400
    %v4193 = vunpack.c.h.b16 %v400
    %v4194 = vunpack.c.l.b16 %v401
    %v4195 = vunpack.c.h.b16 %v401
    %v4196 = vunpack.c.l.b16 %v402
    %v4197 = vunpack.c.h.b16 %v402
    %v4198 = vunpack.c.l.b16 %v403
    %v4199 = vunpack.c.h.b16 %v403
    %v4200 = vunpack.c.l.b16 %v404
    %v4201 = vunpack.c.h.b16 %v404
    %v4202 = vunpack.c.l.b16 %v405
    %v4203 = vunpack.c.h.b16 %v405
    %v4204 = vunpack.c.l.b16 %v406
    %v4205 = vunpack.c.h.b16 %v406
    %v4206 = vunpack.c.l.b16 %v407
    %v4207 = vunpack.c.h.b16 %v407
    %v4208 = vunpack.c.l.b16 %v408
    %v4209 = vunpack.c.h.b16 %v408
    %v4210 = vunpack.c.l.b16 %v409
    %v4211 = vunpack.c.h.b16 %v409
    %v4212 = vunpack.c.l.b16 %v410
    %v4213 = vunpack.c.h.b16 %v410
    %v4214 = vunpack.c.l.b16 %v411
    %v4215 = vunpack.c.h.b16 %v411
    %v4216 = vunpack.c.l.b16 %v412
    %v4217 = vunpack.c.h.b16 %v412
    %v4218 = vunpack.c.l.b16 %v413
    %v4219 = vunpack.c.h.b16 %v413
    %v4220 = vunpack.c.l.b16 %v414
    %v4221 = vunpack.c.h.b16 %v414
    %v4222 = vunpack.c.l.b16 %v415
    %v4223 = vunpack.c.h.b16 %v415
    %v4224 = vunpack.c.l.b16 %v416
    %v4225 = vunpack.c.h.b16 %v416
    %v4226 = vunpack.c.l.b16 %v417
    %v4227 = vunpack.c.h.b16 %v417
    %v4228 = vunpack.c.l.b16 %v418
    %v4229 = vunpack.c.h.b16 %v418
    %v4230 = vunpack.c.l.b16 %v419
    %v4231 = vunpack.c.h.b16 %v419
    %v4232 = vunpack.c.l.b16 %v420
    %v4233 = vunpack.c.h.b16 %v420
    %v4234 = vunpack.c.l.b16 %v421
    %v4235 = vunpack.c.h.b16 %v421
    %v4236 = vunpack.c.l.b16 %v422
    %v4237 = vunpack.c.h.b16 %v422
    %v4238 = vunpack.c.l.b16 %v423
    %v4239 = vunpack.c.h.b16 %v423
    %v4240 = vunpack.c.l.b16 %v424
    %v4241 = vunpack.c.h.b16 %v424
    %v4242 = vunpack.c.l.b16 %v425
    %v4243 = vunpack.c.h.b16 %v425
    %v4244 = vunpack.c.l.b16 %v426
    %v4245 = vunpack.c.h.b16 %v426
    %v4246 = vunpack.c.l.b16 %v427
    %v4247 = vunpack.c.h.b16 %v427
    %v4248 = vunpack.c.l.b16 %v428
    %v4249 = vunpack.c.h.b16 %v428
    %v4250 = vunpack.c.l.b16 %v429
    %v4251 = vunpack.c.h.b16 %v429
    %v4252 = vunpack.c.l.b16 %v430
    %v4253 = vunpack.c.h.b16 %v430
    %v4254 = vunpack.c.l.b16 %v431
    %v4255 = vunpack.c.h.b16 %v431
    %v4256 = vunpack.c.l.b16 %v432
    %v4257 = vunpack.c.h.b16 %v432
    %v4258 = vunpack.c.l.b16 %v433
    %v4259 = vunpack.c.h.b16 %v433
    %v4260 = vunpack.c.l.b16 %v434
    %v4261 = vunpack.c.h.b16 %v434
    %v4262 = vunpack.c.l.b16 %v435
    %v4263 = vunpack.c.h.b16 %v435
    %v4264 = vunpack.c.l.b16 %v436
    %v4265 = vunpack.c.h.b16 %v436
    %v4266 = vunpack.c.l.b16 %v437
    %v4267 = vunpack.c.h.b16 %v437
    %v4268 = vunpack.c.l.b16 %v438
    %v4269 = vunpack.c.h.b16 %v438
    %v4270 = vunpack.c.l.b16 %v439
    %v4271 = vunpack.c.h.b16 %v439
    %v4272 = vunpack.c.l.b16 %v440
    %v4273 = vunpack.c.h.b16 %v440
    %v4274 = vunpack.c.l.b16 %v441
    %v4275 = vunpack.c.h.b16 %v441
    %v4276 = vunpack.c.l.b16 %v442
    %v4277 = vunpack.c.h.b16 %v442
    %v4278 = vunpack.c.l.b16 %v443
    %v4279 = vunpack.c.h.b16 %v443
    %v4280 = vunpack.c.l.b16 %v444
    %v4281 = vunpack.c.h.b16 %v444
    %v4282 = vunpack.c.l.b16 %v445
    %v4283 = vunpack.c.h.b16 %v445
    %v4284 = vunpack.c.l.b16 %v446
    %v4285 = vunpack.c.h.b16 %v446
    %v4286 = vunpack.c.l.b16 %v447
    %v4287 = vunpack.c.h.b16 %v447
    %v4288 = vunpack.c.l.b16 %v448
    %v4289 = vunpack.c.h.b16 %v448
    %v4290 = vunpack.c.l.b16 %v449
    %v4291 = vunpack.c.h.b16 %v449
    %v4292 = vunpack.c.l.b16 %v450
    %v4293 = vunpack.c.h.b16 %v450
    %v4294 = vunpack.c.l.b16 %v451
    %v4295 = vunpack.c.h.b16 %v451
    %v4296 = vunpack.c.l.b16 %v452
    %v4297 = vunpack.c.h.b16 %v452
    %v4298 = vunpack.c.l.b16 %v453
    %v4299 = vunpack.c.h.b16 %v453
    %v4300 = vunpack.c.l.b16 %v454
    %v4301 = vunpack.c.h.b16 %v454
    %v4302 = vunpack.c.l.b16 %v455
    %v4303 = vunpack.c.h.b16 %v455
    %v4304 = vunpack.c.l.b16 %v456
    %v4305 = vunpack.c.h.b16 %v456
    %v4306 = vunpack.c.l.b16 %v457
    %v4307 = vunpack.c.h.b16 %v457
    %v4308 = vunpack.c.l.b16 %v458
    %v4309 = vunpack.c.h.b16 %v458
    %v4310 = vunpack.c.l.b16 %v459
    %v4311 = vunpack.c.h.b16 %v459
    %v4312 = vunpack.c.l.b16 %v460
    %v4313 = vunpack.c.h.b16 %v460
    %v4314 = vunpack.c.l.b16 %v461
    %v4315 = vunpack.c.h.b16 %v461
    %v4316 = vunpack.c.l.b16 %v462
    %v4317 = vunpack.c.h.b16 %v462
    %v4318 = vunpack.c.l.b16 %v463
    %v4319 = vunpack.c.h.b16 %v463
    %v4320 = vunpack.c.l.b16 %v464
    %v4321 = vunpack.c.h.b16 %v464
    %v4322 = vunpack.c.l.b16 %v465
    %v4323 = vunpack.c.h.b16 %v465
    %v4324 = vunpack.c.l.b16 %v466
    %v4325 = vunpack.c.h.b16 %v466
    %v4326 = vunpack.c.l.b16 %v467
    %v4327 = vunpack.c.h.b16 %v467
    %v4328 = vunpack.c.l.b16 %v468
    %v4329 = vunpack.c.h.b16 %v468
    %v4330 = vunpack.c.l.b16 %v469
    %v4331 = vunpack.c.h.b16 %v469
    %v4332 = vunpack.c.l.b16 %v470
    %v4333 = vunpack.c.h.b16 %v470
    %v4334 = vunpack.c.l.b16 %v471
    %v4335 = vunpack.c.h.b16 %v471
    %v4336 = vunpack.c.l.b16 %v472
    %v4337 = vunpack.c.h.b16 %v472
    %v4338 = vunpack.c.l.b16 %v473
    %v4339 = vunpack.c.h.b16 %v473
    %v4340 = vunpack.c.l.b16 %v474
    %v4341 = vunpack.c.h.b16 %v474
    %v4342 = vunpack.c.l.b16 %v475
    %v4343 = vunpack.c.h.b16 %v475
    %v4344 = vunpack.c.l.b16 %v476
    %v4345 = vunpack.c.h.b16 %v476
    %v4346 = vunpack.c.l.b16 %v477
    %v4347 = vunpack.c.h.b16 %v477
    %v4348 = vunpack.c.l.b16 %v478
    %v4349 = vunpack.c.h.b16 %v478
    %v4350 = vunpack.c.l.b16 %v479
    %v4351 = vunpack.c.h.b16 %v479
    %v4352 = vunpack.c.l.b16 %v480
    %v4353 = vunpack.c.h.b16 %v480
    %v4354 = vunpack.c.l.b16 %v481
    %v4355 = vunpack.c.h.b16 %v481
    %v4356 = vunpack.c.l.b16 %v482
    %v4357 = vunpack.c.h.b16 %v482
    %v4358 = vunpack.c.l.b16 %v483
    %v4359 = vunpack.c.h.b16 %v483
    %v4360 = vunpack.c.l.b16 %v484
    %v4361 = vunpack.c.h.b16 %v484
    %v4362 = vunpack.c.l.b16 %v485
    %v4363 = vunpack.c.h.b16 %v485
    %v4364 = vunpack.c.l.b16 %v486
    %v4365 = vunpack.c.h.b16 %v486
    %v4366 = vunpack.c.l.b16 %v487
    %v4367 = vunpack.c.h.b16 %v487
    %v4368 = vunpack.c.l.b16 %v488
    %v4369 = vunpack.c.h.b16 %v488
    %v4370 = vunpack.c.l.b16 %v489
    %v4371 = vunpack.c.h.b16 %v489
    %v4372 = vunpack.c.l.b16 %v490
    %v4373 = vunpack.c.h.b16 %v490
    %v4374 = vunpack.c.l.b16 %v491
    %v4375 = vunpack.c.h.b16 %v491
    %v4376 = vunpack.c.l.b16 %v492
    %v4377 = vunpack.c.h.b16 %v492
    %v4378 = vunpack.c.l.b16 %v493
    %v4379 = vunpack.c.h.b16 %v493
    %v4380 = vunpack.c.l.b16 %v494
    %v4381 = vunpack.c.h.b16 %v494
    %v4382 = vunpack.c.l.b16 %v495
    %v4383 = vunpack.c.h.b16 %v495
    %v4384 = vunpack.c.l.b16 %v496
    %v4385 = vunpack.c.h.b16 %v496
    %v4386 = vunpack.c.l.b16 %v497
    %v4387 = vunpack.c.h.b16 %v497
    %v4388 = vunpack.c.l.b16 %v498
    %v4389 = vunpack.c.h.b16 %v498
    %v4390 = vunpack.c.l.b16 %v499
    %v4391 = vunpack.c.h.b16 %v499
    %v4392 = vunpack.c.l.b16 %v500
    %v4393 = vunpack.c.h.b16 %v500
    %v4394 = vunpack.c.l.b16 %v501
    %v4395 = vunpack.c.h.b16 %v501
    %v4396 = vunpack.c.l.b16 %v502
    %v4397 = vunpack.c.h.b16 %v502
    %v4398 = vunpack.c.l.b16 %v503
    %v4399 = vunpack.c.h.b16 %v503
    %v4400 = vunpack.c.l.b16 %v504
    %v4401 = vunpack.c.h.b16 %v504
    %v4402 = vunpack.c.l.b16 %v505
    %v4403 = vunpack.c.h.b16 %v505
    %v4404 = vunpack.c.l.b16 %v506
    %v4405 = vunpack.c.h.b16 %v506
    %v4406 = vunpack.c.l.b16 %v507
    %v4407 = vunpack.c.h.b16 %v507
    %v4408 = vunpack.c.l.b16 %v508
    %v4409 = vunpack.c.h.b16 %v508
    %v4410 = vunpack.c.l.b16 %v509
    %v4411 = vunpack.c.h.b16 %v509
    %v4412 = vunpack.c.l.b16 %v510
    %v4413 = vunpack.c.h.b16 %v510
    %v4414 = vunpack.c.l.b16 %v511
    %v4415 = vunpack.c.h.b16 %v511
    %v4416 = vunpack.c.l.b16 %v512
    %v4417 = vunpack.c.h.b16 %v512
    %v4418 = vunpack.c.l.b16 %v513
    %v4419 = vunpack.c.h.b16 %v513
    %v4420 = vunpack.c.l.b16 %v514
    %v4421 = vunpack.c.h.b16 %v514
    %v4422 = vunpack.c.l.b16 %v515
    %v4423 = vunpack.c.h.b16 %v515
    %v4424 = vunpack.c.l.b16 %v516
    %v4425 = vunpack.c.h.b16 %v516
    %v4426 = vunpack.c.l.b16 %v517
    %v4427 = vunpack.c.h.b16 %v517
    %v4428 = vunpack.c.l.b16 %v518
    %v4429 = vunpack.c.h.b16 %v518
    %v4430 = vunpack.c.l.b16 %v519
    %v4431 = vunpack.c.h.b16 %v519
    %v4432 = vunpack.c.l.b16 %v520
    %v4433 = vunpack.c.h.b16 %v520
    %v4434 = vunpack.c.l.b16 %v521
    %v4435 = vunpack.c.h.b16 %v521
    %v4436 = vunpack.c.l.b16 %v522
    %v4437 = vunpack.c.h.b16 %v522
    %v4438 = vunpack.c.l.b16 %v523
    %v4439 = vunpack.c.h.b16 %v523
    %v4440 = vunpack.c.l.b16 %v524
    %v4441 = vunpack.c.h.b16 %v524
    %v4442 = vunpack.c.l.b16 %v525
    %v4443 = vunpack.c.h.b16 %v525
    %v4444 = vunpack.c.l.b16 %v526
    %v4445 = vunpack.c.h.b16 %v526
    %v4446 = vunpack.c.l.b16 %v527
    %v4447 = vunpack.c.h.b16 %v527
    %v4448 = vunpack.c.l.b16 %v528
    %v4449 = vunpack.c.h.b16 %v528
    %v4450 = vunpack.c.l.b16 %v529
    %v4451 = vunpack.c.h.b16 %v529
    %v4452 = vunpack.c.l.b16 %v530
    %v4453 = vunpack.c.h.b16 %v530
    %v4454 = vunpack.c.l.b16 %v531
    %v4455 = vunpack.c.h.b16 %v531
    %v4456 = vunpack.c.l.b16 %v532
    %v4457 = vunpack.c.h.b16 %v532
    %v4458 = vunpack.c.l.b16 %v533
    %v4459 = vunpack.c.h.b16 %v533
    %v4460 = vunpack.c.l.b16 %v534
    %v4461 = vunpack.c.h.b16 %v534
    %v4462 = vunpack.c.l.b16 %v535
    %v4463 = vunpack.c.h.b16 %v535
    %v4464 = vunpack.c.l.b16 %v536
    %v4465 = vunpack.c.h.b16 %v536
    %v4466 = vunpack.c.l.b16 %v537
    %v4467 = vunpack.c.h.b16 %v537
    %v4468 = vunpack.c.l.b16 %v538
    %v4469 = vunpack.c.h.b16 %v538
    %v4470 = vunpack.c.l.b16 %v539
    %v4471 = vunpack.c.h.b16 %v539
    %v4472 = vunpack.c.l.b16 %v540
    %v4473 = vunpack.c.h.b16 %v540
    %v4474 = vunpack.c.l.b16 %v541
    %v4475 = vunpack.c.h.b16 %v541
    %v4476 = vunpack.c.l.b16 %v542
    %v4477 = vunpack.c.h.b16 %v542
    %v4478 = vunpack.c.l.b16 %v543
    %v4479 = vunpack.c.h.b16 %v543
    %v4480 = vunpack.c.l.b16 %v544
    %v4481 = vunpack.c.h.b16 %v544
    %v4482 = vunpack.c.l.b16 %v545
    %v4483 = vunpack.c.h.b16 %v545
    %v4484 = vunpack.c.l.b16 %v546
    %v4485 = vunpack.c.h.b16 %v546
    %v4486 = vunpack.c.l.b16 %v547
    %v4487 = vunpack.c.h.b16 %v547
    %v4488 = vunpack.c.l.b16 %v548
    %v4489 = vunpack.c.h.b16 %v548
    %v4490 = vunpack.c.l.b16 %v549
    %v4491 = vunpack.c.h.b16 %v549
    %v4492 = vunpack.c.l.b16 %v550
    %v4493 = vunpack.c.h.b16 %v550
    %v4494 = vunpack.c.l.b16 %v551
    %v4495 = vunpack.c.h.b16 %v551
    %v4496 = vunpack.c.l.b16 %v552
    %v4497 = vunpack.c.h.b16 %v552
    %v4498 = vunpack.c.l.b16 %v553
    %v4499 = vunpack.c.h.b16 %v553
    %v4500 = vunpack.c.l.b16 %v554
    %v4501 = vunpack.c.h.b16 %v554
    %v4502 = vunpack.c.l.b16 %v555
    %v4503 = vunpack.c.h.b16 %v555
    %v4504 = vunpack.c.l.b16 %v556
    %v4505 = vunpack.c.h.b16 %v556
    %v4506 = vunpack.c.l.b16 %v557
    %v4507 = vunpack.c.h.b16 %v557
    %v4508 = vunpack.c.l.b16 %v558
    %v4509 = vunpack.c.h.b16 %v558
    %v4510 = vunpack.c.l.b16 %v559
    %v4511 = vunpack.c.h.b16 %v559
    %v4512 = vunpack.c.l.b16 %v560
    %v4513 = vunpack.c.h.b16 %v560
    %v4514 = vunpack.c.l.b16 %v561
    %v4515 = vunpack.c.h.b16 %v561
    %v4516 = vunpack.c.l.b16 %v562
    %v4517 = vunpack.c.h.b16 %v562
    %v4518 = vunpack.c.l.b16 %v563
    %v4519 = vunpack.c.h.b16 %v563
    %v4520 = vunpack.c.l.b16 %v564
    %v4521 = vunpack.c.h.b16 %v564
    %v4522 = vunpack.c.l.b16 %v565
    %v4523 = vunpack.c.h.b16 %v565
    %v4524 = vunpack.c.l.b16 %v566
    %v4525 = vunpack.c.h.b16 %v566
    %v4526 = vunpack.c.l.b16 %v567
    %v4527 = vunpack.c.h.b16 %v567
    %v4528 = vunpack.c.l.b16 %v568
    %v4529 = vunpack.c.h.b16 %v568
    %v4530 = vunpack.c.l.b16 %v569
    %v4531 = vunpack.c.h.b16 %v569
    %v4532 = vunpack.c.l.b16 %v570
    %v4533 = vunpack.c.h.b16 %v570
    %v4534 = vunpack.c.l.b16 %v571
    %v4535 = vunpack.c.h.b16 %v571
    %v4536 = vunpack.c.l.b16 %v572
    %v4537 = vunpack.c.h.b16 %v572
    %v4538 = vunpack.c.l.b16 %v573
    %v4539 = vunpack.c.h.b16 %v573
    %v4540 = vunpack.c.l.b16 %v574
    %v4541 = vunpack.c.h.b16 %v574
    %v4542 = vunpack.c.l.b16 %v575
    %v4543 = vunpack.c.h.b16 %v575
    %v4544 = vunpack.c.l.b16 %v576
    %v4545 = vunpack.c.h.b16 %v576
    %v4546 = vunpack.c.l.b16 %v577
    %v4547 = vunpack.c.h.b16 %v577
    %v4548 = vunpack.c.l.b16 %v578
    %v4549 = vunpack.c.h.b16 %v578
    %v4550 = vunpack.c.l.b16 %v579
    %v4551 = vunpack.c.h.b16 %v579
    %v4552 = vunpack.c.l.b16 %v580
    %v4553 = vunpack.c.h.b16 %v580
    %v4554 = vunpack.c.l.b16 %v581
    %v4555 = vunpack.c.h.b16 %v581
    %v4556 = vunpack.c.l.b16 %v582
    %v4557 = vunpack.c.h.b16 %v582
    %v4558 = vunpack.c.l.b16 %v583
    %v4559 = vunpack.c.h.b16 %v583
    %v4560 = vunpack.c.l.b16 %v584
    %v4561 = vunpack.c.h.b16 %v584
    %v4562 = vunpack.c.l.b16 %v585
    %v4563 = vunpack.c.h.b16 %v585
    %v4564 = vunpack.c.l.b16 %v586
    %v4565 = vunpack.c.h.b16 %v586
    %v4566 = vunpack.c.l.b16 %v587
    %v4567 = vunpack.c.h.b16 %v587
    %v4568 = vunpack.c.l.b16 %v588
    %v4569 = vunpack.c.h.b16 %v588
    %v4570 = vunpack.c.l.b16 %v589
    %v4571 = vunpack.c.h.b16 %v589
    %v4572 = vunpack.c.l.b16 %v590
    %v4573 = vunpack.c.h.b16 %v590
    %v4574 = vunpack.c.l.b16 %v591
    %v4575 = vunpack.c.h.b16 %v591
    %v4576 = vunpack.c.l.b16 %v592
    %v4577 = vunpack.c.h.b16 %v592
    %v4578 = vunpack.c.l.b16 %v593
    %v4579 = vunpack.c.h.b16 %v593
    %v4580 = vunpack.c.l.b16 %v594
    %v4581 = vunpack.c.h.b16 %v594
    %v4582 = vunpack.c.l.b16 %v595
    %v4583 = vunpack.c.h.b16 %v595
    %v4584 = vunpack.c.l.b16 %v596
    %v4585 = vunpack.c.h.b16 %v596
    %v4586 = vunpack.c.l.b16 %v597
    %v4587 = vunpack.c.h.b16 %v597
    %v4588 = vunpack.c.l.b16 %v598
    %v4589 = vunpack.c.h.b16 %v598
    %v4590 = vunpack.c.l.b16 %v599
    %v4591 = vunpack.c.h.b16 %v599
    %v4592 = vunpack.c.l.b16 %v600
    %v4593 = vunpack.c.h.b16 %v600
    %v4594 = vunpack.c.l.b16 %v601
    %v4595 = vunpack.c.h.b16 %v601
    %v4596 = vunpack.c.l.b16 %v602
    %v4597 = vunpack.c.h.b16 %v602
    %v4598 = vunpack.c.l.b16 %v603
    %v4599 = vunpack.c.h.b16 %v603
    %v4600 = vunpack.c.l.b16 %v604
    %v4601 = vunpack.c.h.b16 %v604
    %v4602 = vunpack.c.l.b16 %v605
    %v4603 = vunpack.c.h.b16 %v605
    %v4604 = vunpack.c.l.b16 %v606
    %v4605 = vunpack.c.h.b16 %v606
    %v4606 = vunpack.c.l.b16 %v607
    %v4607 = vunpack.c.h.b16 %v607
    %v4608 = vunpack.c.l.b16 %v608
    %v4609 = vunpack.c.h.b16 %v608
    %v4610 = vunpack.c.l.b16 %v609
    %v4611 = vunpack.c.h.b16 %v609
    %v4612 = vunpack.c.l.b16 %v610
    %v4613 = vunpack.c.h.b16 %v610
    %v4614 = vunpack.c.l.b16 %v611
    %v4615 = vunpack.c.h.b16 %v611
    %v4616 = vunpack.c.l.b16 %v612
    %v4617 = vunpack.c.h.b16 %v612
    %v4618 = vunpack.c.l.b16 %v613
    %v4619 = vunpack.c.h.b16 %v613
    %v4620 = vunpack.c.l.b16 %v614
    %v4621 = vunpack.c.h.b16 %v614
    %v4622 = vunpack.c.l.b16 %v615
    %v4623 = vunpack.c.h.b16 %v615
    %v4624 = vunpack.c.l.b16 %v616
    %v4625 = vunpack.c.h.b16 %v616
    %v4626 = vunpack.c.l.b16 %v617
    %v4627 = vunpack.c.h.b16 %v617
    %v4628 = vunpack.c.l.b16 %v618
    %v4629 = vunpack.c.h.b16 %v618
    %v4630 = vunpack.c.l.b16 %v619
    %v4631 = vunpack.c.h.b16 %v619
    %v4632 = vunpack.c.l.b16 %v620
    %v4633 = vunpack.c.h.b16 %v620
    %v4634 = vunpack.c.l.b16 %v621
    %v4635 = vunpack.c.h.b16 %v621
    %v4636 = vunpack.c.l.b16 %v622
    %v4637 = vunpack.c.h.b16 %v622
    %v4638 = vunpack.c.l.b16 %v623
    %v4639 = vunpack.c.h.b16 %v623
    %v4640 = vunpack.c.l.b16 %v624
    %v4641 = vunpack.c.h.b16 %v624
    %v4642 = vunpack.c.l.b16 %v625
    %v4643 = vunpack.c.h.b16 %v625
    %v4644 = vunpack.c.l.b16 %v626
    %v4645 = vunpack.c.h.b16 %v626
    %v4646 = vunpack.c.l.b16 %v627
    %v4647 = vunpack.c.h.b16 %v627
    %v4648 = vunpack.c.l.b16 %v628
    %v4649 = vunpack.c.h.b16 %v628
    %v4650 = vunpack.c.l.b16 %v629
    %v4651 = vunpack.c.h.b16 %v629
    %v4652 = vunpack.c.l.b16 %v630
    %v4653 = vunpack.c.h.b16 %v630
    %v4654 = vunpack.c.l.b16 %v631
    %v4655 = vunpack.c.h.b16 %v631
    %v4656 = vunpack.c.l.b16 %v632
    %v4657 = vunpack.c.h.b16 %v632
    %v4658 = vunpack.c.l.b16 %v633
    %v4659 = vunpack.c.h.b16 %v633
    %v4660 = vunpack.c.l.b16 %v634
    %v4661 = vunpack.c.h.b16 %v634
    %v4662 = vunpack.c.l.b16 %v635
    %v4663 = vunpack.c.h.b16 %v635
    %v4664 = vunpack.c.l.b16 %v636
    %v4665 = vunpack.c.h.b16 %v636
    %v4666 = vunpack.c.l.b16 %v637
    %v4667 = vunpack.c.h.b16 %v637
    %v4668 = vunpack.c.l.b16 %v638
    %v4669 = vunpack.c.h.b16 %v638
    %v4670 = vunpack.c.l.b16 %v639
    %v4671 = vunpack.c.h.b16 %v639
    %v4672 = vunpack.c.l.b16 %v640
    %v4673 = vunpack.c.h.b16 %v640
    %v4674 = vunpack.c.l.b16 %v641
    %v4675 = vunpack.c.h.b16 %v641
    %v4676 = vunpack.c.l.b16 %v642
    %v4677 = vunpack.c.h.b16 %v642
    %v4678 = vunpack.c.l.b16 %v643
    %v4679 = vunpack.c.h.b16 %v643
    %v4680 = vunpack.c.l.b16 %v644
    %v4681 = vunpack.c.h.b16 %v644
    %v4682 = vunpack.c.l.b16 %v645
    %v4683 = vunpack.c.h.b16 %v645
    %v4684 = vunpack.c.l.b16 %v646
    %v4685 = vunpack.c.h.b16 %v646
    %v4686 = vunpack.c.l.b16 %v647
    %v4687 = vunpack.c.h.b16 %v647
    %v4688 = vunpack.c.l.b16 %v648
    %v4689 = vunpack.c.h.b16 %v648
    %v4690 = vunpack.c.l.b16 %v649
    %v4691 = vunpack.c.h.b16 %v649
    %v4692 = vunpack.c.l.b16 %v650
    %v4693 = vunpack.c.h.b16 %v650
    %v4694 = vunpack.c.l.b16 %v651
    %v4695 = vunpack.c.h.b16 %v651
    %v4696 = vunpack.c.l.b16 %v652
    %v4697 = vunpack.c.h.b16 %v652
    %v4698 = vunpack.c.l.b16 %v653
    %v4699 = vunpack.c.h.b16 %v653
    %v4700 = vunpack.c.l.b16 %v654
    %v4701 = vunpack.c.h.b16 %v654
    %v4702 = vunpack.c.l.b16 %v655
    %v4703 = vunpack.c.h.b16 %v655
    %v4704 = vunpack.c.l.b16 %v656
    %v4705 = vunpack.c.h.b16 %v656
    %v4706 = vunpack.c.l.b16 %v657
    %v4707 = vunpack.c.h.b16 %v657
    %v4708 = vunpack.c.l.b16 %v658
    %v4709 = vunpack.c.h.b16 %v658
    %v4710 = vunpack.c.l.b16 %v659
    %v4711 = vunpack.c.h.b16 %v659
    %v4712 = vunpack.c.l.b16 %v660
    %v4713 = vunpack.c.h.b16 %v660
    %v4714 = vunpack.c.l.b16 %v661
    %v4715 = vunpack.c.h.b16 %v661
    %v4716 = vunpack.c.l.b16 %v662
    %v4717 = vunpack.c.h.b16 %v662
    %v4718 = vunpack.c.l.b16 %v663
    %v4719 = vunpack.c.h.b16 %v663
    %v4720 = vunpack.c.l.b16 %v664
    %v4721 = vunpack.c.h.b16 %v664
    %v4722 = vunpack.c.l.b16 %v665
    %v4723 = vunpack.c.h.b16 %v665
    %v4724 = vunpack.c.l.b16 %v666
    %v4725 = vunpack.c.h.b16 %v666
    %v4726 = vunpack.c.l.b16 %v667
    %v4727 = vunpack.c.h.b16 %v667
    %v4728 = vunpack.c.l.b16 %v668
    %v4729 = vunpack.c.h.b16 %v668
    %v4730 = vunpack.c.l.b16 %v669
    %v4731 = vunpack.c.h.b16 %v669
    %v4732 = vunpack.c.l.b16 %v670
    %v4733 = vunpack.c.h.b16 %v670
    %v4734 = vunpack.c.l.b16 %v671
    %v4735 = vunpack.c.h.b16 %v671
    %v4736 = vunpack.c.l.b16 %v672
    %v4737 = vunpack.c.h.b16 %v672
    %v4738 = vunpack.c.l.b16 %v673
    %v4739 = vunpack.c.h.b16 %v673
    %v4740 = vunpack.c.l.b16 %v674
    %v4741 = vunpack.c.h.b16 %v674
    %v4742 = vunpack.c.l.b16 %v675
    %v4743 = vunpack.c.h.b16 %v675
    %v4744 = vunpack.c.l.b16 %v676
    %v4745 = vunpack.c.h.b16 %v676
    %v4746 = vunpack.c.l.b16 %v677
    %v4747 = vunpack.c.h.b16 %v677
    %v4748 = vunpack.c.l.b16 %v678
    %v4749 = vunpack.c.h.b16 %v678
    %v4750 = vunpack.c.l.b16 %v679
    %v4751 = vunpack.c.h.b16 %v679
    %v4752 = vunpack.c.l.b16 %v680
    %v4753 = vunpack.c.h.b16 %v680
    %v4754 = vunpack.c.l.b16 %v681
    %v4755 = vunpack.c.h.b16 %v681
    %v4756 = vunpack.c.l.b16 %v682
    %v4757 = vunpack.c.h.b16 %v682
    %v4758 = vunpack.c.l.b16 %v683
    %v4759 = vunpack.c.h.b16 %v683
    %v4760 = vunpack.c.l.b16 %v684
    %v4761 = vunpack.c.h.b16 %v684
    %v4762 = vunpack.c.l.b16 %v685
    %v4763 = vunpack.c.h.b16 %v685
    %v4764 = vunpack.c.l.b16 %v686
    %v4765 = vunpack.c.h.b16 %v686
    %v4766 = vunpack.c.l.b16 %v687
    %v4767 = vunpack.c.h.b16 %v687
    %v4768 = vunpack.c.l.b16 %v688
    %v4769 = vunpack.c.h.b16 %v688
    %v4770 = vunpack.c.l.b16 %v689
    %v4771 = vunpack.c.h.b16 %v689
    %v4772 = vunpack.c.l.b16 %v690
    %v4773 = vunpack.c.h.b16 %v690
    %v4774 = vunpack.c.l.b16 %v691
    %v4775 = vunpack.c.h.b16 %v691
    %v4776 = vunpack.c.l.b16 %v692
    %v4777 = vunpack.c.h.b16 %v692
    %v4778 = vunpack.c.l.b16 %v693
    %v4779 = vunpack.c.h.b16 %v693
    %v4780 = vunpack.c.l.b16 %v694
    %v4781 = vunpack.c.h.b16 %v694
    %v4782 = vunpack.c.l.b16 %v695
    %v4783 = vunpack.c.h.b16 %v695
    %v4784 = vunpack.c.l.b16 %v696
    %v4785 = vunpack.c.h.b16 %v696
    %v4786 = vunpack.c.l.b16 %v697
    %v4787 = vunpack.c.h.b16 %v697
    %v4788 = vunpack.c.l.b16 %v698
    %v4789 = vunpack.c.h.b16 %v698
    %v4790 = vunpack.c.l.b16 %v699
    %v4791 = vunpack.c.h.b16 %v699
    %v4792 = vunpack.c.l.b16 %v700
    %v4793 = vunpack.c.h.b16 %v700
    %v4794 = vunpack.c.l.b16 %v701
    %v4795 = vunpack.c.h.b16 %v701
    %v4796 = vunpack.c.l.b16 %v702
    %v4797 = vunpack.c.h.b16 %v702
    %v4798 = vunpack.c.l.b16 %v703
    %v4799 = vunpack.c.h.b16 %v703
    %v4800 = vunpack.c.l.b16 %v704
    %v4801 = vunpack.c.h.b16 %v704
    %v4802 = vunpack.c.l.b16 %v705
    %v4803 = vunpack.c.h.b16 %v705
    %v4804 = vunpack.c.l.b16 %v706
    %v4805 = vunpack.c.h.b16 %v706
    %v4806 = vunpack.c.l.b16 %v707
    %v4807 = vunpack.c.h.b16 %v707
    %v4808 = vunpack.c.l.b16 %v708
    %v4809 = vunpack.c.h.b16 %v708
    %v4810 = vunpack.c.l.b16 %v709
    %v4811 = vunpack.c.h.b16 %v709
    %v4812 = vunpack.c.l.b16 %v710
    %v4813 = vunpack.c.h.b16 %v710
    %v4814 = vunpack.c.l.b16 %v711
    %v4815 = vunpack.c.h.b16 %v711
    %v4816 = vunpack.c.l.b16 %v712
    %v4817 = vunpack.c.h.b16 %v712
    %v4818 = vunpack.c.l.b16 %v713
    %v4819 = vunpack.c.h.b16 %v713
    %v4820 = vunpack.c.l.b16 %v714
    %v4821 = vunpack.c.h.b16 %v714
    %v4822 = vunpack.c.l.b16 %v715
    %v4823 = vunpack.c.h.b16 %v715
    %v4824 = vunpack.c.l.b16 %v716
    %v4825 = vunpack.c.h.b16 %v716
    %v4826 = vunpack.c.l.b16 %v717
    %v4827 = vunpack.c.h.b16 %v717
    %v4828 = vunpack.c.l.b16 %v718
    %v4829 = vunpack.c.h.b16 %v718
    %v4830 = vunpack.c.l.b16 %v719
    %v4831 = vunpack.c.h.b16 %v719
    %v4832 = vunpack.c.l.b16 %v720
    %v4833 = vunpack.c.h.b16 %v720
    %v4834 = vunpack.c.l.b16 %v721
    %v4835 = vunpack.c.h.b16 %v721
    %v4836 = vunpack.c.l.b16 %v722
    %v4837 = vunpack.c.h.b16 %v722
    %v4838 = vunpack.c.l.b16 %v723
    %v4839 = vunpack.c.h.b16 %v723
    %v4840 = vunpack.c.l.b16 %v724
    %v4841 = vunpack.c.h.b16 %v724
    %v4842 = vunpack.c.l.b16 %v725
    %v4843 = vunpack.c.h.b16 %v725
    %v4844 = vunpack.c.l.b16 %v726
    %v4845 = vunpack.c.h.b16 %v726
    %v4846 = vunpack.c.l.b16 %v727
    %v4847 = vunpack.c.h.b16 %v727
    %v4848 = vunpack.c.l.b16 %v728
    %v4849 = vunpack.c.h.b16 %v728
    %v4850 = vunpack.c.l.b16 %v729
    %v4851 = vunpack.c.h.b16 %v729
    %v4852 = vunpack.c.l.b16 %v730
    %v4853 = vunpack.c.h.b16 %v730
    %v4854 = vunpack.c.l.b16 %v731
    %v4855 = vunpack.c.h.b16 %v731
    %v4856 = vunpack.c.l.b16 %v732
    %v4857 = vunpack.c.h.b16 %v732
    %v4858 = vunpack.c.l.b16 %v733
    %v4859 = vunpack.c.h.b16 %v733
    %v4860 = vunpack.c.l.b16 %v734
    %v4861 = vunpack.c.h.b16 %v734
    %v4862 = vunpack.c.l.b16 %v735
    %v4863 = vunpack.c.h.b16 %v735
    %v4864 = vunpack.c.l.b16 %v736
    %v4865 = vunpack.c.h.b16 %v736
    %v4866 = vunpack.c.l.b16 %v737
    %v4867 = vunpack.c.h.b16 %v737
    %v4868 = vunpack.c.l.b16 %v738
    %v4869 = vunpack.c.h.b16 %v738
    %v4870 = vunpack.c.l.b16 %v739
    %v4871 = vunpack.c.h.b16 %v739
    %v4872 = vunpack.c.l.b16 %v740
    %v4873 = vunpack.c.h.b16 %v740
    %v4874 = vunpack.c.l.b16 %v741
    %v4875 = vunpack.c.h.b16 %v741
    %v4876 = vunpack.c.l.b16 %v742
    %v4877 = vunpack.c.h.b16 %v742
    %v4878 = vunpack.c.l.b16 %v743
    %v4879 = vunpack.c.h.b16 %v743
    %v4880 = vunpack.c.l.b16 %v744
    %v4881 = vunpack.c.h.b16 %v744
    %v4882 = vunpack.c.l.b16 %v745
    %v4883 = vunpack.c.h.b16 %v745
    %v4884 = vunpack.c.l.b16 %v746
    %v4885 = vunpack.c.h.b16 %v746
    %v4886 = vunpack.c.l.b16 %v747
    %v4887 = vunpack.c.h.b16 %v747
    %v4888 = vunpack.c.l.b16 %v748
    %v4889 = vunpack.c.h.b16 %v748
    %v4890 = vunpack.c.l.b16 %v749
    %v4891 = vunpack.c.h.b16 %v749
    %v4892 = vunpack.c.l.b16 %v750
    %v4893 = vunpack.c.h.b16 %v750
    %v4894 = vunpack.c.l.b16 %v751
    %v4895 = vunpack.c.h.b16 %v751
    %v4896 = vunpack.c.l.b16 %v752
    %v4897 = vunpack.c.h.b16 %v752
    %v4898 = vunpack.c.l.b16 %v753
    %v4899 = vunpack.c.h.b16 %v753
    %v4900 = vunpack.c.l.b16 %v754
    %v4901 = vunpack.c.h.b16 %v754
    %v4902 = vunpack.c.l.b16 %v755
    %v4903 = vunpack.c.h.b16 %v755
    %v4904 = vunpack.c.l.b16 %v756
    %v4905 = vunpack.c.h.b16 %v756
    %v4906 = vunpack.c.l.b16 %v757
    %v4907 = vunpack.c.h.b16 %v757
    %v4908 = vunpack.c.l.b16 %v758
    %v4909 = vunpack.c.h.b16 %v758
    %v4910 = vunpack.c.l.b16 %v759
    %v4911 = vunpack.c.h.b16 %v759
    %v4912 = vunpack.c.l.b16 %v760
    %v4913 = vunpack.c.h.b16 %v760
    %v4914 = vunpack.c.l.b16 %v761
    %v4915 = vunpack.c.h.b16 %v761
    %v4916 = vunpack.c.l.b16 %v762
    %v4917 = vunpack.c.h.b16 %v762
    %v4918 = vunpack.c.l.b16 %v763
    %v4919 = vunpack.c.h.b16 %v763
    %v4920 = vunpack.c.l.b16 %v764
    %v4921 = vunpack.c.h.b16 %v764
    %v4922 = vunpack.c.l.b16 %v765
    %v4923 = vunpack.c.h.b16 %v765
    %v4924 = vunpack.c.l.b16 %v766
    %v4925 = vunpack.c.h.b16 %v766
    %v4926 = vunpack.c.l.b16 %v767
    %v4927 = vunpack.c.h.b16 %v767
    %v4928 = vunpack.c.l.b16 %v768
    %v4929 = vunpack.c.h.b16 %v768
    %v4930 = vunpack.c.l.b16 %v769
    %v4931 = vunpack.c.h.b16 %v769
    %v4932 = vunpack.c.l.b16 %v770
    %v4933 = vunpack.c.h.b16 %v770
    %v4934 = vunpack.c.l.b16 %v771
    %v4935 = vunpack.c.h.b16 %v771
    %v4936 = vunpack.c.l.b16 %v772
    %v4937 = vunpack.c.h.b16 %v772
    %v4938 = vunpack.c.l.b16 %v773
    %v4939 = vunpack.c.h.b16 %v773
    %v4940 = vunpack.c.l.b16 %v774
    %v4941 = vunpack.c.h.b16 %v774
    %v4942 = vunpack.c.l.b16 %v775
    %v4943 = vunpack.c.h.b16 %v775
    %v4944 = vunpack.c.l.b16 %v776
    %v4945 = vunpack.c.h.b16 %v776
    %v4946 = vunpack.c.l.b16 %v777
    %v4947 = vunpack.c.h.b16 %v777
    %v4948 = vunpack.c.l.b16 %v778
    %v4949 = vunpack.c.h.b16 %v778
    %v4950 = vunpack.c.l.b16 %v779
    %v4951 = vunpack.c.h.b16 %v779
    %v4952 = vunpack.c.l.b16 %v780
    %v4953 = vunpack.c.h.b16 %v780
    %v4954 = vunpack.c.l.b16 %v781
    %v4955 = vunpack.c.h.b16 %v781
    %v4956 = vunpack.c.l.b16 %v782
    %v4957 = vunpack.c.h.b16 %v782
    %v4958 = vunpack.c.l.b16 %v783
    %v4959 = vunpack.c.h.b16 %v783
    %v4960 = vunpack.c.l.b16 %v784
    %v4961 = vunpack.c.h.b16 %v784
    %v4962 = vunpack.c.l.b16 %v785
    %v4963 = vunpack.c.h.b16 %v785
    %v4964 = vunpack.c.l.b16 %v786
    %v4965 = vunpack.c.h.b16 %v786
    %v4966 = vunpack.c.l.b16 %v787
    %v4967 = vunpack.c.h.b16 %v787
    %v4968 = vunpack.c.l.b16 %v788
    %v4969 = vunpack.c.h.b16 %v788
    %v4970 = vunpack.c.l.b16 %v789
    %v4971 = vunpack.c.h.b16 %v789
    %v4972 = vunpack.c.l.b16 %v790
    %v4973 = vunpack.c.h.b16 %v790
    %v4974 = vunpack.c.l.b16 %v791
    %v4975 = vunpack.c.h.b16 %v791
    %v4976 = vunpack.c.l.b16 %v792
    %v4977 = vunpack.c.h.b16 %v792
    %v4978 = vunpack.c.l.b16 %v793
    %v4979 = vunpack.c.h.b16 %v793
    %v4980 = vunpack.c.l.b16 %v794
    %v4981 = vunpack.c.h.b16 %v794
    %v4982 = vunpack.c.l.b16 %v795
    %v4983 = vunpack.c.h.b16 %v795
    %v4984 = vunpack.c.l.b16 %v796
    %v4985 = vunpack.c.h.b16 %v796
    %v4986 = vunpack.c.l.b16 %v797
    %v4987 = vunpack.c.h.b16 %v797
    %v4988 = vunpack.c.l.b16 %v798
    %v4989 = vunpack.c.h.b16 %v798
    %v4990 = vunpack.c.l.b16 %v799
    %v4991 = vunpack.c.h.b16 %v799
    %v4992 = vunpack.c.l.b16 %v800
    %v4993 = vunpack.c.h.b16 %v800
    %v4994 = vunpack.c.l.b16 %v801
    %v4995 = vunpack.c.h.b16 %v801
    %v4996 = vunpack.c.l.b16 %v802
    %v4997 = vunpack.c.h.b16 %v802
    %v4998 = vunpack.c.l.b16 %v803
    %v4999 = vunpack.c.h.b16 %v803
    %v5000 = vunpack.c.l.b16 %v804
    %v5001 = vunpack.c.h.b16 %v804
    %v5002 = vunpack.c.l.b16 %v805
    %v5003 = vunpack.c.h.b16 %v805
    %v5004 = vunpack.c.l.b16 %v806
    %v5005 = vunpack.c.h.b16 %v806
    %v5006 = vunpack.c.l.b16 %v807
    %v5007 = vunpack.c.h.b16 %v807
    %v5008 = vunpack.c.l.b16 %v808
    %v5009 = vunpack.c.h.b16 %v808
    %v5010 = vunpack.c.l.b16 %v809
    %v5011 = vunpack.c.h.b16 %v809
    %v5012 = vunpack.c.l.b16 %v810
    %v5013 = vunpack.c.h.b16 %v810
    %v5014 = vunpack.c.l.b16 %v811
    %v5015 = vunpack.c.h.b16 %v811
    %v5016 = vunpack.c.l.b16 %v812
    %v5017 = vunpack.c.h.b16 %v812
    %v5018 = vunpack.c.l.b16 %v813
    %v5019 = vunpack.c.h.b16 %v813
    %v5020 = vunpack.c.l.b16 %v814
    %v5021 = vunpack.c.h.b16 %v814
    %v5022 = vunpack.c.l.b16 %v815
    %v5023 = vunpack.c.h.b16 %v815
    %v5024 = vunpack.c.l.b16 %v816
    %v5025 = vunpack.c.h.b16 %v816
    %v5026 = vunpack.c.l.b16 %v817
    %v5027 = vunpack.c.h.b16 %v817
    %v5028 = vunpack.c.l.b16 %v818
    %v5029 = vunpack.c.h.b16 %v818
    %v5030 = vunpack.c.l.b16 %v819
    %v5031 = vunpack.c.h.b16 %v819
    %v5032 = vunpack.c.l.b16 %v820
    %v5033 = vunpack.c.h.b16 %v820
    %v5034 = vunpack.c.l.b16 %v821
    %v5035 = vunpack.c.h.b16 %v821
    %v5036 = vunpack.c.l.b16 %v822
    %v5037 = vunpack.c.h.b16 %v822
    %v5038 = vunpack.c.l.b16 %v823
    %v5039 = vunpack.c.h.b16 %v823
    %v5040 = vunpack.c.l.b16 %v824
    %v5041 = vunpack.c.h.b16 %v824
    %v5042 = vunpack.c.l.b16 %v825
    %v5043 = vunpack.c.h.b16 %v825
    %v5044 = vunpack.c.l.b16 %v826
    %v5045 = vunpack.c.h.b16 %v826
    %v5046 = vunpack.c.l.b16 %v827
    %v5047 = vunpack.c.h.b16 %v827
    %v5048 = vunpack.c.l.b16 %v828
    %v5049 = vunpack.c.h.b16 %v828
    %v5050 = vunpack.c.l.b16 %v829
    %v5051 = vunpack.c.h.b16 %v829
    %v5052 = vunpack.c.l.b16 %v830
    %v5053 = vunpack.c.h.b16 %v830
    %v5054 = vunpack.c.l.b16 %v831
    %v5055 = vunpack.c.h.b16 %v831
    %v5056 = vunpack.c.l.b16 %v832
    %v5057 = vunpack.c.h.b16 %v832
    %v5058 = vunpack.c.l.b16 %v833
    %v5059 = vunpack.c.h.b16 %v833
    %v5060 = vunpack.c.l.b16 %v834
    %v5061 = vunpack.c.h.b16 %v834
    %v5062 = vunpack.c.l.b16 %v835
    %v5063 = vunpack.c.h.b16 %v835
    %v5064 = vunpack.c.l.b16 %v836
    %v5065 = vunpack.c.h.b16 %v836
    %v5066 = vunpack.c.l.b16 %v837
    %v5067 = vunpack.c.h.b16 %v837
    %v5068 = vunpack.c.l.b16 %v838
    %v5069 = vunpack.c.h.b16 %v838
    %v5070 = vunpack.c.l.b16 %v839
    %v5071 = vunpack.c.h.b16 %v839
    %v5072 = vunpack.c.l.b16 %v840
    %v5073 = vunpack.c.h.b16 %v840
    %v5074 = vunpack.c.l.b16 %v841
    %v5075 = vunpack.c.h.b16 %v841
    %v5076 = vunpack.c.l.b16 %v842
    %v5077 = vunpack.c.h.b16 %v842
    %v5078 = vunpack.c.l.b16 %v843
    %v5079 = vunpack.c.h.b16 %v843
    %v5080 = vunpack.c.l.b16 %v844
    %v5081 = vunpack.c.h.b16 %v844
    %v5082 = vunpack.c.l.b16 %v845
    %v5083 = vunpack.c.h.b16 %v845
    %v5084 = vunpack.c.l.b16 %v846
    %v5085 = vunpack.c.h.b16 %v846
    %v5086 = vunpack.c.l.b16 %v847
    %v5087 = vunpack.c.h.b16 %v847
    %v5088 = vunpack.c.l.b16 %v848
    %v5089 = vunpack.c.h.b16 %v848
    %v5090 = vunpack.c.l.b16 %v849
    %v5091 = vunpack.c.h.b16 %v849
    %v5092 = vunpack.c.l.b16 %v850
    %v5093 = vunpack.c.h.b16 %v850
    %v5094 = vunpack.c.l.b16 %v851
    %v5095 = vunpack.c.h.b16 %v851
    %v5096 = vunpack.c.l.b16 %v852
    %v5097 = vunpack.c.h.b16 %v852
    %v5098 = vunpack.c.l.b16 %v853
    %v5099 = vunpack.c.h.b16 %v853
    %v5100 = vunpack.c.l.b16 %v854
    %v5101 = vunpack.c.h.b16 %v854
    %v5102 = vunpack.c.l.b16 %v855
    %v5103 = vunpack.c.h.b16 %v855
    %v5104 = vunpack.c.l.b16 %v856
    %v5105 = vunpack.c.h.b16 %v856
    %v5106 = vunpack.c.l.b16 %v857
    %v5107 = vunpack.c.h.b16 %v857
    %v5108 = vunpack.c.l.b16 %v858
    %v5109 = vunpack.c.h.b16 %v858
    %v5110 = vunpack.c.l.b16 %v859
    %v5111 = vunpack.c.h.b16 %v859
    %v5112 = vunpack.c.l.b16 %v860
    %v5113 = vunpack.c.h.b16 %v860
    %v5114 = vunpack.c.l.b16 %v861
    %v5115 = vunpack.c.h.b16 %v861
    %v5116 = vunpack.c.l.b16 %v862
    %v5117 = vunpack.c.h.b16 %v862
    %v5118 = vunpack.c.l.b16 %v863
    %v5119 = vunpack.c.h.b16 %v863
    %v5120 = vunpack.c.l.b16 %v864
    %v5121 = vunpack.c.h.b16 %v864
    %v5122 = vunpack.c.l.b16 %v865
    %v5123 = vunpack.c.h.b16 %v865
    %v5124 = vunpack.c.l.b16 %v866
    %v5125 = vunpack.c.h.b16 %v866
    %v5126 = vunpack.c.l.b16 %v867
    %v5127 = vunpack.c.h.b16 %v867
    %v5128 = vunpack.c.l.b16 %v868
    %v5129 = vunpack.c.h.b16 %v868
    %v5130 = vunpack.c.l.b16 %v869
    %v5131 = vunpack.c.h.b16 %v869
    %v5132 = vunpack.c.l.b16 %v870
    %v5133 = vunpack.c.h.b16 %v870
    %v5134 = vunpack.c.l.b16 %v871
    %v5135 = vunpack.c.h.b16 %v871
    %v5136 = vunpack.c.l.b16 %v872
    %v5137 = vunpack.c.h.b16 %v872
    %v5138 = vunpack.c.l.b16 %v873
    %v5139 = vunpack.c.h.b16 %v873
    %v5140 = vunpack.c.l.b16 %v874
    %v5141 = vunpack.c.h.b16 %v874
    %v5142 = vunpack.c.l.b16 %v875
    %v5143 = vunpack.c.h.b16 %v875
    %v5144 = vunpack.c.l.b16 %v876
    %v5145 = vunpack.c.h.b16 %v876
    %v5146 = vunpack.c.l.b16 %v877
    %v5147 = vunpack.c.h.b16 %v877
    %v5148 = vunpack.c.l.b16 %v878
    %v5149 = vunpack.c.h.b16 %v878
    %v5150 = vunpack.c.l.b16 %v879
    %v5151 = vunpack.c.h.b16 %v879
    %v5152 = vunpack.c.l.b16 %v880
    %v5153 = vunpack.c.h.b16 %v880
    %v5154 = vunpack.c.l.b16 %v881
    %v5155 = vunpack.c.h.b16 %v881
    %v5156 = vunpack.c.l.b16 %v882
    %v5157 = vunpack.c.h.b16 %v882
    %v5158 = vunpack.c.l.b16 %v883
    %v5159 = vunpack.c.h.b16 %v883
    %v5160 = vunpack.c.l.b16 %v884
    %v5161 = vunpack.c.h.b16 %v884
    %v5162 = vunpack.c.l.b16 %v885
    %v5163 = vunpack.c.h.b16 %v885
    %v5164 = vunpack.c.l.b16 %v886
    %v5165 = vunpack.c.h.b16 %v886
    %v5166 = vunpack.c.l.b16 %v887
    %v5167 = vunpack.c.h.b16 %v887
    %v5168 = vunpack.c.l.b16 %v888
    %v5169 = vunpack.c.h.b16 %v888
    %v5170 = vunpack.c.l.b16 %v889
    %v5171 = vunpack.c.h.b16 %v889
    %v5172 = vunpack.c.l.b16 %v890
    %v5173 = vunpack.c.h.b16 %v890
    %v5174 = vunpack.c.l.b16 %v891
    %v5175 = vunpack.c.h.b16 %v891
    %v5176 = vunpack.c.l.b16 %v892
    %v5177 = vunpack.c.h.b16 %v892
    %v5178 = vunpack.c.l.b16 %v893
    %v5179 = vunpack.c.h.b16 %v893
    %v5180 = vunpack.c.l.b16 %v894
    %v5181 = vunpack.c.h.b16 %v894
    %v5182 = vunpack.c.l.b16 %v895
    %v5183 = vunpack.c.h.b16 %v895
    %v5184 = vunpack.c.l.b16 %v896
    %v5185 = vunpack.c.h.b16 %v896
    %v5186 = vunpack.c.l.b16 %v897
    %v5187 = vunpack.c.h.b16 %v897
    %v5188 = vunpack.c.l.b16 %v898
    %v5189 = vunpack.c.h.b16 %v898
    %v5190 = vunpack.c.l.b16 %v899
    %v5191 = vunpack.c.h.b16 %v899
    %v5192 = vunpack.c.l.b16 %v900
    %v5193 = vunpack.c.h.b16 %v900
    %v5194 = vunpack.c.l.b16 %v901
    %v5195 = vunpack.c.h.b16 %v901
    %v5196 = vunpack.c.l.b16 %v902
    %v5197 = vunpack.c.h.b16 %v902
    %v5198 = vunpack.c.l.b16 %v903
    %v5199 = vunpack.c.h.b16 %v903
    %v5200 = vunpack.c.l.b16 %v904
    %v5201 = vunpack.c.h.b16 %v904
    %v5202 = vunpack.c.l.b16 %v905
    %v5203 = vunpack.c.h.b16 %v905
    %v5204 = vunpack.c.l.b16 %v906
    %v5205 = vunpack.c.h.b16 %v906
    %v5206 = vunpack.c.l.b16 %v907
    %v5207 = vunpack.c.h.b16 %v907
    %v5208 = vunpack.c.l.b16 %v908
    %v5209 = vunpack.c.h.b16 %v908
    %v5210 = vunpack.c.l.b16 %v909
    %v5211 = vunpack.c.h.b16 %v909
    %v5212 = vunpack.c.l.b16 %v910
    %v5213 = vunpack.c.h.b16 %v910
    %v5214 = vunpack.c.l.b16 %v911
    %v5215 = vunpack.c.h.b16 %v911
    %v5216 = vunpack.c.l.b16 %v912
    %v5217 = vunpack.c.h.b16 %v912
    %v5218 = vunpack.c.l.b16 %v913
    %v5219 = vunpack.c.h.b16 %v913
    %v5220 = vunpack.c.l.b16 %v914
    %v5221 = vunpack.c.h.b16 %v914
    %v5222 = vunpack.c.l.b16 %v915
    %v5223 = vunpack.c.h.b16 %v915
    %v5224 = vunpack.c.l.b16 %v916
    %v5225 = vunpack.c.h.b16 %v916
    %v5226 = vunpack.c.l.b16 %v917
    %v5227 = vunpack.c.h.b16 %v917
    %v5228 = vunpack.c.l.b16 %v918
    %v5229 = vunpack.c.h.b16 %v918
    %v5230 = vunpack.c.l.b16 %v919
    %v5231 = vunpack.c.h.b16 %v919
    %v5232 = vunpack.c.l.b16 %v920
    %v5233 = vunpack.c.h.b16 %v920
    %v5234 = vunpack.c.l.b16 %v921
    %v5235 = vunpack.c.h.b16 %v921
    %v5236 = vunpack.c.l.b16 %v922
    %v5237 = vunpack.c.h.b16 %v922
    %v5238 = vunpack.c.l.b16 %v923
    %v5239 = vunpack.c.h.b16 %v923
    %v5240 = vunpack.c.l.b16 %v924
    %v5241 = vunpack.c.h.b16 %v924
    %v5242 = vunpack.c.l.b16 %v925
    %v5243 = vunpack.c.h.b16 %v925
    %v5244 = vunpack.c.l.b16 %v926
    %v5245 = vunpack.c.h.b16 %v926
    %v5246 = vunpack.c.l.b16 %v927
    %v5247 = vunpack.c.h.b16 %v927
    %v5248 = vunpack.c.l.b16 %v928
    %v5249 = vunpack.c.h.b16 %v928
    %v5250 = vunpack.c.l.b16 %v929
    %v5251 = vunpack.c.h.b16 %v929
    %v5252 = vunpack.c.l.b16 %v930
    %v5253 = vunpack.c.h.b16 %v930
    %v5254 = vunpack.c.l.b16 %v931
    %v5255 = vunpack.c.h.b16 %v931
    %v5256 = vunpack.c.l.b16 %v932
    %v5257 = vunpack.c.h.b16 %v932
    %v5258 = vunpack.c.l.b16 %v933
    %v5259 = vunpack.c.h.b16 %v933
    %v5260 = vunpack.c.l.b16 %v934
    %v5261 = vunpack.c.h.b16 %v934
    %v5262 = vunpack.c.l.b16 %v935
    %v5263 = vunpack.c.h.b16 %v935
    %v5264 = vunpack.c.l.b16 %v936
    %v5265 = vunpack.c.h.b16 %v936
    %v5266 = vunpack.c.l.b16 %v937
    %v5267 = vunpack.c.h.b16 %v937
    %v5268 = vunpack.c.l.b16 %v938
    %v5269 = vunpack.c.h.b16 %v938
    %v5270 = vunpack.c.l.b16 %v939
    %v5271 = vunpack.c.h.b16 %v939
    %v5272 = vunpack.c.l.b16 %v940
    %v5273 = vunpack.c.h.b16 %v940
    %v5274 = vunpack.c.l.b16 %v941
    %v5275 = vunpack.c.h.b16 %v941
    %v5276 = vunpack.c.l.b16 %v942
    %v5277 = vunpack.c.h.b16 %v942
    %v5278 = vunpack.c.l.b16 %v943
    %v5279 = vunpack.c.h.b16 %v943
    %v5280 = vunpack.c.l.b16 %v944
    %v5281 = vunpack.c.h.b16 %v944
    %v5282 = vunpack.c.l.b16 %v945
    %v5283 = vunpack.c.h.b16 %v945
    %v5284 = vunpack.c.l.b16 %v946
    %v5285 = vunpack.c.h.b16 %v946
    %v5286 = vunpack.c.l.b16 %v947
    %v5287 = vunpack.c.h.b16 %v947
    %v5288 = vunpack.c.l.b16 %v948
    %v5289 = vunpack.c.h.b16 %v948
    %v5290 = vunpack.c.l.b16 %v949
    %v5291 = vunpack.c.h.b16 %v949
    %v5292 = vunpack.c.l.b16 %v950
    %v5293 = vunpack.c.h.b16 %v950
    %v5294 = vunpack.c.l.b16 %v951
    %v5295 = vunpack.c.h.b16 %v951
    %v5296 = vunpack.c.l.b16 %v952
    %v5297 = vunpack.c.h.b16 %v952
    %v5298 = vunpack.c.l.b16 %v953
    %v5299 = vunpack.c.h.b16 %v953
    %v5300 = vunpack.c.l.b16 %v954
    %v5301 = vunpack.c.h.b16 %v954
    %v5302 = vunpack.c.l.b16 %v955
    %v5303 = vunpack.c.h.b16 %v955
    %v5304 = vunpack.c.l.b16 %v956
    %v5305 = vunpack.c.h.b16 %v956
    %v5306 = vunpack.c.l.b16 %v957
    %v5307 = vunpack.c.h.b16 %v957
    %v5308 = vunpack.c.l.b16 %v958
    %v5309 = vunpack.c.h.b16 %v958
    %v5310 = vunpack.c.l.b16 %v959
    %v5311 = vunpack.c.h.b16 %v959
    %v5312 = vunpack.c.l.b16 %v960
    %v5313 = vunpack.c.h.b16 %v960
    %v5314 = vunpack.c.l.b16 %v961
    %v5315 = vunpack.c.h.b16 %v961
    %v5316 = vunpack.c.l.b16 %v962
    %v5317 = vunpack.c.h.b16 %v962
    %v5318 = vunpack.c.l.b16 %v963
    %v5319 = vunpack.c.h.b16 %v963
    %v5320 = vunpack.c.l.b16 %v964
    %v5321 = vunpack.c.h.b16 %v964
    %v5322 = vunpack.c.l.b16 %v965
    %v5323 = vunpack.c.h.b16 %v965
    %v5324 = vunpack.c.l.b16 %v966
    %v5325 = vunpack.c.h.b16 %v966
    %v5326 = vunpack.c.l.b16 %v967
    %v5327 = vunpack.c.h.b16 %v967
    %v5328 = vunpack.c.l.b16 %v968
    %v5329 = vunpack.c.h.b16 %v968
    %v5330 = vunpack.c.l.b16 %v969
    %v5331 = vunpack.c.h.b16 %v969
    %v5332 = vunpack.c.l.b16 %v970
    %v5333 = vunpack.c.h.b16 %v970
    %v5334 = vunpack.c.l.b16 %v971
    %v5335 = vunpack.c.h.b16 %v971
    %v5336 = vunpack.c.l.b16 %v972
    %v5337 = vunpack.c.h.b16 %v972
    %v5338 = vunpack.c.l.b16 %v973
    %v5339 = vunpack.c.h.b16 %v973
    %v5340 = vunpack.c.l.b16 %v974
    %v5341 = vunpack.c.h.b16 %v974
    %v5342 = vunpack.c.l.b16 %v975
    %v5343 = vunpack.c.h.b16 %v975
    %v5344 = vunpack.c.l.b16 %v976
    %v5345 = vunpack.c.h.b16 %v976
    %v5346 = vunpack.c.l.b16 %v977
    %v5347 = vunpack.c.h.b16 %v977
    %v5348 = vunpack.c.l.b16 %v978
    %v5349 = vunpack.c.h.b16 %v978
    %v5350 = vunpack.c.l.b16 %v979
    %v5351 = vunpack.c.h.b16 %v979
    %v5352 = vunpack.c.l.b16 %v980
    %v5353 = vunpack.c.h.b16 %v980
    %v5354 = vunpack.c.l.b16 %v981
    %v5355 = vunpack.c.h.b16 %v981
    %v5356 = vunpack.c.l.b16 %v982
    %v5357 = vunpack.c.h.b16 %v982
    %v5358 = vunpack.c.l.b16 %v983
    %v5359 = vunpack.c.h.b16 %v983
    %v5360 = vunpack.c.l.b16 %v984
    %v5361 = vunpack.c.h.b16 %v984
    %v5362 = vunpack.c.l.b16 %v985
    %v5363 = vunpack.c.h.b16 %v985
    %v5364 = vunpack.c.l.b16 %v986
    %v5365 = vunpack.c.h.b16 %v986
    %v5366 = vunpack.c.l.b16 %v987
    %v5367 = vunpack.c.h.b16 %v987
    %v5368 = vunpack.c.l.b16 %v988
    %v5369 = vunpack.c.h.b16 %v988
    %v5370 = vunpack.c.l.b16 %v989
    %v5371 = vunpack.c.h.b16 %v989
    %v5372 = vunpack.c.l.b16 %v990
    %v5373 = vunpack.c.h.b16 %v990
    %v5374 = vunpack.c.l.b16 %v991
    %v5375 = vunpack.c.h.b16 %v991
    %v5376 = vunpack.c.l.b16 %v992
    %v5377 = vunpack.c.h.b16 %v992
    %v5378 = vunpack.c.l.b16 %v993
    %v5379 = vunpack.c.h.b16 %v993
    %v5380 = vunpack.c.l.b16 %v994
    %v5381 = vunpack.c.h.b16 %v994
    %v5382 = vunpack.c.l.b16 %v995
    %v5383 = vunpack.c.h.b16 %v995
    %v5384 = vunpack.c.l.b16 %v996
    %v5385 = vunpack.c.h.b16 %v996
    %v5386 = vunpack.c.l.b16 %v997
    %v5387 = vunpack.c.h.b16 %v997
    %v5388 = vunpack.c.l.b16 %v998
    %v5389 = vunpack.c.h.b16 %v998
    %v5390 = vunpack.c.l.b16 %v999
    %v5391 = vunpack.c.h.b16 %v999
    %v5392 = vunpack.c.l.b16 %v1000
    %v5393 = vunpack.c.h.b16 %v1000
    %v5394 = vunpack.c.l.b16 %v1001
    %v5395 = vunpack.c.h.b16 %v1001
    %v5396 = vunpack.c.l.b16 %v1002
    %v5397 = vunpack.c.h.b16 %v1002
    %v5398 = vunpack.c.l.b16 %v1003
    %v5399 = vunpack.c.h.b16 %v1003
    %v5400 = vunpack.c.l.b16 %v1004
    %v5401 = vunpack.c.h.b16 %v1004
    %v5402 = vunpack.c.l.b16 %v1005
    %v5403 = vunpack.c.h.b16 %v1005
    %v5404 = vunpack.c.l.b16 %v1006
    %v5405 = vunpack.c.h.b16 %v1006
    %v5406 = vunpack.c.l.b16 %v1007
    %v5407 = vunpack.c.h.b16 %v1007
    %v5408 = vunpack.c.l.b16 %v1008
    %v5409 = vunpack.c.h.b16 %v1008
    %v5410 = vunpack.c.l.b16 %v1009
    %v5411 = vunpack.c.h.b16 %v1009
    %v5412 = vunpack.c.l.b16 %v1010
    %v5413 = vunpack.c.h.b16 %v1010
    %v5414 = vunpack.c.l.b16 %v1011
    %v5415 = vunpack.c.h.b16 %v1011
    %v5416 = vunpack.c.l.b16 %v1012
    %v5417 = vunpack.c.h.b16 %v1012
    %v5418 = vunpack.c.l.b16 %v1013
    %v5419 = vunpack.c.h.b16 %v1013
    %v5420 = vunpack.c.l.b16 %v1014
    %v5421 = vunpack.c.h.b16 %v1014
    %v5422 = vunpack.c.l.b16 %v1015
    %v5423 = vunpack.c.h.b16 %v1015
    %v5424 = vunpack.c.l.b16 %v1016
    %v5425 = vunpack.c.h.b16 %v1016
    %v5426 = vunpack.c.l.b16 %v1017
    %v5427 = vunpack.c.h.b16 %v1017
    %v5428 = vunpack.c.l.b16 %v1018
    %v5429 = vunpack.c.h.b16 %v1018
    %v5430 = vunpack.c.l.b16 %v1019
    %v5431 = vunpack.c.h.b16 %v1019
    %v5432 = vunpack.c.l.b16 %v1020
    %v5433 = vunpack.c.h.b16 %v1020
    %v5434 = vunpack.c.l.b16 %v1021
    %v5435 = vunpack.c.h.b16 %v1021
    %v5436 = vunpack.c.l.b16 %v1022
    %v5437 = vunpack.c.h.b16 %v1022
    %v5438 = vunpack.c.l.b16 %v1023
    %v5439 = vunpack.c.h.b16 %v1023
    %v5440 = vunpack.c.l.b16 %v1024
    %v5441 = vunpack.c.h.b16 %v1024
    %v5442 = vunpack.c.l.b16 %v1025
    %v5443 = vunpack.c.h.b16 %v1025
    %v5444 = vunpack.c.l.b16 %v1026
    %v5445 = vunpack.c.h.b16 %v1026
    %v5446 = vunpack.c.l.b16 %v1027
    %v5447 = vunpack.c.h.b16 %v1027
    %v5448 = vunpack.c.l.b16 %v1028
    %v5449 = vunpack.c.h.b16 %v1028
    %v5450 = vunpack.c.l.b16 %v1029
    %v5451 = vunpack.c.h.b16 %v1029
    %v5452 = vunpack.c.l.b16 %v1030
    %v5453 = vunpack.c.h.b16 %v1030
    %v5454 = vunpack.c.l.b16 %v1031
    %v5455 = vunpack.c.h.b16 %v1031
    %v5456 = vunpack.c.l.b16 %v1032
    %v5457 = vunpack.c.h.b16 %v1032
    %v5458 = vunpack.c.l.b16 %v1033
    %v5459 = vunpack.c.h.b16 %v1033
    %v5460 = vunpack.c.l.b16 %v1034
    %v5461 = vunpack.c.h.b16 %v1034
    %v5462 = vunpack.c.l.b16 %v1035
    %v5463 = vunpack.c.h.b16 %v1035
    %v5464 = vunpack.c.l.b16 %v1036
    %v5465 = vunpack.c.h.b16 %v1036
    %v5466 = vunpack.c.l.b16 %v1037
    %v5467 = vunpack.c.h.b16 %v1037
    %v5468 = vunpack.c.l.b16 %v1038
    %v5469 = vunpack.c.h.b16 %v1038
    %v5470 = vunpack.c.l.b16 %v1039
    %v5471 = vunpack.c.h.b16 %v1039
    %v5472 = vunpack.c.l.b16 %v1040
    %v5473 = vunpack.c.h.b16 %v1040
    %v5474 = vunpack.c.l.b16 %v1041
    %v5475 = vunpack.c.h.b16 %v1041
    %v5476 = vunpack.c.l.b16 %v1042
    %v5477 = vunpack.c.h.b16 %v1042
    %v5478 = vunpack.c.l.b16 %v1043
    %v5479 = vunpack.c.h.b16 %v1043
    %v5480 = vunpack.c.l.b16 %v1044
    %v5481 = vunpack.c.h.b16 %v1044
    %v5482 = vunpack.c.l.b16 %v1045
    %v5483 = vunpack.c.h.b16 %v1045
    %v5484 = vunpack.c.l.b16 %v1046
    %v5485 = vunpack.c.h.b16 %v1046
    %v5486 = vunpack.c.l.b16 %v1047
    %v5487 = vunpack.c.h.b16 %v1047
    %v5488 = vunpack.c.l.b16 %v1048
    %v5489 = vunpack.c.h.b16 %v1048
    %v5490 = vunpack.c.l.b16 %v1049
    %v5491 = vunpack.c.h.b16 %v1049
    %v5492 = vunpack.c.l.b16 %v1050
    %v5493 = vunpack.c.h.b16 %v1050
    %v5494 = vunpack.c.l.b16 %v1051
    %v5495 = vunpack.c.h.b16 %v1051
    %v5496 = vunpack.c.l.b16 %v1052
    %v5497 = vunpack.c.h.b16 %v1052
    %v5498 = vunpack.c.l.b16 %v1053
    %v5499 = vunpack.c.h.b16 %v1053
    %v5500 = vunpack.c.l.b16 %v1054
    %v5501 = vunpack.c.h.b16 %v1054
    %v5502 = vunpack.c.l.b16 %v1055
    %v5503 = vunpack.c.h.b16 %v1055
    %v5504 = vunpack.c.l.b16 %v1056
    %v5505 = vunpack.c.h.b16 %v1056
    %v5506 = vunpack.c.l.b16 %v1057
    %v5507 = vunpack.c.h.b16 %v1057
    %v5508 = vunpack.c.l.b16 %v1058
    %v5509 = vunpack.c.h.b16 %v1058
    %v5510 = vunpack.c.l.b16 %v1059
    %v5511 = vunpack.c.h.b16 %v1059
    %v5512 = vunpack.c.l.b16 %v1060
    %v5513 = vunpack.c.h.b16 %v1060
    %v5514 = vunpack.c.l.b16 %v1061
    %v5515 = vunpack.c.h.b16 %v1061
    %v5516 = vunpack.c.l.b16 %v1062
    %v5517 = vunpack.c.h.b16 %v1062
    %v5518 = vunpack.c.l.b16 %v1063
    %v5519 = vunpack.c.h.b16 %v1063
    %v5520 = vunpack.c.l.b16 %v1064
    %v5521 = vunpack.c.h.b16 %v1064
    %v5522 = vunpack.c.l.b16 %v1065
    %v5523 = vunpack.c.h.b16 %v1065
    %v5524 = vunpack.c.l.b16 %v1066
    %v5525 = vunpack.c.h.b16 %v1066
    %v5526 = vunpack.c.l.b16 %v1067
    %v5527 = vunpack.c.h.b16 %v1067
    %v5528 = vunpack.c.l.b16 %v1068
    %v5529 = vunpack.c.h.b16 %v1068
    %v5530 = vunpack.c.l.b16 %v1069
    %v5531 = vunpack.c.h.b16 %v1069
    %v5532 = vunpack.c.l.b16 %v1070
    %v5533 = vunpack.c.h.b16 %v1070
    %v5534 = vunpack.c.l.b16 %v1071
    %v5535 = vunpack.c.h.b16 %v1071
    %v5536 = vunpack.c.l.b16 %v1072
    %v5537 = vunpack.c.h.b16 %v1072
    %v5538 = vunpack.c.l.b16 %v1073
    %v5539 = vunpack.c.h.b16 %v1073
    %v5540 = vunpack.c.l.b16 %v1074
    %v5541 = vunpack.c.h.b16 %v1074
    %v5542 = vunpack.c.l.b16 %v1075
    %v5543 = vunpack.c.h.b16 %v1075
    %v5544 = vunpack.c.l.b16 %v1076
    %v5545 = vunpack.c.h.b16 %v1076
    %v5546 = vunpack.c.l.b16 %v1077
    %v5547 = vunpack.c.h.b16 %v1077
    %v5548 = vunpack.c.l.b16 %v1078
    %v5549 = vunpack.c.h.b16 %v1078
    %v5550 = vunpack.c.l.b16 %v1079
    %v5551 = vunpack.c.h.b16 %v1079
    %v5552 = vunpack.c.l.b16 %v1080
    %v5553 = vunpack.c.h.b16 %v1080
    %v5554 = vunpack.c.l.b16 %v1081
    %v5555 = vunpack.c.h.b16 %v1081
    %v5556 = vunpack.c.l.b16 %v1082
    %v5557 = vunpack.c.h.b16 %v1082
    %v5558 = vunpack.c.l.b16 %v1083
    %v5559 = vunpack.c.h.b16 %v1083
    %v5560 = vunpack.c.l.b16 %v1084
    %v5561 = vunpack.c.h.b16 %v1084
    %v5562 = vunpack.c.l.b16 %v1085
    %v5563 = vunpack.c.h.b16 %v1085
    %v5564 = vunpack.c.l.b16 %v1086
    %v5565 = vunpack.c.h.b16 %v1086
    %v5566 = vunpack.c.l.b16 %v1087
    %v5567 = vunpack.c.h.b16 %v1087
    %v5568 = vunpack.c.l.b16 %v1088
    %v5569 = vunpack.c.h.b16 %v1088
    %v5570 = vunpack.c.l.b16 %v1089
    %v5571 = vunpack.c.h.b16 %v1089
    %v5572 = vunpack.c.l.b16 %v1090
    %v5573 = vunpack.c.h.b16 %v1090
    %v5574 = vunpack.c.l.b16 %v1091
    %v5575 = vunpack.c.h.b16 %v1091
    %v5576 = vunpack.c.l.b16 %v1092
    %v5577 = vunpack.c.h.b16 %v1092
    %v5578 = vunpack.c.l.b16 %v1093
    %v5579 = vunpack.c.h.b16 %v1093
    %v5580 = vunpack.c.l.b16 %v1094
    %v5581 = vunpack.c.h.b16 %v1094
    %v5582 = vunpack.c.l.b16 %v1095
    %v5583 = vunpack.c.h.b16 %v1095
    %v5584 = vunpack.c.l.b16 %v1096
    %v5585 = vunpack.c.h.b16 %v1096
    %v5586 = vunpack.c.l.b16 %v1097
    %v5587 = vunpack.c.h.b16 %v1097
    %v5588 = vunpack.c.l.b16 %v1098
    %v5589 = vunpack.c.h.b16 %v1098
    %v5590 = vunpack.c.l.b16 %v1099
    %v5591 = vunpack.c.h.b16 %v1099
    %v5592 = vunpack.c.l.b16 %v1100
    %v5593 = vunpack.c.h.b16 %v1100
    %v5594 = vunpack.c.l.b16 %v1101
    %v5595 = vunpack.c.h.b16 %v1101
    %v5596 = vunpack.c.l.b16 %v1102
    %v5597 = vunpack.c.h.b16 %v1102
    %v5598 = vunpack.c.l.b16 %v1103
    %v5599 = vunpack.c.h.b16 %v1103
    %v5600 = vunpack.c.l.b16 %v1104
    %v5601 = vunpack.c.h.b16 %v1104
    %v5602 = vunpack.c.l.b16 %v1105
    %v5603 = vunpack.c.h.b16 %v1105
    %v5604 = vunpack.c.l.b16 %v1106
    %v5605 = vunpack.c.h.b16 %v1106
    %v5606 = vunpack.c.l.b16 %v1107
    %v5607 = vunpack.c.h.b16 %v1107
    %v5608 = vunpack.c.l.b16 %v1108
    %v5609 = vunpack.c.h.b16 %v1108
    %v5610 = vunpack.c.l.b16 %v1109
    %v5611 = vunpack.c.h.b16 %v1109
    %v5612 = vunpack.c.l.b16 %v1110
    %v5613 = vunpack.c.h.b16 %v1110
    %v5614 = vunpack.c.l.b16 %v1111
    %v5615 = vunpack.c.h.b16 %v1111
    %v5616 = vunpack.c.l.b16 %v1112
    %v5617 = vunpack.c.h.b16 %v1112
    %v5618 = vunpack.c.l.b16 %v1113
    %v5619 = vunpack.c.h.b16 %v1113
    %v5620 = vunpack.c.l.b16 %v1114
    %v5621 = vunpack.c.h.b16 %v1114
    %v5622 = vunpack.c.l.b16 %v1115
    %v5623 = vunpack.c.h.b16 %v1115
    %v5624 = vunpack.c.l.b16 %v1116
    %v5625 = vunpack.c.h.b16 %v1116
    %v5626 = vunpack.c.l.b16 %v1117
    %v5627 = vunpack.c.h.b16 %v1117
    %v5628 = vunpack.c.l.b16 %v1118
    %v5629 = vunpack.c.h.b16 %v1118
    %v5630 = vunpack.c.l.b16 %v1119
    %v5631 = vunpack.c.h.b16 %v1119
    %v5632 = vunpack.c.l.b16 %v1120
    %v5633 = vunpack.c.h.b16 %v1120
    %v5634 = vunpack.c.l.b16 %v1121
    %v5635 = vunpack.c.h.b16 %v1121
    %v5636 = vunpack.c.l.b16 %v1122
    %v5637 = vunpack.c.h.b16 %v1122
    %v5638 = vunpack.c.l.b16 %v1123
    %v5639 = vunpack.c.h.b16 %v1123
    %v5640 = vunpack.c.l.b16 %v1124
    %v5641 = vunpack.c.h.b16 %v1124
    %v5642 = vunpack.c.l.b16 %v1125
    %v5643 = vunpack.c.h.b16 %v1125
    %v5644 = vunpack.c.l.b16 %v1126
    %v5645 = vunpack.c.h.b16 %v1126
    %v5646 = vunpack.c.l.b16 %v1127
    %v5647 = vunpack.c.h.b16 %v1127
    %v5648 = vunpack.c.l.b16 %v1128
    %v5649 = vunpack.c.h.b16 %v1128
    %v5650 = vunpack.c.l.b16 %v1129
    %v5651 = vunpack.c.h.b16 %v1129
    %v5652 = vunpack.c.l.b16 %v1130
    %v5653 = vunpack.c.h.b16 %v1130
    %v5654 = vunpack.c.l.b16 %v1131
    %v5655 = vunpack.c.h.b16 %v1131
    %v5656 = vunpack.c.l.b16 %v1132
    %v5657 = vunpack.c.h.b16 %v1132
    %v5658 = vunpack.c.l.b16 %v1133
    %v5659 = vunpack.c.h.b16 %v1133
    %v5660 = vunpack.c.l.b16 %v1134
    %v5661 = vunpack.c.h.b16 %v1134
    %v5662 = vunpack.c.l.b16 %v1135
    %v5663 = vunpack.c.h.b16 %v1135
    %v5664 = vunpack.c.l.b16 %v1136
    %v5665 = vunpack.c.h.b16 %v1136
    %v5666 = vunpack.c.l.b16 %v1137
    %v5667 = vunpack.c.h.b16 %v1137
    %v5668 = vunpack.c.l.b16 %v1138
    %v5669 = vunpack.c.h.b16 %v1138
    %v5670 = vunpack.c.l.b16 %v1139
    %v5671 = vunpack.c.h.b16 %v1139
    %v5672 = vunpack.c.l.b16 %v1140
    %v5673 = vunpack.c.h.b16 %v1140
    %v5674 = vunpack.c.l.b16 %v1141
    %v5675 = vunpack.c.h.b16 %v1141
    %v5676 = vunpack.c.l.b16 %v1142
    %v5677 = vunpack.c.h.b16 %v1142
    %v5678 = vunpack.c.l.b16 %v1143
    %v5679 = vunpack.c.h.b16 %v1143
    %v5680 = vunpack.c.l.b16 %v1144
    %v5681 = vunpack.c.h.b16 %v1144
    %v5682 = vunpack.c.l.b16 %v1145
    %v5683 = vunpack.c.h.b16 %v1145
    %v5684 = vunpack.c.l.b16 %v1146
    %v5685 = vunpack.c.h.b16 %v1146
    %v5686 = vunpack.c.l.b16 %v1147
    %v5687 = vunpack.c.h.b16 %v1147
    %v5688 = vunpack.c.l.b16 %v1148
    %v5689 = vunpack.c.h.b16 %v1148
    %v5690 = vunpack.c.l.b16 %v1149
    %v5691 = vunpack.c.h.b16 %v1149
    %v5692 = vunpack.c.l.b16 %v1150
    %v5693 = vunpack.c.h.b16 %v1150
    %v5694 = vunpack.c.l.b16 %v1151
    %v5695 = vunpack.c.h.b16 %v1151
    %v5696 = vunpack.c.l.b16 %v1152
    %v5697 = vunpack.c.h.b16 %v1152
    %v5698 = vunpack.c.l.b16 %v1153
    %v5699 = vunpack.c.h.b16 %v1153
    %v5700 = vunpack.c.l.b16 %v1154
    %v5701 = vunpack.c.h.b16 %v1154
    %v5702 = vunpack.c.l.b16 %v1155
    %v5703 = vunpack.c.h.b16 %v1155
    %v5704 = vunpack.c.l.b16 %v1156
    %v5705 = vunpack.c.h.b16 %v1156
    %v5706 = vunpack.c.l.b16 %v1157
    %v5707 = vunpack.c.h.b16 %v1157
    %v5708 = vunpack.c.l.b16 %v1158
    %v5709 = vunpack.c.h.b16 %v1158
    %v5710 = vunpack.c.l.b16 %v1159
    %v5711 = vunpack.c.h.b16 %v1159
    %v5712 = vunpack.c.l.b16 %v1160
    %v5713 = vunpack.c.h.b16 %v1160
    %v5714 = vunpack.c.l.b16 %v1161
    %v5715 = vunpack.c.h.b16 %v1161
    %v5716 = vunpack.c.l.b16 %v1162
    %v5717 = vunpack.c.h.b16 %v1162
    %v5718 = vunpack.c.l.b16 %v1163
    %v5719 = vunpack.c.h.b16 %v1163
    %v5720 = vunpack.c.l.b16 %v1164
    %v5721 = vunpack.c.h.b16 %v1164
    %v5722 = vunpack.c.l.b16 %v1165
    %v5723 = vunpack.c.h.b16 %v1165
    %v5724 = vunpack.c.l.b16 %v1166
    %v5725 = vunpack.c.h.b16 %v1166
    %v5726 = vunpack.c.l.b16 %v1167
    %v5727 = vunpack.c.h.b16 %v1167
    %v5728 = vunpack.c.l.b16 %v1168
    %v5729 = vunpack.c.h.b16 %v1168
    %v5730 = vunpack.c.l.b16 %v1169
    %v5731 = vunpack.c.h.b16 %v1169
    %v5732 = vunpack.c.l.b16 %v1170
    %v5733 = vunpack.c.h.b16 %v1170
    %v5734 = vunpack.c.l.b16 %v1171
    %v5735 = vunpack.c.h.b16 %v1171
    %v5736 = vunpack.c.l.b16 %v1172
    %v5737 = vunpack.c.h.b16 %v1172
    %v5738 = vunpack.c.l.b16 %v1173
    %v5739 = vunpack.c.h.b16 %v1173
    %v5740 = vunpack.c.l.b16 %v1174
    %v5741 = vunpack.c.h.b16 %v1174
    %v5742 = vunpack.c.l.b16 %v1175
    %v5743 = vunpack.c.h.b16 %v1175
    %v5744 = vunpack.c.l.b16 %v1176
    %v5745 = vunpack.c.h.b16 %v1176
    %v5746 = vunpack.c.l.b16 %v1177
    %v5747 = vunpack.c.h.b16 %v1177
    %v5748 = vunpack.c.l.b16 %v1178
    %v5749 = vunpack.c.h.b16 %v1178
    %v5750 = vunpack.c.l.b16 %v1179
    %v5751 = vunpack.c.h.b16 %v1179
    %v5752 = vunpack.c.l.b16 %v1180
    %v5753 = vunpack.c.h.b16 %v1180
    %v5754 = vunpack.c.l.b16 %v1181
    %v5755 = vunpack.c.h.b16 %v1181
    %v5756 = vunpack.c.l.b16 %v1182
    %v5757 = vunpack.c.h.b16 %v1182
    %v5758 = vunpack.c.l.b16 %v1183
    %v5759 = vunpack.c.h.b16 %v1183
    %v5760 = vunpack.c.l.b16 %v1184
    %v5761 = vunpack.c.h.b16 %v1184
    %v5762 = vunpack.c.l.b16 %v1185
    %v5763 = vunpack.c.h.b16 %v1185
    %v5764 = vunpack.c.l.b16 %v1186
    %v5765 = vunpack.c.h.b16 %v1186
    %v5766 = vunpack.c.l.b16 %v1187
    %v5767 = vunpack.c.h.b16 %v1187
    %v5768 = vunpack.c.l.b16 %v1188
    %v5769 = vunpack.c.h.b16 %v1188
    %v5770 = vunpack.c.l.b16 %v1189
    %v5771 = vunpack.c.h.b16 %v1189
    %v5772 = vunpack.c.l.b16 %v1190
    %v5773 = vunpack.c.h.b16 %v1190
    %v5774 = vunpack.c.l.b16 %v1191
    %v5775 = vunpack.c.h.b16 %v1191
    %v5776 = vunpack.c.l.b16 %v1192
    %v5777 = vunpack.c.h.b16 %v1192
    %v5778 = vunpack.c.l.b16 %v1193
    %v5779 = vunpack.c.h.b16 %v1193
    %v5780 = vunpack.c.l.b16 %v1194
    %v5781 = vunpack.c.h.b16 %v1194
    %v5782 = vunpack.c.l.b16 %v1195
    %v5783 = vunpack.c.h.b16 %v1195
    %v5784 = vunpack.c.l.b16 %v1196
    %v5785 = vunpack.c.h.b16 %v1196
    %v5786 = vunpack.c.l.b16 %v1197
    %v5787 = vunpack.c.h.b16 %v1197
    %v5788 = vunpack.c.l.b16 %v1198
    %v5789 = vunpack.c.h.b16 %v1198
    %v5790 = vunpack.c.l.b16 %v1199
    %v5791 = vunpack.c.h.b16 %v1199
    %v5792 = vunpack.c.l.b16 %v1200
    %v5793 = vunpack.c.h.b16 %v1200
    %v5794 = vunpack.c.l.b16 %v1201
    %v5795 = vunpack.c.h.b16 %v1201
    %v5796 = vunpack.c.l.b16 %v1202
    %v5797 = vunpack.c.h.b16 %v1202
    %v5798 = vunpack.c.l.b16 %v1203
    %v5799 = vunpack.c.h.b16 %v1203
    %v5800 = vunpack.c.l.b16 %v1204
    %v5801 = vunpack.c.h.b16 %v1204
    %v5802 = vunpack.c.l.b16 %v1205
    %v5803 = vunpack.c.h.b16 %v1205
    %v5804 = vunpack.c.l.b16 %v1206
    %v5805 = vunpack.c.h.b16 %v1206
    %v5806 = vunpack.c.l.b16 %v1207
    %v5807 = vunpack.c.h.b16 %v1207
    %v5808 = vunpack.c.l.b16 %v1208
    %v5809 = vunpack.c.h.b16 %v1208
    %v5810 = vunpack.c.l.b16 %v1209
    %v5811 = vunpack.c.h.b16 %v1209
    %v5812 = vunpack.c.l.b16 %v1210
    %v5813 = vunpack.c.h.b16 %v1210
    %v5814 = vunpack.c.l.b16 %v1211
    %v5815 = vunpack.c.h.b16 %v1211
    %v5816 = vunpack.c.l.b16 %v1212
    %v5817 = vunpack.c.h.b16 %v1212
    %v5818 = vunpack.c.l.b16 %v1213
    %v5819 = vunpack.c.h.b16 %v1213
    %v5820 = vunpack.c.l.b16 %v1214
    %v5821 = vunpack.c.h.b16 %v1214
    %v5822 = vunpack.c.l.b16 %v1215
    %v5823 = vunpack.c.h.b16 %v1215
    %v5824 = vunpack.c.l.b16 %v1216
    %v5825 = vunpack.c.h.b16 %v1216
    %v5826 = vunpack.c.l.b16 %v1217
    %v5827 = vunpack.c.h.b16 %v1217
    %v5828 = vunpack.c.l.b16 %v1218
    %v5829 = vunpack.c.h.b16 %v1218
    %v5830 = vunpack.c.l.b16 %v1219
    %v5831 = vunpack.c.h.b16 %v1219
    %v5832 = vunpack.c.l.b16 %v1220
    %v5833 = vunpack.c.h.b16 %v1220
    %v5834 = vunpack.c.l.b16 %v1221
    %v5835 = vunpack.c.h.b16 %v1221
    %v5836 = vunpack.c.l.b16 %v1222
    %v5837 = vunpack.c.h.b16 %v1222
    %v5838 = vunpack.c.l.b16 %v1223
    %v5839 = vunpack.c.h.b16 %v1223
    %v5840 = vunpack.c.l.b16 %v1224
    %v5841 = vunpack.c.h.b16 %v1224
    %v5842 = vunpack.c.l.b16 %v1225
    %v5843 = vunpack.c.h.b16 %v1225
    %v5844 = vunpack.c.l.b16 %v1226
    %v5845 = vunpack.c.h.b16 %v1226
    %v5846 = vunpack.c.l.b16 %v1227
    %v5847 = vunpack.c.h.b16 %v1227
    %v5848 = vunpack.c.l.b16 %v1228
    %v5849 = vunpack.c.h.b16 %v1228
    %v5850 = vunpack.c.l.b16 %v1229
    %v5851 = vunpack.c.h.b16 %v1229
    %v5852 = vunpack.c.l.b16 %v1230
    %v5853 = vunpack.c.h.b16 %v1230
    %v5854 = vunpack.c.l.b16 %v1231
    %v5855 = vunpack.c.h.b16 %v1231
    %v5856 = vunpack.c.l.b16 %v1232
    %v5857 = vunpack.c.h.b16 %v1232
    %v5858 = vunpack.c.l.b16 %v1233
    %v5859 = vunpack.c.h.b16 %v1233
    %v5860 = vunpack.c.l.b16 %v1234
    %v5861 = vunpack.c.h.b16 %v1234
    %v5862 = vunpack.c.l.b16 %v1235
    %v5863 = vunpack.c.h.b16 %v1235
    %v5864 = vunpack.c.l.b16 %v1236
    %v5865 = vunpack.c.h.b16 %v1236
    %v5866 = vunpack.c.l.b16 %v1237
    %v5867 = vunpack.c.h.b16 %v1237
    %v5868 = vunpack.c.l.b16 %v1238
    %v5869 = vunpack.c.h.b16 %v1238
    %v5870 = vunpack.c.l.b16 %v1239
    %v5871 = vunpack.c.h.b16 %v1239
    %v5872 = vunpack.c.l.b16 %v1240
    %v5873 = vunpack.c.h.b16 %v1240
    %v5874 = vunpack.c.l.b16 %v1241
    %v5875 = vunpack.c.h.b16 %v1241
    %v5876 = vunpack.c.l.b16 %v1242
    %v5877 = vunpack.c.h.b16 %v1242
    %v5878 = vunpack.c.l.b16 %v1243
    %v5879 = vunpack.c.h.b16 %v1243
    %v5880 = vunpack.c.l.b16 %v1244
    %v5881 = vunpack.c.h.b16 %v1244
    %v5882 = vunpack.c.l.b16 %v1245
    %v5883 = vunpack.c.h.b16 %v1245
    %v5884 = vunpack.c.l.b16 %v1246
    %v5885 = vunpack.c.h.b16 %v1246
    %v5886 = vunpack.c.l.b16 %v1247
    %v5887 = vunpack.c.h.b16 %v1247
    %v5888 = vunpack.c.l.b16 %v1248
    %v5889 = vunpack.c.h.b16 %v1248
    %v5890 = vunpack.c.l.b16 %v1249
    %v5891 = vunpack.c.h.b16 %v1249
    %v5892 = vunpack.c.l.b16 %v1250
    %v5893 = vunpack.c.h.b16 %v1250
    %v5894 = vunpack.c.l.b16 %v1251
    %v5895 = vunpack.c.h.b16 %v1251
    %v5896 = vunpack.c.l.b16 %v1252
    %v5897 = vunpack.c.h.b16 %v1252
    %v5898 = vunpack.c.l.b16 %v1253
    %v5899 = vunpack.c.h.b16 %v1253
    %v5900 = vunpack.c.l.b16 %v1254
    %v5901 = vunpack.c.h.b16 %v1254
    %v5902 = vunpack.c.l.b16 %v1255
    %v5903 = vunpack.c.h.b16 %v1255
    %v5904 = vunpack.c.l.b16 %v1256
    %v5905 = vunpack.c.h.b16 %v1256
    %v5906 = vunpack.c.l.b16 %v1257
    %v5907 = vunpack.c.h.b16 %v1257
    %v5908 = vunpack.c.l.b16 %v1258
    %v5909 = vunpack.c.h.b16 %v1258
    %v5910 = vunpack.c.l.b16 %v1259
    %v5911 = vunpack.c.h.b16 %v1259
    %v5912 = vunpack.c.l.b16 %v1260
    %v5913 = vunpack.c.h.b16 %v1260
    %v5914 = vunpack.c.l.b16 %v1261
    %v5915 = vunpack.c.h.b16 %v1261
    %v5916 = vunpack.c.l.b16 %v1262
    %v5917 = vunpack.c.h.b16 %v1262
    %v5918 = vunpack.c.l.b16 %v1263
    %v5919 = vunpack.c.h.b16 %v1263
    %v5920 = vunpack.c.l.b16 %v1264
    %v5921 = vunpack.c.h.b16 %v1264
    %v5922 = vunpack.c.l.b16 %v1265
    %v5923 = vunpack.c.h.b16 %v1265
    %v5924 = vunpack.c.l.b16 %v1266
    %v5925 = vunpack.c.h.b16 %v1266
    %v5926 = vunpack.c.l.b16 %v1267
    %v5927 = vunpack.c.h.b16 %v1267
    %v5928 = vunpack.c.l.b16 %v1268
    %v5929 = vunpack.c.h.b16 %v1268
    %v5930 = vunpack.c.l.b16 %v1269
    %v5931 = vunpack.c.h.b16 %v1269
    %v5932 = vunpack.c.l.b16 %v1270
    %v5933 = vunpack.c.h.b16 %v1270
    %v5934 = vunpack.c.l.b16 %v1271
    %v5935 = vunpack.c.h.b16 %v1271
    %v5936 = vunpack.c.l.b16 %v1272
    %v5937 = vunpack.c.h.b16 %v1272
    %v5938 = vunpack.c.l.b16 %v1273
    %v5939 = vunpack.c.h.b16 %v1273
    %v5940 = vunpack.c.l.b16 %v1274
    %v5941 = vunpack.c.h.b16 %v1274
    %v5942 = vunpack.c.l.b16 %v1275
    %v5943 = vunpack.c.h.b16 %v1275
    %v5944 = vunpack.c.l.b16 %v1276
    %v5945 = vunpack.c.h.b16 %v1276
    %v5946 = vunpack.c.l.b16 %v1277
    %v5947 = vunpack.c.h.b16 %v1277
    %v5948 = vunpack.c.l.b16 %v1278
    %v5949 = vunpack.c.h.b16 %v1278
    %v5950 = vunpack.c.l.b16 %v1279
    %v5951 = vunpack.c.h.b16 %v1279
    %v5952 = vunpack.c.l.b16 %v1280
    %v5953 = vunpack.c.h.b16 %v1280
    %v5954 = vunpack.c.l.b16 %v1281
    %v5955 = vunpack.c.h.b16 %v1281
    %v5956 = vunpack.c.l.b16 %v1282
    %v5957 = vunpack.c.h.b16 %v1282
    %v5958 = vunpack.c.l.b16 %v1283
    %v5959 = vunpack.c.h.b16 %v1283
    %v5960 = vunpack.c.l.b16 %v1284
    %v5961 = vunpack.c.h.b16 %v1284
    %v5962 = vunpack.c.l.b16 %v1285
    %v5963 = vunpack.c.h.b16 %v1285
    %v5964 = vunpack.c.l.b16 %v1286
    %v5965 = vunpack.c.h.b16 %v1286
    %v5966 = vunpack.c.l.b16 %v1287
    %v5967 = vunpack.c.h.b16 %v1287
    %v5968 = vunpack.c.l.b16 %v1288
    %v5969 = vunpack.c.h.b16 %v1288
    %v5970 = vunpack.c.l.b16 %v1289
    %v5971 = vunpack.c.h.b16 %v1289
    %v5972 = vunpack.c.l.b16 %v1290
    %v5973 = vunpack.c.h.b16 %v1290
    %v5974 = vunpack.c.l.b16 %v1291
    %v5975 = vunpack.c.h.b16 %v1291
    %v5976 = vunpack.c.l.b16 %v1292
    %v5977 = vunpack.c.h.b16 %v1292
    %v5978 = vunpack.c.l.b16 %v1293
    %v5979 = vunpack.c.h.b16 %v1293
    %v5980 = vunpack.c.l.b16 %v1294
    %v5981 = vunpack.c.h.b16 %v1294
    %v5982 = vunpack.c.l.b16 %v1295
    %v5983 = vunpack.c.h.b16 %v1295
    %v5984 = vunpack.c.l.b16 %v1296
    %v5985 = vunpack.c.h.b16 %v1296
    %v5986 = vunpack.c.l.b16 %v1297
    %v5987 = vunpack.c.h.b16 %v1297
    %v5988 = vunpack.c.l.b16 %v1298
    %v5989 = vunpack.c.h.b16 %v1298
    %v5990 = vunpack.c.l.b16 %v1299
    %v5991 = vunpack.c.h.b16 %v1299
    %v5992 = vunpack.c.l.b16 %v1300
    %v5993 = vunpack.c.h.b16 %v1300
    %v5994 = vunpack.c.l.b16 %v1301
    %v5995 = vunpack.c.h.b16 %v1301
    %v5996 = vunpack.c.l.b16 %v1302
    %v5997 = vunpack.c.h.b16 %v1302
    %v5998 = vunpack.c.l.b16 %v1303
    %v5999 = vunpack.c.h.b16 %v1303
    %v6000 = vunpack.c.l.b16 %v1304
    %v6001 = vunpack.c.h.b16 %v1304
    %v6002 = vunpack.c.l.b16 %v1305
    %v6003 = vunpack.c.h.b16 %v1305
    %v6004 = vunpack.c.l.b16 %v1306
    %v6005 = vunpack.c.h.b16 %v1306
    %v6006 = vunpack.c.l.b16 %v1307
    %v6007 = vunpack.c.h.b16 %v1307
    %v6008 = vunpack.c.l.b16 %v1308
    %v6009 = vunpack.c.h.b16 %v1308
    %v6010 = vunpack.c.l.b16 %v1309
    %v6011 = vunpack.c.h.b16 %v1309
    %v6012 = vunpack.c.l.b16 %v1310
    %v6013 = vunpack.c.h.b16 %v1310
    %v6014 = vunpack.c.l.b16 %v1311
    %v6015 = vunpack.c.h.b16 %v1311
    %v6016 = vunpack.c.l.b16 %v1312
    %v6017 = vunpack.c.h.b16 %v1312
    %v6018 = vunpack.c.l.b16 %v1313
    %v6019 = vunpack.c.h.b16 %v1313
    %v6020 = vunpack.c.l.b16 %v1314
    %v6021 = vunpack.c.h.b16 %v1314
    %v6022 = vunpack.c.l.b16 %v1315
    %v6023 = vunpack.c.h.b16 %v1315
    %v6024 = vunpack.c.l.b16 %v1316
    %v6025 = vunpack.c.h.b16 %v1316
    %v6026 = vunpack.c.l.b16 %v1317
    %v6027 = vunpack.c.h.b16 %v1317
    %v6028 = vunpack.c.l.b16 %v1318
    %v6029 = vunpack.c.h.b16 %v1318
    %v6030 = vunpack.c.l.b16 %v1319
    %v6031 = vunpack.c.h.b16 %v1319
    %v6032 = vunpack.c.l.b16 %v1320
    %v6033 = vunpack.c.h.b16 %v1320
    %v6034 = vunpack.c.l.b16 %v1321
    %v6035 = vunpack.c.h.b16 %v1321
    %v6036 = vunpack.c.l.b16 %v1322
    %v6037 = vunpack.c.h.b16 %v1322
    %v6038 = vunpack.c.l.b16 %v1323
    %v6039 = vunpack.c.h.b16 %v1323
    %v6040 = vunpack.c.l.b16 %v1324
    %v6041 = vunpack.c.h.b16 %v1324
    %v6042 = vunpack.c.l.b16 %v1325
    %v6043 = vunpack.c.h.b16 %v1325
    %v6044 = vunpack.c.l.b16 %v1326
    %v6045 = vunpack.c.h.b16 %v1326
    %v6046 = vunpack.c.l.b16 %v1327
    %v6047 = vunpack.c.h.b16 %v1327
    %v6048 = vunpack.c.l.b16 %v1328
    %v6049 = vunpack.c.h.b16 %v1328
    %v6050 = vunpack.c.l.b16 %v1329
    %v6051 = vunpack.c.h.b16 %v1329
    %v6052 = vunpack.c.l.b16 %v1330
    %v6053 = vunpack.c.h.b16 %v1330
    %v6054 = vunpack.c.l.b16 %v1331
    %v6055 = vunpack.c.h.b16 %v1331
    %v6056 = vunpack.c.l.b16 %v1332
    %v6057 = vunpack.c.h.b16 %v1332
    %v6058 = vunpack.c.l.b16 %v1333
    %v6059 = vunpack.c.h.b16 %v1333
    %v6060 = vunpack.c.l.b16 %v1334
    %v6061 = vunpack.c.h.b16 %v1334
    %v6062 = vunpack.c.l.b16 %v1335
    %v6063 = vunpack.c.h.b16 %v1335
    %v6064 = vunpack.c.l.b16 %v1336
    %v6065 = vunpack.c.h.b16 %v1336
    %v6066 = vunpack.c.l.b16 %v1337
    %v6067 = vunpack.c.h.b16 %v1337
    %v6068 = vunpack.c.l.b16 %v1338
    %v6069 = vunpack.c.h.b16 %v1338
    %v6070 = vunpack.c.l.b16 %v1339
    %v6071 = vunpack.c.h.b16 %v1339
    %v6072 = vunpack.c.l.b16 %v1340
    %v6073 = vunpack.c.h.b16 %v1340
    %v6074 = vunpack.c.l.b16 %v1341
    %v6075 = vunpack.c.h.b16 %v1341
    %v6076 = vunpack.c.l.b16 %v1342
    %v6077 = vunpack.c.h.b16 %v1342
    %v6078 = vunpack.c.l.b16 %v1343
    %v6079 = vunpack.c.h.b16 %v1343
    %v6080 = vunpack.c.l.b16 %v1344
    %v6081 = vunpack.c.h.b16 %v1344
    %v6082 = vunpack.c.l.b16 %v1345
    %v6083 = vunpack.c.h.b16 %v1345
    %v6084 = vunpack.c.l.b16 %v1346
    %v6085 = vunpack.c.h.b16 %v1346
    %v6086 = vunpack.c.l.b16 %v1347
    %v6087 = vunpack.c.h.b16 %v1347
    %v6088 = vunpack.c.l.b16 %v1348
    %v6089 = vunpack.c.h.b16 %v1348
    %v6090 = vunpack.c.l.b16 %v1349
    %v6091 = vunpack.c.h.b16 %v1349
    %v6092 = vunpack.c.l.b16 %v1350
    %v6093 = vunpack.c.h.b16 %v1350
    %v6094 = vunpack.c.l.b16 %v1351
    %v6095 = vunpack.c.h.b16 %v1351
    %v6096 = vunpack.c.l.b16 %v1352
    %v6097 = vunpack.c.h.b16 %v1352
    %v6098 = vunpack.c.l.b16 %v1353
    %v6099 = vunpack.c.h.b16 %v1353
    %v6100 = vunpack.c.l.b16 %v1354
    %v6101 = vunpack.c.h.b16 %v1354
    %v6102 = vunpack.c.l.b16 %v1355
    %v6103 = vunpack.c.h.b16 %v1355
    %v6104 = vunpack.c.l.b16 %v1356
    %v6105 = vunpack.c.h.b16 %v1356
    %v6106 = vunpack.c.l.b16 %v1357
    %v6107 = vunpack.c.h.b16 %v1357
    %v6108 = vunpack.c.l.b16 %v1358
    %v6109 = vunpack.c.h.b16 %v1358
    %v6110 = vunpack.c.l.b16 %v1359
    %v6111 = vunpack.c.h.b16 %v1359
    %v6112 = vunpack.c.l.b16 %v1360
    %v6113 = vunpack.c.h.b16 %v1360
    %v6114 = vunpack.c.l.b16 %v1361
    %v6115 = vunpack.c.h.b16 %v1361
    %v6116 = vunpack.c.l.b16 %v1362
    %v6117 = vunpack.c.h.b16 %v1362
    %v6118 = vunpack.c.l.b16 %v1363
    %v6119 = vunpack.c.h.b16 %v1363
    %v6120 = vunpack.c.l.b16 %v1364
    %v6121 = vunpack.c.h.b16 %v1364
    %v6122 = vunpack.c.l.b16 %v1365
    %v6123 = vunpack.c.h.b16 %v1365
    %v6124 = vunpack.c.l.b16 %v1366
    %v6125 = vunpack.c.h.b16 %v1366
    %v6126 = vunpack.c.l.b16 %v1367
    %v6127 = vunpack.c.h.b16 %v1367
    %v6128 = vunpack.c.l.b16 %v1368
    %v6129 = vunpack.c.h.b16 %v1368
    %v6130 = vunpack.c.l.b16 %v1369
    %v6131 = vunpack.c.h.b16 %v1369
    %v6132 = vunpack.c.l.b16 %v1370
    %v6133 = vunpack.c.h.b16 %v1370
    %v6134 = vunpack.c.l.b16 %v1371
    %v6135 = vunpack.c.h.b16 %v1371
    %v6136 = vunpack.c.l.b16 %v1372
    %v6137 = vunpack.c.h.b16 %v1372
    %v6138 = vunpack.c.l.b16 %v1373
    %v6139 = vunpack.c.h.b16 %v1373
    %v6140 = vunpack.c.l.b16 %v1374
    %v6141 = vunpack.c.h.b16 %v1374
    %v6142 = vunpack.c.l.b16 %v1375
    %v6143 = vunpack.c.h.b16 %v1375
    %v6144 = vunpack.c.l.b16 %v1376
    %v6145 = vunpack.c.h.b16 %v1376
    %v6146 = vunpack.c.l.b16 %v1377
    %v6147 = vunpack.c.h.b16 %v1377
    %v6148 = vunpack.c.l.b16 %v1378
    %v6149 = vunpack.c.h.b16 %v1378
    %v6150 = vunpack.c.l.b16 %v1379
    %v6151 = vunpack.c.h.b16 %v1379
    %v6152 = vunpack.c.l.b16 %v1380
    %v6153 = vunpack.c.h.b16 %v1380
    %v6154 = vunpack.c.l.b16 %v1381
    %v6155 = vunpack.c.h.b16 %v1381
    %v6156 = vunpack.c.l.b16 %v1382
    %v6157 = vunpack.c.h.b16 %v1382
    %v6158 = vunpack.c.l.b16 %v1383
    %v6159 = vunpack.c.h.b16 %v1383
    %v6160 = vunpack.c.l.b16 %v1384
    %v6161 = vunpack.c.h.b16 %v1384
    %v6162 = vunpack.c.l.b16 %v1385
    %v6163 = vunpack.c.h.b16 %v1385
    %v6164 = vunpack.c.l.b16 %v1386
    %v6165 = vunpack.c.h.b16 %v1386
    %v6166 = vunpack.c.l.b16 %v1387
    %v6167 = vunpack.c.h.b16 %v1387
    %v6168 = vunpack.c.l.b16 %v1388
    %v6169 = vunpack.c.h.b16 %v1388
    %v6170 = vunpack.c.l.b16 %v1389
    %v6171 = vunpack.c.h.b16 %v1389
    %v6172 = vunpack.c.l.b16 %v1390
    %v6173 = vunpack.c.h.b16 %v1390
    %v6174 = vunpack.c.l.b16 %v1391
    %v6175 = vunpack.c.h.b16 %v1391
    %v6176 = vunpack.c.l.b16 %v1392
    %v6177 = vunpack.c.h.b16 %v1392
    %v6178 = vunpack.c.l.b16 %v1393
    %v6179 = vunpack.c.h.b16 %v1393
    %v6180 = vunpack.c.l.b16 %v1394
    %v6181 = vunpack.c.h.b16 %v1394
    %v6182 = vunpack.c.l.b16 %v1395
    %v6183 = vunpack.c.h.b16 %v1395
    %v6184 = vunpack.c.l.b16 %v1396
    %v6185 = vunpack.c.h.b16 %v1396
    %v6186 = vunpack.c.l.b16 %v1397
    %v6187 = vunpack.c.h.b16 %v1397
    %v6188 = vunpack.c.l.b16 %v1398
    %v6189 = vunpack.c.h.b16 %v1398
    %v6190 = vunpack.c.l.b16 %v1399
    %v6191 = vunpack.c.h.b16 %v1399
    %v6192 = vunpack.c.l.b16 %v1400
    %v6193 = vunpack.c.h.b16 %v1400
    %v6194 = vunpack.c.l.b16 %v1401
    %v6195 = vunpack.c.h.b16 %v1401
    %v6196 = vunpack.c.l.b16 %v1402
    %v6197 = vunpack.c.h.b16 %v1402
    %v6198 = vunpack.c.l.b16 %v1403
    %v6199 = vunpack.c.h.b16 %v1403
    %v6200 = vunpack.c.l.b16 %v1404
    %v6201 = vunpack.c.h.b16 %v1404
    %v6202 = vunpack.c.l.b16 %v1405
    %v6203 = vunpack.c.h.b16 %v1405
    %v6204 = vunpack.c.l.b16 %v1406
    %v6205 = vunpack.c.h.b16 %v1406
    %v6206 = vunpack.c.l.b16 %v1407
    %v6207 = vunpack.c.h.b16 %v1407
    %v6208 = vunpack.c.l.b16 %v1408
    %v6209 = vunpack.c.h.b16 %v1408
    %v6210 = vunpack.c.l.b16 %v1409
    %v6211 = vunpack.c.h.b16 %v1409
    %v6212 = vunpack.c.l.b16 %v1410
    %v6213 = vunpack.c.h.b16 %v1410
    %v6214 = vunpack.c.l.b16 %v1411
    %v6215 = vunpack.c.h.b16 %v1411
    %v6216 = vunpack.c.l.b16 %v1412
    %v6217 = vunpack.c.h.b16 %v1412
    %v6218 = vunpack.c.l.b16 %v1413
    %v6219 = vunpack.c.h.b16 %v1413
    %v6220 = vunpack.c.l.b16 %v1414
    %v6221 = vunpack.c.h.b16 %v1414
    %v6222 = vunpack.c.l.b16 %v1415
    %v6223 = vunpack.c.h.b16 %v1415
    %v6224 = vunpack.c.l.b16 %v1416
    %v6225 = vunpack.c.h.b16 %v1416
    %v6226 = vunpack.c.l.b16 %v1417
    %v6227 = vunpack.c.h.b16 %v1417
    %v6228 = vunpack.c.l.b16 %v1418
    %v6229 = vunpack.c.h.b16 %v1418
    %v6230 = vunpack.c.l.b16 %v1419
    %v6231 = vunpack.c.h.b16 %v1419
    %v6232 = vunpack.c.l.b16 %v1420
    %v6233 = vunpack.c.h.b16 %v1420
    %v6234 = vunpack.c.l.b16 %v1421
    %v6235 = vunpack.c.h.b16 %v1421
    %v6236 = vunpack.c.l.b16 %v1422
    %v6237 = vunpack.c.h.b16 %v1422
    %v6238 = vunpack.c.l.b16 %v1423
    %v6239 = vunpack.c.h.b16 %v1423
    %v6240 = vunpack.c.l.b16 %v1424
    %v6241 = vunpack.c.h.b16 %v1424
    %v6242 = vunpack.c.l.b16 %v1425
    %v6243 = vunpack.c.h.b16 %v1425
    %v6244 = vunpack.c.l.b16 %v1426
    %v6245 = vunpack.c.h.b16 %v1426
    %v6246 = vunpack.c.l.b16 %v1427
    %v6247 = vunpack.c.h.b16 %v1427
    %v6248 = vunpack.c.l.b16 %v1428
    %v6249 = vunpack.c.h.b16 %v1428
    %v6250 = vunpack.c.l.b16 %v1429
    %v6251 = vunpack.c.h.b16 %v1429
    %v6252 = vunpack.c.l.b16 %v1430
    %v6253 = vunpack.c.h.b16 %v1430
    %v6254 = vunpack.c.l.b16 %v1431
    %v6255 = vunpack.c.h.b16 %v1431
    %v6256 = vunpack.c.l.b16 %v1432
    %v6257 = vunpack.c.h.b16 %v1432
    %v6258 = vunpack.c.l.b16 %v1433
    %v6259 = vunpack.c.h.b16 %v1433
    %v6260 = vunpack.c.l.b16 %v1434
    %v6261 = vunpack.c.h.b16 %v1434
    %v6262 = vunpack.c.l.b16 %v1435
    %v6263 = vunpack.c.h.b16 %v1435
    %v6264 = vunpack.c.l.b16 %v1436
    %v6265 = vunpack.c.h.b16 %v1436
    %v6266 = vunpack.c.l.b16 %v1437
    %v6267 = vunpack.c.h.b16 %v1437
    %v6268 = vunpack.c.l.b16 %v1438
    %v6269 = vunpack.c.h.b16 %v1438
    %v6270 = vunpack.c.l.b16 %v1439
    %v6271 = vunpack.c.h.b16 %v1439
    %v6272 = vunpack.c.l.b16 %v1440
    %v6273 = vunpack.c.h.b16 %v1440
    %v6274 = vunpack.c.l.b16 %v1441
    %v6275 = vunpack.c.h.b16 %v1441
    %v6276 = vunpack.c.l.b16 %v1442
    %v6277 = vunpack.c.h.b16 %v1442
    %v6278 = vunpack.c.l.b16 %v1443
    %v6279 = vunpack.c.h.b16 %v1443
    %v6280 = vunpack.c.l.b16 %v1444
    %v6281 = vunpack.c.h.b16 %v1444
    %v6282 = vunpack.c.l.b16 %v1445
    %v6283 = vunpack.c.h.b16 %v1445
    %v6284 = vunpack.c.l.b16 %v1446
    %v6285 = vunpack.c.h.b16 %v1446
    %v6286 = vunpack.c.l.b16 %v1447
    %v6287 = vunpack.c.h.b16 %v1447
    %v6288 = vunpack.c.l.b16 %v1448
    %v6289 = vunpack.c.h.b16 %v1448
    %v6290 = vunpack.c.l.b16 %v1449
    %v6291 = vunpack.c.h.b16 %v1449
    %v6292 = vunpack.c.l.b16 %v1450
    %v6293 = vunpack.c.h.b16 %v1450
    %v6294 = vunpack.c.l.b16 %v1451
    %v6295 = vunpack.c.h.b16 %v1451
    %v6296 = vunpack.c.l.b16 %v1452
    %v6297 = vunpack.c.h.b16 %v1452
    %v6298 = vunpack.c.l.b16 %v1453
    %v6299 = vunpack.c.h.b16 %v1453
    %v6300 = vunpack.c.l.b16 %v1454
    %v6301 = vunpack.c.h.b16 %v1454
    %v6302 = vunpack.c.l.b16 %v1455
    %v6303 = vunpack.c.h.b16 %v1455
    %v6304 = vunpack.c.l.b16 %v1456
    %v6305 = vunpack.c.h.b16 %v1456
    %v6306 = vunpack.c.l.b16 %v1457
    %v6307 = vunpack.c.h.b16 %v1457
    %v6308 = vunpack.c.l.b16 %v1458
    %v6309 = vunpack.c.h.b16 %v1458
    %v6310 = vunpack.c.l.b16 %v1459
    %v6311 = vunpack.c.h.b16 %v1459
    %v6312 = vunpack.c.l.b16 %v1460
    %v6313 = vunpack.c.h.b16 %v1460
    %v6314 = vunpack.c.l.b16 %v1461
    %v6315 = vunpack.c.h.b16 %v1461
    %v6316 = vunpack.c.l.b16 %v1462
    %v6317 = vunpack.c.h.b16 %v1462
    %v6318 = vunpack.c.l.b16 %v1463
    %v6319 = vunpack.c.h.b16 %v1463
    %v6320 = vunpack.c.l.b16 %v1464
    %v6321 = vunpack.c.h.b16 %v1464
    %v6322 = vunpack.c.l.b16 %v1465
    %v6323 = vunpack.c.h.b16 %v1465
    %v6324 = vunpack.c.l.b16 %v1466
    %v6325 = vunpack.c.h.b16 %v1466
    %v6326 = vunpack.c.l.b16 %v1467
    %v6327 = vunpack.c.h.b16 %v1467
    %v6328 = vunpack.c.l.b16 %v1468
    %v6329 = vunpack.c.h.b16 %v1468
    %v6330 = vunpack.c.l.b16 %v1469
    %v6331 = vunpack.c.h.b16 %v1469
    %v6332 = vunpack.c.l.b16 %v1470
    %v6333 = vunpack.c.h.b16 %v1470
    %v6334 = vunpack.c.l.b16 %v1471
    %v6335 = vunpack.c.h.b16 %v1471
    %v6336 = vunpack.c.l.b16 %v1472
    %v6337 = vunpack.c.h.b16 %v1472
    %v6338 = vunpack.c.l.b16 %v1473
    %v6339 = vunpack.c.h.b16 %v1473
    %v6340 = vunpack.c.l.b16 %v1474
    %v6341 = vunpack.c.h.b16 %v1474
    %v6342 = vunpack.c.l.b16 %v1475
    %v6343 = vunpack.c.h.b16 %v1475
    %v6344 = vunpack.c.l.b16 %v1476
    %v6345 = vunpack.c.h.b16 %v1476
    %v6346 = vunpack.c.l.b16 %v1477
    %v6347 = vunpack.c.h.b16 %v1477
    %v6348 = vunpack.c.l.b16 %v1478
    %v6349 = vunpack.c.h.b16 %v1478
    %v6350 = vunpack.c.l.b16 %v1479
    %v6351 = vunpack.c.h.b16 %v1479
    %v6352 = vunpack.c.l.b16 %v1480
    %v6353 = vunpack.c.h.b16 %v1480
    %v6354 = vunpack.c.l.b16 %v1481
    %v6355 = vunpack.c.h.b16 %v1481
    %v6356 = vunpack.c.l.b16 %v1482
    %v6357 = vunpack.c.h.b16 %v1482
    %v6358 = vunpack.c.l.b16 %v1483
    %v6359 = vunpack.c.h.b16 %v1483
    %v6360 = vunpack.c.l.b16 %v1484
    %v6361 = vunpack.c.h.b16 %v1484
    %v6362 = vunpack.c.l.b16 %v1485
    %v6363 = vunpack.c.h.b16 %v1485
    %v6364 = vunpack.c.l.b16 %v1486
    %v6365 = vunpack.c.h.b16 %v1486
    %v6366 = vunpack.c.l.b16 %v1487
    %v6367 = vunpack.c.h.b16 %v1487
    %v6368 = vunpack.c.l.b16 %v1488
    %v6369 = vunpack.c.h.b16 %v1488
    %v6370 = vunpack.c.l.b16 %v1489
    %v6371 = vunpack.c.h.b16 %v1489
    %v6372 = vunpack.c.l.b16 %v1490
    %v6373 = vunpack.c.h.b16 %v1490
    %v6374 = vunpack.c.l.b16 %v1491
    %v6375 = vunpack.c.h.b16 %v1491
    %v6376 = vunpack.c.l.b16 %v1492
    %v6377 = vunpack.c.h.b16 %v1492
    %v6378 = vunpack.c.l.b16 %v1493
    %v6379 = vunpack.c.h.b16 %v1493
    %v6380 = vunpack.c.l.b16 %v1494
    %v6381 = vunpack.c.h.b16 %v1494
    %v6382 = vunpack.c.l.b16 %v1495
    %v6383 = vunpack.c.h.b16 %v1495
    %v6384 = vunpack.c.l.b16 %v1496
    %v6385 = vunpack.c.h.b16 %v1496
    %v6386 = vunpack.c.l.b16 %v1497
    %v6387 = vunpack.c.h.b16 %v1497
    %v6388 = vunpack.c.l.b16 %v1498
    %v6389 = vunpack.c.h.b16 %v1498
    %v6390 = vunpack.c.l.b16 %v1499
    %v6391 = vunpack.c.h.b16 %v1499
    %v6392 = vunpack.c.l.b16 %v1500
    %v6393 = vunpack.c.h.b16 %v1500
    %v6394 = vunpack.c.l.b16 %v1501
    %v6395 = vunpack.c.h.b16 %v1501
    %v6396 = vunpack.c.l.b16 %v1502
    %v6397 = vunpack.c.h.b16 %v1502
    %v6398 = vunpack.c.l.b16 %v1503
    %v6399 = vunpack.c.h.b16 %v1503
    %v6400 = vunpack.c.l.b16 %v1504
    %v6401 = vunpack.c.h.b16 %v1504
    %v6402 = vunpack.c.l.b16 %v1505
    %v6403 = vunpack.c.h.b16 %v1505
    %v6404 = vunpack.c.l.b16 %v1506
    %v6405 = vunpack.c.h.b16 %v1506
    %v6406 = vunpack.c.l.b16 %v1507
    %v6407 = vunpack.c.h.b16 %v1507
    %v6408 = vunpack.c.l.b16 %v1508
    %v6409 = vunpack.c.h.b16 %v1508
    %v6410 = vunpack.c.l.b16 %v1509
    %v6411 = vunpack.c.h.b16 %v1509
    %v6412 = vunpack.c.l.b16 %v1510
    %v6413 = vunpack.c.h.b16 %v1510
    %v6414 = vunpack.c.l.b16 %v1511
    %v6415 = vunpack.c.h.b16 %v1511
    %v6416 = vunpack.c.l.b16 %v1512
    %v6417 = vunpack.c.h.b16 %v1512
    %v6418 = vunpack.c.l.b16 %v1513
    %v6419 = vunpack.c.h.b16 %v1513
    %v6420 = vunpack.c.l.b16 %v1514
    %v6421 = vunpack.c.h.b16 %v1514
    %v6422 = vunpack.c.l.b16 %v1515
    %v6423 = vunpack.c.h.b16 %v1515
    %v6424 = vunpack.c.l.b16 %v1516
    %v6425 = vunpack.c.h.b16 %v1516
    %v6426 = vunpack.c.l.b16 %v1517
    %v6427 = vunpack.c.h.b16 %v1517
    %v6428 = vunpack.c.l.b16 %v1518
    %v6429 = vunpack.c.h.b16 %v1518
    %v6430 = vunpack.c.l.b16 %v1519
    %v6431 = vunpack.c.h.b16 %v1519
    %v6432 = vunpack.c.l.b16 %v1520
    %v6433 = vunpack.c.h.b16 %v1520
    %v6434 = vunpack.c.l.b16 %v1521
    %v6435 = vunpack.c.h.b16 %v1521
    %v6436 = vunpack.c.l.b16 %v1522
    %v6437 = vunpack.c.h.b16 %v1522
    %v6438 = vunpack.c.l.b16 %v1523
    %v6439 = vunpack.c.h.b16 %v1523
    %v6440 = vunpack.c.l.b16 %v1524
    %v6441 = vunpack.c.h.b16 %v1524
    %v6442 = vunpack.c.l.b16 %v1525
    %v6443 = vunpack.c.h.b16 %v1525
    %v6444 = vpack.c.b16 %v4144, %v4140
    %v6445 = vpack.c.b16 %v4145, %v4141
    %v6446 = vpack.c.b16 %v4146, %v4142
    %v6447 = vpack.c.b16 %v4147, %v4143
    %v6448 = vpack.c.b16 %v4152, %v4148
    %v6449 = vpack.c.b16 %v4153, %v4149
    %v6450 = vpack.c.b16 %v4154, %v4150
    %v6451 = vpack.c.b16 %v4155, %v4151
    %v6452 = vpack.c.b16 %v4160, %v4156
    %v6453 = vpack.c.b16 %v4161, %v4157
    %v6454 = vpack.c.b16 %v4162, %v4158
    %v6455 = vpack.c.b16 %v4163, %v4159
    %v6456 = vpack.c.b16 %v4168, %v4164
    %v6457 = vpack.c.b16 %v4169, %v4165
    %v6458 = vpack.c.b16 %v4170, %v4166
    %v6459 = vpack.c.b16 %v4171, %v4167
    %v6460 = vpack.c.b16 %v4176, %v4172
    %v6461 = vpack.c.b16 %v4177, %v4173
    %v6462 = vpack.c.b16 %v4178, %v4174
    %v6463 = vpack.c.b16 %v4179, %v4175
    %v6464 = vpack.c.b16 %v4184, %v4180
    %v6465 = vpack.c.b16 %v4185, %v4181
    %v6466 = vpack.c.b16 %v4186, %v4182
    %v6467 = vpack.c.b16 %v4187, %v4183
    %v6468 = vpack.c.b16 %v4192, %v4188
    %v6469 = vpack.c.b16 %v4193, %v4189
    %v6470 = vpack.c.b16 %v4194, %v4190
    %v6471 = vpack.c.b16 %v4195, %v4191
    %v6472 = vpack.c.b16 %v4200, %v4196
    %v6473 = vpack.c.b16 %v4201, %v4197
    %v6474 = vpack.c.b16 %v4202, %v4198
    %v6475 = vpack.c.b16 %v4203, %v4199
    %v6476 = vpack.c.b16 %v4208, %v4204
    %v6477 = vpack.c.b16 %v4209, %v4205
    %v6478 = vpack.c.b16 %v4210, %v4206
    %v6479 = vpack.c.b16 %v4211, %v4207
    %v6480 = vpack.c.b16 %v4216, %v4212
    %v6481 = vpack.c.b16 %v4217, %v4213
    %v6482 = vpack.c.b16 %v4218, %v4214
    %v6483 = vpack.c.b16 %v4219, %v4215
    %v6484 = vpack.c.b16 %v4224, %v4220
    %v6485 = vpack.c.b16 %v4225, %v4221
    %v6486 = vpack.c.b16 %v4226, %v4222
    %v6487 = vpack.c.b16 %v4227, %v4223
    %v6488 = vpack.c.b16 %v4232, %v4228
    %v6489 = vpack.c.b16 %v4233, %v4229
    %v6490 = vpack.c.b16 %v4234, %v4230
    %v6491 = vpack.c.b16 %v4235, %v4231
    %v6492 = vpack.c.b16 %v4240, %v4236
    %v6493 = vpack.c.b16 %v4241, %v4237
    %v6494 = vpack.c.b16 %v4242, %v4238
    %v6495 = vpack.c.b16 %v4243, %v4239
    %v6496 = vpack.c.b16 %v4248, %v4244
    %v6497 = vpack.c.b16 %v4249, %v4245
    %v6498 = vpack.c.b16 %v4250, %v4246
    %v6499 = vpack.c.b16 %v4251, %v4247
    %v6500 = vpack.c.b16 %v4256, %v4252
    %v6501 = vpack.c.b16 %v4257, %v4253
    %v6502 = vpack.c.b16 %v4258, %v4254
    %v6503 = vpack.c.b16 %v4259, %v4255
    %v6504 = vpack.c.b16 %v4264, %v4260
    %v6505 = vpack.c.b16 %v4265, %v4261
    %v6506 = vpack.c.b16 %v4266, %v4262
    %v6507 = vpack.c.b16 %v4267, %v4263
    %v6508 = vpack.c.b16 %v4272, %v4268
    %v6509 = vpack.c.b16 %v4273, %v4269
    %v6510 = vpack.c.b16 %v4274, %v4270
    %v6511 = vpack.c.b16 %v4275, %v4271
    %v6512 = vpack.c.b16 %v4280, %v4276
    %v6513 = vpack.c.b16 %v4281, %v4277
    %v6514 = vpack.c.b16 %v4282, %v4278
    %v6515 = vpack.c.b16 %v4283, %v4279
    %v6516 = vpack.c.b16 %v4288, %v4284
    %v6517 = vpack.c.b16 %v4289, %v4285
    %v6518 = vpack.c.b16 %v4290, %v4286
    %v6519 = vpack.c.b16 %v4291, %v4287
    %v6520 = vpack.c.b16 %v4296, %v4292
    %v6521 = vpack.c.b16 %v4297, %v4293
    %v6522 = vpack.c.b16 %v4298, %v4294
    %v6523 = vpack.c.b16 %v4299, %v4295
    %v6524 = vpack.c.b16 %v4304, %v4300
    %v6525 = vpack.c.b16 %v4305, %v4301
    %v6526 = vpack.c.b16 %v4306, %v4302
    %v6527 = vpack.c.b16 %v4307, %v4303
    %v6528 = vpack.c.b16 %v4312, %v4308
    %v6529 = vpack.c.b16 %v4313, %v4309
    %v6530 = vpack.c.b16 %v4314, %v4310
    %v6531 = vpack.c.b16 %v4315, %v4311
    %v6532 = vpack.c.b16 %v4320, %v4316
    %v6533 = vpack.c.b16 %v4321, %v4317
    %v6534 = vpack.c.b16 %v4322, %v4318
    %v6535 = vpack.c.b16 %v4323, %v4319
    %v6536 = vpack.c.b16 %v4328, %v4324
    %v6537 = vpack.c.b16 %v4329, %v4325
    %v6538 = vpack.c.b16 %v4330, %v4326
    %v6539 = vpack.c.b16 %v4331, %v4327
    %v6540 = vpack.c.b16 %v4336, %v4332
    %v6541 = vpack.c.b16 %v4337, %v4333
    %v6542 = vpack.c.b16 %v4338, %v4334
    %v6543 = vpack.c.b16 %v4339, %v4335
    %v6544 = vpack.c.b16 %v4344, %v4340
    %v6545 = vpack.c.b16 %v4345, %v4341
    %v6546 = vpack.c.b16 %v4346, %v4342
    %v6547 = vpack.c.b16 %v4347, %v4343
    %v6548 = vpack.c.b16 %v4352, %v4348
    %v6549 = vpack.c.b16 %v4353, %v4349
    %v6550 = vpack.c.b16 %v4354, %v4350
    %v6551 = vpack.c.b16 %v4355, %v4351
    %v6552 = vpack.c.b16 %v4360, %v4356
    %v6553 = vpack.c.b16 %v4361, %v4357
    %v6554 = vpack.c.b16 %v4362, %v4358
    %v6555 = vpack.c.b16 %v4363, %v4359
    %v6556 = vpack.c.b16 %v4368, %v4364
    %v6557 = vpack.c.b16 %v4369, %v4365
    %v6558 = vpack.c.b16 %v4370, %v4366
    %v6559 = vpack.c.b16 %v4371, %v4367
    %v6560 = vpack.c.b16 %v4376, %v4372
    %v6561 = vpack.c.b16 %v4377, %v4373
    %v6562 = vpack.c.b16 %v4378, %v4374
    %v6563 = vpack.c.b16 %v4379, %v4375
    %v6564 = vpack.c.b16 %v4384, %v4380
    %v6565 = vpack.c.b16 %v4385, %v4381
    %v6566 = vpack.c.b16 %v4386, %v4382
    %v6567 = vpack.c.b16 %v4387, %v4383
    %v6568 = vpack.c.b16 %v4392, %v4388
    %v6569 = vpack.c.b16 %v4393, %v4389
    %v6570 = vpack.c.b16 %v4394, %v4390
    %v6571 = vpack.c.b16 %v4395, %v4391
    %v6572 = vpack.c.b16 %v4400, %v4396
    %v6573 = vpack.c.b16 %v4401, %v4397
    %v6574 = vpack.c.b16 %v4402, %v4398
    %v6575 = vpack.c.b16 %v4403, %v4399
    %v6576 = vpack.c.b16 %v4408, %v4404
    %v6577 = vpack.c.b16 %v4409, %v4405
    %v6578 = vpack.c.b16 %v4410, %v4406
    %v6579 = vpack.c.b16 %v4411, %v4407
    %v6580 = vpack.c.b16 %v4416, %v4412
    %v6581 = vpack.c.b16 %v4417, %v4413
    %v6582 = vpack.c.b16 %v4418, %v4414
    %v6583 = vpack.c.b16 %v4419, %v4415
    %v6584 = vpack.c.b16 %v4424, %v4420
    %v6585 = vpack.c.b16 %v4425, %v4421
    %v6586 = vpack.c.b16 %v4426, %v4422
    %v6587 = vpack.c.b16 %v4427, %v4423
    %v6588 = vpack.c.b16 %v4432, %v4428
    %v6589 = vpack.c.b16 %v4433, %v4429
    %v6590 = vpack.c.b16 %v4434, %v4430
    %v6591 = vpack.c.b16 %v4435, %v4431
    %v6592 = vpack.c.b16 %v4440, %v4436
    %v6593 = vpack.c.b16 %v4441, %v4437
    %v6594 = vpack.c.b16 %v4442, %v4438
    %v6595 = vpack.c.b16 %v4443, %v4439
    %v6596 = vpack.c.b16 %v4448, %v4444
    %v6597 = vpack.c.b16 %v4449, %v4445
    %v6598 = vpack.c.b16 %v4450, %v4446
    %v6599 = vpack.c.b16 %v4451, %v4447
    %v6600 = vpack.c.b16 %v4456, %v4452
    %v6601 = vpack.c.b16 %v4457, %v4453
    %v6602 = vpack.c.b16 %v4458, %v4454
    %v6603 = vpack.c.b16 %v4459, %v4455
    %v6604 = vpack.c.b16 %v4464, %v4460
    %v6605 = vpack.c.b16 %v4465, %v4461
    %v6606 = vpack.c.b16 %v4466, %v4462
    %v6607 = vpack.c.b16 %v4467, %v4463
    %v6608 = vpack.c.b16 %v4472, %v4468
    %v6609 = vpack.c.b16 %v4473, %v4469
    %v6610 = vpack.c.b16 %v4474, %v4470
    %v6611 = vpack.c.b16 %v4475, %v4471
    %v6612 = vpack.c.b16 %v4480, %v4476
    %v6613 = vpack.c.b16 %v4481, %v4477
    %v6614 = vpack.c.b16 %v4482, %v4478
    %v6615 = vpack.c.b16 %v4483, %v4479
    %v6616 = vpack.c.b16 %v4488, %v4484
    %v6617 = vpack.c.b16 %v4489, %v4485
    %v6618 = vpack.c.b16 %v4490, %v4486
    %v6619 = vpack.c.b16 %v4491, %v4487
    %v6620 = vpack.c.b16 %v4496, %v4492
    %v6621 = vpack.c.b16 %v4497, %v4493
    %v6622 = vpack.c.b16 %v4498, %v4494
    %v6623 = vpack.c.b16 %v4499, %v4495
    %v6624 = vpack.c.b16 %v4504, %v4500
    %v6625 = vpack.c.b16 %v4505, %v4501
    %v6626 = vpack.c.b16 %v4506, %v4502
    %v6627 = vpack.c.b16 %v4507, %v4503
    %v6628 = vpack.c.b16 %v4512, %v4508
    %v6629 = vpack.c.b16 %v4513, %v4509
    %v6630 = vpack.c.b16 %v4514, %v4510
    %v6631 = vpack.c.b16 %v4515, %v4511
    %v6632 = vpack.c.b16 %v4520, %v4516
    %v6633 = vpack.c.b16 %v4521, %v4517
    %v6634 = vpack.c.b16 %v4522, %v4518
    %v6635 = vpack.c.b16 %v4523, %v4519
    %v6636 = vpack.c.b16 %v4528, %v4524
    %v6637 = vpack.c.b16 %v4529, %v4525
    %v6638 = vpack.c.b16 %v4530, %v4526
    %v6639 = vpack.c.b16 %v4531, %v4527
    %v6640 = vpack.c.b16 %v4536, %v4532
    %v6641 = vpack.c.b16 %v4537, %v4533
    %v6642 = vpack.c.b16 %v4538, %v4534
    %v6643 = vpack.c.b16 %v4539, %v4535
    %v6644 = vpack.c.b16 %v4544, %v4540
    %v6645 = vpack.c.b16 %v4545, %v4541
    %v6646 = vpack.c.b16 %v4546, %v4542
    %v6647 = vpack.c.b16 %v4547, %v4543
    %v6648 = vpack.c.b16 %v4552, %v4548
    %v6649 = vpack.c.b16 %v4553, %v4549
    %v6650 = vpack.c.b16 %v4554, %v4550
    %v6651 = vpack.c.b16 %v4555, %v4551
    %v6652 = vpack.c.b16 %v4560, %v4556
    %v6653 = vpack.c.b16 %v4561, %v4557
    %v6654 = vpack.c.b16 %v4562, %v4558
    %v6655 = vpack.c.b16 %v4563, %v4559
    %v6656 = vpack.c.b16 %v4568, %v4564
    %v6657 = vpack.c.b16 %v4569, %v4565
    %v6658 = vpack.c.b16 %v4570, %v4566
    %v6659 = vpack.c.b16 %v4571, %v4567
    %v6660 = vpack.c.b16 %v4576, %v4572
    %v6661 = vpack.c.b16 %v4577, %v4573
    %v6662 = vpack.c.b16 %v4578, %v4574
    %v6663 = vpack.c.b16 %v4579, %v4575
    %v6664 = vpack.c.b16 %v4584, %v4580
    %v6665 = vpack.c.b16 %v4585, %v4581
    %v6666 = vpack.c.b16 %v4586, %v4582
    %v6667 = vpack.c.b16 %v4587, %v4583
    %v6668 = vpack.c.b16 %v4592, %v4588
    %v6669 = vpack.c.b16 %v4593, %v4589
    %v6670 = vpack.c.b16 %v4594, %v4590
    %v6671 = vpack.c.b16 %v4595, %v4591
    %v6672 = vpack.c.b16 %v4600, %v4596
    %v6673 = vpack.c.b16 %v4601, %v4597
    %v6674 = vpack.c.b16 %v4602, %v4598
    %v6675 = vpack.c.b16 %v4603, %v4599
    %v6676 = vpack.c.b16 %v4608, %v4604
    %v6677 = vpack.c.b16 %v4609, %v4605
    %v6678 = vpack.c.b16 %v4610, %v4606
    %v6679 = vpack.c.b16 %v4611, %v4607
    %v6680 = vpack.c.b16 %v4616, %v4612
    %v6681 = vpack.c.b16 %v4617, %v4613
    %v6682 = vpack.c.b16 %v4618, %v4614
    %v6683 = vpack.c.b16 %v4619, %v4615
    %v6684 = vpack.c.b16 %v4624, %v4620
    %v6685 = vpack.c.b16 %v4625, %v4621
    %v6686 = vpack.c.b16 %v4626, %v4622
    %v6687 = vpack.c.b16 %v4627, %v4623
    %v6688 = vpack.c.b16 %v4632, %v4628
    %v6689 = vpack.c.b16 %v4633, %v4629
    %v6690 = vpack.c.b16 %v4634, %v4630
    %v6691 = vpack.c.b16 %v4635, %v4631
    %v6692 = vpack.c.b16 %v4640, %v4636
    %v6693 = vpack.c.b16 %v4641, %v4637
    %v6694 = vpack.c.b16 %v4642, %v4638
    %v6695 = vpack.c.b16 %v4643, %v4639
    %v6696 = vpack.c.b16 %v4648, %v4644
    %v6697 = vpack.c.b16 %v4649, %v4645
    %v6698 = vpack.c.b16 %v4650, %v4646
    %v6699 = vpack.c.b16 %v4651, %v4647
    %v6700 = vpack.c.b16 %v4656, %v4652
    %v6701 = vpack.c.b16 %v4657, %v4653
    %v6702 = vpack.c.b16 %v4658, %v4654
    %v6703 = vpack.c.b16 %v4659, %v4655
    %v6704 = vpack.c.b16 %v4664, %v4660
    %v6705 = vpack.c.b16 %v4665, %v4661
    %v6706 = vpack.c.b16 %v4666, %v4662
    %v6707 = vpack.c.b16 %v4667, %v4663
    %v6708 = vpack.c.b16 %v4672, %v4668
    %v6709 = vpack.c.b16 %v4673, %v4669
    %v6710 = vpack.c.b16 %v4674, %v4670
    %v6711 = vpack.c.b16 %v4675, %v4671
    %v6712 = vpack.c.b16 %v4680, %v4676
    %v6713 = vpack.c.b16 %v4681, %v4677
    %v6714 = vpack.c.b16 %v4682, %v4678
    %v6715 = vpack.c.b16 %v4683, %v4679
    %v6716 = vpack.c.b16 %v4688, %v4684
    %v6717 = vpack.c.b16 %v4689, %v4685
    %v6718 = vpack.c.b16 %v4690, %v4686
    %v6719 = vpack.c.b16 %v4691, %v4687
    %v6720 = vpack.c.b16 %v4696, %v4692
    %v6721 = vpack.c.b16 %v4697, %v4693
    %v6722 = vpack.c.b16 %v4698, %v4694
    %v6723 = vpack.c.b16 %v4699, %v4695
    %v6724 = vpack.c.b16 %v4704, %v4700
    %v6725 = vpack.c.b16 %v4705, %v4701
    %v6726 = vpack.c.b16 %v4706, %v4702
    %v6727 = vpack.c.b16 %v4707, %v4703
    %v6728 = vpack.c.b16 %v4712, %v4708
    %v6729 = vpack.c.b16 %v4713, %v4709
    %v6730 = vpack.c.b16 %v4714, %v4710
    %v6731 = vpack.c.b16 %v4715, %v4711
    %v6732 = vpack.c.b16 %v4720, %v4716
    %v6733 = vpack.c.b16 %v4721, %v4717
    %v6734 = vpack.c.b16 %v4722, %v4718
    %v6735 = vpack.c.b16 %v4723, %v4719
    %v6736 = vpack.c.b16 %v4728, %v4724
    %v6737 = vpack.c.b16 %v4729, %v4725
    %v6738 = vpack.c.b16 %v4730, %v4726
    %v6739 = vpack.c.b16 %v4731, %v4727
    %v6740 = vpack.c.b16 %v4736, %v4732
    %v6741 = vpack.c.b16 %v4737, %v4733
    %v6742 = vpack.c.b16 %v4738, %v4734
    %v6743 = vpack.c.b16 %v4739, %v4735
    %v6744 = vpack.c.b16 %v4744, %v4740
    %v6745 = vpack.c.b16 %v4745, %v4741
    %v6746 = vpack.c.b16 %v4746, %v4742
    %v6747 = vpack.c.b16 %v4747, %v4743
    %v6748 = vpack.c.b16 %v4752, %v4748
    %v6749 = vpack.c.b16 %v4753, %v4749
    %v6750 = vpack.c.b16 %v4754, %v4750
    %v6751 = vpack.c.b16 %v4755, %v4751
    %v6752 = vpack.c.b16 %v4760, %v4756
    %v6753 = vpack.c.b16 %v4761, %v4757
    %v6754 = vpack.c.b16 %v4762, %v4758
    %v6755 = vpack.c.b16 %v4763, %v4759
    %v6756 = vpack.c.b16 %v4768, %v4764
    %v6757 = vpack.c.b16 %v4769, %v4765
    %v6758 = vpack.c.b16 %v4770, %v4766
    %v6759 = vpack.c.b16 %v4771, %v4767
    %v6760 = vpack.c.b16 %v4776, %v4772
    %v6761 = vpack.c.b16 %v4777, %v4773
    %v6762 = vpack.c.b16 %v4778, %v4774
    %v6763 = vpack.c.b16 %v4779, %v4775
    %v6764 = vpack.c.b16 %v4784, %v4780
    %v6765 = vpack.c.b16 %v4785, %v4781
    %v6766 = vpack.c.b16 %v4786, %v4782
    %v6767 = vpack.c.b16 %v4787, %v4783
    %v6768 = vpack.c.b16 %v4792, %v4788
    %v6769 = vpack.c.b16 %v4793, %v4789
    %v6770 = vpack.c.b16 %v4794, %v4790
    %v6771 = vpack.c.b16 %v4795, %v4791
    %v6772 = vpack.c.b16 %v4800, %v4796
    %v6773 = vpack.c.b16 %v4801, %v4797
    %v6774 = vpack.c.b16 %v4802, %v4798
    %v6775 = vpack.c.b16 %v4803, %v4799
    %v6776 = vpack.c.b16 %v4808, %v4804
    %v6777 = vpack.c.b16 %v4809, %v4805
    %v6778 = vpack.c.b16 %v4810, %v4806
    %v6779 = vpack.c.b16 %v4811, %v4807
    %v6780 = vpack.c.b16 %v4816, %v4812
    %v6781 = vpack.c.b16 %v4817, %v4813
    %v6782 = vpack.c.b16 %v4818, %v4814
    %v6783 = vpack.c.b16 %v4819, %v4815
    %v6784 = vpack.c.b16 %v4824, %v4820
    %v6785 = vpack.c.b16 %v4825, %v4821
    %v6786 = vpack.c.b16 %v4826, %v4822
    %v6787 = vpack.c.b16 %v4827, %v4823
    %v6788 = vpack.c.b16 %v4832, %v4828
    %v6789 = vpack.c.b16 %v4833, %v4829
    %v6790 = vpack.c.b16 %v4834, %v4830
    %v6791 = vpack.c.b16 %v4835, %v4831
    %v6792 = vpack.c.b16 %v4840, %v4836
    %v6793 = vpack.c.b16 %v4841, %v4837
    %v6794 = vpack.c.b16 %v4842, %v4838
    %v6795 = vpack.c.b16 %v4843, %v4839
    %v6796 = vpack.c.b16 %v4848, %v4844
    %v6797 = vpack.c.b16 %v4849, %v4845
    %v6798 = vpack.c.b16 %v4850, %v4846
    %v6799 = vpack.c.b16 %v4851, %v4847
    %v6800 = vpack.c.b16 %v4856, %v4852
    %v6801 = vpack.c.b16 %v4857, %v4853
    %v6802 = vpack.c.b16 %v4858, %v4854
    %v6803 = vpack.c.b16 %v4859, %v4855
    %v6804 = vpack.c.b16 %v4864, %v4860
    %v6805 = vpack.c.b16 %v4865, %v4861
    %v6806 = vpack.c.b16 %v4866, %v4862
    %v6807 = vpack.c.b16 %v4867, %v4863
    %v6808 = vpack.c.b16 %v4872, %v4868
    %v6809 = vpack.c.b16 %v4873, %v4869
    %v6810 = vpack.c.b16 %v4874, %v4870
    %v6811 = vpack.c.b16 %v4875, %v4871
    %v6812 = vpack.c.b16 %v4880, %v4876
    %v6813 = vpack.c.b16 %v4881, %v4877
    %v6814 = vpack.c.b16 %v4882, %v4878
    %v6815 = vpack.c.b16 %v4883, %v4879
    %v6816 = vpack.c.b16 %v4888, %v4884
    %v6817 = vpack.c.b16 %v4889, %v4885
    %v6818 = vpack.c.b16 %v4890, %v4886
    %v6819 = vpack.c.b16 %v4891, %v4887
    %v6820 = vpack.c.b16 %v4896, %v4892
    %v6821 = vpack.c.b16 %v4897, %v4893
    %v6822 = vpack.c.b16 %v4898, %v4894
    %v6823 = vpack.c.b16 %v4899, %v4895
    %v6824 = vpack.c.b16 %v4904, %v4900
    %v6825 = vpack.c.b16 %v4905, %v4901
    %v6826 = vpack.c.b16 %v4906, %v4902
    %v6827 = vpack.c.b16 %v4907, %v4903
    %v6828 = vpack.c.b16 %v4912, %v4908
    %v6829 = vpack.c.b16 %v4913, %v4909
    %v6830 = vpack.c.b16 %v4914, %v4910
    %v6831 = vpack.c.b16 %v4915, %v4911
    %v6832 = vpack.c.b16 %v4920, %v4916
    %v6833 = vpack.c.b16 %v4921, %v4917
    %v6834 = vpack.c.b16 %v4922, %v4918
    %v6835 = vpack.c.b16 %v4923, %v4919
    %v6836 = vpack.c.b16 %v4928, %v4924
    %v6837 = vpack.c.b16 %v4929, %v4925
    %v6838 = vpack.c.b16 %v4930, %v4926
    %v6839 = vpack.c.b16 %v4931, %v4927
    %v6840 = vpack.c.b16 %v4936, %v4932
    %v6841 = vpack.c.b16 %v4937, %v4933
    %v6842 = vpack.c.b16 %v4938, %v4934
    %v6843 = vpack.c.b16 %v4939, %v4935
    %v6844 = vpack.c.b16 %v4944, %v4940
    %v6845 = vpack.c.b16 %v4945, %v4941
    %v6846 = vpack.c.b16 %v4946, %v4942
    %v6847 = vpack.c.b16 %v4947, %v4943
    %v6848 = vpack.c.b16 %v4952, %v4948
    %v6849 = vpack.c.b16 %v4953, %v4949
    %v6850 = vpack.c.b16 %v4954, %v4950
    %v6851 = vpack.c.b16 %v4955, %v4951
    %v6852 = vpack.c.b16 %v4960, %v4956
    %v6853 = vpack.c.b16 %v4961, %v4957
    %v6854 = vpack.c.b16 %v4962, %v4958
    %v6855 = vpack.c.b16 %v4963, %v4959
    %v6856 = vpack.c.b16 %v4968, %v4964
    %v6857 = vpack.c.b16 %v4969, %v4965
    %v6858 = vpack.c.b16 %v4970, %v4966
    %v6859 = vpack.c.b16 %v4971, %v4967
    %v6860 = vpack.c.b16 %v4976, %v4972
    %v6861 = vpack.c.b16 %v4977, %v4973
    %v6862 = vpack.c.b16 %v4978, %v4974
    %v6863 = vpack.c.b16 %v4979, %v4975
    %v6864 = vpack.c.b16 %v4984, %v4980
    %v6865 = vpack.c.b16 %v4985, %v4981
    %v6866 = vpack.c.b16 %v4986, %v4982
    %v6867 = vpack.c.b16 %v4987, %v4983
    %v6868 = vpack.c.b16 %v4992, %v4988
    %v6869 = vpack.c.b16 %v4993, %v4989
    %v6870 = vpack.c.b16 %v4994, %v4990
    %v6871 = vpack.c.b16 %v4995, %v4991
    %v6872 = vpack.c.b16 %v5000, %v4996
    %v6873 = vpack.c.b16 %v5001, %v4997
    %v6874 = vpack.c.b16 %v5002, %v4998
    %v6875 = vpack.c.b16 %v5003, %v4999
    %v6876 = vpack.c.b16 %v5008, %v5004
    %v6877 = vpack.c.b16 %v5009, %v5005
    %v6878 = vpack.c.b16 %v5010, %v5006
    %v6879 = vpack.c.b16 %v5011, %v5007
    %v6880 = vpack.c.b16 %v5016, %v5012
    %v6881 = vpack.c.b16 %v5017, %v5013
    %v6882 = vpack.c.b16 %v5018, %v5014
    %v6883 = vpack.c.b16 %v5019, %v5015
    %v6884 = vpack.c.b16 %v5024, %v5020
    %v6885 = vpack.c.b16 %v5025, %v5021
    %v6886 = vpack.c.b16 %v5026, %v5022
    %v6887 = vpack.c.b16 %v5027, %v5023
    %v6888 = vpack.c.b16 %v5032, %v5028
    %v6889 = vpack.c.b16 %v5033, %v5029
    %v6890 = vpack.c.b16 %v5034, %v5030
    %v6891 = vpack.c.b16 %v5035, %v5031
    %v6892 = vpack.c.b16 %v5040, %v5036
    %v6893 = vpack.c.b16 %v5041, %v5037
    %v6894 = vpack.c.b16 %v5042, %v5038
    %v6895 = vpack.c.b16 %v5043, %v5039
    %v6896 = vpack.c.b16 %v5048, %v5044
    %v6897 = vpack.c.b16 %v5049, %v5045
    %v6898 = vpack.c.b16 %v5050, %v5046
    %v6899 = vpack.c.b16 %v5051, %v5047
    %v6900 = vpack.c.b16 %v5056, %v5052
    %v6901 = vpack.c.b16 %v5057, %v5053
    %v6902 = vpack.c.b16 %v5058, %v5054
    %v6903 = vpack.c.b16 %v5059, %v5055
    %v6904 = vpack.c.b16 %v5064, %v5060
    %v6905 = vpack.c.b16 %v5065, %v5061
    %v6906 = vpack.c.b16 %v5066, %v5062
    %v6907 = vpack.c.b16 %v5067, %v5063
    %v6908 = vpack.c.b16 %v5072, %v5068
    %v6909 = vpack.c.b16 %v5073, %v5069
    %v6910 = vpack.c.b16 %v5074, %v5070
    %v6911 = vpack.c.b16 %v5075, %v5071
    %v6912 = vpack.c.b16 %v5080, %v5076
    %v6913 = vpack.c.b16 %v5081, %v5077
    %v6914 = vpack.c.b16 %v5082, %v5078
    %v6915 = vpack.c.b16 %v5083, %v5079
    %v6916 = vpack.c.b16 %v5088, %v5084
    %v6917 = vpack.c.b16 %v5089, %v5085
    %v6918 = vpack.c.b16 %v5090, %v5086
    %v6919 = vpack.c.b16 %v5091, %v5087
    %v6920 = vpack.c.b16 %v5096, %v5092
    %v6921 = vpack.c.b16 %v5097, %v5093
    %v6922 = vpack.c.b16 %v5098, %v5094
    %v6923 = vpack.c.b16 %v5099, %v5095
    %v6924 = vpack.c.b16 %v5104, %v5100
    %v6925 = vpack.c.b16 %v5105, %v5101
    %v6926 = vpack.c.b16 %v5106, %v5102
    %v6927 = vpack.c.b16 %v5107, %v5103
    %v6928 = vpack.c.b16 %v5112, %v5108
    %v6929 = vpack.c.b16 %v5113, %v5109
    %v6930 = vpack.c.b16 %v5114, %v5110
    %v6931 = vpack.c.b16 %v5115, %v5111
    %v6932 = vpack.c.b16 %v5120, %v5116
    %v6933 = vpack.c.b16 %v5121, %v5117
    %v6934 = vpack.c.b16 %v5122, %v5118
    %v6935 = vpack.c.b16 %v5123, %v5119
    %v6936 = vpack.c.b16 %v5128, %v5124
    %v6937 = vpack.c.b16 %v5129, %v5125
    %v6938 = vpack.c.b16 %v5130, %v5126
    %v6939 = vpack.c.b16 %v5131, %v5127
    %v6940 = vpack.c.b16 %v5136, %v5132
    %v6941 = vpack.c.b16 %v5137, %v5133
    %v6942 = vpack.c.b16 %v5138, %v5134
    %v6943 = vpack.c.b16 %v5139, %v5135
    %v6944 = vpack.c.b16 %v5144, %v5140
    %v6945 = vpack.c.b16 %v5145, %v5141
    %v6946 = vpack.c.b16 %v5146, %v5142
    %v6947 = vpack.c.b16 %v5147, %v5143
    %v6948 = vpack.c.b16 %v5152, %v5148
    %v6949 = vpack.c.b16 %v5153, %v5149
    %v6950 = vpack.c.b16 %v5154, %v5150
    %v6951 = vpack.c.b16 %v5155, %v5151
    %v6952 = vpack.c.b16 %v5160, %v5156
    %v6953 = vpack.c.b16 %v5161, %v5157
    %v6954 = vpack.c.b16 %v5162, %v5158
    %v6955 = vpack.c.b16 %v5163, %v5159
    %v6956 = vpack.c.b16 %v5168, %v5164
    %v6957 = vpack.c.b16 %v5169, %v5165
    %v6958 = vpack.c.b16 %v5170, %v5166
    %v6959 = vpack.c.b16 %v5171, %v5167
    %v6960 = vpack.c.b16 %v5176, %v5172
    %v6961 = vpack.c.b16 %v5177, %v5173
    %v6962 = vpack.c.b16 %v5178, %v5174
    %v6963 = vpack.c.b16 %v5179, %v5175
    %v6964 = vpack.c.b16 %v5184, %v5180
    %v6965 = vpack.c.b16 %v5185, %v5181
    %v6966 = vpack.c.b16 %v5186, %v5182
    %v6967 = vpack.c.b16 %v5187, %v5183
    %v6968 = vpack.c.b16 %v5192, %v5188
    %v6969 = vpack.c.b16 %v5193, %v5189
    %v6970 = vpack.c.b16 %v5194, %v5190
    %v6971 = vpack.c.b16 %v5195, %v5191
    %v6972 = vpack.c.b16 %v5200, %v5196
    %v6973 = vpack.c.b16 %v5201, %v5197
    %v6974 = vpack.c.b16 %v5202, %v5198
    %v6975 = vpack.c.b16 %v5203, %v5199
    %v6976 = vpack.c.b16 %v5208, %v5204
    %v6977 = vpack.c.b16 %v5209, %v5205
    %v6978 = vpack.c.b16 %v5210, %v5206
    %v6979 = vpack.c.b16 %v5211, %v5207
    %v6980 = vpack.c.b16 %v5216, %v5212
    %v6981 = vpack.c.b16 %v5217, %v5213
    %v6982 = vpack.c.b16 %v5218, %v5214
    %v6983 = vpack.c.b16 %v5219, %v5215
    %v6984 = vpack.c.b16 %v5224, %v5220
    %v6985 = vpack.c.b16 %v5225, %v5221
    %v6986 = vpack.c.b16 %v5226, %v5222
    %v6987 = vpack.c.b16 %v5227, %v5223
    %v6988 = vpack.c.b16 %v5232, %v5228
    %v6989 = vpack.c.b16 %v5233, %v5229
    %v6990 = vpack.c.b16 %v5234, %v5230
    %v6991 = vpack.c.b16 %v5235, %v5231
    %v6992 = vpack.c.b16 %v5240, %v5236
    %v6993 = vpack.c.b16 %v5241, %v5237
    %v6994 = vpack.c.b16 %v5242, %v5238
    %v6995 = vpack.c.b16 %v5243, %v5239
    %v6996 = vpack.c.b16 %v5248, %v5244
    %v6997 = vpack.c.b16 %v5249, %v5245
    %v6998 = vpack.c.b16 %v5250, %v5246
    %v6999 = vpack.c.b16 %v5251, %v5247
    %v7000 = vpack.c.b16 %v5256, %v5252
    %v7001 = vpack.c.b16 %v5257, %v5253
    %v7002 = vpack.c.b16 %v5258, %v5254
    %v7003 = vpack.c.b16 %v5259, %v5255
    %v7004 = vpack.c.b16 %v5264, %v5260
    %v7005 = vpack.c.b16 %v5265, %v5261
    %v7006 = vpack.c.b16 %v5266, %v5262
    %v7007 = vpack.c.b16 %v5267, %v5263
    %v7008 = vpack.c.b16 %v5272, %v5268
    %v7009 = vpack.c.b16 %v5273, %v5269
    %v7010 = vpack.c.b16 %v5274, %v5270
    %v7011 = vpack.c.b16 %v5275, %v5271
    %v7012 = vpack.c.b16 %v5280, %v5276
    %v7013 = vpack.c.b16 %v5281, %v5277
    %v7014 = vpack.c.b16 %v5282, %v5278
    %v7015 = vpack.c.b16 %v5283, %v5279
    %v7016 = vpack.c.b16 %v5288, %v5284
    %v7017 = vpack.c.b16 %v5289, %v5285
    %v7018 = vpack.c.b16 %v5290, %v5286
    %v7019 = vpack.c.b16 %v5291, %v5287
    %v7020 = vpack.c.b16 %v5296, %v5292
    %v7021 = vpack.c.b16 %v5297, %v5293
    %v7022 = vpack.c.b16 %v5298, %v5294
    %v7023 = vpack.c.b16 %v5299, %v5295
    %v7024 = vpack.c.b16 %v5304, %v5300
    %v7025 = vpack.c.b16 %v5305, %v5301
    %v7026 = vpack.c.b16 %v5306, %v5302
    %v7027 = vpack.c.b16 %v5307, %v5303
    %v7028 = vpack.c.b16 %v5312, %v5308
    %v7029 = vpack.c.b16 %v5313, %v5309
    %v7030 = vpack.c.b16 %v5314, %v5310
    %v7031 = vpack.c.b16 %v5315, %v5311
    %v7032 = vpack.c.b16 %v5320, %v5316
    %v7033 = vpack.c.b16 %v5321, %v5317
    %v7034 = vpack.c.b16 %v5322, %v5318
    %v7035 = vpack.c.b16 %v5323, %v5319
    %v7036 = vpack.c.b16 %v5328, %v5324
    %v7037 = vpack.c.b16 %v5329, %v5325
    %v7038 = vpack.c.b16 %v5330, %v5326
    %v7039 = vpack.c.b16 %v5331, %v5327
    %v7040 = vpack.c.b16 %v5336, %v5332
    %v7041 = vpack.c.b16 %v5337, %v5333
    %v7042 = vpack.c.b16 %v5338, %v5334
    %v7043 = vpack.c.b16 %v5339, %v5335
    %v7044 = vpack.c.b16 %v5344, %v5340
    %v7045 = vpack.c.b16 %v5345, %v5341
    %v7046 = vpack.c.b16 %v5346, %v5342
    %v7047 = vpack.c.b16 %v5347, %v5343
    %v7048 = vpack.c.b16 %v5352, %v5348
    %v7049 = vpack.c.b16 %v5353, %v5349
    %v7050 = vpack.c.b16 %v5354, %v5350
    %v7051 = vpack.c.b16 %v5355, %v5351
    %v7052 = vpack.c.b16 %v5360, %v5356
    %v7053 = vpack.c.b16 %v5361, %v5357
    %v7054 = vpack.c.b16 %v5362, %v5358
    %v7055 = vpack.c.b16 %v5363, %v5359
    %v7056 = vpack.c.b16 %v5368, %v5364
    %v7057 = vpack.c.b16 %v5369, %v5365
    %v7058 = vpack.c.b16 %v5370, %v5366
    %v7059 = vpack.c.b16 %v5371, %v5367
    %v7060 = vpack.c.b16 %v5376, %v5372
    %v7061 = vpack.c.b16 %v5377, %v5373
    %v7062 = vpack.c.b16 %v5378, %v5374
    %v7063 = vpack.c.b16 %v5379, %v5375
    %v7064 = vpack.c.b16 %v5384, %v5380
    %v7065 = vpack.c.b16 %v5385, %v5381
    %v7066 = vpack.c.b16 %v5386, %v5382
    %v7067 = vpack.c.b16 %v5387, %v5383
    %v7068 = vpack.c.b16 %v5392, %v5388
    %v7069 = vpack.c.b16 %v5393, %v5389
    %v7070 = vpack.c.b16 %v5394, %v5390
    %v7071 = vpack.c.b16 %v5395, %v5391
    %v7072 = vpack.c.b16 %v5400, %v5396
    %v7073 = vpack.c.b16 %v5401, %v5397
    %v7074 = vpack.c.b16 %v5402, %v5398
    %v7075 = vpack.c.b16 %v5403, %v5399
    %v7076 = vpack.c.b16 %v5408, %v5404
    %v7077 = vpack.c.b16 %v5409, %v5405
    %v7078 = vpack.c.b16 %v5410, %v5406
    %v7079 = vpack.c.b16 %v5411, %v5407
    %v7080 = vpack.c.b16 %v5416, %v5412
    %v7081 = vpack.c.b16 %v5417, %v5413
    %v7082 = vpack.c.b16 %v5418, %v5414
    %v7083 = vpack.c.b16 %v5419, %v5415
    %v7084 = vpack.c.b16 %v5424, %v5420
    %v7085 = vpack.c.b16 %v5425, %v5421
    %v7086 = vpack.c.b16 %v5426, %v5422
    %v7087 = vpack.c.b16 %v5427, %v5423
    %v7088 = vpack.c.b16 %v5432, %v5428
    %v7089 = vpack.c.b16 %v5433, %v5429
    %v7090 = vpack.c.b16 %v5434, %v5430
    %v7091 = vpack.c.b16 %v5435, %v5431
    %v7092 = vpack.c.b16 %v5440, %v5436
    %v7093 = vpack.c.b16 %v5441, %v5437
    %v7094 = vpack.c.b16 %v5442, %v5438
    %v7095 = vpack.c.b16 %v5443, %v5439
    %v7096 = vpack.c.b16 %v5448, %v5444
    %v7097 = vpack.c.b16 %v5449, %v5445
    %v7098 = vpack.c.b16 %v5450, %v5446
    %v7099 = vpack.c.b16 %v5451, %v5447
    %v7100 = vpack.c.b16 %v5456, %v5452
    %v7101 = vpack.c.b16 %v5457, %v5453
    %v7102 = vpack.c.b16 %v5458, %v5454
    %v7103 = vpack.c.b16 %v5459, %v5455
    %v7104 = vpack.c.b16 %v5464, %v5460
    %v7105 = vpack.c.b16 %v5465, %v5461
    %v7106 = vpack.c.b16 %v5466, %v5462
    %v7107 = vpack.c.b16 %v5467, %v5463
    %v7108 = vpack.c.b16 %v5472, %v5468
    %v7109 = vpack.c.b16 %v5473, %v5469
    %v7110 = vpack.c.b16 %v5474, %v5470
    %v7111 = vpack.c.b16 %v5475, %v5471
    %v7112 = vpack.c.b16 %v5480, %v5476
    %v7113 = vpack.c.b16 %v5481, %v5477
    %v7114 = vpack.c.b16 %v5482, %v5478
    %v7115 = vpack.c.b16 %v5483, %v5479
    %v7116 = vpack.c.b16 %v5488, %v5484
    %v7117 = vpack.c.b16 %v5489, %v5485
    %v7118 = vpack.c.b16 %v5490, %v5486
    %v7119 = vpack.c.b16 %v5491, %v5487
    %v7120 = vpack.c.b16 %v5496, %v5492
    %v7121 = vpack.c.b16 %v5497, %v5493
    %v7122 = vpack.c.b16 %v5498, %v5494
    %v7123 = vpack.c.b16 %v5499, %v5495
    %v7124 = vpack.c.b16 %v5504, %v5500
    %v7125 = vpack.c.b16 %v5505, %v5501
    %v7126 = vpack.c.b16 %v5506, %v5502
    %v7127 = vpack.c.b16 %v5507, %v5503
    %v7128 = vpack.c.b16 %v5512, %v5508
    %v7129 = vpack.c.b16 %v5513, %v5509
    %v7130 = vpack.c.b16 %v5514, %v5510
    %v7131 = vpack.c.b16 %v5515, %v5511
    %v7132 = vpack.c.b16 %v5520, %v5516
    %v7133 = vpack.c.b16 %v5521, %v5517
    %v7134 = vpack.c.b16 %v5522, %v5518
    %v7135 = vpack.c.b16 %v5523, %v5519
    %v7136 = vpack.c.b16 %v5528, %v5524
    %v7137 = vpack.c.b16 %v5529, %v5525
    %v7138 = vpack.c.b16 %v5530, %v5526
    %v7139 = vpack.c.b16 %v5531, %v5527
    %v7140 = vpack.c.b16 %v5536, %v5532
    %v7141 = vpack.c.b16 %v5537, %v5533
    %v7142 = vpack.c.b16 %v5538, %v5534
    %v7143 = vpack.c.b16 %v5539, %v5535
    %v7144 = vpack.c.b16 %v5544, %v5540
    %v7145 = vpack.c.b16 %v5545, %v5541
    %v7146 = vpack.c.b16 %v5546, %v5542
    %v7147 = vpack.c.b16 %v5547, %v5543
    %v7148 = vpack.c.b16 %v5552, %v5548
    %v7149 = vpack.c.b16 %v5553, %v5549
    %v7150 = vpack.c.b16 %v5554, %v5550
    %v7151 = vpack.c.b16 %v5555, %v5551
    %v7152 = vpack.c.b16 %v5560, %v5556
    %v7153 = vpack.c.b16 %v5561, %v5557
    %v7154 = vpack.c.b16 %v5562, %v5558
    %v7155 = vpack.c.b16 %v5563, %v5559
    %v7156 = vpack.c.b16 %v5568, %v5564
    %v7157 = vpack.c.b16 %v5569, %v5565
    %v7158 = vpack.c.b16 %v5570, %v5566
    %v7159 = vpack.c.b16 %v5571, %v5567
    %v7160 = vpack.c.b16 %v5576, %v5572
    %v7161 = vpack.c.b16 %v5577, %v5573
    %v7162 = vpack.c.b16 %v5578, %v5574
    %v7163 = vpack.c.b16 %v5579, %v5575
    %v7164 = vpack.c.b16 %v5584, %v5580
    %v7165 = vpack.c.b16 %v5585, %v5581
    %v7166 = vpack.c.b16 %v5586, %v5582
    %v7167 = vpack.c.b16 %v5587, %v5583
    %v7168 = vpack.c.b16 %v5592, %v5588
    %v7169 = vpack.c.b16 %v5593, %v5589
    %v7170 = vpack.c.b16 %v5594, %v5590
    %v7171 = vpack.c.b16 %v5595, %v5591
    %v7172 = vpack.c.b16 %v5600, %v5596
    %v7173 = vpack.c.b16 %v5601, %v5597
    %v7174 = vpack.c.b16 %v5602, %v5598
    %v7175 = vpack.c.b16 %v5603, %v5599
    %v7176 = vpack.c.b16 %v5608, %v5604
    %v7177 = vpack.c.b16 %v5609, %v5605
    %v7178 = vpack.c.b16 %v5610, %v5606
    %v7179 = vpack.c.b16 %v5611, %v5607
    %v7180 = vpack.c.b16 %v5616, %v5612
    %v7181 = vpack.c.b16 %v5617, %v5613
    %v7182 = vpack.c.b16 %v5618, %v5614
    %v7183 = vpack.c.b16 %v5619, %v5615
    %v7184 = vpack.c.b16 %v5624, %v5620
    %v7185 = vpack.c.b16 %v5625, %v5621
    %v7186 = vpack.c.b16 %v5626, %v5622
    %v7187 = vpack.c.b16 %v5627, %v5623
    %v7188 = vpack.c.b16 %v5632, %v5628
    %v7189 = vpack.c.b16 %v5633, %v5629
    %v7190 = vpack.c.b16 %v5634, %v5630
    %v7191 = vpack.c.b16 %v5635, %v5631
    %v7192 = vpack.c.b16 %v5640, %v5636
    %v7193 = vpack.c.b16 %v5641, %v5637
    %v7194 = vpack.c.b16 %v5642, %v5638
    %v7195 = vpack.c.b16 %v5643, %v5639
    %v7196 = vpack.c.b16 %v5648, %v5644
    %v7197 = vpack.c.b16 %v5649, %v5645
    %v7198 = vpack.c.b16 %v5650, %v5646
    %v7199 = vpack.c.b16 %v5651, %v5647
    %v7200 = vpack.c.b16 %v5656, %v5652
    %v7201 = vpack.c.b16 %v5657, %v5653
    %v7202 = vpack.c.b16 %v5658, %v5654
    %v7203 = vpack.c.b16 %v5659, %v5655
    %v7204 = vpack.c.b16 %v5664, %v5660
    %v7205 = vpack.c.b16 %v5665, %v5661
    %v7206 = vpack.c.b16 %v5666, %v5662
    %v7207 = vpack.c.b16 %v5667, %v5663
    %v7208 = vpack.c.b16 %v5672, %v5668
    %v7209 = vpack.c.b16 %v5673, %v5669
    %v7210 = vpack.c.b16 %v5674, %v5670
    %v7211 = vpack.c.b16 %v5675, %v5671
    %v7212 = vpack.c.b16 %v5680, %v5676
    %v7213 = vpack.c.b16 %v5681, %v5677
    %v7214 = vpack.c.b16 %v5682, %v5678
    %v7215 = vpack.c.b16 %v5683, %v5679
    %v7216 = vpack.c.b16 %v5688, %v5684
    %v7217 = vpack.c.b16 %v5689, %v5685
    %v7218 = vpack.c.b16 %v5690, %v5686
    %v7219 = vpack.c.b16 %v5691, %v5687
    %v7220 = vpack.c.b16 %v5696, %v5692
    %v7221 = vpack.c.b16 %v5697, %v5693
    %v7222 = vpack.c.b16 %v5698, %v5694
    %v7223 = vpack.c.b16 %v5699, %v5695
    %v7224 = vpack.c.b16 %v5704, %v5700
    %v7225 = vpack.c.b16 %v5705, %v5701
    %v7226 = vpack.c.b16 %v5706, %v5702
    %v7227 = vpack.c.b16 %v5707, %v5703
    %v7228 = vpack.c.b16 %v5712, %v5708
    %v7229 = vpack.c.b16 %v5713, %v5709
    %v7230 = vpack.c.b16 %v5714, %v5710
    %v7231 = vpack.c.b16 %v5715, %v5711
    %v7232 = vpack.c.b16 %v5720, %v5716
    %v7233 = vpack.c.b16 %v5721, %v5717
    %v7234 = vpack.c.b16 %v5722, %v5718
    %v7235 = vpack.c.b16 %v5723, %v5719
    %v7236 = vpack.c.b16 %v5728, %v5724
    %v7237 = vpack.c.b16 %v5729, %v5725
    %v7238 = vpack.c.b16 %v5730, %v5726
    %v7239 = vpack.c.b16 %v5731, %v5727
    %v7240 = vpack.c.b16 %v5736, %v5732
    %v7241 = vpack.c.b16 %v5737, %v5733
    %v7242 = vpack.c.b16 %v5738, %v5734
    %v7243 = vpack.c.b16 %v5739, %v5735
    %v7244 = vpack.c.b16 %v5744, %v5740
    %v7245 = vpack.c.b16 %v5745, %v5741
    %v7246 = vpack.c.b16 %v5746, %v5742
    %v7247 = vpack.c.b16 %v5747, %v5743
    %v7248 = vpack.c.b16 %v5752, %v5748
    %v7249 = vpack.c.b16 %v5753, %v5749
    %v7250 = vpack.c.b16 %v5754, %v5750
    %v7251 = vpack.c.b16 %v5755, %v5751
    %v7252 = vpack.c.b16 %v5760, %v5756
    %v7253 = vpack.c.b16 %v5761, %v5757
    %v7254 = vpack.c.b16 %v5762, %v5758
    %v7255 = vpack.c.b16 %v5763, %v5759
    %v7256 = vpack.c.b16 %v5768, %v5764
    %v7257 = vpack.c.b16 %v5769, %v5765
    %v7258 = vpack.c.b16 %v5770, %v5766
    %v7259 = vpack.c.b16 %v5771, %v5767
    %v7260 = vpack.c.b16 %v5776, %v5772
    %v7261 = vpack.c.b16 %v5777, %v5773
    %v7262 = vpack.c.b16 %v5778, %v5774
    %v7263 = vpack.c.b16 %v5779, %v5775
    %v7264 = vpack.c.b16 %v5784, %v5780
    %v7265 = vpack.c.b16 %v5785, %v5781
    %v7266 = vpack.c.b16 %v5786, %v5782
    %v7267 = vpack.c.b16 %v5787, %v5783
    %v7268 = vpack.c.b16 %v5792, %v5788
    %v7269 = vpack.c.b16 %v5793, %v5789
    %v7270 = vpack.c.b16 %v5794, %v5790
    %v7271 = vpack.c.b16 %v5795, %v5791
    %v7272 = vpack.c.b16 %v5800, %v5796
    %v7273 = vpack.c.b16 %v5801, %v5797
    %v7274 = vpack.c.b16 %v5802, %v5798
    %v7275 = vpack.c.b16 %v5803, %v5799
    %v7276 = vpack.c.b16 %v5808, %v5804
    %v7277 = vpack.c.b16 %v5809, %v5805
    %v7278 = vpack.c.b16 %v5810, %v5806
    %v7279 = vpack.c.b16 %v5811, %v5807
    %v7280 = vpack.c.b16 %v5816, %v5812
    %v7281 = vpack.c.b16 %v5817, %v5813
    %v7282 = vpack.c.b16 %v5818, %v5814
    %v7283 = vpack.c.b16 %v5819, %v5815
    %v7284 = vpack.c.b16 %v5824, %v5820
    %v7285 = vpack.c.b16 %v5825, %v5821
    %v7286 = vpack.c.b16 %v5826, %v5822
    %v7287 = vpack.c.b16 %v5827, %v5823
    %v7288 = vpack.c.b16 %v5832, %v5828
    %v7289 = vpack.c.b16 %v5833, %v5829
    %v7290 = vpack.c.b16 %v5834, %v5830
    %v7291 = vpack.c.b16 %v5835, %v5831
    %v7292 = vpack.c.b16 %v5840, %v5836
    %v7293 = vpack.c.b16 %v5841, %v5837
    %v7294 = vpack.c.b16 %v5842, %v5838
    %v7295 = vpack.c.b16 %v5843, %v5839
    %v7296 = vpack.c.b16 %v5848, %v5844
    %v7297 = vpack.c.b16 %v5849, %v5845
    %v7298 = vpack.c.b16 %v5850, %v5846
    %v7299 = vpack.c.b16 %v5851, %v5847
    %v7300 = vpack.c.b16 %v5856, %v5852
    %v7301 = vpack.c.b16 %v5857, %v5853
    %v7302 = vpack.c.b16 %v5858, %v5854
    %v7303 = vpack.c.b16 %v5859, %v5855
    %v7304 = vpack.c.b16 %v5864, %v5860
    %v7305 = vpack.c.b16 %v5865, %v5861
    %v7306 = vpack.c.b16 %v5866, %v5862
    %v7307 = vpack.c.b16 %v5867, %v5863
    %v7308 = vpack.c.b16 %v5872, %v5868
    %v7309 = vpack.c.b16 %v5873, %v5869
    %v7310 = vpack.c.b16 %v5874, %v5870
    %v7311 = vpack.c.b16 %v5875, %v5871
    %v7312 = vpack.c.b16 %v5880, %v5876
    %v7313 = vpack.c.b16 %v5881, %v5877
    %v7314 = vpack.c.b16 %v5882, %v5878
    %v7315 = vpack.c.b16 %v5883, %v5879
    %v7316 = vpack.c.b16 %v5888, %v5884
    %v7317 = vpack.c.b16 %v5889, %v5885
    %v7318 = vpack.c.b16 %v5890, %v5886
    %v7319 = vpack.c.b16 %v5891, %v5887
    %v7320 = vpack.c.b16 %v5896, %v5892
    %v7321 = vpack.c.b16 %v5897, %v5893
    %v7322 = vpack.c.b16 %v5898, %v5894
    %v7323 = vpack.c.b16 %v5899, %v5895
    %v7324 = vpack.c.b16 %v5904, %v5900
    %v7325 = vpack.c.b16 %v5905, %v5901
    %v7326 = vpack.c.b16 %v5906, %v5902
    %v7327 = vpack.c.b16 %v5907, %v5903
    %v7328 = vpack.c.b16 %v5912, %v5908
    %v7329 = vpack.c.b16 %v5913, %v5909
    %v7330 = vpack.c.b16 %v5914, %v5910
    %v7331 = vpack.c.b16 %v5915, %v5911
    %v7332 = vpack.c.b16 %v5920, %v5916
    %v7333 = vpack.c.b16 %v5921, %v5917
    %v7334 = vpack.c.b16 %v5922, %v5918
    %v7335 = vpack.c.b16 %v5923, %v5919
    %v7336 = vpack.c.b16 %v5928, %v5924
    %v7337 = vpack.c.b16 %v5929, %v5925
    %v7338 = vpack.c.b16 %v5930, %v5926
    %v7339 = vpack.c.b16 %v5931, %v5927
    %v7340 = vpack.c.b16 %v5936, %v5932
    %v7341 = vpack.c.b16 %v5937, %v5933
    %v7342 = vpack.c.b16 %v5938, %v5934
    %v7343 = vpack.c.b16 %v5939, %v5935
    %v7344 = vpack.c.b16 %v5944, %v5940
    %v7345 = vpack.c.b16 %v5945, %v5941
    %v7346 = vpack.c.b16 %v5946, %v5942
    %v7347 = vpack.c.b16 %v5947, %v5943
    %v7348 = vpack.c.b16 %v5952, %v5948
    %v7349 = vpack.c.b16 %v5953, %v5949
    %v7350 = vpack.c.b16 %v5954, %v5950
    %v7351 = vpack.c.b16 %v5955, %v5951
    %v7352 = vpack.c.b16 %v5960, %v5956
    %v7353 = vpack.c.b16 %v5961, %v5957
    %v7354 = vpack.c.b16 %v5962, %v5958
    %v7355 = vpack.c.b16 %v5963, %v5959
    %v7356 = vpack.c.b16 %v5968, %v5964
    %v7357 = vpack.c.b16 %v5969, %v5965
    %v7358 = vpack.c.b16 %v5970, %v5966
    %v7359 = vpack.c.b16 %v5971, %v5967
    %v7360 = vpack.c.b16 %v5976, %v5972
    %v7361 = vpack.c.b16 %v5977, %v5973
    %v7362 = vpack.c.b16 %v5978, %v5974
    %v7363 = vpack.c.b16 %v5979, %v5975
    %v7364 = vpack.c.b16 %v5984, %v5980
    %v7365 = vpack.c.b16 %v5985, %v5981
    %v7366 = vpack.c.b16 %v5986, %v5982
    %v7367 = vpack.c.b16 %v5987, %v5983
    %v7368 = vpack.c.b16 %v5992, %v5988
    %v7369 = vpack.c.b16 %v5993, %v5989
    %v7370 = vpack.c.b16 %v5994, %v5990
    %v7371 = vpack.c.b16 %v5995, %v5991
    %v7372 = vpack.c.b16 %v6000, %v5996
    %v7373 = vpack.c.b16 %v6001, %v5997
    %v7374 = vpack.c.b16 %v6002, %v5998
    %v7375 = vpack.c.b16 %v6003, %v5999
    %v7376 = vpack.c.b16 %v6008, %v6004
    %v7377 = vpack.c.b16 %v6009, %v6005
    %v7378 = vpack.c.b16 %v6010, %v6006
    %v7379 = vpack.c.b16 %v6011, %v6007
    %v7380 = vpack.c.b16 %v6016, %v6012
    %v7381 = vpack.c.b16 %v6017, %v6013
    %v7382 = vpack.c.b16 %v6018, %v6014
    %v7383 = vpack.c.b16 %v6019, %v6015
    %v7384 = vpack.c.b16 %v6024, %v6020
    %v7385 = vpack.c.b16 %v6025, %v6021
    %v7386 = vpack.c.b16 %v6026, %v6022
    %v7387 = vpack.c.b16 %v6027, %v6023
    %v7388 = vpack.c.b16 %v6032, %v6028
    %v7389 = vpack.c.b16 %v6033, %v6029
    %v7390 = vpack.c.b16 %v6034, %v6030
    %v7391 = vpack.c.b16 %v6035, %v6031
    %v7392 = vpack.c.b16 %v6040, %v6036
    %v7393 = vpack.c.b16 %v6041, %v6037
    %v7394 = vpack.c.b16 %v6042, %v6038
    %v7395 = vpack.c.b16 %v6043, %v6039
    %v7396 = vpack.c.b16 %v6048, %v6044
    %v7397 = vpack.c.b16 %v6049, %v6045
    %v7398 = vpack.c.b16 %v6050, %v6046
    %v7399 = vpack.c.b16 %v6051, %v6047
    %v7400 = vpack.c.b16 %v6056, %v6052
    %v7401 = vpack.c.b16 %v6057, %v6053
    %v7402 = vpack.c.b16 %v6058, %v6054
    %v7403 = vpack.c.b16 %v6059, %v6055
    %v7404 = vpack.c.b16 %v6064, %v6060
    %v7405 = vpack.c.b16 %v6065, %v6061
    %v7406 = vpack.c.b16 %v6066, %v6062
    %v7407 = vpack.c.b16 %v6067, %v6063
    %v7408 = vpack.c.b16 %v6072, %v6068
    %v7409 = vpack.c.b16 %v6073, %v6069
    %v7410 = vpack.c.b16 %v6074, %v6070
    %v7411 = vpack.c.b16 %v6075, %v6071
    %v7412 = vpack.c.b16 %v6080, %v6076
    %v7413 = vpack.c.b16 %v6081, %v6077
    %v7414 = vpack.c.b16 %v6082, %v6078
    %v7415 = vpack.c.b16 %v6083, %v6079
    %v7416 = vpack.c.b16 %v6088, %v6084
    %v7417 = vpack.c.b16 %v6089, %v6085
    %v7418 = vpack.c.b16 %v6090, %v6086
    %v7419 = vpack.c.b16 %v6091, %v6087
    %v7420 = vpack.c.b16 %v6096, %v6092
    %v7421 = vpack.c.b16 %v6097, %v6093
    %v7422 = vpack.c.b16 %v6098, %v6094
    %v7423 = vpack.c.b16 %v6099, %v6095
    %v7424 = vpack.c.b16 %v6104, %v6100
    %v7425 = vpack.c.b16 %v6105, %v6101
    %v7426 = vpack.c.b16 %v6106, %v6102
    %v7427 = vpack.c.b16 %v6107, %v6103
    %v7428 = vpack.c.b16 %v6112, %v6108
    %v7429 = vpack.c.b16 %v6113, %v6109
    %v7430 = vpack.c.b16 %v6114, %v6110
    %v7431 = vpack.c.b16 %v6115, %v6111
    %v7432 = vpack.c.b16 %v6120, %v6116
    %v7433 = vpack.c.b16 %v6121, %v6117
    %v7434 = vpack.c.b16 %v6122, %v6118
    %v7435 = vpack.c.b16 %v6123, %v6119
    %v7436 = vpack.c.b16 %v6128, %v6124
    %v7437 = vpack.c.b16 %v6129, %v6125
    %v7438 = vpack.c.b16 %v6130, %v6126
    %v7439 = vpack.c.b16 %v6131, %v6127
    %v7440 = vpack.c.b16 %v6136, %v6132
    %v7441 = vpack.c.b16 %v6137, %v6133
    %v7442 = vpack.c.b16 %v6138, %v6134
    %v7443 = vpack.c.b16 %v6139, %v6135
    %v7444 = vpack.c.b16 %v6144, %v6140
    %v7445 = vpack.c.b16 %v6145, %v6141
    %v7446 = vpack.c.b16 %v6146, %v6142
    %v7447 = vpack.c.b16 %v6147, %v6143
    %v7448 = vpack.c.b16 %v6152, %v6148
    %v7449 = vpack.c.b16 %v6153, %v6149
    %v7450 = vpack.c.b16 %v6154, %v6150
    %v7451 = vpack.c.b16 %v6155, %v6151
    %v7452 = vpack.c.b16 %v6160, %v6156
    %v7453 = vpack.c.b16 %v6161, %v6157
    %v7454 = vpack.c.b16 %v6162, %v6158
    %v7455 = vpack.c.b16 %v6163, %v6159
    %v7456 = vpack.c.b16 %v6168, %v6164
    %v7457 = vpack.c.b16 %v6169, %v6165
    %v7458 = vpack.c.b16 %v6170, %v6166
    %v7459 = vpack.c.b16 %v6171, %v6167
    %v7460 = vpack.c.b16 %v6176, %v6172
    %v7461 = vpack.c.b16 %v6177, %v6173
    %v7462 = vpack.c.b16 %v6178, %v6174
    %v7463 = vpack.c.b16 %v6179, %v6175
    %v7464 = vpack.c.b16 %v6184, %v6180
    %v7465 = vpack.c.b16 %v6185, %v6181
    %v7466 = vpack.c.b16 %v6186, %v6182
    %v7467 = vpack.c.b16 %v6187, %v6183
    %v7468 = vpack.c.b16 %v6192, %v6188
    %v7469 = vpack.c.b16 %v6193, %v6189
    %v7470 = vpack.c.b16 %v6194, %v6190
    %v7471 = vpack.c.b16 %v6195, %v6191
    %v7472 = vpack.c.b16 %v6200, %v6196
    %v7473 = vpack.c.b16 %v6201, %v6197
    %v7474 = vpack.c.b16 %v6202, %v6198
    %v7475 = vpack.c.b16 %v6203, %v6199
    %v7476 = vpack.c.b16 %v6208, %v6204
    %v7477 = vpack.c.b16 %v6209, %v6205
    %v7478 = vpack.c.b16 %v6210, %v6206
    %v7479 = vpack.c.b16 %v6211, %v6207
    %v7480 = vpack.c.b16 %v6216, %v6212
    %v7481 = vpack.c.b16 %v6217, %v6213
    %v7482 = vpack.c.b16 %v6218, %v6214
    %v7483 = vpack.c.b16 %v6219, %v6215
    %v7484 = vpack.c.b16 %v6224, %v6220
    %v7485 = vpack.c.b16 %v6225, %v6221
    %v7486 = vpack.c.b16 %v6226, %v6222
    %v7487 = vpack.c.b16 %v6227, %v6223
    %v7488 = vpack.c.b16 %v6232, %v6228
    %v7489 = vpack.c.b16 %v6233, %v6229
    %v7490 = vpack.c.b16 %v6234, %v6230
    %v7491 = vpack.c.b16 %v6235, %v6231
    %v7492 = vpack.c.b16 %v6240, %v6236
    %v7493 = vpack.c.b16 %v6241, %v6237
    %v7494 = vpack.c.b16 %v6242, %v6238
    %v7495 = vpack.c.b16 %v6243, %v6239
    %v7496 = vpack.c.b16 %v6248, %v6244
    %v7497 = vpack.c.b16 %v6249, %v6245
    %v7498 = vpack.c.b16 %v6250, %v6246
    %v7499 = vpack.c.b16 %v6251, %v6247
    %v7500 = vpack.c.b16 %v6256, %v6252
    %v7501 = vpack.c.b16 %v6257, %v6253
    %v7502 = vpack.c.b16 %v6258, %v6254
    %v7503 = vpack.c.b16 %v6259, %v6255
    %v7504 = vpack.c.b16 %v6264, %v6260
    %v7505 = vpack.c.b16 %v6265, %v6261
    %v7506 = vpack.c.b16 %v6266, %v6262
    %v7507 = vpack.c.b16 %v6267, %v6263
    %v7508 = vpack.c.b16 %v6272, %v6268
    %v7509 = vpack.c.b16 %v6273, %v6269
    %v7510 = vpack.c.b16 %v6274, %v6270
    %v7511 = vpack.c.b16 %v6275, %v6271
    %v7512 = vpack.c.b16 %v6280, %v6276
    %v7513 = vpack.c.b16 %v6281, %v6277
    %v7514 = vpack.c.b16 %v6282, %v6278
    %v7515 = vpack.c.b16 %v6283, %v6279
    %v7516 = vpack.c.b16 %v6288, %v6284
    %v7517 = vpack.c.b16 %v6289, %v6285
    %v7518 = vpack.c.b16 %v6290, %v6286
    %v7519 = vpack.c.b16 %v6291, %v6287
    %v7520 = vpack.c.b16 %v6296, %v6292
    %v7521 = vpack.c.b16 %v6297, %v6293
    %v7522 = vpack.c.b16 %v6298, %v6294
    %v7523 = vpack.c.b16 %v6299, %v6295
    %v7524 = vpack.c.b16 %v6304, %v6300
    %v7525 = vpack.c.b16 %v6305, %v6301
    %v7526 = vpack.c.b16 %v6306, %v6302
    %v7527 = vpack.c.b16 %v6307, %v6303
    %v7528 = vpack.c.b16 %v6312, %v6308
    %v7529 = vpack.c.b16 %v6313, %v6309
    %v7530 = vpack.c.b16 %v6314, %v6310
    %v7531 = vpack.c.b16 %v6315, %v6311
    %v7532 = vpack.c.b16 %v6320, %v6316
    %v7533 = vpack.c.b16 %v6321, %v6317
    %v7534 = vpack.c.b16 %v6322, %v6318
    %v7535 = vpack.c.b16 %v6323, %v6319
    %v7536 = vpack.c.b16 %v6328, %v6324
    %v7537 = vpack.c.b16 %v6329, %v6325
    %v7538 = vpack.c.b16 %v6330, %v6326
    %v7539 = vpack.c.b16 %v6331, %v6327
    %v7540 = vpack.c.b16 %v6336, %v6332
    %v7541 = vpack.c.b16 %v6337, %v6333
    %v7542 = vpack.c.b16 %v6338, %v6334
    %v7543 = vpack.c.b16 %v6339, %v6335
    %v7544 = vpack.c.b16 %v6344, %v6340
    %v7545 = vpack.c.b16 %v6345, %v6341
    %v7546 = vpack.c.b16 %v6346, %v6342
    %v7547 = vpack.c.b16 %v6347, %v6343
    %v7548 = vpack.c.b16 %v6352, %v6348
    %v7549 = vpack.c.b16 %v6353, %v6349
    %v7550 = vpack.c.b16 %v6354, %v6350
    %v7551 = vpack.c.b16 %v6355, %v6351
    %v7552 = vpack.c.b16 %v6360, %v6356
    %v7553 = vpack.c.b16 %v6361, %v6357
    %v7554 = vpack.c.b16 %v6362, %v6358
    %v7555 = vpack.c.b16 %v6363, %v6359
    %v7556 = vpack.c.b16 %v6368, %v6364
    %v7557 = vpack.c.b16 %v6369, %v6365
    %v7558 = vpack.c.b16 %v6370, %v6366
    %v7559 = vpack.c.b16 %v6371, %v6367
    %v7560 = vpack.c.b16 %v6376, %v6372
    %v7561 = vpack.c.b16 %v6377, %v6373
    %v7562 = vpack.c.b16 %v6378, %v6374
    %v7563 = vpack.c.b16 %v6379, %v6375
    %v7564 = vpack.c.b16 %v6384, %v6380
    %v7565 = vpack.c.b16 %v6385, %v6381
    %v7566 = vpack.c.b16 %v6386, %v6382
    %v7567 = vpack.c.b16 %v6387, %v6383
    %v7568 = vpack.c.b16 %v6392, %v6388
    %v7569 = vpack.c.b16 %v6393, %v6389
    %v7570 = vpack.c.b16 %v6394, %v6390
    %v7571 = vpack.c.b16 %v6395, %v6391
    %v7572 = vpack.c.b16 %v6400, %v6396
    %v7573 = vpack.c.b16 %v6401, %v6397
    %v7574 = vpack.c.b16 %v6402, %v6398
    %v7575 = vpack.c.b16 %v6403, %v6399
    %v7576 = vpack.c.b16 %v6408, %v6404
    %v7577 = vpack.c.b16 %v6409, %v6405
    %v7578 = vpack.c.b16 %v6410, %v6406
    %v7579 = vpack.c.b16 %v6411, %v6407
    %v7580 = vpack.c.b16 %v6416, %v6412
    %v7581 = vpack.c.b16 %v6417, %v6413
    %v7582 = vpack.c.b16 %v6418, %v6414
    %v7583 = vpack.c.b16 %v6419, %v6415
    %v7584 = vpack.c.b16 %v6424, %v6420
    %v7585 = vpack.c.b16 %v6425, %v6421
    %v7586 = vpack.c.b16 %v6426, %v6422
    %v7587 = vpack.c.b16 %v6427, %v6423
    %v7588 = vpack.c.b16 %v6432, %v6428
    %v7589 = vpack.c.b16 %v6433, %v6429
    %v7590 = vpack.c.b16 %v6434, %v6430
    %v7591 = vpack.c.b16 %v6435, %v6431
    %v7592 = vpack.c.b16 %v6440, %v6436
    %v7593 = vpack.c.b16 %v6441, %v6437
    %v7594 = vpack.c.b16 %v6442, %v6438
    %v7595 = vpack.c.b16 %v6443, %v6439
    %8748 = vmatprep.subr.bf16.mxu0 %v6473
    %8749 = vmatpush1.bf16.msra.mxu0 %v6472
    %8750 = vmatprep.subr.bf16.mxu0 %v6469
    %8751 = vmatpush1.bf16.msra.mxu0 %v6468
    %8752 = vmatprep.subr.bf16.mxu0 %v6465
    %8753 = vmatpush1.bf16.msra.mxu0 %v6464
    %8754 = vmatprep.subr.bf16.mxu0 %v6461
    %8755 = vmatpush1.bf16.msra.mxu0 %v6460
    %8756 = vmatprep.subr.bf16.mxu0 %v6457
    %8757 = vmatpush1.bf16.msra.mxu0 %v6456
    %8758 = vmatprep.subr.bf16.mxu0 %v6453
    %8759 = vmatpush1.bf16.msra.mxu0 %v6452
    %8760 = vmatprep.subr.bf16.mxu0 %v6449
    %8761 = vmatpush1.bf16.msra.mxu0 %v6448
    %8762 = vmatprep.subr.bf16.mxu0 %v6445
    %8763 = vmatpush1.bf16.msra.mxu0 %v6444
    %8764 = vmatprep.subr.bf16.mxu0 %v6505
    %8765 = vmatpush2.bf16.msra.mxu0 %v6504
    %8766 = vmatprep.subr.bf16.mxu0 %v6501
    %8767 = vmatpush2.bf16.msra.mxu0 %v6500
    %8768 = vmatprep.subr.bf16.mxu0 %v6497
    %8769 = vmatpush2.bf16.msra.mxu0 %v6496
    %8770 = vmatprep.subr.bf16.mxu0 %v6493
    %8771 = vmatpush2.bf16.msra.mxu0 %v6492
    %8772 = vmatprep.subr.bf16.mxu0 %v6489
    %8773 = vmatpush2.bf16.msra.mxu0 %v6488
    %8774 = vmatprep.subr.bf16.mxu0 %v6485
    %8775 = vmatpush2.bf16.msra.mxu0 %v6484
    %8776 = vmatprep.subr.bf16.mxu0 %v6481
    %8777 = vmatpush2.bf16.msra.mxu0 %v6480
    %8778 = vmatprep.subr.bf16.mxu0 %v6477
    %8779 = vmatpush2.bf16.msra.mxu0 %v6476
    %8780 = vmatprep.mubr.bf16.mxu0 %v2413
    %8781 = vmatmul.mubr.bf16.gmra.mxu0 %v2412
    %v8782 = vpop.f32.mrf.mxu0
    %v8783 = vadd.f32 %v1531, %v8782
    %v8784 = vpop.f32.mrf.mxu0
    %v8785 = vadd.f32 %v1535, %v8784
    %v8786 = vpop.f32.mrf.mxu0
    %v8787 = vadd.f32 %v1531, %v8786
    %v8788 = vpop.f32.mrf.mxu0
    %v8789 = vadd.f32 %v1535, %v8788
    %8790 = vmatprep.mubr.bf16.mxu0 %v2449
    %8791 = vmatmul.mubr.bf16.gmra.mxu0 %v2448
    %v8792 = vpop.f32.mrf.mxu0
    %v8793 = vadd.f32 %v1531, %v8792
    %v8794 = vpop.f32.mrf.mxu0
    %v8795 = vadd.f32 %v1535, %v8794
    %v8796 = vpop.f32.mrf.mxu0
    %v8797 = vadd.f32 %v1531, %v8796
    %v8798 = vpop.f32.mrf.mxu0
    %v8799 = vadd.f32 %v1535, %v8798
    %8800 = vmatprep.mubr.bf16.mxu0 %v2485
    %8801 = vmatmul.mubr.bf16.gmra.mxu0 %v2484
    %v8802 = vpop.f32.mrf.mxu0
    %v8803 = vadd.f32 %v1531, %v8802
    %v8804 = vpop.f32.mrf.mxu0
    %v8805 = vadd.f32 %v1535, %v8804
    %v8806 = vpop.f32.mrf.mxu0
    %v8807 = vadd.f32 %v1531, %v8806
    %v8808 = vpop.f32.mrf.mxu0
    %v8809 = vadd.f32 %v1535, %v8808
    %8810 = vmatprep.mubr.bf16.mxu0 %v2521
    %8811 = vmatmul.mubr.bf16.gmra.mxu0 %v2520
    %v8812 = vpop.f32.mrf.mxu0
    %v8813 = vadd.f32 %v1531, %v8812
    %v8814 = vpop.f32.mrf.mxu0
    %v8815 = vadd.f32 %v1535, %v8814
    %v8816 = vpop.f32.mrf.mxu0
    %v8817 = vadd.f32 %v1531, %v8816
    %v8818 = vpop.f32.mrf.mxu0
    %v8819 = vadd.f32 %v1535, %v8818
    %8820 = vmatprep.mubr.bf16.mxu0 %v2557
    %8821 = vmatmul.mubr.bf16.gmra.mxu0 %v2556
    %v8822 = vpop.f32.mrf.mxu0
    %v8823 = vadd.f32 %v1531, %v8822
    %v8824 = vpop.f32.mrf.mxu0
    %v8825 = vadd.f32 %v1535, %v8824
    %v8826 = vpop.f32.mrf.mxu0
    %v8827 = vadd.f32 %v1531, %v8826
    %v8828 = vpop.f32.mrf.mxu0
    %v8829 = vadd.f32 %v1535, %v8828
    %8830 = vmatprep.mubr.bf16.mxu0 %v2593
    %8831 = vmatmul.mubr.bf16.gmra.mxu0 %v2592
    %v8832 = vpop.f32.mrf.mxu0
    %v8833 = vadd.f32 %v1531, %v8832
    %v8834 = vpop.f32.mrf.mxu0
    %v8835 = vadd.f32 %v1535, %v8834
    %v8836 = vpop.f32.mrf.mxu0
    %v8837 = vadd.f32 %v1531, %v8836
    %v8838 = vpop.f32.mrf.mxu0
    %v8839 = vadd.f32 %v1535, %v8838
    %8840 = vmatprep.mubr.bf16.mxu0 %v2629
    %8841 = vmatmul.mubr.bf16.gmra.mxu0 %v2628
    %v8842 = vpop.f32.mrf.mxu0
    %v8843 = vadd.f32 %v1531, %v8842
    %v8844 = vpop.f32.mrf.mxu0
    %v8845 = vadd.f32 %v1535, %v8844
    %v8846 = vpop.f32.mrf.mxu0
    %v8847 = vadd.f32 %v1531, %v8846
    %v8848 = vpop.f32.mrf.mxu0
    %v8849 = vadd.f32 %v1535, %v8848
    %8850 = vmatprep.mubr.bf16.mxu0 %v2665
    %8851 = vmatmul.mubr.bf16.gmra.mxu0 %v2664
    %v8852 = vpop.f32.mrf.mxu0
    %v8853 = vadd.f32 %v1531, %v8852
    %v8854 = vpop.f32.mrf.mxu0
    %v8855 = vadd.f32 %v1535, %v8854
    %v8856 = vpop.f32.mrf.mxu0
    %v8857 = vadd.f32 %v1531, %v8856
    %v8858 = vpop.f32.mrf.mxu0
    %v8859 = vadd.f32 %v1535, %v8858
    %8860 = vdwg.mxu0
    %8861 = vmatprep.subr.bf16.mxu0 %v6537
    %8862 = vmatpush1.bf16.msra.mxu0 %v6536
    %8863 = vmatprep.subr.bf16.mxu0 %v6533
    %8864 = vmatpush1.bf16.msra.mxu0 %v6532
    %8865 = vmatprep.subr.bf16.mxu0 %v6529
    %8866 = vmatpush1.bf16.msra.mxu0 %v6528
    %8867 = vmatprep.subr.bf16.mxu0 %v6525
    %8868 = vmatpush1.bf16.msra.mxu0 %v6524
    %8869 = vmatprep.subr.bf16.mxu0 %v6521
    %8870 = vmatpush1.bf16.msra.mxu0 %v6520
    %8871 = vmatprep.subr.bf16.mxu0 %v6517
    %8872 = vmatpush1.bf16.msra.mxu0 %v6516
    %8873 = vmatprep.subr.bf16.mxu0 %v6513
    %8874 = vmatpush1.bf16.msra.mxu0 %v6512
    %8875 = vmatprep.subr.bf16.mxu0 %v6509
    %8876 = vmatpush1.bf16.msra.mxu0 %v6508
    %8877 = vmatprep.subr.bf16.mxu0 %v6569
    %8878 = vmatpush2.bf16.msra.mxu0 %v6568
    %8879 = vmatprep.subr.bf16.mxu0 %v6565
    %8880 = vmatpush2.bf16.msra.mxu0 %v6564
    %8881 = vmatprep.subr.bf16.mxu0 %v6561
    %8882 = vmatpush2.bf16.msra.mxu0 %v6560
    %8883 = vmatprep.subr.bf16.mxu0 %v6557
    %8884 = vmatpush2.bf16.msra.mxu0 %v6556
    %8885 = vmatprep.subr.bf16.mxu0 %v6553
    %8886 = vmatpush2.bf16.msra.mxu0 %v6552
    %8887 = vmatprep.subr.bf16.mxu0 %v6549
    %8888 = vmatpush2.bf16.msra.mxu0 %v6548
    %8889 = vmatprep.subr.bf16.mxu0 %v6545
    %8890 = vmatpush2.bf16.msra.mxu0 %v6544
    %8891 = vmatprep.subr.bf16.mxu0 %v6541
    %8892 = vmatpush2.bf16.msra.mxu0 %v6540
    %8893 = vmatprep.mubr.bf16.mxu0 %v2415
    %8894 = vmatmul.mubr.bf16.gmra.mxu0 %v2414
    %v8895 = vpop.f32.mrf.mxu0
    %v8896 = vadd.f32 %v8783, %v8895
    %v8897 = vpop.f32.mrf.mxu0
    %v8898 = vadd.f32 %v8785, %v8897
    %v8899 = vpop.f32.mrf.mxu0
    %v8900 = vadd.f32 %v8787, %v8899
    %v8901 = vpop.f32.mrf.mxu0
    %v8902 = vadd.f32 %v8789, %v8901
    %8903 = vmatprep.mubr.bf16.mxu0 %v2451
    %8904 = vmatmul.mubr.bf16.gmra.mxu0 %v2450
    %v8905 = vpop.f32.mrf.mxu0
    %v8906 = vadd.f32 %v8793, %v8905
    %v8907 = vpop.f32.mrf.mxu0
    %v8908 = vadd.f32 %v8795, %v8907
    %v8909 = vpop.f32.mrf.mxu0
    %v8910 = vadd.f32 %v8797, %v8909
    %v8911 = vpop.f32.mrf.mxu0
    %v8912 = vadd.f32 %v8799, %v8911
    %8913 = vmatprep.mubr.bf16.mxu0 %v2487
    %8914 = vmatmul.mubr.bf16.gmra.mxu0 %v2486
    %v8915 = vpop.f32.mrf.mxu0
    %v8916 = vadd.f32 %v8803, %v8915
    %v8917 = vpop.f32.mrf.mxu0
    %v8918 = vadd.f32 %v8805, %v8917
    %v8919 = vpop.f32.mrf.mxu0
    %v8920 = vadd.f32 %v8807, %v8919
    %v8921 = vpop.f32.mrf.mxu0
    %v8922 = vadd.f32 %v8809, %v8921
    %8923 = vmatprep.mubr.bf16.mxu0 %v2523
    %8924 = vmatmul.mubr.bf16.gmra.mxu0 %v2522
    %v8925 = vpop.f32.mrf.mxu0
    %v8926 = vadd.f32 %v8813, %v8925
    %v8927 = vpop.f32.mrf.mxu0
    %v8928 = vadd.f32 %v8815, %v8927
    %v8929 = vpop.f32.mrf.mxu0
    %v8930 = vadd.f32 %v8817, %v8929
    %v8931 = vpop.f32.mrf.mxu0
    %v8932 = vadd.f32 %v8819, %v8931
    %8933 = vmatprep.mubr.bf16.mxu0 %v2559
    %8934 = vmatmul.mubr.bf16.gmra.mxu0 %v2558
    %v8935 = vpop.f32.mrf.mxu0
    %v8936 = vadd.f32 %v8823, %v8935
    %v8937 = vpop.f32.mrf.mxu0
    %v8938 = vadd.f32 %v8825, %v8937
    %v8939 = vpop.f32.mrf.mxu0
    %v8940 = vadd.f32 %v8827, %v8939
    %v8941 = vpop.f32.mrf.mxu0
    %v8942 = vadd.f32 %v8829, %v8941
    %8943 = vmatprep.mubr.bf16.mxu0 %v2595
    %8944 = vmatmul.mubr.bf16.gmra.mxu0 %v2594
    %v8945 = vpop.f32.mrf.mxu0
    %v8946 = vadd.f32 %v8833, %v8945
    %v8947 = vpop.f32.mrf.mxu0
    %v8948 = vadd.f32 %v8835, %v8947
    %v8949 = vpop.f32.mrf.mxu0
    %v8950 = vadd.f32 %v8837, %v8949
    %v8951 = vpop.f32.mrf.mxu0
    %v8952 = vadd.f32 %v8839, %v8951
    %8953 = vmatprep.mubr.bf16.mxu0 %v2631
    %8954 = vmatmul.mubr.bf16.gmra.mxu0 %v2630
    %v8955 = vpop.f32.mrf.mxu0
    %v8956 = vadd.f32 %v8843, %v8955
    %v8957 = vpop.f32.mrf.mxu0
    %v8958 = vadd.f32 %v8845, %v8957
    %v8959 = vpop.f32.mrf.mxu0
    %v8960 = vadd.f32 %v8847, %v8959
    %v8961 = vpop.f32.mrf.mxu0
    %v8962 = vadd.f32 %v8849, %v8961
    %8963 = vmatprep.mubr.bf16.mxu0 %v2667
    %8964 = vmatmul.mubr.bf16.gmra.mxu0 %v2666
    %v8965 = vpop.f32.mrf.mxu0
    %v8966 = vadd.f32 %v8853, %v8965
    %v8967 = vpop.f32.mrf.mxu0
    %v8968 = vadd.f32 %v8855, %v8967
    %v8969 = vpop.f32.mrf.mxu0
    %v8970 = vadd.f32 %v8857, %v8969
    %v8971 = vpop.f32.mrf.mxu0
    %v8972 = vadd.f32 %v8859, %v8971
    %8973 = vdwg.mxu0
    %8974 = vmatprep.subr.bf16.mxu0 %v6601
    %8975 = vmatpush1.bf16.msra.mxu0 %v6600
    %8976 = vmatprep.subr.bf16.mxu0 %v6597
    %8977 = vmatpush1.bf16.msra.mxu0 %v6596
    %8978 = vmatprep.subr.bf16.mxu0 %v6593
    %8979 = vmatpush1.bf16.msra.mxu0 %v6592
    %8980 = vmatprep.subr.bf16.mxu0 %v6589
    %8981 = vmatpush1.bf16.msra.mxu0 %v6588
    %8982 = vmatprep.subr.bf16.mxu0 %v6585
    %8983 = vmatpush1.bf16.msra.mxu0 %v6584
    %8984 = vmatprep.subr.bf16.mxu0 %v6581
    %8985 = vmatpush1.bf16.msra.mxu0 %v6580
    %8986 = vmatprep.subr.bf16.mxu0 %v6577
    %8987 = vmatpush1.bf16.msra.mxu0 %v6576
    %8988 = vmatprep.subr.bf16.mxu0 %v6573
    %8989 = vmatpush1.bf16.msra.mxu0 %v6572
    %8990 = vmatprep.subr.bf16.mxu0 %v6633
    %8991 = vmatpush2.bf16.msra.mxu0 %v6632
    %8992 = vmatprep.subr.bf16.mxu0 %v6629
    %8993 = vmatpush2.bf16.msra.mxu0 %v6628
    %8994 = vmatprep.subr.bf16.mxu0 %v6625
    %8995 = vmatpush2.bf16.msra.mxu0 %v6624
    %8996 = vmatprep.subr.bf16.mxu0 %v6621
    %8997 = vmatpush2.bf16.msra.mxu0 %v6620
    %8998 = vmatprep.subr.bf16.mxu0 %v6617
    %8999 = vmatpush2.bf16.msra.mxu0 %v6616
    %9000 = vmatprep.subr.bf16.mxu0 %v6613
    %9001 = vmatpush2.bf16.msra.mxu0 %v6612
    %9002 = vmatprep.subr.bf16.mxu0 %v6609
    %9003 = vmatpush2.bf16.msra.mxu0 %v6608
    %9004 = vmatprep.subr.bf16.mxu0 %v6605
    %9005 = vmatpush2.bf16.msra.mxu0 %v6604
    %9006 = vmatprep.mubr.bf16.mxu0 %v2417
    %9007 = vmatmul.mubr.bf16.gmra.mxu0 %v2416
    %v9008 = vpop.f32.mrf.mxu0
    %v9009 = vadd.f32 %v8896, %v9008
    %v9010 = vpop.f32.mrf.mxu0
    %v9011 = vadd.f32 %v8898, %v9010
    %v9012 = vpop.f32.mrf.mxu0
    %v9013 = vadd.f32 %v8900, %v9012
    %v9014 = vpop.f32.mrf.mxu0
    %v9015 = vadd.f32 %v8902, %v9014
    %9016 = vmatprep.mubr.bf16.mxu0 %v2453
    %9017 = vmatmul.mubr.bf16.gmra.mxu0 %v2452
    %v9018 = vpop.f32.mrf.mxu0
    %v9019 = vadd.f32 %v8906, %v9018
    %v9020 = vpop.f32.mrf.mxu0
    %v9021 = vadd.f32 %v8908, %v9020
    %v9022 = vpop.f32.mrf.mxu0
    %v9023 = vadd.f32 %v8910, %v9022
    %v9024 = vpop.f32.mrf.mxu0
    %v9025 = vadd.f32 %v8912, %v9024
    %9026 = vmatprep.mubr.bf16.mxu0 %v2489
    %9027 = vmatmul.mubr.bf16.gmra.mxu0 %v2488
    %v9028 = vpop.f32.mrf.mxu0
    %v9029 = vadd.f32 %v8916, %v9028
    %v9030 = vpop.f32.mrf.mxu0
    %v9031 = vadd.f32 %v8918, %v9030
    %v9032 = vpop.f32.mrf.mxu0
    %v9033 = vadd.f32 %v8920, %v9032
    %v9034 = vpop.f32.mrf.mxu0
    %v9035 = vadd.f32 %v8922, %v9034
    %9036 = vmatprep.mubr.bf16.mxu0 %v2525
    %9037 = vmatmul.mubr.bf16.gmra.mxu0 %v2524
    %v9038 = vpop.f32.mrf.mxu0
    %v9039 = vadd.f32 %v8926, %v9038
    %v9040 = vpop.f32.mrf.mxu0
    %v9041 = vadd.f32 %v8928, %v9040
    %v9042 = vpop.f32.mrf.mxu0
    %v9043 = vadd.f32 %v8930, %v9042
    %v9044 = vpop.f32.mrf.mxu0
    %v9045 = vadd.f32 %v8932, %v9044
    %9046 = vmatprep.mubr.bf16.mxu0 %v2561
    %9047 = vmatmul.mubr.bf16.gmra.mxu0 %v2560
    %v9048 = vpop.f32.mrf.mxu0
    %v9049 = vadd.f32 %v8936, %v9048
    %v9050 = vpop.f32.mrf.mxu0
    %v9051 = vadd.f32 %v8938, %v9050
    %v9052 = vpop.f32.mrf.mxu0
    %v9053 = vadd.f32 %v8940, %v9052
    %v9054 = vpop.f32.mrf.mxu0
    %v9055 = vadd.f32 %v8942, %v9054
    %9056 = vmatprep.mubr.bf16.mxu0 %v2597
    %9057 = vmatmul.mubr.bf16.gmra.mxu0 %v2596
    %v9058 = vpop.f32.mrf.mxu0
    %v9059 = vadd.f32 %v8946, %v9058
    %v9060 = vpop.f32.mrf.mxu0
    %v9061 = vadd.f32 %v8948, %v9060
    %v9062 = vpop.f32.mrf.mxu0
    %v9063 = vadd.f32 %v8950, %v9062
    %v9064 = vpop.f32.mrf.mxu0
    %v9065 = vadd.f32 %v8952, %v9064
    %9066 = vmatprep.mubr.bf16.mxu0 %v2633
    %9067 = vmatmul.mubr.bf16.gmra.mxu0 %v2632
    %v9068 = vpop.f32.mrf.mxu0
    %v9069 = vadd.f32 %v8956, %v9068
    %v9070 = vpop.f32.mrf.mxu0
    %v9071 = vadd.f32 %v8958, %v9070
    %v9072 = vpop.f32.mrf.mxu0
    %v9073 = vadd.f32 %v8960, %v9072
    %v9074 = vpop.f32.mrf.mxu0
    %v9075 = vadd.f32 %v8962, %v9074
    %9076 = vmatprep.mubr.bf16.mxu0 %v2669
    %9077 = vmatmul.mubr.bf16.gmra.mxu0 %v2668
    %v9078 = vpop.f32.mrf.mxu0
    %v9079 = vadd.f32 %v8966, %v9078
    %v9080 = vpop.f32.mrf.mxu0
    %v9081 = vadd.f32 %v8968, %v9080
    %v9082 = vpop.f32.mrf.mxu0
    %v9083 = vadd.f32 %v8970, %v9082
    %v9084 = vpop.f32.mrf.mxu0
    %v9085 = vadd.f32 %v8972, %v9084
    %9086 = vdwg.mxu0
    %9087 = vmatprep.subr.bf16.mxu0 %v6665
    %9088 = vmatpush1.bf16.msra.mxu0 %v6664
    %9089 = vmatprep.subr.bf16.mxu0 %v6661
    %9090 = vmatpush1.bf16.msra.mxu0 %v6660
    %9091 = vmatprep.subr.bf16.mxu0 %v6657
    %9092 = vmatpush1.bf16.msra.mxu0 %v6656
    %9093 = vmatprep.subr.bf16.mxu0 %v6653
    %9094 = vmatpush1.bf16.msra.mxu0 %v6652
    %9095 = vmatprep.subr.bf16.mxu0 %v6649
    %9096 = vmatpush1.bf16.msra.mxu0 %v6648
    %9097 = vmatprep.subr.bf16.mxu0 %v6645
    %9098 = vmatpush1.bf16.msra.mxu0 %v6644
    %9099 = vmatprep.subr.bf16.mxu0 %v6641
    %9100 = vmatpush1.bf16.msra.mxu0 %v6640
    %9101 = vmatprep.subr.bf16.mxu0 %v6637
    %9102 = vmatpush1.bf16.msra.mxu0 %v6636
    %9103 = vmatprep.subr.bf16.mxu0 %v6697
    %9104 = vmatpush2.bf16.msra.mxu0 %v6696
    %9105 = vmatprep.subr.bf16.mxu0 %v6693
    %9106 = vmatpush2.bf16.msra.mxu0 %v6692
    %9107 = vmatprep.subr.bf16.mxu0 %v6689
    %9108 = vmatpush2.bf16.msra.mxu0 %v6688
    %9109 = vmatprep.subr.bf16.mxu0 %v6685
    %9110 = vmatpush2.bf16.msra.mxu0 %v6684
    %9111 = vmatprep.subr.bf16.mxu0 %v6681
    %9112 = vmatpush2.bf16.msra.mxu0 %v6680
    %9113 = vmatprep.subr.bf16.mxu0 %v6677
    %9114 = vmatpush2.bf16.msra.mxu0 %v6676
    %9115 = vmatprep.subr.bf16.mxu0 %v6673
    %9116 = vmatpush2.bf16.msra.mxu0 %v6672
    %9117 = vmatprep.subr.bf16.mxu0 %v6669
    %9118 = vmatpush2.bf16.msra.mxu0 %v6668
    %9119 = vmatprep.mubr.bf16.mxu0 %v2419
    %9120 = vmatmul.mubr.bf16.gmra.mxu0 %v2418
    %v9121 = vpop.f32.mrf.mxu0
    %v9122 = vadd.f32 %v9009, %v9121
    %v9123 = vpop.f32.mrf.mxu0
    %v9124 = vadd.f32 %v9011, %v9123
    %v9125 = vpop.f32.mrf.mxu0
    %v9126 = vadd.f32 %v9013, %v9125
    %v9127 = vpop.f32.mrf.mxu0
    %v9128 = vadd.f32 %v9015, %v9127
    %9129 = vmatprep.mubr.bf16.mxu0 %v2455
    %9130 = vmatmul.mubr.bf16.gmra.mxu0 %v2454
    %v9131 = vpop.f32.mrf.mxu0
    %v9132 = vadd.f32 %v9019, %v9131
    %v9133 = vpop.f32.mrf.mxu0
    %v9134 = vadd.f32 %v9021, %v9133
    %v9135 = vpop.f32.mrf.mxu0
    %v9136 = vadd.f32 %v9023, %v9135
    %v9137 = vpop.f32.mrf.mxu0
    %v9138 = vadd.f32 %v9025, %v9137
    %9139 = vmatprep.mubr.bf16.mxu0 %v2491
    %9140 = vmatmul.mubr.bf16.gmra.mxu0 %v2490
    %v9141 = vpop.f32.mrf.mxu0
    %v9142 = vadd.f32 %v9029, %v9141
    %v9143 = vpop.f32.mrf.mxu0
    %v9144 = vadd.f32 %v9031, %v9143
    %v9145 = vpop.f32.mrf.mxu0
    %v9146 = vadd.f32 %v9033, %v9145
    %v9147 = vpop.f32.mrf.mxu0
    %v9148 = vadd.f32 %v9035, %v9147
    %9149 = vmatprep.mubr.bf16.mxu0 %v2527
    %9150 = vmatmul.mubr.bf16.gmra.mxu0 %v2526
    %v9151 = vpop.f32.mrf.mxu0
    %v9152 = vadd.f32 %v9039, %v9151
    %v9153 = vpop.f32.mrf.mxu0
    %v9154 = vadd.f32 %v9041, %v9153
    %v9155 = vpop.f32.mrf.mxu0
    %v9156 = vadd.f32 %v9043, %v9155
    %v9157 = vpop.f32.mrf.mxu0
    %v9158 = vadd.f32 %v9045, %v9157
    %9159 = vmatprep.mubr.bf16.mxu0 %v2563
    %9160 = vmatmul.mubr.bf16.gmra.mxu0 %v2562
    %v9161 = vpop.f32.mrf.mxu0
    %v9162 = vadd.f32 %v9049, %v9161
    %v9163 = vpop.f32.mrf.mxu0
    %v9164 = vadd.f32 %v9051, %v9163
    %v9165 = vpop.f32.mrf.mxu0
    %v9166 = vadd.f32 %v9053, %v9165
    %v9167 = vpop.f32.mrf.mxu0
    %v9168 = vadd.f32 %v9055, %v9167
    %9169 = vmatprep.mubr.bf16.mxu0 %v2599
    %9170 = vmatmul.mubr.bf16.gmra.mxu0 %v2598
    %v9171 = vpop.f32.mrf.mxu0
    %v9172 = vadd.f32 %v9059, %v9171
    %v9173 = vpop.f32.mrf.mxu0
    %v9174 = vadd.f32 %v9061, %v9173
    %v9175 = vpop.f32.mrf.mxu0
    %v9176 = vadd.f32 %v9063, %v9175
    %v9177 = vpop.f32.mrf.mxu0
    %v9178 = vadd.f32 %v9065, %v9177
    %9179 = vmatprep.mubr.bf16.mxu0 %v2635
    %9180 = vmatmul.mubr.bf16.gmra.mxu0 %v2634
    %v9181 = vpop.f32.mrf.mxu0
    %v9182 = vadd.f32 %v9069, %v9181
    %v9183 = vpop.f32.mrf.mxu0
    %v9184 = vadd.f32 %v9071, %v9183
    %v9185 = vpop.f32.mrf.mxu0
    %v9186 = vadd.f32 %v9073, %v9185
    %v9187 = vpop.f32.mrf.mxu0
    %v9188 = vadd.f32 %v9075, %v9187
    %9189 = vmatprep.mubr.bf16.mxu0 %v2671
    %9190 = vmatmul.mubr.bf16.gmra.mxu0 %v2670
    %v9191 = vpop.f32.mrf.mxu0
    %v9192 = vadd.f32 %v9079, %v9191
    %v9193 = vpop.f32.mrf.mxu0
    %v9194 = vadd.f32 %v9081, %v9193
    %v9195 = vpop.f32.mrf.mxu0
    %v9196 = vadd.f32 %v9083, %v9195
    %v9197 = vpop.f32.mrf.mxu0
    %v9198 = vadd.f32 %v9085, %v9197
    %9199 = vdwg.mxu0
    %9200 = vmatprep.subr.bf16.mxu0 %v6729
    %9201 = vmatpush1.bf16.msra.mxu0 %v6728
    %9202 = vmatprep.subr.bf16.mxu0 %v6725
    %9203 = vmatpush1.bf16.msra.mxu0 %v6724
    %9204 = vmatprep.subr.bf16.mxu0 %v6721
    %9205 = vmatpush1.bf16.msra.mxu0 %v6720
    %9206 = vmatprep.subr.bf16.mxu0 %v6717
    %9207 = vmatpush1.bf16.msra.mxu0 %v6716
    %9208 = vmatprep.subr.bf16.mxu0 %v6713
    %9209 = vmatpush1.bf16.msra.mxu0 %v6712
    %9210 = vmatprep.subr.bf16.mxu0 %v6709
    %9211 = vmatpush1.bf16.msra.mxu0 %v6708
    %9212 = vmatprep.subr.bf16.mxu0 %v6705
    %9213 = vmatpush1.bf16.msra.mxu0 %v6704
    %9214 = vmatprep.subr.bf16.mxu0 %v6701
    %9215 = vmatpush1.bf16.msra.mxu0 %v6700
    %9216 = vmatprep.subr.bf16.mxu0 %v6761
    %9217 = vmatpush2.bf16.msra.mxu0 %v6760
    %9218 = vmatprep.subr.bf16.mxu0 %v6757
    %9219 = vmatpush2.bf16.msra.mxu0 %v6756
    %9220 = vmatprep.subr.bf16.mxu0 %v6753
    %9221 = vmatpush2.bf16.msra.mxu0 %v6752
    %9222 = vmatprep.subr.bf16.mxu0 %v6749
    %9223 = vmatpush2.bf16.msra.mxu0 %v6748
    %9224 = vmatprep.subr.bf16.mxu0 %v6745
    %9225 = vmatpush2.bf16.msra.mxu0 %v6744
    %9226 = vmatprep.subr.bf16.mxu0 %v6741
    %9227 = vmatpush2.bf16.msra.mxu0 %v6740
    %9228 = vmatprep.subr.bf16.mxu0 %v6737
    %9229 = vmatpush2.bf16.msra.mxu0 %v6736
    %9230 = vmatprep.subr.bf16.mxu0 %v6733
    %9231 = vmatpush2.bf16.msra.mxu0 %v6732
    %9232 = vmatprep.mubr.bf16.mxu0 %v2421
    %9233 = vmatmul.mubr.bf16.gmra.mxu0 %v2420
    %v9234 = vpop.f32.mrf.mxu0
    %v9235 = vadd.f32 %v9122, %v9234
    %v9236 = vpop.f32.mrf.mxu0
    %v9237 = vadd.f32 %v9124, %v9236
    %v9238 = vpop.f32.mrf.mxu0
    %v9239 = vadd.f32 %v9126, %v9238
    %v9240 = vpop.f32.mrf.mxu0
    %v9241 = vadd.f32 %v9128, %v9240
    %9242 = vmatprep.mubr.bf16.mxu0 %v2457
    %9243 = vmatmul.mubr.bf16.gmra.mxu0 %v2456
    %v9244 = vpop.f32.mrf.mxu0
    %v9245 = vadd.f32 %v9132, %v9244
    %v9246 = vpop.f32.mrf.mxu0
    %v9247 = vadd.f32 %v9134, %v9246
    %v9248 = vpop.f32.mrf.mxu0
    %v9249 = vadd.f32 %v9136, %v9248
    %v9250 = vpop.f32.mrf.mxu0
    %v9251 = vadd.f32 %v9138, %v9250
    %9252 = vmatprep.mubr.bf16.mxu0 %v2493
    %9253 = vmatmul.mubr.bf16.gmra.mxu0 %v2492
    %v9254 = vpop.f32.mrf.mxu0
    %v9255 = vadd.f32 %v9142, %v9254
    %v9256 = vpop.f32.mrf.mxu0
    %v9257 = vadd.f32 %v9144, %v9256
    %v9258 = vpop.f32.mrf.mxu0
    %v9259 = vadd.f32 %v9146, %v9258
    %v9260 = vpop.f32.mrf.mxu0
    %v9261 = vadd.f32 %v9148, %v9260
    %9262 = vmatprep.mubr.bf16.mxu0 %v2529
    %9263 = vmatmul.mubr.bf16.gmra.mxu0 %v2528
    %v9264 = vpop.f32.mrf.mxu0
    %v9265 = vadd.f32 %v9152, %v9264
    %v9266 = vpop.f32.mrf.mxu0
    %v9267 = vadd.f32 %v9154, %v9266
    %v9268 = vpop.f32.mrf.mxu0
    %v9269 = vadd.f32 %v9156, %v9268
    %v9270 = vpop.f32.mrf.mxu0
    %v9271 = vadd.f32 %v9158, %v9270
    %9272 = vmatprep.mubr.bf16.mxu0 %v2565
    %9273 = vmatmul.mubr.bf16.gmra.mxu0 %v2564
    %v9274 = vpop.f32.mrf.mxu0
    %v9275 = vadd.f32 %v9162, %v9274
    %v9276 = vpop.f32.mrf.mxu0
    %v9277 = vadd.f32 %v9164, %v9276
    %v9278 = vpop.f32.mrf.mxu0
    %v9279 = vadd.f32 %v9166, %v9278
    %v9280 = vpop.f32.mrf.mxu0
    %v9281 = vadd.f32 %v9168, %v9280
    %9282 = vmatprep.mubr.bf16.mxu0 %v2601
    %9283 = vmatmul.mubr.bf16.gmra.mxu0 %v2600
    %v9284 = vpop.f32.mrf.mxu0
    %v9285 = vadd.f32 %v9172, %v9284
    %v9286 = vpop.f32.mrf.mxu0
    %v9287 = vadd.f32 %v9174, %v9286
    %v9288 = vpop.f32.mrf.mxu0
    %v9289 = vadd.f32 %v9176, %v9288
    %v9290 = vpop.f32.mrf.mxu0
    %v9291 = vadd.f32 %v9178, %v9290
    %9292 = vmatprep.mubr.bf16.mxu0 %v2637
    %9293 = vmatmul.mubr.bf16.gmra.mxu0 %v2636
    %v9294 = vpop.f32.mrf.mxu0
    %v9295 = vadd.f32 %v9182, %v9294
    %v9296 = vpop.f32.mrf.mxu0
    %v9297 = vadd.f32 %v9184, %v9296
    %v9298 = vpop.f32.mrf.mxu0
    %v9299 = vadd.f32 %v9186, %v9298
    %v9300 = vpop.f32.mrf.mxu0
    %v9301 = vadd.f32 %v9188, %v9300
    %9302 = vmatprep.mubr.bf16.mxu0 %v2673
    %9303 = vmatmul.mubr.bf16.gmra.mxu0 %v2672
    %v9304 = vpop.f32.mrf.mxu0
    %v9305 = vadd.f32 %v9192, %v9304
    %v9306 = vpop.f32.mrf.mxu0
    %v9307 = vadd.f32 %v9194, %v9306
    %v9308 = vpop.f32.mrf.mxu0
    %v9309 = vadd.f32 %v9196, %v9308
    %v9310 = vpop.f32.mrf.mxu0
    %v9311 = vadd.f32 %v9198, %v9310
    %9312 = vdwg.mxu0
    %9313 = vmatprep.subr.bf16.mxu0 %v6793
    %9314 = vmatpush1.bf16.msra.mxu0 %v6792
    %9315 = vmatprep.subr.bf16.mxu0 %v6789
    %9316 = vmatpush1.bf16.msra.mxu0 %v6788
    %9317 = vmatprep.subr.bf16.mxu0 %v6785
    %9318 = vmatpush1.bf16.msra.mxu0 %v6784
    %9319 = vmatprep.subr.bf16.mxu0 %v6781
    %9320 = vmatpush1.bf16.msra.mxu0 %v6780
    %9321 = vmatprep.subr.bf16.mxu0 %v6777
    %9322 = vmatpush1.bf16.msra.mxu0 %v6776
    %9323 = vmatprep.subr.bf16.mxu0 %v6773
    %9324 = vmatpush1.bf16.msra.mxu0 %v6772
    %9325 = vmatprep.subr.bf16.mxu0 %v6769
    %9326 = vmatpush1.bf16.msra.mxu0 %v6768
    %9327 = vmatprep.subr.bf16.mxu0 %v6765
    %9328 = vmatpush1.bf16.msra.mxu0 %v6764
    %9329 = vmatprep.subr.bf16.mxu0 %v6825
    %9330 = vmatpush2.bf16.msra.mxu0 %v6824
    %9331 = vmatprep.subr.bf16.mxu0 %v6821
    %9332 = vmatpush2.bf16.msra.mxu0 %v6820
    %9333 = vmatprep.subr.bf16.mxu0 %v6817
    %9334 = vmatpush2.bf16.msra.mxu0 %v6816
    %9335 = vmatprep.subr.bf16.mxu0 %v6813
    %9336 = vmatpush2.bf16.msra.mxu0 %v6812
    %9337 = vmatprep.subr.bf16.mxu0 %v6809
    %9338 = vmatpush2.bf16.msra.mxu0 %v6808
    %9339 = vmatprep.subr.bf16.mxu0 %v6805
    %9340 = vmatpush2.bf16.msra.mxu0 %v6804
    %9341 = vmatprep.subr.bf16.mxu0 %v6801
    %9342 = vmatpush2.bf16.msra.mxu0 %v6800
    %9343 = vmatprep.subr.bf16.mxu0 %v6797
    %9344 = vmatpush2.bf16.msra.mxu0 %v6796
    %9345 = vmatprep.mubr.bf16.mxu0 %v2423
    %9346 = vmatmul.mubr.bf16.gmra.mxu0 %v2422
    %v9347 = vpop.f32.mrf.mxu0
    %v9348 = vadd.f32 %v9235, %v9347
    %v9349 = vpop.f32.mrf.mxu0
    %v9350 = vadd.f32 %v9237, %v9349
    %v9351 = vpop.f32.mrf.mxu0
    %v9352 = vadd.f32 %v9239, %v9351
    %v9353 = vpop.f32.mrf.mxu0
    %v9354 = vadd.f32 %v9241, %v9353
    %9355 = vmatprep.mubr.bf16.mxu0 %v2459
    %9356 = vmatmul.mubr.bf16.gmra.mxu0 %v2458
    %v9357 = vpop.f32.mrf.mxu0
    %v9358 = vadd.f32 %v9245, %v9357
    %v9359 = vpop.f32.mrf.mxu0
    %v9360 = vadd.f32 %v9247, %v9359
    %v9361 = vpop.f32.mrf.mxu0
    %v9362 = vadd.f32 %v9249, %v9361
    %v9363 = vpop.f32.mrf.mxu0
    %v9364 = vadd.f32 %v9251, %v9363
    %9365 = vmatprep.mubr.bf16.mxu0 %v2495
    %9366 = vmatmul.mubr.bf16.gmra.mxu0 %v2494
    %v9367 = vpop.f32.mrf.mxu0
    %v9368 = vadd.f32 %v9255, %v9367
    %v9369 = vpop.f32.mrf.mxu0
    %v9370 = vadd.f32 %v9257, %v9369
    %v9371 = vpop.f32.mrf.mxu0
    %v9372 = vadd.f32 %v9259, %v9371
    %v9373 = vpop.f32.mrf.mxu0
    %v9374 = vadd.f32 %v9261, %v9373
    %9375 = vmatprep.mubr.bf16.mxu0 %v2531
    %9376 = vmatmul.mubr.bf16.gmra.mxu0 %v2530
    %v9377 = vpop.f32.mrf.mxu0
    %v9378 = vadd.f32 %v9265, %v9377
    %v9379 = vpop.f32.mrf.mxu0
    %v9380 = vadd.f32 %v9267, %v9379
    %v9381 = vpop.f32.mrf.mxu0
    %v9382 = vadd.f32 %v9269, %v9381
    %v9383 = vpop.f32.mrf.mxu0
    %v9384 = vadd.f32 %v9271, %v9383
    %9385 = vmatprep.mubr.bf16.mxu0 %v2567
    %9386 = vmatmul.mubr.bf16.gmra.mxu0 %v2566
    %v9387 = vpop.f32.mrf.mxu0
    %v9388 = vadd.f32 %v9275, %v9387
    %v9389 = vpop.f32.mrf.mxu0
    %v9390 = vadd.f32 %v9277, %v9389
    %v9391 = vpop.f32.mrf.mxu0
    %v9392 = vadd.f32 %v9279, %v9391
    %v9393 = vpop.f32.mrf.mxu0
    %v9394 = vadd.f32 %v9281, %v9393
    %9395 = vmatprep.mubr.bf16.mxu0 %v2603
    %9396 = vmatmul.mubr.bf16.gmra.mxu0 %v2602
    %v9397 = vpop.f32.mrf.mxu0
    %v9398 = vadd.f32 %v9285, %v9397
    %v9399 = vpop.f32.mrf.mxu0
    %v9400 = vadd.f32 %v9287, %v9399
    %v9401 = vpop.f32.mrf.mxu0
    %v9402 = vadd.f32 %v9289, %v9401
    %v9403 = vpop.f32.mrf.mxu0
    %v9404 = vadd.f32 %v9291, %v9403
    %9405 = vmatprep.mubr.bf16.mxu0 %v2639
    %9406 = vmatmul.mubr.bf16.gmra.mxu0 %v2638
    %v9407 = vpop.f32.mrf.mxu0
    %v9408 = vadd.f32 %v9295, %v9407
    %v9409 = vpop.f32.mrf.mxu0
    %v9410 = vadd.f32 %v9297, %v9409
    %v9411 = vpop.f32.mrf.mxu0
    %v9412 = vadd.f32 %v9299, %v9411
    %v9413 = vpop.f32.mrf.mxu0
    %v9414 = vadd.f32 %v9301, %v9413
    %9415 = vmatprep.mubr.bf16.mxu0 %v2675
    %9416 = vmatmul.mubr.bf16.gmra.mxu0 %v2674
    %v9417 = vpop.f32.mrf.mxu0
    %v9418 = vadd.f32 %v9305, %v9417
    %v9419 = vpop.f32.mrf.mxu0
    %v9420 = vadd.f32 %v9307, %v9419
    %v9421 = vpop.f32.mrf.mxu0
    %v9422 = vadd.f32 %v9309, %v9421
    %v9423 = vpop.f32.mrf.mxu0
    %v9424 = vadd.f32 %v9311, %v9423
    %9425 = vdwg.mxu0
    %9426 = vmatprep.subr.bf16.mxu0 %v6857
    %9427 = vmatpush1.bf16.msra.mxu0 %v6856
    %9428 = vmatprep.subr.bf16.mxu0 %v6853
    %9429 = vmatpush1.bf16.msra.mxu0 %v6852
    %9430 = vmatprep.subr.bf16.mxu0 %v6849
    %9431 = vmatpush1.bf16.msra.mxu0 %v6848
    %9432 = vmatprep.subr.bf16.mxu0 %v6845
    %9433 = vmatpush1.bf16.msra.mxu0 %v6844
    %9434 = vmatprep.subr.bf16.mxu0 %v6841
    %9435 = vmatpush1.bf16.msra.mxu0 %v6840
    %9436 = vmatprep.subr.bf16.mxu0 %v6837
    %9437 = vmatpush1.bf16.msra.mxu0 %v6836
    %9438 = vmatprep.subr.bf16.mxu0 %v6833
    %9439 = vmatpush1.bf16.msra.mxu0 %v6832
    %9440 = vmatprep.subr.bf16.mxu0 %v6829
    %9441 = vmatpush1.bf16.msra.mxu0 %v6828
    %9442 = vmatprep.subr.bf16.mxu0 %v6889
    %9443 = vmatpush2.bf16.msra.mxu0 %v6888
    %9444 = vmatprep.subr.bf16.mxu0 %v6885
    %9445 = vmatpush2.bf16.msra.mxu0 %v6884
    %9446 = vmatprep.subr.bf16.mxu0 %v6881
    %9447 = vmatpush2.bf16.msra.mxu0 %v6880
    %9448 = vmatprep.subr.bf16.mxu0 %v6877
    %9449 = vmatpush2.bf16.msra.mxu0 %v6876
    %9450 = vmatprep.subr.bf16.mxu0 %v6873
    %9451 = vmatpush2.bf16.msra.mxu0 %v6872
    %9452 = vmatprep.subr.bf16.mxu0 %v6869
    %9453 = vmatpush2.bf16.msra.mxu0 %v6868
    %9454 = vmatprep.subr.bf16.mxu0 %v6865
    %9455 = vmatpush2.bf16.msra.mxu0 %v6864
    %9456 = vmatprep.subr.bf16.mxu0 %v6861
    %9457 = vmatpush2.bf16.msra.mxu0 %v6860
    %9458 = vmatprep.mubr.bf16.mxu0 %v2425
    %9459 = vmatmul.mubr.bf16.gmra.mxu0 %v2424
    %v9460 = vpop.f32.mrf.mxu0
    %v9461 = vadd.f32 %v9348, %v9460
    %v9462 = vpop.f32.mrf.mxu0
    %v9463 = vadd.f32 %v9350, %v9462
    %v9464 = vpop.f32.mrf.mxu0
    %v9465 = vadd.f32 %v9352, %v9464
    %v9466 = vpop.f32.mrf.mxu0
    %v9467 = vadd.f32 %v9354, %v9466
    %9468 = vmatprep.mubr.bf16.mxu0 %v2461
    %9469 = vmatmul.mubr.bf16.gmra.mxu0 %v2460
    %v9470 = vpop.f32.mrf.mxu0
    %v9471 = vadd.f32 %v9358, %v9470
    %v9472 = vpop.f32.mrf.mxu0
    %v9473 = vadd.f32 %v9360, %v9472
    %v9474 = vpop.f32.mrf.mxu0
    %v9475 = vadd.f32 %v9362, %v9474
    %v9476 = vpop.f32.mrf.mxu0
    %v9477 = vadd.f32 %v9364, %v9476
    %9478 = vmatprep.mubr.bf16.mxu0 %v2497
    %9479 = vmatmul.mubr.bf16.gmra.mxu0 %v2496
    %v9480 = vpop.f32.mrf.mxu0
    %v9481 = vadd.f32 %v9368, %v9480
    %v9482 = vpop.f32.mrf.mxu0
    %v9483 = vadd.f32 %v9370, %v9482
    %v9484 = vpop.f32.mrf.mxu0
    %v9485 = vadd.f32 %v9372, %v9484
    %v9486 = vpop.f32.mrf.mxu0
    %v9487 = vadd.f32 %v9374, %v9486
    %9488 = vmatprep.mubr.bf16.mxu0 %v2533
    %9489 = vmatmul.mubr.bf16.gmra.mxu0 %v2532
    %v9490 = vpop.f32.mrf.mxu0
    %v9491 = vadd.f32 %v9378, %v9490
    %v9492 = vpop.f32.mrf.mxu0
    %v9493 = vadd.f32 %v9380, %v9492
    %v9494 = vpop.f32.mrf.mxu0
    %v9495 = vadd.f32 %v9382, %v9494
    %v9496 = vpop.f32.mrf.mxu0
    %v9497 = vadd.f32 %v9384, %v9496
    %9498 = vmatprep.mubr.bf16.mxu0 %v2569
    %9499 = vmatmul.mubr.bf16.gmra.mxu0 %v2568
    %v9500 = vpop.f32.mrf.mxu0
    %v9501 = vadd.f32 %v9388, %v9500
    %v9502 = vpop.f32.mrf.mxu0
    %v9503 = vadd.f32 %v9390, %v9502
    %v9504 = vpop.f32.mrf.mxu0
    %v9505 = vadd.f32 %v9392, %v9504
    %v9506 = vpop.f32.mrf.mxu0
    %v9507 = vadd.f32 %v9394, %v9506
    %9508 = vmatprep.mubr.bf16.mxu0 %v2605
    %9509 = vmatmul.mubr.bf16.gmra.mxu0 %v2604
    %v9510 = vpop.f32.mrf.mxu0
    %v9511 = vadd.f32 %v9398, %v9510
    %v9512 = vpop.f32.mrf.mxu0
    %v9513 = vadd.f32 %v9400, %v9512
    %v9514 = vpop.f32.mrf.mxu0
    %v9515 = vadd.f32 %v9402, %v9514
    %v9516 = vpop.f32.mrf.mxu0
    %v9517 = vadd.f32 %v9404, %v9516
    %9518 = vmatprep.mubr.bf16.mxu0 %v2641
    %9519 = vmatmul.mubr.bf16.gmra.mxu0 %v2640
    %v9520 = vpop.f32.mrf.mxu0
    %v9521 = vadd.f32 %v9408, %v9520
    %v9522 = vpop.f32.mrf.mxu0
    %v9523 = vadd.f32 %v9410, %v9522
    %v9524 = vpop.f32.mrf.mxu0
    %v9525 = vadd.f32 %v9412, %v9524
    %v9526 = vpop.f32.mrf.mxu0
    %v9527 = vadd.f32 %v9414, %v9526
    %9528 = vmatprep.mubr.bf16.mxu0 %v2677
    %9529 = vmatmul.mubr.bf16.gmra.mxu0 %v2676
    %v9530 = vpop.f32.mrf.mxu0
    %v9531 = vadd.f32 %v9418, %v9530
    %v9532 = vpop.f32.mrf.mxu0
    %v9533 = vadd.f32 %v9420, %v9532
    %v9534 = vpop.f32.mrf.mxu0
    %v9535 = vadd.f32 %v9422, %v9534
    %v9536 = vpop.f32.mrf.mxu0
    %v9537 = vadd.f32 %v9424, %v9536
    %9538 = vdwg.mxu0
    %9539 = vmatprep.subr.bf16.mxu0 %v6921
    %9540 = vmatpush1.bf16.msra.mxu0 %v6920
    %9541 = vmatprep.subr.bf16.mxu0 %v6917
    %9542 = vmatpush1.bf16.msra.mxu0 %v6916
    %9543 = vmatprep.subr.bf16.mxu0 %v6913
    %9544 = vmatpush1.bf16.msra.mxu0 %v6912
    %9545 = vmatprep.subr.bf16.mxu0 %v6909
    %9546 = vmatpush1.bf16.msra.mxu0 %v6908
    %9547 = vmatprep.subr.bf16.mxu0 %v6905
    %9548 = vmatpush1.bf16.msra.mxu0 %v6904
    %9549 = vmatprep.subr.bf16.mxu0 %v6901
    %9550 = vmatpush1.bf16.msra.mxu0 %v6900
    %9551 = vmatprep.subr.bf16.mxu0 %v6897
    %9552 = vmatpush1.bf16.msra.mxu0 %v6896
    %9553 = vmatprep.subr.bf16.mxu0 %v6893
    %9554 = vmatpush1.bf16.msra.mxu0 %v6892
    %9555 = vmatprep.subr.bf16.mxu0 %v6953
    %9556 = vmatpush2.bf16.msra.mxu0 %v6952
    %9557 = vmatprep.subr.bf16.mxu0 %v6949
    %9558 = vmatpush2.bf16.msra.mxu0 %v6948
    %9559 = vmatprep.subr.bf16.mxu0 %v6945
    %9560 = vmatpush2.bf16.msra.mxu0 %v6944
    %9561 = vmatprep.subr.bf16.mxu0 %v6941
    %9562 = vmatpush2.bf16.msra.mxu0 %v6940
    %9563 = vmatprep.subr.bf16.mxu0 %v6937
    %9564 = vmatpush2.bf16.msra.mxu0 %v6936
    %9565 = vmatprep.subr.bf16.mxu0 %v6933
    %9566 = vmatpush2.bf16.msra.mxu0 %v6932
    %9567 = vmatprep.subr.bf16.mxu0 %v6929
    %9568 = vmatpush2.bf16.msra.mxu0 %v6928
    %9569 = vmatprep.subr.bf16.mxu0 %v6925
    %9570 = vmatpush2.bf16.msra.mxu0 %v6924
    %9571 = vmatprep.mubr.bf16.mxu0 %v2427
    %9572 = vmatmul.mubr.bf16.gmra.mxu0 %v2426
    %v9573 = vpop.f32.mrf.mxu0
    %v9574 = vadd.f32 %v9461, %v9573
    %v9575 = vpop.f32.mrf.mxu0
    %v9576 = vadd.f32 %v9463, %v9575
    %v9577 = vpop.f32.mrf.mxu0
    %v9578 = vadd.f32 %v9465, %v9577
    %v9579 = vpop.f32.mrf.mxu0
    %v9580 = vadd.f32 %v9467, %v9579
    %9581 = vmatprep.mubr.bf16.mxu0 %v2463
    %9582 = vmatmul.mubr.bf16.gmra.mxu0 %v2462
    %v9583 = vpop.f32.mrf.mxu0
    %v9584 = vadd.f32 %v9471, %v9583
    %v9585 = vpop.f32.mrf.mxu0
    %v9586 = vadd.f32 %v9473, %v9585
    %v9587 = vpop.f32.mrf.mxu0
    %v9588 = vadd.f32 %v9475, %v9587
    %v9589 = vpop.f32.mrf.mxu0
    %v9590 = vadd.f32 %v9477, %v9589
    %9591 = vmatprep.mubr.bf16.mxu0 %v2499
    %9592 = vmatmul.mubr.bf16.gmra.mxu0 %v2498
    %v9593 = vpop.f32.mrf.mxu0
    %v9594 = vadd.f32 %v9481, %v9593
    %v9595 = vpop.f32.mrf.mxu0
    %v9596 = vadd.f32 %v9483, %v9595
    %v9597 = vpop.f32.mrf.mxu0
    %v9598 = vadd.f32 %v9485, %v9597
    %v9599 = vpop.f32.mrf.mxu0
    %v9600 = vadd.f32 %v9487, %v9599
    %9601 = vmatprep.mubr.bf16.mxu0 %v2535
    %9602 = vmatmul.mubr.bf16.gmra.mxu0 %v2534
    %v9603 = vpop.f32.mrf.mxu0
    %v9604 = vadd.f32 %v9491, %v9603
    %v9605 = vpop.f32.mrf.mxu0
    %v9606 = vadd.f32 %v9493, %v9605
    %v9607 = vpop.f32.mrf.mxu0
    %v9608 = vadd.f32 %v9495, %v9607
    %v9609 = vpop.f32.mrf.mxu0
    %v9610 = vadd.f32 %v9497, %v9609
    %9611 = vmatprep.mubr.bf16.mxu0 %v2571
    %9612 = vmatmul.mubr.bf16.gmra.mxu0 %v2570
    %v9613 = vpop.f32.mrf.mxu0
    %v9614 = vadd.f32 %v9501, %v9613
    %v9615 = vpop.f32.mrf.mxu0
    %v9616 = vadd.f32 %v9503, %v9615
    %v9617 = vpop.f32.mrf.mxu0
    %v9618 = vadd.f32 %v9505, %v9617
    %v9619 = vpop.f32.mrf.mxu0
    %v9620 = vadd.f32 %v9507, %v9619
    %9621 = vmatprep.mubr.bf16.mxu0 %v2607
    %9622 = vmatmul.mubr.bf16.gmra.mxu0 %v2606
    %v9623 = vpop.f32.mrf.mxu0
    %v9624 = vadd.f32 %v9511, %v9623
    %v9625 = vpop.f32.mrf.mxu0
    %v9626 = vadd.f32 %v9513, %v9625
    %v9627 = vpop.f32.mrf.mxu0
    %v9628 = vadd.f32 %v9515, %v9627
    %v9629 = vpop.f32.mrf.mxu0
    %v9630 = vadd.f32 %v9517, %v9629
    %9631 = vmatprep.mubr.bf16.mxu0 %v2643
    %9632 = vmatmul.mubr.bf16.gmra.mxu0 %v2642
    %v9633 = vpop.f32.mrf.mxu0
    %v9634 = vadd.f32 %v9521, %v9633
    %v9635 = vpop.f32.mrf.mxu0
    %v9636 = vadd.f32 %v9523, %v9635
    %v9637 = vpop.f32.mrf.mxu0
    %v9638 = vadd.f32 %v9525, %v9637
    %v9639 = vpop.f32.mrf.mxu0
    %v9640 = vadd.f32 %v9527, %v9639
    %9641 = vmatprep.mubr.bf16.mxu0 %v2679
    %9642 = vmatmul.mubr.bf16.gmra.mxu0 %v2678
    %v9643 = vpop.f32.mrf.mxu0
    %v9644 = vadd.f32 %v9531, %v9643
    %v9645 = vpop.f32.mrf.mxu0
    %v9646 = vadd.f32 %v9533, %v9645
    %v9647 = vpop.f32.mrf.mxu0
    %v9648 = vadd.f32 %v9535, %v9647
    %v9649 = vpop.f32.mrf.mxu0
    %v9650 = vadd.f32 %v9537, %v9649
    %9651 = vdwg.mxu0
    %9652 = vmatprep.subr.bf16.mxu0 %v6985
    %9653 = vmatpush1.bf16.msra.mxu0 %v6984
    %9654 = vmatprep.subr.bf16.mxu0 %v6981
    %9655 = vmatpush1.bf16.msra.mxu0 %v6980
    %9656 = vmatprep.subr.bf16.mxu0 %v6977
    %9657 = vmatpush1.bf16.msra.mxu0 %v6976
    %9658 = vmatprep.subr.bf16.mxu0 %v6973
    %9659 = vmatpush1.bf16.msra.mxu0 %v6972
    %9660 = vmatprep.subr.bf16.mxu0 %v6969
    %9661 = vmatpush1.bf16.msra.mxu0 %v6968
    %9662 = vmatprep.subr.bf16.mxu0 %v6965
    %9663 = vmatpush1.bf16.msra.mxu0 %v6964
    %9664 = vmatprep.subr.bf16.mxu0 %v6961
    %9665 = vmatpush1.bf16.msra.mxu0 %v6960
    %9666 = vmatprep.subr.bf16.mxu0 %v6957
    %9667 = vmatpush1.bf16.msra.mxu0 %v6956
    %9668 = vmatprep.subr.bf16.mxu0 %v7017
    %9669 = vmatpush2.bf16.msra.mxu0 %v7016
    %9670 = vmatprep.subr.bf16.mxu0 %v7013
    %9671 = vmatpush2.bf16.msra.mxu0 %v7012
    %9672 = vmatprep.subr.bf16.mxu0 %v7009
    %9673 = vmatpush2.bf16.msra.mxu0 %v7008
    %9674 = vmatprep.subr.bf16.mxu0 %v7005
    %9675 = vmatpush2.bf16.msra.mxu0 %v7004
    %9676 = vmatprep.subr.bf16.mxu0 %v7001
    %9677 = vmatpush2.bf16.msra.mxu0 %v7000
    %9678 = vmatprep.subr.bf16.mxu0 %v6997
    %9679 = vmatpush2.bf16.msra.mxu0 %v6996
    %9680 = vmatprep.subr.bf16.mxu0 %v6993
    %9681 = vmatpush2.bf16.msra.mxu0 %v6992
    %9682 = vmatprep.subr.bf16.mxu0 %v6989
    %9683 = vmatpush2.bf16.msra.mxu0 %v6988
    %9684 = vmatprep.mubr.bf16.mxu0 %v2429
    %9685 = vmatmul.mubr.bf16.gmra.mxu0 %v2428
    %v9686 = vpop.f32.mrf.mxu0
    %v9687 = vadd.f32 %v9574, %v9686
    %v9688 = vpop.f32.mrf.mxu0
    %v9689 = vadd.f32 %v9576, %v9688
    %v9690 = vpop.f32.mrf.mxu0
    %v9691 = vadd.f32 %v9578, %v9690
    %v9692 = vpop.f32.mrf.mxu0
    %v9693 = vadd.f32 %v9580, %v9692
    %9694 = vmatprep.mubr.bf16.mxu0 %v2465
    %9695 = vmatmul.mubr.bf16.gmra.mxu0 %v2464
    %v9696 = vpop.f32.mrf.mxu0
    %v9697 = vadd.f32 %v9584, %v9696
    %v9698 = vpop.f32.mrf.mxu0
    %v9699 = vadd.f32 %v9586, %v9698
    %v9700 = vpop.f32.mrf.mxu0
    %v9701 = vadd.f32 %v9588, %v9700
    %v9702 = vpop.f32.mrf.mxu0
    %v9703 = vadd.f32 %v9590, %v9702
    %9704 = vmatprep.mubr.bf16.mxu0 %v2501
    %9705 = vmatmul.mubr.bf16.gmra.mxu0 %v2500
    %v9706 = vpop.f32.mrf.mxu0
    %v9707 = vadd.f32 %v9594, %v9706
    %v9708 = vpop.f32.mrf.mxu0
    %v9709 = vadd.f32 %v9596, %v9708
    %v9710 = vpop.f32.mrf.mxu0
    %v9711 = vadd.f32 %v9598, %v9710
    %v9712 = vpop.f32.mrf.mxu0
    %v9713 = vadd.f32 %v9600, %v9712
    %9714 = vmatprep.mubr.bf16.mxu0 %v2537
    %9715 = vmatmul.mubr.bf16.gmra.mxu0 %v2536
    %v9716 = vpop.f32.mrf.mxu0
    %v9717 = vadd.f32 %v9604, %v9716
    %v9718 = vpop.f32.mrf.mxu0
    %v9719 = vadd.f32 %v9606, %v9718
    %v9720 = vpop.f32.mrf.mxu0
    %v9721 = vadd.f32 %v9608, %v9720
    %v9722 = vpop.f32.mrf.mxu0
    %v9723 = vadd.f32 %v9610, %v9722
    %9724 = vmatprep.mubr.bf16.mxu0 %v2573
    %9725 = vmatmul.mubr.bf16.gmra.mxu0 %v2572
    %v9726 = vpop.f32.mrf.mxu0
    %v9727 = vadd.f32 %v9614, %v9726
    %v9728 = vpop.f32.mrf.mxu0
    %v9729 = vadd.f32 %v9616, %v9728
    %v9730 = vpop.f32.mrf.mxu0
    %v9731 = vadd.f32 %v9618, %v9730
    %v9732 = vpop.f32.mrf.mxu0
    %v9733 = vadd.f32 %v9620, %v9732
    %9734 = vmatprep.mubr.bf16.mxu0 %v2609
    %9735 = vmatmul.mubr.bf16.gmra.mxu0 %v2608
    %v9736 = vpop.f32.mrf.mxu0
    %v9737 = vadd.f32 %v9624, %v9736
    %v9738 = vpop.f32.mrf.mxu0
    %v9739 = vadd.f32 %v9626, %v9738
    %v9740 = vpop.f32.mrf.mxu0
    %v9741 = vadd.f32 %v9628, %v9740
    %v9742 = vpop.f32.mrf.mxu0
    %v9743 = vadd.f32 %v9630, %v9742
    %9744 = vmatprep.mubr.bf16.mxu0 %v2645
    %9745 = vmatmul.mubr.bf16.gmra.mxu0 %v2644
    %v9746 = vpop.f32.mrf.mxu0
    %v9747 = vadd.f32 %v9634, %v9746
    %v9748 = vpop.f32.mrf.mxu0
    %v9749 = vadd.f32 %v9636, %v9748
    %v9750 = vpop.f32.mrf.mxu0
    %v9751 = vadd.f32 %v9638, %v9750
    %v9752 = vpop.f32.mrf.mxu0
    %v9753 = vadd.f32 %v9640, %v9752
    %9754 = vmatprep.mubr.bf16.mxu0 %v2681
    %9755 = vmatmul.mubr.bf16.gmra.mxu0 %v2680
    %v9756 = vpop.f32.mrf.mxu0
    %v9757 = vadd.f32 %v9644, %v9756
    %v9758 = vpop.f32.mrf.mxu0
    %v9759 = vadd.f32 %v9646, %v9758
    %v9760 = vpop.f32.mrf.mxu0
    %v9761 = vadd.f32 %v9648, %v9760
    %v9762 = vpop.f32.mrf.mxu0
    %v9763 = vadd.f32 %v9650, %v9762
    %9764 = vdwg.mxu0
    %9765 = vmatprep.subr.bf16.mxu0 %v7049
    %9766 = vmatpush1.bf16.msra.mxu0 %v7048
    %9767 = vmatprep.subr.bf16.mxu0 %v7045
    %9768 = vmatpush1.bf16.msra.mxu0 %v7044
    %9769 = vmatprep.subr.bf16.mxu0 %v7041
    %9770 = vmatpush1.bf16.msra.mxu0 %v7040
    %9771 = vmatprep.subr.bf16.mxu0 %v7037
    %9772 = vmatpush1.bf16.msra.mxu0 %v7036
    %9773 = vmatprep.subr.bf16.mxu0 %v7033
    %9774 = vmatpush1.bf16.msra.mxu0 %v7032
    %9775 = vmatprep.subr.bf16.mxu0 %v7029
    %9776 = vmatpush1.bf16.msra.mxu0 %v7028
    %9777 = vmatprep.subr.bf16.mxu0 %v7025
    %9778 = vmatpush1.bf16.msra.mxu0 %v7024
    %9779 = vmatprep.subr.bf16.mxu0 %v7021
    %9780 = vmatpush1.bf16.msra.mxu0 %v7020
    %9781 = vmatprep.subr.bf16.mxu0 %v7081
    %9782 = vmatpush2.bf16.msra.mxu0 %v7080
    %9783 = vmatprep.subr.bf16.mxu0 %v7077
    %9784 = vmatpush2.bf16.msra.mxu0 %v7076
    %9785 = vmatprep.subr.bf16.mxu0 %v7073
    %9786 = vmatpush2.bf16.msra.mxu0 %v7072
    %9787 = vmatprep.subr.bf16.mxu0 %v7069
    %9788 = vmatpush2.bf16.msra.mxu0 %v7068
    %9789 = vmatprep.subr.bf16.mxu0 %v7065
    %9790 = vmatpush2.bf16.msra.mxu0 %v7064
    %9791 = vmatprep.subr.bf16.mxu0 %v7061
    %9792 = vmatpush2.bf16.msra.mxu0 %v7060
    %9793 = vmatprep.subr.bf16.mxu0 %v7057
    %9794 = vmatpush2.bf16.msra.mxu0 %v7056
    %9795 = vmatprep.subr.bf16.mxu0 %v7053
    %9796 = vmatpush2.bf16.msra.mxu0 %v7052
    %9797 = vmatprep.mubr.bf16.mxu0 %v2431
    %9798 = vmatmul.mubr.bf16.gmra.mxu0 %v2430
    %v9799 = vpop.f32.mrf.mxu0
    %v9800 = vadd.f32 %v9687, %v9799
    %v9801 = vpop.f32.mrf.mxu0
    %v9802 = vadd.f32 %v9689, %v9801
    %v9803 = vpop.f32.mrf.mxu0
    %v9804 = vadd.f32 %v9691, %v9803
    %v9805 = vpop.f32.mrf.mxu0
    %v9806 = vadd.f32 %v9693, %v9805
    %9807 = vmatprep.mubr.bf16.mxu0 %v2467
    %9808 = vmatmul.mubr.bf16.gmra.mxu0 %v2466
    %v9809 = vpop.f32.mrf.mxu0
    %v9810 = vadd.f32 %v9697, %v9809
    %v9811 = vpop.f32.mrf.mxu0
    %v9812 = vadd.f32 %v9699, %v9811
    %v9813 = vpop.f32.mrf.mxu0
    %v9814 = vadd.f32 %v9701, %v9813
    %v9815 = vpop.f32.mrf.mxu0
    %v9816 = vadd.f32 %v9703, %v9815
    %9817 = vmatprep.mubr.bf16.mxu0 %v2503
    %9818 = vmatmul.mubr.bf16.gmra.mxu0 %v2502
    %v9819 = vpop.f32.mrf.mxu0
    %v9820 = vadd.f32 %v9707, %v9819
    %v9821 = vpop.f32.mrf.mxu0
    %v9822 = vadd.f32 %v9709, %v9821
    %v9823 = vpop.f32.mrf.mxu0
    %v9824 = vadd.f32 %v9711, %v9823
    %v9825 = vpop.f32.mrf.mxu0
    %v9826 = vadd.f32 %v9713, %v9825
    %9827 = vmatprep.mubr.bf16.mxu0 %v2539
    %9828 = vmatmul.mubr.bf16.gmra.mxu0 %v2538
    %v9829 = vpop.f32.mrf.mxu0
    %v9830 = vadd.f32 %v9717, %v9829
    %v9831 = vpop.f32.mrf.mxu0
    %v9832 = vadd.f32 %v9719, %v9831
    %v9833 = vpop.f32.mrf.mxu0
    %v9834 = vadd.f32 %v9721, %v9833
    %v9835 = vpop.f32.mrf.mxu0
    %v9836 = vadd.f32 %v9723, %v9835
    %9837 = vmatprep.mubr.bf16.mxu0 %v2575
    %9838 = vmatmul.mubr.bf16.gmra.mxu0 %v2574
    %v9839 = vpop.f32.mrf.mxu0
    %v9840 = vadd.f32 %v9727, %v9839
    %v9841 = vpop.f32.mrf.mxu0
    %v9842 = vadd.f32 %v9729, %v9841
    %v9843 = vpop.f32.mrf.mxu0
    %v9844 = vadd.f32 %v9731, %v9843
    %v9845 = vpop.f32.mrf.mxu0
    %v9846 = vadd.f32 %v9733, %v9845
    %9847 = vmatprep.mubr.bf16.mxu0 %v2611
    %9848 = vmatmul.mubr.bf16.gmra.mxu0 %v2610
    %v9849 = vpop.f32.mrf.mxu0
    %v9850 = vadd.f32 %v9737, %v9849
    %v9851 = vpop.f32.mrf.mxu0
    %v9852 = vadd.f32 %v9739, %v9851
    %v9853 = vpop.f32.mrf.mxu0
    %v9854 = vadd.f32 %v9741, %v9853
    %v9855 = vpop.f32.mrf.mxu0
    %v9856 = vadd.f32 %v9743, %v9855
    %9857 = vmatprep.mubr.bf16.mxu0 %v2647
    %9858 = vmatmul.mubr.bf16.gmra.mxu0 %v2646
    %v9859 = vpop.f32.mrf.mxu0
    %v9860 = vadd.f32 %v9747, %v9859
    %v9861 = vpop.f32.mrf.mxu0
    %v9862 = vadd.f32 %v9749, %v9861
    %v9863 = vpop.f32.mrf.mxu0
    %v9864 = vadd.f32 %v9751, %v9863
    %v9865 = vpop.f32.mrf.mxu0
    %v9866 = vadd.f32 %v9753, %v9865
    %9867 = vmatprep.mubr.bf16.mxu0 %v2683
    %9868 = vmatmul.mubr.bf16.gmra.mxu0 %v2682
    %v9869 = vpop.f32.mrf.mxu0
    %v9870 = vadd.f32 %v9757, %v9869
    %v9871 = vpop.f32.mrf.mxu0
    %v9872 = vadd.f32 %v9759, %v9871
    %v9873 = vpop.f32.mrf.mxu0
    %v9874 = vadd.f32 %v9761, %v9873
    %v9875 = vpop.f32.mrf.mxu0
    %v9876 = vadd.f32 %v9763, %v9875
    %9877 = vdwg.mxu0
    %9878 = vmatprep.subr.bf16.mxu0 %v7113
    %9879 = vmatpush1.bf16.msra.mxu0 %v7112
    %9880 = vmatprep.subr.bf16.mxu0 %v7109
    %9881 = vmatpush1.bf16.msra.mxu0 %v7108
    %9882 = vmatprep.subr.bf16.mxu0 %v7105
    %9883 = vmatpush1.bf16.msra.mxu0 %v7104
    %9884 = vmatprep.subr.bf16.mxu0 %v7101
    %9885 = vmatpush1.bf16.msra.mxu0 %v7100
    %9886 = vmatprep.subr.bf16.mxu0 %v7097
    %9887 = vmatpush1.bf16.msra.mxu0 %v7096
    %9888 = vmatprep.subr.bf16.mxu0 %v7093
    %9889 = vmatpush1.bf16.msra.mxu0 %v7092
    %9890 = vmatprep.subr.bf16.mxu0 %v7089
    %9891 = vmatpush1.bf16.msra.mxu0 %v7088
    %9892 = vmatprep.subr.bf16.mxu0 %v7085
    %9893 = vmatpush1.bf16.msra.mxu0 %v7084
    %9894 = vmatprep.subr.bf16.mxu0 %v7145
    %9895 = vmatpush2.bf16.msra.mxu0 %v7144
    %9896 = vmatprep.subr.bf16.mxu0 %v7141
    %9897 = vmatpush2.bf16.msra.mxu0 %v7140
    %9898 = vmatprep.subr.bf16.mxu0 %v7137
    %9899 = vmatpush2.bf16.msra.mxu0 %v7136
    %9900 = vmatprep.subr.bf16.mxu0 %v7133
    %9901 = vmatpush2.bf16.msra.mxu0 %v7132
    %9902 = vmatprep.subr.bf16.mxu0 %v7129
    %9903 = vmatpush2.bf16.msra.mxu0 %v7128
    %9904 = vmatprep.subr.bf16.mxu0 %v7125
    %9905 = vmatpush2.bf16.msra.mxu0 %v7124
    %9906 = vmatprep.subr.bf16.mxu0 %v7121
    %9907 = vmatpush2.bf16.msra.mxu0 %v7120
    %9908 = vmatprep.subr.bf16.mxu0 %v7117
    %9909 = vmatpush2.bf16.msra.mxu0 %v7116
    %9910 = vmatprep.mubr.bf16.mxu0 %v2433
    %9911 = vmatmul.mubr.bf16.gmra.mxu0 %v2432
    %v9912 = vpop.f32.mrf.mxu0
    %v9913 = vadd.f32 %v9800, %v9912
    %v9914 = vpop.f32.mrf.mxu0
    %v9915 = vadd.f32 %v9802, %v9914
    %v9916 = vpop.f32.mrf.mxu0
    %v9917 = vadd.f32 %v9804, %v9916
    %v9918 = vpop.f32.mrf.mxu0
    %v9919 = vadd.f32 %v9806, %v9918
    %9920 = vmatprep.mubr.bf16.mxu0 %v2469
    %9921 = vmatmul.mubr.bf16.gmra.mxu0 %v2468
    %v9922 = vpop.f32.mrf.mxu0
    %v9923 = vadd.f32 %v9810, %v9922
    %v9924 = vpop.f32.mrf.mxu0
    %v9925 = vadd.f32 %v9812, %v9924
    %v9926 = vpop.f32.mrf.mxu0
    %v9927 = vadd.f32 %v9814, %v9926
    %v9928 = vpop.f32.mrf.mxu0
    %v9929 = vadd.f32 %v9816, %v9928
    %9930 = vmatprep.mubr.bf16.mxu0 %v2505
    %9931 = vmatmul.mubr.bf16.gmra.mxu0 %v2504
    %v9932 = vpop.f32.mrf.mxu0
    %v9933 = vadd.f32 %v9820, %v9932
    %v9934 = vpop.f32.mrf.mxu0
    %v9935 = vadd.f32 %v9822, %v9934
    %v9936 = vpop.f32.mrf.mxu0
    %v9937 = vadd.f32 %v9824, %v9936
    %v9938 = vpop.f32.mrf.mxu0
    %v9939 = vadd.f32 %v9826, %v9938
    %9940 = vmatprep.mubr.bf16.mxu0 %v2541
    %9941 = vmatmul.mubr.bf16.gmra.mxu0 %v2540
    %v9942 = vpop.f32.mrf.mxu0
    %v9943 = vadd.f32 %v9830, %v9942
    %v9944 = vpop.f32.mrf.mxu0
    %v9945 = vadd.f32 %v9832, %v9944
    %v9946 = vpop.f32.mrf.mxu0
    %v9947 = vadd.f32 %v9834, %v9946
    %v9948 = vpop.f32.mrf.mxu0
    %v9949 = vadd.f32 %v9836, %v9948
    %9950 = vmatprep.mubr.bf16.mxu0 %v2577
    %9951 = vmatmul.mubr.bf16.gmra.mxu0 %v2576
    %v9952 = vpop.f32.mrf.mxu0
    %v9953 = vadd.f32 %v9840, %v9952
    %v9954 = vpop.f32.mrf.mxu0
    %v9955 = vadd.f32 %v9842, %v9954
    %v9956 = vpop.f32.mrf.mxu0
    %v9957 = vadd.f32 %v9844, %v9956
    %v9958 = vpop.f32.mrf.mxu0
    %v9959 = vadd.f32 %v9846, %v9958
    %9960 = vmatprep.mubr.bf16.mxu0 %v2613
    %9961 = vmatmul.mubr.bf16.gmra.mxu0 %v2612
    %v9962 = vpop.f32.mrf.mxu0
    %v9963 = vadd.f32 %v9850, %v9962
    %v9964 = vpop.f32.mrf.mxu0
    %v9965 = vadd.f32 %v9852, %v9964
    %v9966 = vpop.f32.mrf.mxu0
    %v9967 = vadd.f32 %v9854, %v9966
    %v9968 = vpop.f32.mrf.mxu0
    %v9969 = vadd.f32 %v9856, %v9968
    %9970 = vmatprep.mubr.bf16.mxu0 %v2649
    %9971 = vmatmul.mubr.bf16.gmra.mxu0 %v2648
    %v9972 = vpop.f32.mrf.mxu0
    %v9973 = vadd.f32 %v9860, %v9972
    %v9974 = vpop.f32.mrf.mxu0
    %v9975 = vadd.f32 %v9862, %v9974
    %v9976 = vpop.f32.mrf.mxu0
    %v9977 = vadd.f32 %v9864, %v9976
    %v9978 = vpop.f32.mrf.mxu0
    %v9979 = vadd.f32 %v9866, %v9978
    %9980 = vmatprep.mubr.bf16.mxu0 %v2685
    %9981 = vmatmul.mubr.bf16.gmra.mxu0 %v2684
    %v9982 = vpop.f32.mrf.mxu0
    %v9983 = vadd.f32 %v9870, %v9982
    %v9984 = vpop.f32.mrf.mxu0
    %v9985 = vadd.f32 %v9872, %v9984
    %v9986 = vpop.f32.mrf.mxu0
    %v9987 = vadd.f32 %v9874, %v9986
    %v9988 = vpop.f32.mrf.mxu0
    %v9989 = vadd.f32 %v9876, %v9988
    %9990 = vdwg.mxu0
    %9991 = vmatprep.subr.bf16.mxu0 %v7177
    %9992 = vmatpush1.bf16.msra.mxu0 %v7176
    %9993 = vmatprep.subr.bf16.mxu0 %v7173
    %9994 = vmatpush1.bf16.msra.mxu0 %v7172
    %9995 = vmatprep.subr.bf16.mxu0 %v7169
    %9996 = vmatpush1.bf16.msra.mxu0 %v7168
    %9997 = vmatprep.subr.bf16.mxu0 %v7165
    %9998 = vmatpush1.bf16.msra.mxu0 %v7164
    %9999 = vmatprep.subr.bf16.mxu0 %v7161
    %10000 = vmatpush1.bf16.msra.mxu0 %v7160
    %10001 = vmatprep.subr.bf16.mxu0 %v7157
    %10002 = vmatpush1.bf16.msra.mxu0 %v7156
    %10003 = vmatprep.subr.bf16.mxu0 %v7153
    %10004 = vmatpush1.bf16.msra.mxu0 %v7152
    %10005 = vmatprep.subr.bf16.mxu0 %v7149
    %10006 = vmatpush1.bf16.msra.mxu0 %v7148
    %10007 = vmatprep.subr.bf16.mxu0 %v7209
    %10008 = vmatpush2.bf16.msra.mxu0 %v7208
    %10009 = vmatprep.subr.bf16.mxu0 %v7205
    %10010 = vmatpush2.bf16.msra.mxu0 %v7204
    %10011 = vmatprep.subr.bf16.mxu0 %v7201
    %10012 = vmatpush2.bf16.msra.mxu0 %v7200
    %10013 = vmatprep.subr.bf16.mxu0 %v7197
    %10014 = vmatpush2.bf16.msra.mxu0 %v7196
    %10015 = vmatprep.subr.bf16.mxu0 %v7193
    %10016 = vmatpush2.bf16.msra.mxu0 %v7192
    %10017 = vmatprep.subr.bf16.mxu0 %v7189
    %10018 = vmatpush2.bf16.msra.mxu0 %v7188
    %10019 = vmatprep.subr.bf16.mxu0 %v7185
    %10020 = vmatpush2.bf16.msra.mxu0 %v7184
    %10021 = vmatprep.subr.bf16.mxu0 %v7181
    %10022 = vmatpush2.bf16.msra.mxu0 %v7180
    %10023 = vmatprep.mubr.bf16.mxu0 %v2435
    %10024 = vmatmul.mubr.bf16.gmra.mxu0 %v2434
    %v10025 = vpop.f32.mrf.mxu0
    %v10026 = vadd.f32 %v9913, %v10025
    %v10027 = vpop.f32.mrf.mxu0
    %v10028 = vadd.f32 %v9915, %v10027
    %v10029 = vpop.f32.mrf.mxu0
    %v10030 = vadd.f32 %v9917, %v10029
    %v10031 = vpop.f32.mrf.mxu0
    %v10032 = vadd.f32 %v9919, %v10031
    %10033 = vmatprep.mubr.bf16.mxu0 %v2471
    %10034 = vmatmul.mubr.bf16.gmra.mxu0 %v2470
    %v10035 = vpop.f32.mrf.mxu0
    %v10036 = vadd.f32 %v9923, %v10035
    %v10037 = vpop.f32.mrf.mxu0
    %v10038 = vadd.f32 %v9925, %v10037
    %v10039 = vpop.f32.mrf.mxu0
    %v10040 = vadd.f32 %v9927, %v10039
    %v10041 = vpop.f32.mrf.mxu0
    %v10042 = vadd.f32 %v9929, %v10041
    %10043 = vmatprep.mubr.bf16.mxu0 %v2507
    %10044 = vmatmul.mubr.bf16.gmra.mxu0 %v2506
    %v10045 = vpop.f32.mrf.mxu0
    %v10046 = vadd.f32 %v9933, %v10045
    %v10047 = vpop.f32.mrf.mxu0
    %v10048 = vadd.f32 %v9935, %v10047
    %v10049 = vpop.f32.mrf.mxu0
    %v10050 = vadd.f32 %v9937, %v10049
    %v10051 = vpop.f32.mrf.mxu0
    %v10052 = vadd.f32 %v9939, %v10051
    %10053 = vmatprep.mubr.bf16.mxu0 %v2543
    %10054 = vmatmul.mubr.bf16.gmra.mxu0 %v2542
    %v10055 = vpop.f32.mrf.mxu0
    %v10056 = vadd.f32 %v9943, %v10055
    %v10057 = vpop.f32.mrf.mxu0
    %v10058 = vadd.f32 %v9945, %v10057
    %v10059 = vpop.f32.mrf.mxu0
    %v10060 = vadd.f32 %v9947, %v10059
    %v10061 = vpop.f32.mrf.mxu0
    %v10062 = vadd.f32 %v9949, %v10061
    %10063 = vmatprep.mubr.bf16.mxu0 %v2579
    %10064 = vmatmul.mubr.bf16.gmra.mxu0 %v2578
    %v10065 = vpop.f32.mrf.mxu0
    %v10066 = vadd.f32 %v9953, %v10065
    %v10067 = vpop.f32.mrf.mxu0
    %v10068 = vadd.f32 %v9955, %v10067
    %v10069 = vpop.f32.mrf.mxu0
    %v10070 = vadd.f32 %v9957, %v10069
    %v10071 = vpop.f32.mrf.mxu0
    %v10072 = vadd.f32 %v9959, %v10071
    %10073 = vmatprep.mubr.bf16.mxu0 %v2615
    %10074 = vmatmul.mubr.bf16.gmra.mxu0 %v2614
    %v10075 = vpop.f32.mrf.mxu0
    %v10076 = vadd.f32 %v9963, %v10075
    %v10077 = vpop.f32.mrf.mxu0
    %v10078 = vadd.f32 %v9965, %v10077
    %v10079 = vpop.f32.mrf.mxu0
    %v10080 = vadd.f32 %v9967, %v10079
    %v10081 = vpop.f32.mrf.mxu0
    %v10082 = vadd.f32 %v9969, %v10081
    %10083 = vmatprep.mubr.bf16.mxu0 %v2651
    %10084 = vmatmul.mubr.bf16.gmra.mxu0 %v2650
    %v10085 = vpop.f32.mrf.mxu0
    %v10086 = vadd.f32 %v9973, %v10085
    %v10087 = vpop.f32.mrf.mxu0
    %v10088 = vadd.f32 %v9975, %v10087
    %v10089 = vpop.f32.mrf.mxu0
    %v10090 = vadd.f32 %v9977, %v10089
    %v10091 = vpop.f32.mrf.mxu0
    %v10092 = vadd.f32 %v9979, %v10091
    %10093 = vmatprep.mubr.bf16.mxu0 %v2687
    %10094 = vmatmul.mubr.bf16.gmra.mxu0 %v2686
    %v10095 = vpop.f32.mrf.mxu0
    %v10096 = vadd.f32 %v9983, %v10095
    %v10097 = vpop.f32.mrf.mxu0
    %v10098 = vadd.f32 %v9985, %v10097
    %v10099 = vpop.f32.mrf.mxu0
    %v10100 = vadd.f32 %v9987, %v10099
    %v10101 = vpop.f32.mrf.mxu0
    %v10102 = vadd.f32 %v9989, %v10101
    %10103 = vdwg.mxu0
    %10104 = vmatprep.subr.bf16.mxu0 %v7241
    %10105 = vmatpush1.bf16.msra.mxu0 %v7240
    %10106 = vmatprep.subr.bf16.mxu0 %v7237
    %10107 = vmatpush1.bf16.msra.mxu0 %v7236
    %10108 = vmatprep.subr.bf16.mxu0 %v7233
    %10109 = vmatpush1.bf16.msra.mxu0 %v7232
    %10110 = vmatprep.subr.bf16.mxu0 %v7229
    %10111 = vmatpush1.bf16.msra.mxu0 %v7228
    %10112 = vmatprep.subr.bf16.mxu0 %v7225
    %10113 = vmatpush1.bf16.msra.mxu0 %v7224
    %10114 = vmatprep.subr.bf16.mxu0 %v7221
    %10115 = vmatpush1.bf16.msra.mxu0 %v7220
    %10116 = vmatprep.subr.bf16.mxu0 %v7217
    %10117 = vmatpush1.bf16.msra.mxu0 %v7216
    %10118 = vmatprep.subr.bf16.mxu0 %v7213
    %10119 = vmatpush1.bf16.msra.mxu0 %v7212
    %10120 = vmatprep.subr.bf16.mxu0 %v7273
    %10121 = vmatpush2.bf16.msra.mxu0 %v7272
    %10122 = vmatprep.subr.bf16.mxu0 %v7269
    %10123 = vmatpush2.bf16.msra.mxu0 %v7268
    %10124 = vmatprep.subr.bf16.mxu0 %v7265
    %10125 = vmatpush2.bf16.msra.mxu0 %v7264
    %10126 = vmatprep.subr.bf16.mxu0 %v7261
    %10127 = vmatpush2.bf16.msra.mxu0 %v7260
    %10128 = vmatprep.subr.bf16.mxu0 %v7257
    %10129 = vmatpush2.bf16.msra.mxu0 %v7256
    %10130 = vmatprep.subr.bf16.mxu0 %v7253
    %10131 = vmatpush2.bf16.msra.mxu0 %v7252
    %10132 = vmatprep.subr.bf16.mxu0 %v7249
    %10133 = vmatpush2.bf16.msra.mxu0 %v7248
    %10134 = vmatprep.subr.bf16.mxu0 %v7245
    %10135 = vmatpush2.bf16.msra.mxu0 %v7244
    %10136 = vmatprep.mubr.bf16.mxu0 %v2437
    %10137 = vmatmul.mubr.bf16.gmra.mxu0 %v2436
    %v10138 = vpop.f32.mrf.mxu0
    %v10139 = vadd.f32 %v10026, %v10138
    %v10140 = vpop.f32.mrf.mxu0
    %v10141 = vadd.f32 %v10028, %v10140
    %v10142 = vpop.f32.mrf.mxu0
    %v10143 = vadd.f32 %v10030, %v10142
    %v10144 = vpop.f32.mrf.mxu0
    %v10145 = vadd.f32 %v10032, %v10144
    %10146 = vmatprep.mubr.bf16.mxu0 %v2473
    %10147 = vmatmul.mubr.bf16.gmra.mxu0 %v2472
    %v10148 = vpop.f32.mrf.mxu0
    %v10149 = vadd.f32 %v10036, %v10148
    %v10150 = vpop.f32.mrf.mxu0
    %v10151 = vadd.f32 %v10038, %v10150
    %v10152 = vpop.f32.mrf.mxu0
    %v10153 = vadd.f32 %v10040, %v10152
    %v10154 = vpop.f32.mrf.mxu0
    %v10155 = vadd.f32 %v10042, %v10154
    %10156 = vmatprep.mubr.bf16.mxu0 %v2509
    %10157 = vmatmul.mubr.bf16.gmra.mxu0 %v2508
    %v10158 = vpop.f32.mrf.mxu0
    %v10159 = vadd.f32 %v10046, %v10158
    %v10160 = vpop.f32.mrf.mxu0
    %v10161 = vadd.f32 %v10048, %v10160
    %v10162 = vpop.f32.mrf.mxu0
    %v10163 = vadd.f32 %v10050, %v10162
    %v10164 = vpop.f32.mrf.mxu0
    %v10165 = vadd.f32 %v10052, %v10164
    %10166 = vmatprep.mubr.bf16.mxu0 %v2545
    %10167 = vmatmul.mubr.bf16.gmra.mxu0 %v2544
    %v10168 = vpop.f32.mrf.mxu0
    %v10169 = vadd.f32 %v10056, %v10168
    %v10170 = vpop.f32.mrf.mxu0
    %v10171 = vadd.f32 %v10058, %v10170
    %v10172 = vpop.f32.mrf.mxu0
    %v10173 = vadd.f32 %v10060, %v10172
    %v10174 = vpop.f32.mrf.mxu0
    %v10175 = vadd.f32 %v10062, %v10174
    %10176 = vmatprep.mubr.bf16.mxu0 %v2581
    %10177 = vmatmul.mubr.bf16.gmra.mxu0 %v2580
    %v10178 = vpop.f32.mrf.mxu0
    %v10179 = vadd.f32 %v10066, %v10178
    %v10180 = vpop.f32.mrf.mxu0
    %v10181 = vadd.f32 %v10068, %v10180
    %v10182 = vpop.f32.mrf.mxu0
    %v10183 = vadd.f32 %v10070, %v10182
    %v10184 = vpop.f32.mrf.mxu0
    %v10185 = vadd.f32 %v10072, %v10184
    %10186 = vmatprep.mubr.bf16.mxu0 %v2617
    %10187 = vmatmul.mubr.bf16.gmra.mxu0 %v2616
    %v10188 = vpop.f32.mrf.mxu0
    %v10189 = vadd.f32 %v10076, %v10188
    %v10190 = vpop.f32.mrf.mxu0
    %v10191 = vadd.f32 %v10078, %v10190
    %v10192 = vpop.f32.mrf.mxu0
    %v10193 = vadd.f32 %v10080, %v10192
    %v10194 = vpop.f32.mrf.mxu0
    %v10195 = vadd.f32 %v10082, %v10194
    %10196 = vmatprep.mubr.bf16.mxu0 %v2653
    %10197 = vmatmul.mubr.bf16.gmra.mxu0 %v2652
    %v10198 = vpop.f32.mrf.mxu0
    %v10199 = vadd.f32 %v10086, %v10198
    %v10200 = vpop.f32.mrf.mxu0
    %v10201 = vadd.f32 %v10088, %v10200
    %v10202 = vpop.f32.mrf.mxu0
    %v10203 = vadd.f32 %v10090, %v10202
    %v10204 = vpop.f32.mrf.mxu0
    %v10205 = vadd.f32 %v10092, %v10204
    %10206 = vmatprep.mubr.bf16.mxu0 %v2689
    %10207 = vmatmul.mubr.bf16.gmra.mxu0 %v2688
    %v10208 = vpop.f32.mrf.mxu0
    %v10209 = vadd.f32 %v10096, %v10208
    %v10210 = vpop.f32.mrf.mxu0
    %v10211 = vadd.f32 %v10098, %v10210
    %v10212 = vpop.f32.mrf.mxu0
    %v10213 = vadd.f32 %v10100, %v10212
    %v10214 = vpop.f32.mrf.mxu0
    %v10215 = vadd.f32 %v10102, %v10214
    %10216 = vdwg.mxu0
    %10217 = vmatprep.subr.bf16.mxu0 %v7305
    %10218 = vmatpush1.bf16.msra.mxu0 %v7304
    %10219 = vmatprep.subr.bf16.mxu0 %v7301
    %10220 = vmatpush1.bf16.msra.mxu0 %v7300
    %10221 = vmatprep.subr.bf16.mxu0 %v7297
    %10222 = vmatpush1.bf16.msra.mxu0 %v7296
    %10223 = vmatprep.subr.bf16.mxu0 %v7293
    %10224 = vmatpush1.bf16.msra.mxu0 %v7292
    %10225 = vmatprep.subr.bf16.mxu0 %v7289
    %10226 = vmatpush1.bf16.msra.mxu0 %v7288
    %10227 = vmatprep.subr.bf16.mxu0 %v7285
    %10228 = vmatpush1.bf16.msra.mxu0 %v7284
    %10229 = vmatprep.subr.bf16.mxu0 %v7281
    %10230 = vmatpush1.bf16.msra.mxu0 %v7280
    %10231 = vmatprep.subr.bf16.mxu0 %v7277
    %10232 = vmatpush1.bf16.msra.mxu0 %v7276
    %10233 = vmatprep.subr.bf16.mxu0 %v7337
    %10234 = vmatpush2.bf16.msra.mxu0 %v7336
    %10235 = vmatprep.subr.bf16.mxu0 %v7333
    %10236 = vmatpush2.bf16.msra.mxu0 %v7332
    %10237 = vmatprep.subr.bf16.mxu0 %v7329
    %10238 = vmatpush2.bf16.msra.mxu0 %v7328
    %10239 = vmatprep.subr.bf16.mxu0 %v7325
    %10240 = vmatpush2.bf16.msra.mxu0 %v7324
    %10241 = vmatprep.subr.bf16.mxu0 %v7321
    %10242 = vmatpush2.bf16.msra.mxu0 %v7320
    %10243 = vmatprep.subr.bf16.mxu0 %v7317
    %10244 = vmatpush2.bf16.msra.mxu0 %v7316
    %10245 = vmatprep.subr.bf16.mxu0 %v7313
    %10246 = vmatpush2.bf16.msra.mxu0 %v7312
    %10247 = vmatprep.subr.bf16.mxu0 %v7309
    %10248 = vmatpush2.bf16.msra.mxu0 %v7308
    %10249 = vmatprep.mubr.bf16.mxu0 %v2439
    %10250 = vmatmul.mubr.bf16.gmra.mxu0 %v2438
    %v10251 = vpop.f32.mrf.mxu0
    %v10252 = vadd.f32 %v10139, %v10251
    %v10253 = vpop.f32.mrf.mxu0
    %v10254 = vadd.f32 %v10141, %v10253
    %v10255 = vpop.f32.mrf.mxu0
    %v10256 = vadd.f32 %v10143, %v10255
    %v10257 = vpop.f32.mrf.mxu0
    %v10258 = vadd.f32 %v10145, %v10257
    %10259 = vmatprep.mubr.bf16.mxu0 %v2475
    %10260 = vmatmul.mubr.bf16.gmra.mxu0 %v2474
    %v10261 = vpop.f32.mrf.mxu0
    %v10262 = vadd.f32 %v10149, %v10261
    %v10263 = vpop.f32.mrf.mxu0
    %v10264 = vadd.f32 %v10151, %v10263
    %v10265 = vpop.f32.mrf.mxu0
    %v10266 = vadd.f32 %v10153, %v10265
    %v10267 = vpop.f32.mrf.mxu0
    %v10268 = vadd.f32 %v10155, %v10267
    %10269 = vmatprep.mubr.bf16.mxu0 %v2511
    %10270 = vmatmul.mubr.bf16.gmra.mxu0 %v2510
    %v10271 = vpop.f32.mrf.mxu0
    %v10272 = vadd.f32 %v10159, %v10271
    %v10273 = vpop.f32.mrf.mxu0
    %v10274 = vadd.f32 %v10161, %v10273
    %v10275 = vpop.f32.mrf.mxu0
    %v10276 = vadd.f32 %v10163, %v10275
    %v10277 = vpop.f32.mrf.mxu0
    %v10278 = vadd.f32 %v10165, %v10277
    %10279 = vmatprep.mubr.bf16.mxu0 %v2547
    %10280 = vmatmul.mubr.bf16.gmra.mxu0 %v2546
    %v10281 = vpop.f32.mrf.mxu0
    %v10282 = vadd.f32 %v10169, %v10281
    %v10283 = vpop.f32.mrf.mxu0
    %v10284 = vadd.f32 %v10171, %v10283
    %v10285 = vpop.f32.mrf.mxu0
    %v10286 = vadd.f32 %v10173, %v10285
    %v10287 = vpop.f32.mrf.mxu0
    %v10288 = vadd.f32 %v10175, %v10287
    %10289 = vmatprep.mubr.bf16.mxu0 %v2583
    %10290 = vmatmul.mubr.bf16.gmra.mxu0 %v2582
    %v10291 = vpop.f32.mrf.mxu0
    %v10292 = vadd.f32 %v10179, %v10291
    %v10293 = vpop.f32.mrf.mxu0
    %v10294 = vadd.f32 %v10181, %v10293
    %v10295 = vpop.f32.mrf.mxu0
    %v10296 = vadd.f32 %v10183, %v10295
    %v10297 = vpop.f32.mrf.mxu0
    %v10298 = vadd.f32 %v10185, %v10297
    %10299 = vmatprep.mubr.bf16.mxu0 %v2619
    %10300 = vmatmul.mubr.bf16.gmra.mxu0 %v2618
    %v10301 = vpop.f32.mrf.mxu0
    %v10302 = vadd.f32 %v10189, %v10301
    %v10303 = vpop.f32.mrf.mxu0
    %v10304 = vadd.f32 %v10191, %v10303
    %v10305 = vpop.f32.mrf.mxu0
    %v10306 = vadd.f32 %v10193, %v10305
    %v10307 = vpop.f32.mrf.mxu0
    %v10308 = vadd.f32 %v10195, %v10307
    %10309 = vmatprep.mubr.bf16.mxu0 %v2655
    %10310 = vmatmul.mubr.bf16.gmra.mxu0 %v2654
    %v10311 = vpop.f32.mrf.mxu0
    %v10312 = vadd.f32 %v10199, %v10311
    %v10313 = vpop.f32.mrf.mxu0
    %v10314 = vadd.f32 %v10201, %v10313
    %v10315 = vpop.f32.mrf.mxu0
    %v10316 = vadd.f32 %v10203, %v10315
    %v10317 = vpop.f32.mrf.mxu0
    %v10318 = vadd.f32 %v10205, %v10317
    %10319 = vmatprep.mubr.bf16.mxu0 %v2691
    %10320 = vmatmul.mubr.bf16.gmra.mxu0 %v2690
    %v10321 = vpop.f32.mrf.mxu0
    %v10322 = vadd.f32 %v10209, %v10321
    %v10323 = vpop.f32.mrf.mxu0
    %v10324 = vadd.f32 %v10211, %v10323
    %v10325 = vpop.f32.mrf.mxu0
    %v10326 = vadd.f32 %v10213, %v10325
    %v10327 = vpop.f32.mrf.mxu0
    %v10328 = vadd.f32 %v10215, %v10327
    %10329 = vdwg.mxu0
    %10330 = vmatprep.subr.bf16.mxu0 %v7369
    %10331 = vmatpush1.bf16.msra.mxu0 %v7368
    %10332 = vmatprep.subr.bf16.mxu0 %v7365
    %10333 = vmatpush1.bf16.msra.mxu0 %v7364
    %10334 = vmatprep.subr.bf16.mxu0 %v7361
    %10335 = vmatpush1.bf16.msra.mxu0 %v7360
    %10336 = vmatprep.subr.bf16.mxu0 %v7357
    %10337 = vmatpush1.bf16.msra.mxu0 %v7356
    %10338 = vmatprep.subr.bf16.mxu0 %v7353
    %10339 = vmatpush1.bf16.msra.mxu0 %v7352
    %10340 = vmatprep.subr.bf16.mxu0 %v7349
    %10341 = vmatpush1.bf16.msra.mxu0 %v7348
    %10342 = vmatprep.subr.bf16.mxu0 %v7345
    %10343 = vmatpush1.bf16.msra.mxu0 %v7344
    %10344 = vmatprep.subr.bf16.mxu0 %v7341
    %10345 = vmatpush1.bf16.msra.mxu0 %v7340
    %10346 = vmatprep.subr.bf16.mxu0 %v7401
    %10347 = vmatpush2.bf16.msra.mxu0 %v7400
    %10348 = vmatprep.subr.bf16.mxu0 %v7397
    %10349 = vmatpush2.bf16.msra.mxu0 %v7396
    %10350 = vmatprep.subr.bf16.mxu0 %v7393
    %10351 = vmatpush2.bf16.msra.mxu0 %v7392
    %10352 = vmatprep.subr.bf16.mxu0 %v7389
    %10353 = vmatpush2.bf16.msra.mxu0 %v7388
    %10354 = vmatprep.subr.bf16.mxu0 %v7385
    %10355 = vmatpush2.bf16.msra.mxu0 %v7384
    %10356 = vmatprep.subr.bf16.mxu0 %v7381
    %10357 = vmatpush2.bf16.msra.mxu0 %v7380
    %10358 = vmatprep.subr.bf16.mxu0 %v7377
    %10359 = vmatpush2.bf16.msra.mxu0 %v7376
    %10360 = vmatprep.subr.bf16.mxu0 %v7373
    %10361 = vmatpush2.bf16.msra.mxu0 %v7372
    %10362 = vmatprep.mubr.bf16.mxu0 %v2441
    %10363 = vmatmul.mubr.bf16.gmra.mxu0 %v2440
    %v10364 = vpop.f32.mrf.mxu0
    %v10365 = vadd.f32 %v10252, %v10364
    %v10366 = vpop.f32.mrf.mxu0
    %v10367 = vadd.f32 %v10254, %v10366
    %v10368 = vpop.f32.mrf.mxu0
    %v10369 = vadd.f32 %v10256, %v10368
    %v10370 = vpop.f32.mrf.mxu0
    %v10371 = vadd.f32 %v10258, %v10370
    %10372 = vmatprep.mubr.bf16.mxu0 %v2477
    %10373 = vmatmul.mubr.bf16.gmra.mxu0 %v2476
    %v10374 = vpop.f32.mrf.mxu0
    %v10375 = vadd.f32 %v10262, %v10374
    %v10376 = vpop.f32.mrf.mxu0
    %v10377 = vadd.f32 %v10264, %v10376
    %v10378 = vpop.f32.mrf.mxu0
    %v10379 = vadd.f32 %v10266, %v10378
    %v10380 = vpop.f32.mrf.mxu0
    %v10381 = vadd.f32 %v10268, %v10380
    %10382 = vmatprep.mubr.bf16.mxu0 %v2513
    %10383 = vmatmul.mubr.bf16.gmra.mxu0 %v2512
    %v10384 = vpop.f32.mrf.mxu0
    %v10385 = vadd.f32 %v10272, %v10384
    %v10386 = vpop.f32.mrf.mxu0
    %v10387 = vadd.f32 %v10274, %v10386
    %v10388 = vpop.f32.mrf.mxu0
    %v10389 = vadd.f32 %v10276, %v10388
    %v10390 = vpop.f32.mrf.mxu0
    %v10391 = vadd.f32 %v10278, %v10390
    %10392 = vmatprep.mubr.bf16.mxu0 %v2549
    %10393 = vmatmul.mubr.bf16.gmra.mxu0 %v2548
    %v10394 = vpop.f32.mrf.mxu0
    %v10395 = vadd.f32 %v10282, %v10394
    %v10396 = vpop.f32.mrf.mxu0
    %v10397 = vadd.f32 %v10284, %v10396
    %v10398 = vpop.f32.mrf.mxu0
    %v10399 = vadd.f32 %v10286, %v10398
    %v10400 = vpop.f32.mrf.mxu0
    %v10401 = vadd.f32 %v10288, %v10400
    %10402 = vmatprep.mubr.bf16.mxu0 %v2585
    %10403 = vmatmul.mubr.bf16.gmra.mxu0 %v2584
    %v10404 = vpop.f32.mrf.mxu0
    %v10405 = vadd.f32 %v10292, %v10404
    %v10406 = vpop.f32.mrf.mxu0
    %v10407 = vadd.f32 %v10294, %v10406
    %v10408 = vpop.f32.mrf.mxu0
    %v10409 = vadd.f32 %v10296, %v10408
    %v10410 = vpop.f32.mrf.mxu0
    %v10411 = vadd.f32 %v10298, %v10410
    %10412 = vmatprep.mubr.bf16.mxu0 %v2621
    %10413 = vmatmul.mubr.bf16.gmra.mxu0 %v2620
    %v10414 = vpop.f32.mrf.mxu0
    %v10415 = vadd.f32 %v10302, %v10414
    %v10416 = vpop.f32.mrf.mxu0
    %v10417 = vadd.f32 %v10304, %v10416
    %v10418 = vpop.f32.mrf.mxu0
    %v10419 = vadd.f32 %v10306, %v10418
    %v10420 = vpop.f32.mrf.mxu0
    %v10421 = vadd.f32 %v10308, %v10420
    %10422 = vmatprep.mubr.bf16.mxu0 %v2657
    %10423 = vmatmul.mubr.bf16.gmra.mxu0 %v2656
    %v10424 = vpop.f32.mrf.mxu0
    %v10425 = vadd.f32 %v10312, %v10424
    %v10426 = vpop.f32.mrf.mxu0
    %v10427 = vadd.f32 %v10314, %v10426
    %v10428 = vpop.f32.mrf.mxu0
    %v10429 = vadd.f32 %v10316, %v10428
    %v10430 = vpop.f32.mrf.mxu0
    %v10431 = vadd.f32 %v10318, %v10430
    %10432 = vmatprep.mubr.bf16.mxu0 %v2693
    %10433 = vmatmul.mubr.bf16.gmra.mxu0 %v2692
    %v10434 = vpop.f32.mrf.mxu0
    %v10435 = vadd.f32 %v10322, %v10434
    %v10436 = vpop.f32.mrf.mxu0
    %v10437 = vadd.f32 %v10324, %v10436
    %v10438 = vpop.f32.mrf.mxu0
    %v10439 = vadd.f32 %v10326, %v10438
    %v10440 = vpop.f32.mrf.mxu0
    %v10441 = vadd.f32 %v10328, %v10440
    %10442 = vdwg.mxu0
    %10443 = vmatprep.subr.bf16.mxu0 %v7433
    %10444 = vmatpush1.bf16.msra.mxu0 %v7432
    %10445 = vmatprep.subr.bf16.mxu0 %v7429
    %10446 = vmatpush1.bf16.msra.mxu0 %v7428
    %10447 = vmatprep.subr.bf16.mxu0 %v7425
    %10448 = vmatpush1.bf16.msra.mxu0 %v7424
    %10449 = vmatprep.subr.bf16.mxu0 %v7421
    %10450 = vmatpush1.bf16.msra.mxu0 %v7420
    %10451 = vmatprep.subr.bf16.mxu0 %v7417
    %10452 = vmatpush1.bf16.msra.mxu0 %v7416
    %10453 = vmatprep.subr.bf16.mxu0 %v7413
    %10454 = vmatpush1.bf16.msra.mxu0 %v7412
    %10455 = vmatprep.subr.bf16.mxu0 %v7409
    %10456 = vmatpush1.bf16.msra.mxu0 %v7408
    %10457 = vmatprep.subr.bf16.mxu0 %v7405
    %10458 = vmatpush1.bf16.msra.mxu0 %v7404
    %10459 = vmatprep.subr.bf16.mxu0 %v7465
    %10460 = vmatpush2.bf16.msra.mxu0 %v7464
    %10461 = vmatprep.subr.bf16.mxu0 %v7461
    %10462 = vmatpush2.bf16.msra.mxu0 %v7460
    %10463 = vmatprep.subr.bf16.mxu0 %v7457
    %10464 = vmatpush2.bf16.msra.mxu0 %v7456
    %10465 = vmatprep.subr.bf16.mxu0 %v7453
    %10466 = vmatpush2.bf16.msra.mxu0 %v7452
    %10467 = vmatprep.subr.bf16.mxu0 %v7449
    %10468 = vmatpush2.bf16.msra.mxu0 %v7448
    %10469 = vmatprep.subr.bf16.mxu0 %v7445
    %10470 = vmatpush2.bf16.msra.mxu0 %v7444
    %10471 = vmatprep.subr.bf16.mxu0 %v7441
    %10472 = vmatpush2.bf16.msra.mxu0 %v7440
    %10473 = vmatprep.subr.bf16.mxu0 %v7437
    %10474 = vmatpush2.bf16.msra.mxu0 %v7436
    %10475 = vmatprep.mubr.bf16.mxu0 %v2443
    %10476 = vmatmul.mubr.bf16.gmra.mxu0 %v2442
    %v10477 = vpop.f32.mrf.mxu0
    %v10478 = vadd.f32 %v10365, %v10477
    %v10479 = vpop.f32.mrf.mxu0
    %v10480 = vadd.f32 %v10367, %v10479
    %v10481 = vpop.f32.mrf.mxu0
    %v10482 = vadd.f32 %v10369, %v10481
    %v10483 = vpop.f32.mrf.mxu0
    %v10484 = vadd.f32 %v10371, %v10483
    %10485 = vmatprep.mubr.bf16.mxu0 %v2479
    %10486 = vmatmul.mubr.bf16.gmra.mxu0 %v2478
    %v10487 = vpop.f32.mrf.mxu0
    %v10488 = vadd.f32 %v10375, %v10487
    %v10489 = vpop.f32.mrf.mxu0
    %v10490 = vadd.f32 %v10377, %v10489
    %v10491 = vpop.f32.mrf.mxu0
    %v10492 = vadd.f32 %v10379, %v10491
    %v10493 = vpop.f32.mrf.mxu0
    %v10494 = vadd.f32 %v10381, %v10493
    %10495 = vmatprep.mubr.bf16.mxu0 %v2515
    %10496 = vmatmul.mubr.bf16.gmra.mxu0 %v2514
    %v10497 = vpop.f32.mrf.mxu0
    %v10498 = vadd.f32 %v10385, %v10497
    %v10499 = vpop.f32.mrf.mxu0
    %v10500 = vadd.f32 %v10387, %v10499
    %v10501 = vpop.f32.mrf.mxu0
    %v10502 = vadd.f32 %v10389, %v10501
    %v10503 = vpop.f32.mrf.mxu0
    %v10504 = vadd.f32 %v10391, %v10503
    %10505 = vmatprep.mubr.bf16.mxu0 %v2551
    %10506 = vmatmul.mubr.bf16.gmra.mxu0 %v2550
    %v10507 = vpop.f32.mrf.mxu0
    %v10508 = vadd.f32 %v10395, %v10507
    %v10509 = vpop.f32.mrf.mxu0
    %v10510 = vadd.f32 %v10397, %v10509
    %v10511 = vpop.f32.mrf.mxu0
    %v10512 = vadd.f32 %v10399, %v10511
    %v10513 = vpop.f32.mrf.mxu0
    %v10514 = vadd.f32 %v10401, %v10513
    %10515 = vmatprep.mubr.bf16.mxu0 %v2587
    %10516 = vmatmul.mubr.bf16.gmra.mxu0 %v2586
    %v10517 = vpop.f32.mrf.mxu0
    %v10518 = vadd.f32 %v10405, %v10517
    %v10519 = vpop.f32.mrf.mxu0
    %v10520 = vadd.f32 %v10407, %v10519
    %v10521 = vpop.f32.mrf.mxu0
    %v10522 = vadd.f32 %v10409, %v10521
    %v10523 = vpop.f32.mrf.mxu0
    %v10524 = vadd.f32 %v10411, %v10523
    %10525 = vmatprep.mubr.bf16.mxu0 %v2623
    %10526 = vmatmul.mubr.bf16.gmra.mxu0 %v2622
    %v10527 = vpop.f32.mrf.mxu0
    %v10528 = vadd.f32 %v10415, %v10527
    %v10529 = vpop.f32.mrf.mxu0
    %v10530 = vadd.f32 %v10417, %v10529
    %v10531 = vpop.f32.mrf.mxu0
    %v10532 = vadd.f32 %v10419, %v10531
    %v10533 = vpop.f32.mrf.mxu0
    %v10534 = vadd.f32 %v10421, %v10533
    %10535 = vmatprep.mubr.bf16.mxu0 %v2659
    %10536 = vmatmul.mubr.bf16.gmra.mxu0 %v2658
    %v10537 = vpop.f32.mrf.mxu0
    %v10538 = vadd.f32 %v10425, %v10537
    %v10539 = vpop.f32.mrf.mxu0
    %v10540 = vadd.f32 %v10427, %v10539
    %v10541 = vpop.f32.mrf.mxu0
    %v10542 = vadd.f32 %v10429, %v10541
    %v10543 = vpop.f32.mrf.mxu0
    %v10544 = vadd.f32 %v10431, %v10543
    %10545 = vmatprep.mubr.bf16.mxu0 %v2695
    %10546 = vmatmul.mubr.bf16.gmra.mxu0 %v2694
    %v10547 = vpop.f32.mrf.mxu0
    %v10548 = vadd.f32 %v10435, %v10547
    %v10549 = vpop.f32.mrf.mxu0
    %v10550 = vadd.f32 %v10437, %v10549
    %v10551 = vpop.f32.mrf.mxu0
    %v10552 = vadd.f32 %v10439, %v10551
    %v10553 = vpop.f32.mrf.mxu0
    %v10554 = vadd.f32 %v10441, %v10553
    %10555 = vdwg.mxu0
    %10556 = vmatprep.subr.bf16.mxu0 %v7497
    %10557 = vmatpush1.bf16.msra.mxu0 %v7496
    %10558 = vmatprep.subr.bf16.mxu0 %v7493
    %10559 = vmatpush1.bf16.msra.mxu0 %v7492
    %10560 = vmatprep.subr.bf16.mxu0 %v7489
    %10561 = vmatpush1.bf16.msra.mxu0 %v7488
    %10562 = vmatprep.subr.bf16.mxu0 %v7485
    %10563 = vmatpush1.bf16.msra.mxu0 %v7484
    %10564 = vmatprep.subr.bf16.mxu0 %v7481
    %10565 = vmatpush1.bf16.msra.mxu0 %v7480
    %10566 = vmatprep.subr.bf16.mxu0 %v7477
    %10567 = vmatpush1.bf16.msra.mxu0 %v7476
    %10568 = vmatprep.subr.bf16.mxu0 %v7473
    %10569 = vmatpush1.bf16.msra.mxu0 %v7472
    %10570 = vmatprep.subr.bf16.mxu0 %v7469
    %10571 = vmatpush1.bf16.msra.mxu0 %v7468
    %10572 = vmatprep.subr.bf16.mxu0 %v7529
    %10573 = vmatpush2.bf16.msra.mxu0 %v7528
    %10574 = vmatprep.subr.bf16.mxu0 %v7525
    %10575 = vmatpush2.bf16.msra.mxu0 %v7524
    %10576 = vmatprep.subr.bf16.mxu0 %v7521
    %10577 = vmatpush2.bf16.msra.mxu0 %v7520
    %10578 = vmatprep.subr.bf16.mxu0 %v7517
    %10579 = vmatpush2.bf16.msra.mxu0 %v7516
    %10580 = vmatprep.subr.bf16.mxu0 %v7513
    %10581 = vmatpush2.bf16.msra.mxu0 %v7512
    %10582 = vmatprep.subr.bf16.mxu0 %v7509
    %10583 = vmatpush2.bf16.msra.mxu0 %v7508
    %10584 = vmatprep.subr.bf16.mxu0 %v7505
    %10585 = vmatpush2.bf16.msra.mxu0 %v7504
    %10586 = vmatprep.subr.bf16.mxu0 %v7501
    %10587 = vmatpush2.bf16.msra.mxu0 %v7500
    %10588 = vmatprep.mubr.bf16.mxu0 %v2445
    %10589 = vmatmul.mubr.bf16.gmra.mxu0 %v2444
    %v10590 = vpop.f32.mrf.mxu0
    %v10591 = vadd.f32 %v10478, %v10590
    %v10592 = vpop.f32.mrf.mxu0
    %v10593 = vadd.f32 %v10480, %v10592
    %v10594 = vpop.f32.mrf.mxu0
    %v10595 = vadd.f32 %v10482, %v10594
    %v10596 = vpop.f32.mrf.mxu0
    %v10597 = vadd.f32 %v10484, %v10596
    %10598 = vmatprep.mubr.bf16.mxu0 %v2481
    %10599 = vmatmul.mubr.bf16.gmra.mxu0 %v2480
    %v10600 = vpop.f32.mrf.mxu0
    %v10601 = vadd.f32 %v10488, %v10600
    %v10602 = vpop.f32.mrf.mxu0
    %v10603 = vadd.f32 %v10490, %v10602
    %v10604 = vpop.f32.mrf.mxu0
    %v10605 = vadd.f32 %v10492, %v10604
    %v10606 = vpop.f32.mrf.mxu0
    %v10607 = vadd.f32 %v10494, %v10606
    %10608 = vmatprep.mubr.bf16.mxu0 %v2517
    %10609 = vmatmul.mubr.bf16.gmra.mxu0 %v2516
    %v10610 = vpop.f32.mrf.mxu0
    %v10611 = vadd.f32 %v10498, %v10610
    %v10612 = vpop.f32.mrf.mxu0
    %v10613 = vadd.f32 %v10500, %v10612
    %v10614 = vpop.f32.mrf.mxu0
    %v10615 = vadd.f32 %v10502, %v10614
    %v10616 = vpop.f32.mrf.mxu0
    %v10617 = vadd.f32 %v10504, %v10616
    %10618 = vmatprep.mubr.bf16.mxu0 %v2553
    %10619 = vmatmul.mubr.bf16.gmra.mxu0 %v2552
    %v10620 = vpop.f32.mrf.mxu0
    %v10621 = vadd.f32 %v10508, %v10620
    %v10622 = vpop.f32.mrf.mxu0
    %v10623 = vadd.f32 %v10510, %v10622
    %v10624 = vpop.f32.mrf.mxu0
    %v10625 = vadd.f32 %v10512, %v10624
    %v10626 = vpop.f32.mrf.mxu0
    %v10627 = vadd.f32 %v10514, %v10626
    %10628 = vmatprep.mubr.bf16.mxu0 %v2589
    %10629 = vmatmul.mubr.bf16.gmra.mxu0 %v2588
    %v10630 = vpop.f32.mrf.mxu0
    %v10631 = vadd.f32 %v10518, %v10630
    %v10632 = vpop.f32.mrf.mxu0
    %v10633 = vadd.f32 %v10520, %v10632
    %v10634 = vpop.f32.mrf.mxu0
    %v10635 = vadd.f32 %v10522, %v10634
    %v10636 = vpop.f32.mrf.mxu0
    %v10637 = vadd.f32 %v10524, %v10636
    %10638 = vmatprep.mubr.bf16.mxu0 %v2625
    %10639 = vmatmul.mubr.bf16.gmra.mxu0 %v2624
    %v10640 = vpop.f32.mrf.mxu0
    %v10641 = vadd.f32 %v10528, %v10640
    %v10642 = vpop.f32.mrf.mxu0
    %v10643 = vadd.f32 %v10530, %v10642
    %v10644 = vpop.f32.mrf.mxu0
    %v10645 = vadd.f32 %v10532, %v10644
    %v10646 = vpop.f32.mrf.mxu0
    %v10647 = vadd.f32 %v10534, %v10646
    %10648 = vmatprep.mubr.bf16.mxu0 %v2661
    %10649 = vmatmul.mubr.bf16.gmra.mxu0 %v2660
    %v10650 = vpop.f32.mrf.mxu0
    %v10651 = vadd.f32 %v10538, %v10650
    %v10652 = vpop.f32.mrf.mxu0
    %v10653 = vadd.f32 %v10540, %v10652
    %v10654 = vpop.f32.mrf.mxu0
    %v10655 = vadd.f32 %v10542, %v10654
    %v10656 = vpop.f32.mrf.mxu0
    %v10657 = vadd.f32 %v10544, %v10656
    %10658 = vmatprep.mubr.bf16.mxu0 %v2697
    %10659 = vmatmul.mubr.bf16.gmra.mxu0 %v2696
    %v10660 = vpop.f32.mrf.mxu0
    %v10661 = vadd.f32 %v10548, %v10660
    %v10662 = vpop.f32.mrf.mxu0
    %v10663 = vadd.f32 %v10550, %v10662
    %v10664 = vpop.f32.mrf.mxu0
    %v10665 = vadd.f32 %v10552, %v10664
    %v10666 = vpop.f32.mrf.mxu0
    %v10667 = vadd.f32 %v10554, %v10666
    %10668 = vdwg.mxu0
    %10669 = vmatprep.subr.bf16.mxu0 %v7561
    %10670 = vmatpush1.bf16.msra.mxu0 %v7560
    %10671 = vmatprep.subr.bf16.mxu0 %v7557
    %10672 = vmatpush1.bf16.msra.mxu0 %v7556
    %10673 = vmatprep.subr.bf16.mxu0 %v7553
    %10674 = vmatpush1.bf16.msra.mxu0 %v7552
    %10675 = vmatprep.subr.bf16.mxu0 %v7549
    %10676 = vmatpush1.bf16.msra.mxu0 %v7548
    %10677 = vmatprep.subr.bf16.mxu0 %v7545
    %10678 = vmatpush1.bf16.msra.mxu0 %v7544
    %10679 = vmatprep.subr.bf16.mxu0 %v7541
    %10680 = vmatpush1.bf16.msra.mxu0 %v7540
    %10681 = vmatprep.subr.bf16.mxu0 %v7537
    %10682 = vmatpush1.bf16.msra.mxu0 %v7536
    %10683 = vmatprep.subr.bf16.mxu0 %v7533
    %10684 = vmatpush1.bf16.msra.mxu0 %v7532
    %10685 = vmatprep.subr.bf16.mxu0 %v7593
    %10686 = vmatpush2.bf16.msra.mxu0 %v7592
    %10687 = vmatprep.subr.bf16.mxu0 %v7589
    %10688 = vmatpush2.bf16.msra.mxu0 %v7588
    %10689 = vmatprep.subr.bf16.mxu0 %v7585
    %10690 = vmatpush2.bf16.msra.mxu0 %v7584
    %10691 = vmatprep.subr.bf16.mxu0 %v7581
    %10692 = vmatpush2.bf16.msra.mxu0 %v7580
    %10693 = vmatprep.subr.bf16.mxu0 %v7577
    %10694 = vmatpush2.bf16.msra.mxu0 %v7576
    %10695 = vmatprep.subr.bf16.mxu0 %v7573
    %10696 = vmatpush2.bf16.msra.mxu0 %v7572
    %10697 = vmatprep.subr.bf16.mxu0 %v7569
    %10698 = vmatpush2.bf16.msra.mxu0 %v7568
    %10699 = vmatprep.subr.bf16.mxu0 %v7565
    %10700 = vmatpush2.bf16.msra.mxu0 %v7564
    %10701 = vmatprep.mubr.bf16.mxu0 %v2447
    %10702 = vmatmul.mubr.bf16.gmra.mxu0 %v2446
    %v10703 = vpop.f32.mrf.mxu0
    %v10704 = vadd.f32 %v10591, %v10703
    %v10705 = vpop.f32.mrf.mxu0
    %v10706 = vadd.f32 %v10593, %v10705
    %v10707 = vpop.f32.mrf.mxu0
    %v10708 = vadd.f32 %v10595, %v10707
    %v10709 = vpop.f32.mrf.mxu0
    %v10710 = vadd.f32 %v10597, %v10709
    %10711 = vmatprep.mubr.bf16.mxu0 %v2483
    %10712 = vmatmul.mubr.bf16.gmra.mxu0 %v2482
    %v10713 = vpop.f32.mrf.mxu0
    %v10714 = vadd.f32 %v10601, %v10713
    %v10715 = vpop.f32.mrf.mxu0
    %v10716 = vadd.f32 %v10603, %v10715
    %v10717 = vpop.f32.mrf.mxu0
    %v10718 = vadd.f32 %v10605, %v10717
    %v10719 = vpop.f32.mrf.mxu0
    %v10720 = vadd.f32 %v10607, %v10719
    %10721 = vmatprep.mubr.bf16.mxu0 %v2519
    %10722 = vmatmul.mubr.bf16.gmra.mxu0 %v2518
    %v10723 = vpop.f32.mrf.mxu0
    %v10724 = vadd.f32 %v10611, %v10723
    %v10725 = vpop.f32.mrf.mxu0
    %v10726 = vadd.f32 %v10613, %v10725
    %v10727 = vpop.f32.mrf.mxu0
    %v10728 = vadd.f32 %v10615, %v10727
    %v10729 = vpop.f32.mrf.mxu0
    %v10730 = vadd.f32 %v10617, %v10729
    %10731 = vmatprep.mubr.bf16.mxu0 %v2555
    %10732 = vmatmul.mubr.bf16.gmra.mxu0 %v2554
    %v10733 = vpop.f32.mrf.mxu0
    %v10734 = vadd.f32 %v10621, %v10733
    %v10735 = vpop.f32.mrf.mxu0
    %v10736 = vadd.f32 %v10623, %v10735
    %v10737 = vpop.f32.mrf.mxu0
    %v10738 = vadd.f32 %v10625, %v10737
    %v10739 = vpop.f32.mrf.mxu0
    %v10740 = vadd.f32 %v10627, %v10739
    %10741 = vmatprep.mubr.bf16.mxu0 %v2591
    %10742 = vmatmul.mubr.bf16.gmra.mxu0 %v2590
    %v10743 = vpop.f32.mrf.mxu0
    %v10744 = vadd.f32 %v10631, %v10743
    %v10745 = vpop.f32.mrf.mxu0
    %v10746 = vadd.f32 %v10633, %v10745
    %v10747 = vpop.f32.mrf.mxu0
    %v10748 = vadd.f32 %v10635, %v10747
    %v10749 = vpop.f32.mrf.mxu0
    %v10750 = vadd.f32 %v10637, %v10749
    %10751 = vmatprep.mubr.bf16.mxu0 %v2627
    %10752 = vmatmul.mubr.bf16.gmra.mxu0 %v2626
    %v10753 = vpop.f32.mrf.mxu0
    %v10754 = vadd.f32 %v10641, %v10753
    %v10755 = vpop.f32.mrf.mxu0
    %v10756 = vadd.f32 %v10643, %v10755
    %v10757 = vpop.f32.mrf.mxu0
    %v10758 = vadd.f32 %v10645, %v10757
    %v10759 = vpop.f32.mrf.mxu0
    %v10760 = vadd.f32 %v10647, %v10759
    %10761 = vmatprep.mubr.bf16.mxu0 %v2663
    %10762 = vmatmul.mubr.bf16.gmra.mxu0 %v2662
    %v10763 = vpop.f32.mrf.mxu0
    %v10764 = vadd.f32 %v10651, %v10763
    %v10765 = vpop.f32.mrf.mxu0
    %v10766 = vadd.f32 %v10653, %v10765
    %v10767 = vpop.f32.mrf.mxu0
    %v10768 = vadd.f32 %v10655, %v10767
    %v10769 = vpop.f32.mrf.mxu0
    %v10770 = vadd.f32 %v10657, %v10769
    %10771 = vmatprep.mubr.bf16.mxu0 %v2699
    %10772 = vmatmul.mubr.bf16.gmra.mxu0 %v2698
    %v10773 = vpop.f32.mrf.mxu0
    %v10774 = vadd.f32 %v10661, %v10773
    %v10775 = vpop.f32.mrf.mxu0
    %v10776 = vadd.f32 %v10663, %v10775
    %v10777 = vpop.f32.mrf.mxu0
    %v10778 = vadd.f32 %v10665, %v10777
    %v10779 = vpop.f32.mrf.mxu0
    %v10780 = vadd.f32 %v10667, %v10779
    %10781 = vdwg.mxu0
    %10782 = vmatprep.subr.bf16.mxu0 %v6475
    %10783 = vmatpush1.bf16.msra.mxu0 %v6474
    %10784 = vmatprep.subr.bf16.mxu0 %v6471
    %10785 = vmatpush1.bf16.msra.mxu0 %v6470
    %10786 = vmatprep.subr.bf16.mxu0 %v6467
    %10787 = vmatpush1.bf16.msra.mxu0 %v6466
    %10788 = vmatprep.subr.bf16.mxu0 %v6463
    %10789 = vmatpush1.bf16.msra.mxu0 %v6462
    %10790 = vmatprep.subr.bf16.mxu0 %v6459
    %10791 = vmatpush1.bf16.msra.mxu0 %v6458
    %10792 = vmatprep.subr.bf16.mxu0 %v6455
    %10793 = vmatpush1.bf16.msra.mxu0 %v6454
    %10794 = vmatprep.subr.bf16.mxu0 %v6451
    %10795 = vmatpush1.bf16.msra.mxu0 %v6450
    %10796 = vmatprep.subr.bf16.mxu0 %v6447
    %10797 = vmatpush1.bf16.msra.mxu0 %v6446
    %10798 = vmatprep.subr.bf16.mxu0 %v6507
    %10799 = vmatpush2.bf16.msra.mxu0 %v6506
    %10800 = vmatprep.subr.bf16.mxu0 %v6503
    %10801 = vmatpush2.bf16.msra.mxu0 %v6502
    %10802 = vmatprep.subr.bf16.mxu0 %v6499
    %10803 = vmatpush2.bf16.msra.mxu0 %v6498
    %10804 = vmatprep.subr.bf16.mxu0 %v6495
    %10805 = vmatpush2.bf16.msra.mxu0 %v6494
    %10806 = vmatprep.subr.bf16.mxu0 %v6491
    %10807 = vmatpush2.bf16.msra.mxu0 %v6490
    %10808 = vmatprep.subr.bf16.mxu0 %v6487
    %10809 = vmatpush2.bf16.msra.mxu0 %v6486
    %10810 = vmatprep.subr.bf16.mxu0 %v6483
    %10811 = vmatpush2.bf16.msra.mxu0 %v6482
    %10812 = vmatprep.subr.bf16.mxu0 %v6479
    %10813 = vmatpush2.bf16.msra.mxu0 %v6478
    %10814 = vmatprep.mubr.bf16.mxu0 %v2413
    %10815 = vmatmul.mubr.bf16.gmra.mxu0 %v2412
    %v10816 = vpop.f32.mrf.mxu0
    %v10817 = vadd.f32 %v1539, %v10816
    %v10818 = vpop.f32.mrf.mxu0
    %v10819 = vadd.f32 %v1543, %v10818
    %v10820 = vpop.f32.mrf.mxu0
    %v10821 = vadd.f32 %v1539, %v10820
    %v10822 = vpop.f32.mrf.mxu0
    %v10823 = vadd.f32 %v1543, %v10822
    %10824 = vmatprep.mubr.bf16.mxu0 %v2449
    %10825 = vmatmul.mubr.bf16.gmra.mxu0 %v2448
    %v10826 = vpop.f32.mrf.mxu0
    %v10827 = vadd.f32 %v1539, %v10826
    %v10828 = vpop.f32.mrf.mxu0
    %v10829 = vadd.f32 %v1543, %v10828
    %v10830 = vpop.f32.mrf.mxu0
    %v10831 = vadd.f32 %v1539, %v10830
    %v10832 = vpop.f32.mrf.mxu0
    %v10833 = vadd.f32 %v1543, %v10832
    %10834 = vmatprep.mubr.bf16.mxu0 %v2485
    %10835 = vmatmul.mubr.bf16.gmra.mxu0 %v2484
    %v10836 = vpop.f32.mrf.mxu0
    %v10837 = vadd.f32 %v1539, %v10836
    %v10838 = vpop.f32.mrf.mxu0
    %v10839 = vadd.f32 %v1543, %v10838
    %v10840 = vpop.f32.mrf.mxu0
    %v10841 = vadd.f32 %v1539, %v10840
    %v10842 = vpop.f32.mrf.mxu0
    %v10843 = vadd.f32 %v1543, %v10842
    %10844 = vmatprep.mubr.bf16.mxu0 %v2521
    %10845 = vmatmul.mubr.bf16.gmra.mxu0 %v2520
    %v10846 = vpop.f32.mrf.mxu0
    %v10847 = vadd.f32 %v1539, %v10846
    %v10848 = vpop.f32.mrf.mxu0
    %v10849 = vadd.f32 %v1543, %v10848
    %v10850 = vpop.f32.mrf.mxu0
    %v10851 = vadd.f32 %v1539, %v10850
    %v10852 = vpop.f32.mrf.mxu0
    %v10853 = vadd.f32 %v1543, %v10852
    %10854 = vmatprep.mubr.bf16.mxu0 %v2557
    %10855 = vmatmul.mubr.bf16.gmra.mxu0 %v2556
    %v10856 = vpop.f32.mrf.mxu0
    %v10857 = vadd.f32 %v1539, %v10856
    %v10858 = vpop.f32.mrf.mxu0
    %v10859 = vadd.f32 %v1543, %v10858
    %v10860 = vpop.f32.mrf.mxu0
    %v10861 = vadd.f32 %v1539, %v10860
    %v10862 = vpop.f32.mrf.mxu0
    %v10863 = vadd.f32 %v1543, %v10862
    %10864 = vmatprep.mubr.bf16.mxu0 %v2593
    %10865 = vmatmul.mubr.bf16.gmra.mxu0 %v2592
    %v10866 = vpop.f32.mrf.mxu0
    %v10867 = vadd.f32 %v1539, %v10866
    %v10868 = vpop.f32.mrf.mxu0
    %v10869 = vadd.f32 %v1543, %v10868
    %v10870 = vpop.f32.mrf.mxu0
    %v10871 = vadd.f32 %v1539, %v10870
    %v10872 = vpop.f32.mrf.mxu0
    %v10873 = vadd.f32 %v1543, %v10872
    %10874 = vmatprep.mubr.bf16.mxu0 %v2629
    %10875 = vmatmul.mubr.bf16.gmra.mxu0 %v2628
    %v10876 = vpop.f32.mrf.mxu0
    %v10877 = vadd.f32 %v1539, %v10876
    %v10878 = vpop.f32.mrf.mxu0
    %v10879 = vadd.f32 %v1543, %v10878
    %v10880 = vpop.f32.mrf.mxu0
    %v10881 = vadd.f32 %v1539, %v10880
    %v10882 = vpop.f32.mrf.mxu0
    %v10883 = vadd.f32 %v1543, %v10882
    %10884 = vmatprep.mubr.bf16.mxu0 %v2665
    %10885 = vmatmul.mubr.bf16.gmra.mxu0 %v2664
    %v10886 = vpop.f32.mrf.mxu0
    %v10887 = vadd.f32 %v1539, %v10886
    %v10888 = vpop.f32.mrf.mxu0
    %v10889 = vadd.f32 %v1543, %v10888
    %v10890 = vpop.f32.mrf.mxu0
    %v10891 = vadd.f32 %v1539, %v10890
    %v10892 = vpop.f32.mrf.mxu0
    %v10893 = vadd.f32 %v1543, %v10892
    %10894 = vdwg.mxu0
    %10895 = vmatprep.subr.bf16.mxu0 %v6539
    %10896 = vmatpush1.bf16.msra.mxu0 %v6538
    %10897 = vmatprep.subr.bf16.mxu0 %v6535
    %10898 = vmatpush1.bf16.msra.mxu0 %v6534
    %10899 = vmatprep.subr.bf16.mxu0 %v6531
    %10900 = vmatpush1.bf16.msra.mxu0 %v6530
    %10901 = vmatprep.subr.bf16.mxu0 %v6527
    %10902 = vmatpush1.bf16.msra.mxu0 %v6526
    %10903 = vmatprep.subr.bf16.mxu0 %v6523
    %10904 = vmatpush1.bf16.msra.mxu0 %v6522
    %10905 = vmatprep.subr.bf16.mxu0 %v6519
    %10906 = vmatpush1.bf16.msra.mxu0 %v6518
    %10907 = vmatprep.subr.bf16.mxu0 %v6515
    %10908 = vmatpush1.bf16.msra.mxu0 %v6514
    %10909 = vmatprep.subr.bf16.mxu0 %v6511
    %10910 = vmatpush1.bf16.msra.mxu0 %v6510
    %10911 = vmatprep.subr.bf16.mxu0 %v6571
    %10912 = vmatpush2.bf16.msra.mxu0 %v6570
    %10913 = vmatprep.subr.bf16.mxu0 %v6567
    %10914 = vmatpush2.bf16.msra.mxu0 %v6566
    %10915 = vmatprep.subr.bf16.mxu0 %v6563
    %10916 = vmatpush2.bf16.msra.mxu0 %v6562
    %10917 = vmatprep.subr.bf16.mxu0 %v6559
    %10918 = vmatpush2.bf16.msra.mxu0 %v6558
    %10919 = vmatprep.subr.bf16.mxu0 %v6555
    %10920 = vmatpush2.bf16.msra.mxu0 %v6554
    %10921 = vmatprep.subr.bf16.mxu0 %v6551
    %10922 = vmatpush2.bf16.msra.mxu0 %v6550
    %10923 = vmatprep.subr.bf16.mxu0 %v6547
    %10924 = vmatpush2.bf16.msra.mxu0 %v6546
    %10925 = vmatprep.subr.bf16.mxu0 %v6543
    %10926 = vmatpush2.bf16.msra.mxu0 %v6542
    %10927 = vmatprep.mubr.bf16.mxu0 %v2415
    %10928 = vmatmul.mubr.bf16.gmra.mxu0 %v2414
    %v10929 = vpop.f32.mrf.mxu0
    %v10930 = vadd.f32 %v10817, %v10929
    %v10931 = vpop.f32.mrf.mxu0
    %v10932 = vadd.f32 %v10819, %v10931
    %v10933 = vpop.f32.mrf.mxu0
    %v10934 = vadd.f32 %v10821, %v10933
    %v10935 = vpop.f32.mrf.mxu0
    %v10936 = vadd.f32 %v10823, %v10935
    %10937 = vmatprep.mubr.bf16.mxu0 %v2451
    %10938 = vmatmul.mubr.bf16.gmra.mxu0 %v2450
    %v10939 = vpop.f32.mrf.mxu0
    %v10940 = vadd.f32 %v10827, %v10939
    %v10941 = vpop.f32.mrf.mxu0
    %v10942 = vadd.f32 %v10829, %v10941
    %v10943 = vpop.f32.mrf.mxu0
    %v10944 = vadd.f32 %v10831, %v10943
    %v10945 = vpop.f32.mrf.mxu0
    %v10946 = vadd.f32 %v10833, %v10945
    %10947 = vmatprep.mubr.bf16.mxu0 %v2487
    %10948 = vmatmul.mubr.bf16.gmra.mxu0 %v2486
    %v10949 = vpop.f32.mrf.mxu0
    %v10950 = vadd.f32 %v10837, %v10949
    %v10951 = vpop.f32.mrf.mxu0
    %v10952 = vadd.f32 %v10839, %v10951
    %v10953 = vpop.f32.mrf.mxu0
    %v10954 = vadd.f32 %v10841, %v10953
    %v10955 = vpop.f32.mrf.mxu0
    %v10956 = vadd.f32 %v10843, %v10955
    %10957 = vmatprep.mubr.bf16.mxu0 %v2523
    %10958 = vmatmul.mubr.bf16.gmra.mxu0 %v2522
    %v10959 = vpop.f32.mrf.mxu0
    %v10960 = vadd.f32 %v10847, %v10959
    %v10961 = vpop.f32.mrf.mxu0
    %v10962 = vadd.f32 %v10849, %v10961
    %v10963 = vpop.f32.mrf.mxu0
    %v10964 = vadd.f32 %v10851, %v10963
    %v10965 = vpop.f32.mrf.mxu0
    %v10966 = vadd.f32 %v10853, %v10965
    %10967 = vmatprep.mubr.bf16.mxu0 %v2559
    %10968 = vmatmul.mubr.bf16.gmra.mxu0 %v2558
    %v10969 = vpop.f32.mrf.mxu0
    %v10970 = vadd.f32 %v10857, %v10969
    %v10971 = vpop.f32.mrf.mxu0
    %v10972 = vadd.f32 %v10859, %v10971
    %v10973 = vpop.f32.mrf.mxu0
    %v10974 = vadd.f32 %v10861, %v10973
    %v10975 = vpop.f32.mrf.mxu0
    %v10976 = vadd.f32 %v10863, %v10975
    %10977 = vmatprep.mubr.bf16.mxu0 %v2595
    %10978 = vmatmul.mubr.bf16.gmra.mxu0 %v2594
    %v10979 = vpop.f32.mrf.mxu0
    %v10980 = vadd.f32 %v10867, %v10979
    %v10981 = vpop.f32.mrf.mxu0
    %v10982 = vadd.f32 %v10869, %v10981
    %v10983 = vpop.f32.mrf.mxu0
    %v10984 = vadd.f32 %v10871, %v10983
    %v10985 = vpop.f32.mrf.mxu0
    %v10986 = vadd.f32 %v10873, %v10985
    %10987 = vmatprep.mubr.bf16.mxu0 %v2631
    %10988 = vmatmul.mubr.bf16.gmra.mxu0 %v2630
    %v10989 = vpop.f32.mrf.mxu0
    %v10990 = vadd.f32 %v10877, %v10989
    %v10991 = vpop.f32.mrf.mxu0
    %v10992 = vadd.f32 %v10879, %v10991
    %v10993 = vpop.f32.mrf.mxu0
    %v10994 = vadd.f32 %v10881, %v10993
    %v10995 = vpop.f32.mrf.mxu0
    %v10996 = vadd.f32 %v10883, %v10995
    %10997 = vmatprep.mubr.bf16.mxu0 %v2667
    %10998 = vmatmul.mubr.bf16.gmra.mxu0 %v2666
    %v10999 = vpop.f32.mrf.mxu0
    %v11000 = vadd.f32 %v10887, %v10999
    %v11001 = vpop.f32.mrf.mxu0
    %v11002 = vadd.f32 %v10889, %v11001
    %v11003 = vpop.f32.mrf.mxu0
    %v11004 = vadd.f32 %v10891, %v11003
    %v11005 = vpop.f32.mrf.mxu0
    %v11006 = vadd.f32 %v10893, %v11005
    %11007 = vdwg.mxu0
    %11008 = vmatprep.subr.bf16.mxu0 %v6603
    %11009 = vmatpush1.bf16.msra.mxu0 %v6602
    %11010 = vmatprep.subr.bf16.mxu0 %v6599
    %11011 = vmatpush1.bf16.msra.mxu0 %v6598
    %11012 = vmatprep.subr.bf16.mxu0 %v6595
    %11013 = vmatpush1.bf16.msra.mxu0 %v6594
    %11014 = vmatprep.subr.bf16.mxu0 %v6591
    %11015 = vmatpush1.bf16.msra.mxu0 %v6590
    %11016 = vmatprep.subr.bf16.mxu0 %v6587
    %11017 = vmatpush1.bf16.msra.mxu0 %v6586
    %11018 = vmatprep.subr.bf16.mxu0 %v6583
    %11019 = vmatpush1.bf16.msra.mxu0 %v6582
    %11020 = vmatprep.subr.bf16.mxu0 %v6579
    %11021 = vmatpush1.bf16.msra.mxu0 %v6578
    %11022 = vmatprep.subr.bf16.mxu0 %v6575
    %11023 = vmatpush1.bf16.msra.mxu0 %v6574
    %11024 = vmatprep.subr.bf16.mxu0 %v6635
    %11025 = vmatpush2.bf16.msra.mxu0 %v6634
    %11026 = vmatprep.subr.bf16.mxu0 %v6631
    %11027 = vmatpush2.bf16.msra.mxu0 %v6630
    %11028 = vmatprep.subr.bf16.mxu0 %v6627
    %11029 = vmatpush2.bf16.msra.mxu0 %v6626
    %11030 = vmatprep.subr.bf16.mxu0 %v6623
    %11031 = vmatpush2.bf16.msra.mxu0 %v6622
    %11032 = vmatprep.subr.bf16.mxu0 %v6619
    %11033 = vmatpush2.bf16.msra.mxu0 %v6618
    %11034 = vmatprep.subr.bf16.mxu0 %v6615
    %11035 = vmatpush2.bf16.msra.mxu0 %v6614
    %11036 = vmatprep.subr.bf16.mxu0 %v6611
    %11037 = vmatpush2.bf16.msra.mxu0 %v6610
    %11038 = vmatprep.subr.bf16.mxu0 %v6607
    %11039 = vmatpush2.bf16.msra.mxu0 %v6606
    %11040 = vmatprep.mubr.bf16.mxu0 %v2417
    %11041 = vmatmul.mubr.bf16.gmra.mxu0 %v2416
    %v11042 = vpop.f32.mrf.mxu0
    %v11043 = vadd.f32 %v10930, %v11042
    %v11044 = vpop.f32.mrf.mxu0
    %v11045 = vadd.f32 %v10932, %v11044
    %v11046 = vpop.f32.mrf.mxu0
    %v11047 = vadd.f32 %v10934, %v11046
    %v11048 = vpop.f32.mrf.mxu0
    %v11049 = vadd.f32 %v10936, %v11048
    %11050 = vmatprep.mubr.bf16.mxu0 %v2453
    %11051 = vmatmul.mubr.bf16.gmra.mxu0 %v2452
    %v11052 = vpop.f32.mrf.mxu0
    %v11053 = vadd.f32 %v10940, %v11052
    %v11054 = vpop.f32.mrf.mxu0
    %v11055 = vadd.f32 %v10942, %v11054
    %v11056 = vpop.f32.mrf.mxu0
    %v11057 = vadd.f32 %v10944, %v11056
    %v11058 = vpop.f32.mrf.mxu0
    %v11059 = vadd.f32 %v10946, %v11058
    %11060 = vmatprep.mubr.bf16.mxu0 %v2489
    %11061 = vmatmul.mubr.bf16.gmra.mxu0 %v2488
    %v11062 = vpop.f32.mrf.mxu0
    %v11063 = vadd.f32 %v10950, %v11062
    %v11064 = vpop.f32.mrf.mxu0
    %v11065 = vadd.f32 %v10952, %v11064
    %v11066 = vpop.f32.mrf.mxu0
    %v11067 = vadd.f32 %v10954, %v11066
    %v11068 = vpop.f32.mrf.mxu0
    %v11069 = vadd.f32 %v10956, %v11068
    %11070 = vmatprep.mubr.bf16.mxu0 %v2525
    %11071 = vmatmul.mubr.bf16.gmra.mxu0 %v2524
    %v11072 = vpop.f32.mrf.mxu0
    %v11073 = vadd.f32 %v10960, %v11072
    %v11074 = vpop.f32.mrf.mxu0
    %v11075 = vadd.f32 %v10962, %v11074
    %v11076 = vpop.f32.mrf.mxu0
    %v11077 = vadd.f32 %v10964, %v11076
    %v11078 = vpop.f32.mrf.mxu0
    %v11079 = vadd.f32 %v10966, %v11078
    %11080 = vmatprep.mubr.bf16.mxu0 %v2561
    %11081 = vmatmul.mubr.bf16.gmra.mxu0 %v2560
    %v11082 = vpop.f32.mrf.mxu0
    %v11083 = vadd.f32 %v10970, %v11082
    %v11084 = vpop.f32.mrf.mxu0
    %v11085 = vadd.f32 %v10972, %v11084
    %v11086 = vpop.f32.mrf.mxu0
    %v11087 = vadd.f32 %v10974, %v11086
    %v11088 = vpop.f32.mrf.mxu0
    %v11089 = vadd.f32 %v10976, %v11088
    %11090 = vmatprep.mubr.bf16.mxu0 %v2597
    %11091 = vmatmul.mubr.bf16.gmra.mxu0 %v2596
    %v11092 = vpop.f32.mrf.mxu0
    %v11093 = vadd.f32 %v10980, %v11092
    %v11094 = vpop.f32.mrf.mxu0
    %v11095 = vadd.f32 %v10982, %v11094
    %v11096 = vpop.f32.mrf.mxu0
    %v11097 = vadd.f32 %v10984, %v11096
    %v11098 = vpop.f32.mrf.mxu0
    %v11099 = vadd.f32 %v10986, %v11098
    %11100 = vmatprep.mubr.bf16.mxu0 %v2633
    %11101 = vmatmul.mubr.bf16.gmra.mxu0 %v2632
    %v11102 = vpop.f32.mrf.mxu0
    %v11103 = vadd.f32 %v10990, %v11102
    %v11104 = vpop.f32.mrf.mxu0
    %v11105 = vadd.f32 %v10992, %v11104
    %v11106 = vpop.f32.mrf.mxu0
    %v11107 = vadd.f32 %v10994, %v11106
    %v11108 = vpop.f32.mrf.mxu0
    %v11109 = vadd.f32 %v10996, %v11108
    %11110 = vmatprep.mubr.bf16.mxu0 %v2669
    %11111 = vmatmul.mubr.bf16.gmra.mxu0 %v2668
    %v11112 = vpop.f32.mrf.mxu0
    %v11113 = vadd.f32 %v11000, %v11112
    %v11114 = vpop.f32.mrf.mxu0
    %v11115 = vadd.f32 %v11002, %v11114
    %v11116 = vpop.f32.mrf.mxu0
    %v11117 = vadd.f32 %v11004, %v11116
    %v11118 = vpop.f32.mrf.mxu0
    %v11119 = vadd.f32 %v11006, %v11118
    %11120 = vdwg.mxu0
    %11121 = vmatprep.subr.bf16.mxu0 %v6667
    %11122 = vmatpush1.bf16.msra.mxu0 %v6666
    %11123 = vmatprep.subr.bf16.mxu0 %v6663
    %11124 = vmatpush1.bf16.msra.mxu0 %v6662
    %11125 = vmatprep.subr.bf16.mxu0 %v6659
    %11126 = vmatpush1.bf16.msra.mxu0 %v6658
    %11127 = vmatprep.subr.bf16.mxu0 %v6655
    %11128 = vmatpush1.bf16.msra.mxu0 %v6654
    %11129 = vmatprep.subr.bf16.mxu0 %v6651
    %11130 = vmatpush1.bf16.msra.mxu0 %v6650
    %11131 = vmatprep.subr.bf16.mxu0 %v6647
    %11132 = vmatpush1.bf16.msra.mxu0 %v6646
    %11133 = vmatprep.subr.bf16.mxu0 %v6643
    %11134 = vmatpush1.bf16.msra.mxu0 %v6642
    %11135 = vmatprep.subr.bf16.mxu0 %v6639
    %11136 = vmatpush1.bf16.msra.mxu0 %v6638
    %11137 = vmatprep.subr.bf16.mxu0 %v6699
    %11138 = vmatpush2.bf16.msra.mxu0 %v6698
    %11139 = vmatprep.subr.bf16.mxu0 %v6695
    %11140 = vmatpush2.bf16.msra.mxu0 %v6694
    %11141 = vmatprep.subr.bf16.mxu0 %v6691
    %11142 = vmatpush2.bf16.msra.mxu0 %v6690
    %11143 = vmatprep.subr.bf16.mxu0 %v6687
    %11144 = vmatpush2.bf16.msra.mxu0 %v6686
    %11145 = vmatprep.subr.bf16.mxu0 %v6683
    %11146 = vmatpush2.bf16.msra.mxu0 %v6682
    %11147 = vmatprep.subr.bf16.mxu0 %v6679
    %11148 = vmatpush2.bf16.msra.mxu0 %v6678
    %11149 = vmatprep.subr.bf16.mxu0 %v6675
    %11150 = vmatpush2.bf16.msra.mxu0 %v6674
    %11151 = vmatprep.subr.bf16.mxu0 %v6671
    %11152 = vmatpush2.bf16.msra.mxu0 %v6670
    %11153 = vmatprep.mubr.bf16.mxu0 %v2419
    %11154 = vmatmul.mubr.bf16.gmra.mxu0 %v2418
    %v11155 = vpop.f32.mrf.mxu0
    %v11156 = vadd.f32 %v11043, %v11155
    %v11157 = vpop.f32.mrf.mxu0
    %v11158 = vadd.f32 %v11045, %v11157
    %v11159 = vpop.f32.mrf.mxu0
    %v11160 = vadd.f32 %v11047, %v11159
    %v11161 = vpop.f32.mrf.mxu0
    %v11162 = vadd.f32 %v11049, %v11161
    %11163 = vmatprep.mubr.bf16.mxu0 %v2455
    %11164 = vmatmul.mubr.bf16.gmra.mxu0 %v2454
    %v11165 = vpop.f32.mrf.mxu0
    %v11166 = vadd.f32 %v11053, %v11165
    %v11167 = vpop.f32.mrf.mxu0
    %v11168 = vadd.f32 %v11055, %v11167
    %v11169 = vpop.f32.mrf.mxu0
    %v11170 = vadd.f32 %v11057, %v11169
    %v11171 = vpop.f32.mrf.mxu0
    %v11172 = vadd.f32 %v11059, %v11171
    %11173 = vmatprep.mubr.bf16.mxu0 %v2491
    %11174 = vmatmul.mubr.bf16.gmra.mxu0 %v2490
    %v11175 = vpop.f32.mrf.mxu0
    %v11176 = vadd.f32 %v11063, %v11175
    %v11177 = vpop.f32.mrf.mxu0
    %v11178 = vadd.f32 %v11065, %v11177
    %v11179 = vpop.f32.mrf.mxu0
    %v11180 = vadd.f32 %v11067, %v11179
    %v11181 = vpop.f32.mrf.mxu0
    %v11182 = vadd.f32 %v11069, %v11181
    %11183 = vmatprep.mubr.bf16.mxu0 %v2527
    %11184 = vmatmul.mubr.bf16.gmra.mxu0 %v2526
    %v11185 = vpop.f32.mrf.mxu0
    %v11186 = vadd.f32 %v11073, %v11185
    %v11187 = vpop.f32.mrf.mxu0
    %v11188 = vadd.f32 %v11075, %v11187
    %v11189 = vpop.f32.mrf.mxu0
    %v11190 = vadd.f32 %v11077, %v11189
    %v11191 = vpop.f32.mrf.mxu0
    %v11192 = vadd.f32 %v11079, %v11191
    %11193 = vmatprep.mubr.bf16.mxu0 %v2563
    %11194 = vmatmul.mubr.bf16.gmra.mxu0 %v2562
    %v11195 = vpop.f32.mrf.mxu0
    %v11196 = vadd.f32 %v11083, %v11195
    %v11197 = vpop.f32.mrf.mxu0
    %v11198 = vadd.f32 %v11085, %v11197
    %v11199 = vpop.f32.mrf.mxu0
    %v11200 = vadd.f32 %v11087, %v11199
    %v11201 = vpop.f32.mrf.mxu0
    %v11202 = vadd.f32 %v11089, %v11201
    %11203 = vmatprep.mubr.bf16.mxu0 %v2599
    %11204 = vmatmul.mubr.bf16.gmra.mxu0 %v2598
    %v11205 = vpop.f32.mrf.mxu0
    %v11206 = vadd.f32 %v11093, %v11205
    %v11207 = vpop.f32.mrf.mxu0
    %v11208 = vadd.f32 %v11095, %v11207
    %v11209 = vpop.f32.mrf.mxu0
    %v11210 = vadd.f32 %v11097, %v11209
    %v11211 = vpop.f32.mrf.mxu0
    %v11212 = vadd.f32 %v11099, %v11211
    %11213 = vmatprep.mubr.bf16.mxu0 %v2635
    %11214 = vmatmul.mubr.bf16.gmra.mxu0 %v2634
    %v11215 = vpop.f32.mrf.mxu0
    %v11216 = vadd.f32 %v11103, %v11215
    %v11217 = vpop.f32.mrf.mxu0
    %v11218 = vadd.f32 %v11105, %v11217
    %v11219 = vpop.f32.mrf.mxu0
    %v11220 = vadd.f32 %v11107, %v11219
    %v11221 = vpop.f32.mrf.mxu0
    %v11222 = vadd.f32 %v11109, %v11221
    %11223 = vmatprep.mubr.bf16.mxu0 %v2671
    %11224 = vmatmul.mubr.bf16.gmra.mxu0 %v2670
    %v11225 = vpop.f32.mrf.mxu0
    %v11226 = vadd.f32 %v11113, %v11225
    %v11227 = vpop.f32.mrf.mxu0
    %v11228 = vadd.f32 %v11115, %v11227
    %v11229 = vpop.f32.mrf.mxu0
    %v11230 = vadd.f32 %v11117, %v11229
    %v11231 = vpop.f32.mrf.mxu0
    %v11232 = vadd.f32 %v11119, %v11231
    %11233 = vdwg.mxu0
    %11234 = vmatprep.subr.bf16.mxu0 %v6731
    %11235 = vmatpush1.bf16.msra.mxu0 %v6730
    %11236 = vmatprep.subr.bf16.mxu0 %v6727
    %11237 = vmatpush1.bf16.msra.mxu0 %v6726
    %11238 = vmatprep.subr.bf16.mxu0 %v6723
    %11239 = vmatpush1.bf16.msra.mxu0 %v6722
    %11240 = vmatprep.subr.bf16.mxu0 %v6719
    %11241 = vmatpush1.bf16.msra.mxu0 %v6718
    %11242 = vmatprep.subr.bf16.mxu0 %v6715
    %11243 = vmatpush1.bf16.msra.mxu0 %v6714
    %11244 = vmatprep.subr.bf16.mxu0 %v6711
    %11245 = vmatpush1.bf16.msra.mxu0 %v6710
    %11246 = vmatprep.subr.bf16.mxu0 %v6707
    %11247 = vmatpush1.bf16.msra.mxu0 %v6706
    %11248 = vmatprep.subr.bf16.mxu0 %v6703
    %11249 = vmatpush1.bf16.msra.mxu0 %v6702
    %11250 = vmatprep.subr.bf16.mxu0 %v6763
    %11251 = vmatpush2.bf16.msra.mxu0 %v6762
    %11252 = vmatprep.subr.bf16.mxu0 %v6759
    %11253 = vmatpush2.bf16.msra.mxu0 %v6758
    %11254 = vmatprep.subr.bf16.mxu0 %v6755
    %11255 = vmatpush2.bf16.msra.mxu0 %v6754
    %11256 = vmatprep.subr.bf16.mxu0 %v6751
    %11257 = vmatpush2.bf16.msra.mxu0 %v6750
    %11258 = vmatprep.subr.bf16.mxu0 %v6747
    %11259 = vmatpush2.bf16.msra.mxu0 %v6746
    %11260 = vmatprep.subr.bf16.mxu0 %v6743
    %11261 = vmatpush2.bf16.msra.mxu0 %v6742
    %11262 = vmatprep.subr.bf16.mxu0 %v6739
    %11263 = vmatpush2.bf16.msra.mxu0 %v6738
    %11264 = vmatprep.subr.bf16.mxu0 %v6735
    %11265 = vmatpush2.bf16.msra.mxu0 %v6734
    %11266 = vmatprep.mubr.bf16.mxu0 %v2421
    %11267 = vmatmul.mubr.bf16.gmra.mxu0 %v2420
    %v11268 = vpop.f32.mrf.mxu0
    %v11269 = vadd.f32 %v11156, %v11268
    %v11270 = vpop.f32.mrf.mxu0
    %v11271 = vadd.f32 %v11158, %v11270
    %v11272 = vpop.f32.mrf.mxu0
    %v11273 = vadd.f32 %v11160, %v11272
    %v11274 = vpop.f32.mrf.mxu0
    %v11275 = vadd.f32 %v11162, %v11274
    %11276 = vmatprep.mubr.bf16.mxu0 %v2457
    %11277 = vmatmul.mubr.bf16.gmra.mxu0 %v2456
    %v11278 = vpop.f32.mrf.mxu0
    %v11279 = vadd.f32 %v11166, %v11278
    %v11280 = vpop.f32.mrf.mxu0
    %v11281 = vadd.f32 %v11168, %v11280
    %v11282 = vpop.f32.mrf.mxu0
    %v11283 = vadd.f32 %v11170, %v11282
    %v11284 = vpop.f32.mrf.mxu0
    %v11285 = vadd.f32 %v11172, %v11284
    %11286 = vmatprep.mubr.bf16.mxu0 %v2493
    %11287 = vmatmul.mubr.bf16.gmra.mxu0 %v2492
    %v11288 = vpop.f32.mrf.mxu0
    %v11289 = vadd.f32 %v11176, %v11288
    %v11290 = vpop.f32.mrf.mxu0
    %v11291 = vadd.f32 %v11178, %v11290
    %v11292 = vpop.f32.mrf.mxu0
    %v11293 = vadd.f32 %v11180, %v11292
    %v11294 = vpop.f32.mrf.mxu0
    %v11295 = vadd.f32 %v11182, %v11294
    %11296 = vmatprep.mubr.bf16.mxu0 %v2529
    %11297 = vmatmul.mubr.bf16.gmra.mxu0 %v2528
    %v11298 = vpop.f32.mrf.mxu0
    %v11299 = vadd.f32 %v11186, %v11298
    %v11300 = vpop.f32.mrf.mxu0
    %v11301 = vadd.f32 %v11188, %v11300
    %v11302 = vpop.f32.mrf.mxu0
    %v11303 = vadd.f32 %v11190, %v11302
    %v11304 = vpop.f32.mrf.mxu0
    %v11305 = vadd.f32 %v11192, %v11304
    %11306 = vmatprep.mubr.bf16.mxu0 %v2565
    %11307 = vmatmul.mubr.bf16.gmra.mxu0 %v2564
    %v11308 = vpop.f32.mrf.mxu0
    %v11309 = vadd.f32 %v11196, %v11308
    %v11310 = vpop.f32.mrf.mxu0
    %v11311 = vadd.f32 %v11198, %v11310
    %v11312 = vpop.f32.mrf.mxu0
    %v11313 = vadd.f32 %v11200, %v11312
    %v11314 = vpop.f32.mrf.mxu0
    %v11315 = vadd.f32 %v11202, %v11314
    %11316 = vmatprep.mubr.bf16.mxu0 %v2601
    %11317 = vmatmul.mubr.bf16.gmra.mxu0 %v2600
    %v11318 = vpop.f32.mrf.mxu0
    %v11319 = vadd.f32 %v11206, %v11318
    %v11320 = vpop.f32.mrf.mxu0
    %v11321 = vadd.f32 %v11208, %v11320
    %v11322 = vpop.f32.mrf.mxu0
    %v11323 = vadd.f32 %v11210, %v11322
    %v11324 = vpop.f32.mrf.mxu0
    %v11325 = vadd.f32 %v11212, %v11324
    %11326 = vmatprep.mubr.bf16.mxu0 %v2637
    %11327 = vmatmul.mubr.bf16.gmra.mxu0 %v2636
    %v11328 = vpop.f32.mrf.mxu0
    %v11329 = vadd.f32 %v11216, %v11328
    %v11330 = vpop.f32.mrf.mxu0
    %v11331 = vadd.f32 %v11218, %v11330
    %v11332 = vpop.f32.mrf.mxu0
    %v11333 = vadd.f32 %v11220, %v11332
    %v11334 = vpop.f32.mrf.mxu0
    %v11335 = vadd.f32 %v11222, %v11334
    %11336 = vmatprep.mubr.bf16.mxu0 %v2673
    %11337 = vmatmul.mubr.bf16.gmra.mxu0 %v2672
    %v11338 = vpop.f32.mrf.mxu0
    %v11339 = vadd.f32 %v11226, %v11338
    %v11340 = vpop.f32.mrf.mxu0
    %v11341 = vadd.f32 %v11228, %v11340
    %v11342 = vpop.f32.mrf.mxu0
    %v11343 = vadd.f32 %v11230, %v11342
    %v11344 = vpop.f32.mrf.mxu0
    %v11345 = vadd.f32 %v11232, %v11344
    %11346 = vdwg.mxu0
    %11347 = vmatprep.subr.bf16.mxu0 %v6795
    %11348 = vmatpush1.bf16.msra.mxu0 %v6794
    %11349 = vmatprep.subr.bf16.mxu0 %v6791
    %11350 = vmatpush1.bf16.msra.mxu0 %v6790
    %11351 = vmatprep.subr.bf16.mxu0 %v6787
    %11352 = vmatpush1.bf16.msra.mxu0 %v6786
    %11353 = vmatprep.subr.bf16.mxu0 %v6783
    %11354 = vmatpush1.bf16.msra.mxu0 %v6782
    %11355 = vmatprep.subr.bf16.mxu0 %v6779
    %11356 = vmatpush1.bf16.msra.mxu0 %v6778
    %11357 = vmatprep.subr.bf16.mxu0 %v6775
    %11358 = vmatpush1.bf16.msra.mxu0 %v6774
    %11359 = vmatprep.subr.bf16.mxu0 %v6771
    %11360 = vmatpush1.bf16.msra.mxu0 %v6770
    %11361 = vmatprep.subr.bf16.mxu0 %v6767
    %11362 = vmatpush1.bf16.msra.mxu0 %v6766
    %11363 = vmatprep.subr.bf16.mxu0 %v6827
    %11364 = vmatpush2.bf16.msra.mxu0 %v6826
    %11365 = vmatprep.subr.bf16.mxu0 %v6823
    %11366 = vmatpush2.bf16.msra.mxu0 %v6822
    %11367 = vmatprep.subr.bf16.mxu0 %v6819
    %11368 = vmatpush2.bf16.msra.mxu0 %v6818
    %11369 = vmatprep.subr.bf16.mxu0 %v6815
    %11370 = vmatpush2.bf16.msra.mxu0 %v6814
    %11371 = vmatprep.subr.bf16.mxu0 %v6811
    %11372 = vmatpush2.bf16.msra.mxu0 %v6810
    %11373 = vmatprep.subr.bf16.mxu0 %v6807
    %11374 = vmatpush2.bf16.msra.mxu0 %v6806
    %11375 = vmatprep.subr.bf16.mxu0 %v6803
    %11376 = vmatpush2.bf16.msra.mxu0 %v6802
    %11377 = vmatprep.subr.bf16.mxu0 %v6799
    %11378 = vmatpush2.bf16.msra.mxu0 %v6798
    %11379 = vmatprep.mubr.bf16.mxu0 %v2423
    %11380 = vmatmul.mubr.bf16.gmra.mxu0 %v2422
    %v11381 = vpop.f32.mrf.mxu0
    %v11382 = vadd.f32 %v11269, %v11381
    %v11383 = vpop.f32.mrf.mxu0
    %v11384 = vadd.f32 %v11271, %v11383
    %v11385 = vpop.f32.mrf.mxu0
    %v11386 = vadd.f32 %v11273, %v11385
    %v11387 = vpop.f32.mrf.mxu0
    %v11388 = vadd.f32 %v11275, %v11387
    %11389 = vmatprep.mubr.bf16.mxu0 %v2459
    %11390 = vmatmul.mubr.bf16.gmra.mxu0 %v2458
    %v11391 = vpop.f32.mrf.mxu0
    %v11392 = vadd.f32 %v11279, %v11391
    %v11393 = vpop.f32.mrf.mxu0
    %v11394 = vadd.f32 %v11281, %v11393
    %v11395 = vpop.f32.mrf.mxu0
    %v11396 = vadd.f32 %v11283, %v11395
    %v11397 = vpop.f32.mrf.mxu0
    %v11398 = vadd.f32 %v11285, %v11397
    %11399 = vmatprep.mubr.bf16.mxu0 %v2495
    %11400 = vmatmul.mubr.bf16.gmra.mxu0 %v2494
    %v11401 = vpop.f32.mrf.mxu0
    %v11402 = vadd.f32 %v11289, %v11401
    %v11403 = vpop.f32.mrf.mxu0
    %v11404 = vadd.f32 %v11291, %v11403
    %v11405 = vpop.f32.mrf.mxu0
    %v11406 = vadd.f32 %v11293, %v11405
    %v11407 = vpop.f32.mrf.mxu0
    %v11408 = vadd.f32 %v11295, %v11407
    %11409 = vmatprep.mubr.bf16.mxu0 %v2531
    %11410 = vmatmul.mubr.bf16.gmra.mxu0 %v2530
    %v11411 = vpop.f32.mrf.mxu0
    %v11412 = vadd.f32 %v11299, %v11411
    %v11413 = vpop.f32.mrf.mxu0
    %v11414 = vadd.f32 %v11301, %v11413
    %v11415 = vpop.f32.mrf.mxu0
    %v11416 = vadd.f32 %v11303, %v11415
    %v11417 = vpop.f32.mrf.mxu0
    %v11418 = vadd.f32 %v11305, %v11417
    %11419 = vmatprep.mubr.bf16.mxu0 %v2567
    %11420 = vmatmul.mubr.bf16.gmra.mxu0 %v2566
    %v11421 = vpop.f32.mrf.mxu0
    %v11422 = vadd.f32 %v11309, %v11421
    %v11423 = vpop.f32.mrf.mxu0
    %v11424 = vadd.f32 %v11311, %v11423
    %v11425 = vpop.f32.mrf.mxu0
    %v11426 = vadd.f32 %v11313, %v11425
    %v11427 = vpop.f32.mrf.mxu0
    %v11428 = vadd.f32 %v11315, %v11427
    %11429 = vmatprep.mubr.bf16.mxu0 %v2603
    %11430 = vmatmul.mubr.bf16.gmra.mxu0 %v2602
    %v11431 = vpop.f32.mrf.mxu0
    %v11432 = vadd.f32 %v11319, %v11431
    %v11433 = vpop.f32.mrf.mxu0
    %v11434 = vadd.f32 %v11321, %v11433
    %v11435 = vpop.f32.mrf.mxu0
    %v11436 = vadd.f32 %v11323, %v11435
    %v11437 = vpop.f32.mrf.mxu0
    %v11438 = vadd.f32 %v11325, %v11437
    %11439 = vmatprep.mubr.bf16.mxu0 %v2639
    %11440 = vmatmul.mubr.bf16.gmra.mxu0 %v2638
    %v11441 = vpop.f32.mrf.mxu0
    %v11442 = vadd.f32 %v11329, %v11441
    %v11443 = vpop.f32.mrf.mxu0
    %v11444 = vadd.f32 %v11331, %v11443
    %v11445 = vpop.f32.mrf.mxu0
    %v11446 = vadd.f32 %v11333, %v11445
    %v11447 = vpop.f32.mrf.mxu0
    %v11448 = vadd.f32 %v11335, %v11447
    %11449 = vmatprep.mubr.bf16.mxu0 %v2675
    %11450 = vmatmul.mubr.bf16.gmra.mxu0 %v2674
    %v11451 = vpop.f32.mrf.mxu0
    %v11452 = vadd.f32 %v11339, %v11451
    %v11453 = vpop.f32.mrf.mxu0
    %v11454 = vadd.f32 %v11341, %v11453
    %v11455 = vpop.f32.mrf.mxu0
    %v11456 = vadd.f32 %v11343, %v11455
    %v11457 = vpop.f32.mrf.mxu0
    %v11458 = vadd.f32 %v11345, %v11457
    %11459 = vdwg.mxu0
    %11460 = vmatprep.subr.bf16.mxu0 %v6859
    %11461 = vmatpush1.bf16.msra.mxu0 %v6858
    %11462 = vmatprep.subr.bf16.mxu0 %v6855
    %11463 = vmatpush1.bf16.msra.mxu0 %v6854
    %11464 = vmatprep.subr.bf16.mxu0 %v6851
    %11465 = vmatpush1.bf16.msra.mxu0 %v6850
    %11466 = vmatprep.subr.bf16.mxu0 %v6847
    %11467 = vmatpush1.bf16.msra.mxu0 %v6846
    %11468 = vmatprep.subr.bf16.mxu0 %v6843
    %11469 = vmatpush1.bf16.msra.mxu0 %v6842
    %11470 = vmatprep.subr.bf16.mxu0 %v6839
    %11471 = vmatpush1.bf16.msra.mxu0 %v6838
    %11472 = vmatprep.subr.bf16.mxu0 %v6835
    %11473 = vmatpush1.bf16.msra.mxu0 %v6834
    %11474 = vmatprep.subr.bf16.mxu0 %v6831
    %11475 = vmatpush1.bf16.msra.mxu0 %v6830
    %11476 = vmatprep.subr.bf16.mxu0 %v6891
    %11477 = vmatpush2.bf16.msra.mxu0 %v6890
    %11478 = vmatprep.subr.bf16.mxu0 %v6887
    %11479 = vmatpush2.bf16.msra.mxu0 %v6886
    %11480 = vmatprep.subr.bf16.mxu0 %v6883
    %11481 = vmatpush2.bf16.msra.mxu0 %v6882
    %11482 = vmatprep.subr.bf16.mxu0 %v6879
    %11483 = vmatpush2.bf16.msra.mxu0 %v6878
    %11484 = vmatprep.subr.bf16.mxu0 %v6875
    %11485 = vmatpush2.bf16.msra.mxu0 %v6874
    %11486 = vmatprep.subr.bf16.mxu0 %v6871
    %11487 = vmatpush2.bf16.msra.mxu0 %v6870
    %11488 = vmatprep.subr.bf16.mxu0 %v6867
    %11489 = vmatpush2.bf16.msra.mxu0 %v6866
    %11490 = vmatprep.subr.bf16.mxu0 %v6863
    %11491 = vmatpush2.bf16.msra.mxu0 %v6862
    %11492 = vmatprep.mubr.bf16.mxu0 %v2425
    %11493 = vmatmul.mubr.bf16.gmra.mxu0 %v2424
    %v11494 = vpop.f32.mrf.mxu0
    %v11495 = vadd.f32 %v11382, %v11494
    %v11496 = vpop.f32.mrf.mxu0
    %v11497 = vadd.f32 %v11384, %v11496
    %v11498 = vpop.f32.mrf.mxu0
    %v11499 = vadd.f32 %v11386, %v11498
    %v11500 = vpop.f32.mrf.mxu0
    %v11501 = vadd.f32 %v11388, %v11500
    %11502 = vmatprep.mubr.bf16.mxu0 %v2461
    %11503 = vmatmul.mubr.bf16.gmra.mxu0 %v2460
    %v11504 = vpop.f32.mrf.mxu0
    %v11505 = vadd.f32 %v11392, %v11504
    %v11506 = vpop.f32.mrf.mxu0
    %v11507 = vadd.f32 %v11394, %v11506
    %v11508 = vpop.f32.mrf.mxu0
    %v11509 = vadd.f32 %v11396, %v11508
    %v11510 = vpop.f32.mrf.mxu0
    %v11511 = vadd.f32 %v11398, %v11510
    %11512 = vmatprep.mubr.bf16.mxu0 %v2497
    %11513 = vmatmul.mubr.bf16.gmra.mxu0 %v2496
    %v11514 = vpop.f32.mrf.mxu0
    %v11515 = vadd.f32 %v11402, %v11514
    %v11516 = vpop.f32.mrf.mxu0
    %v11517 = vadd.f32 %v11404, %v11516
    %v11518 = vpop.f32.mrf.mxu0
    %v11519 = vadd.f32 %v11406, %v11518
    %v11520 = vpop.f32.mrf.mxu0
    %v11521 = vadd.f32 %v11408, %v11520
    %11522 = vmatprep.mubr.bf16.mxu0 %v2533
    %11523 = vmatmul.mubr.bf16.gmra.mxu0 %v2532
    %v11524 = vpop.f32.mrf.mxu0
    %v11525 = vadd.f32 %v11412, %v11524
    %v11526 = vpop.f32.mrf.mxu0
    %v11527 = vadd.f32 %v11414, %v11526
    %v11528 = vpop.f32.mrf.mxu0
    %v11529 = vadd.f32 %v11416, %v11528
    %v11530 = vpop.f32.mrf.mxu0
    %v11531 = vadd.f32 %v11418, %v11530
    %11532 = vmatprep.mubr.bf16.mxu0 %v2569
    %11533 = vmatmul.mubr.bf16.gmra.mxu0 %v2568
    %v11534 = vpop.f32.mrf.mxu0
    %v11535 = vadd.f32 %v11422, %v11534
    %v11536 = vpop.f32.mrf.mxu0
    %v11537 = vadd.f32 %v11424, %v11536
    %v11538 = vpop.f32.mrf.mxu0
    %v11539 = vadd.f32 %v11426, %v11538
    %v11540 = vpop.f32.mrf.mxu0
    %v11541 = vadd.f32 %v11428, %v11540
    %11542 = vmatprep.mubr.bf16.mxu0 %v2605
    %11543 = vmatmul.mubr.bf16.gmra.mxu0 %v2604
    %v11544 = vpop.f32.mrf.mxu0
    %v11545 = vadd.f32 %v11432, %v11544
    %v11546 = vpop.f32.mrf.mxu0
    %v11547 = vadd.f32 %v11434, %v11546
    %v11548 = vpop.f32.mrf.mxu0
    %v11549 = vadd.f32 %v11436, %v11548
    %v11550 = vpop.f32.mrf.mxu0
    %v11551 = vadd.f32 %v11438, %v11550
    %11552 = vmatprep.mubr.bf16.mxu0 %v2641
    %11553 = vmatmul.mubr.bf16.gmra.mxu0 %v2640
    %v11554 = vpop.f32.mrf.mxu0
    %v11555 = vadd.f32 %v11442, %v11554
    %v11556 = vpop.f32.mrf.mxu0
    %v11557 = vadd.f32 %v11444, %v11556
    %v11558 = vpop.f32.mrf.mxu0
    %v11559 = vadd.f32 %v11446, %v11558
    %v11560 = vpop.f32.mrf.mxu0
    %v11561 = vadd.f32 %v11448, %v11560
    %11562 = vmatprep.mubr.bf16.mxu0 %v2677
    %11563 = vmatmul.mubr.bf16.gmra.mxu0 %v2676
    %v11564 = vpop.f32.mrf.mxu0
    %v11565 = vadd.f32 %v11452, %v11564
    %v11566 = vpop.f32.mrf.mxu0
    %v11567 = vadd.f32 %v11454, %v11566
    %v11568 = vpop.f32.mrf.mxu0
    %v11569 = vadd.f32 %v11456, %v11568
    %v11570 = vpop.f32.mrf.mxu0
    %v11571 = vadd.f32 %v11458, %v11570
    %11572 = vdwg.mxu0
    %11573 = vmatprep.subr.bf16.mxu0 %v6923
    %11574 = vmatpush1.bf16.msra.mxu0 %v6922
    %11575 = vmatprep.subr.bf16.mxu0 %v6919
    %11576 = vmatpush1.bf16.msra.mxu0 %v6918
    %11577 = vmatprep.subr.bf16.mxu0 %v6915
    %11578 = vmatpush1.bf16.msra.mxu0 %v6914
    %11579 = vmatprep.subr.bf16.mxu0 %v6911
    %11580 = vmatpush1.bf16.msra.mxu0 %v6910
    %11581 = vmatprep.subr.bf16.mxu0 %v6907
    %11582 = vmatpush1.bf16.msra.mxu0 %v6906
    %11583 = vmatprep.subr.bf16.mxu0 %v6903
    %11584 = vmatpush1.bf16.msra.mxu0 %v6902
    %11585 = vmatprep.subr.bf16.mxu0 %v6899
    %11586 = vmatpush1.bf16.msra.mxu0 %v6898
    %11587 = vmatprep.subr.bf16.mxu0 %v6895
    %11588 = vmatpush1.bf16.msra.mxu0 %v6894
    %11589 = vmatprep.subr.bf16.mxu0 %v6955
    %11590 = vmatpush2.bf16.msra.mxu0 %v6954
    %11591 = vmatprep.subr.bf16.mxu0 %v6951
    %11592 = vmatpush2.bf16.msra.mxu0 %v6950
    %11593 = vmatprep.subr.bf16.mxu0 %v6947
    %11594 = vmatpush2.bf16.msra.mxu0 %v6946
    %11595 = vmatprep.subr.bf16.mxu0 %v6943
    %11596 = vmatpush2.bf16.msra.mxu0 %v6942
    %11597 = vmatprep.subr.bf16.mxu0 %v6939
    %11598 = vmatpush2.bf16.msra.mxu0 %v6938
    %11599 = vmatprep.subr.bf16.mxu0 %v6935
    %11600 = vmatpush2.bf16.msra.mxu0 %v6934
    %11601 = vmatprep.subr.bf16.mxu0 %v6931
    %11602 = vmatpush2.bf16.msra.mxu0 %v6930
    %11603 = vmatprep.subr.bf16.mxu0 %v6927
    %11604 = vmatpush2.bf16.msra.mxu0 %v6926
    %11605 = vmatprep.mubr.bf16.mxu0 %v2427
    %11606 = vmatmul.mubr.bf16.gmra.mxu0 %v2426
    %v11607 = vpop.f32.mrf.mxu0
    %v11608 = vadd.f32 %v11495, %v11607
    %v11609 = vpop.f32.mrf.mxu0
    %v11610 = vadd.f32 %v11497, %v11609
    %v11611 = vpop.f32.mrf.mxu0
    %v11612 = vadd.f32 %v11499, %v11611
    %v11613 = vpop.f32.mrf.mxu0
    %v11614 = vadd.f32 %v11501, %v11613
    %11615 = vmatprep.mubr.bf16.mxu0 %v2463
    %11616 = vmatmul.mubr.bf16.gmra.mxu0 %v2462
    %v11617 = vpop.f32.mrf.mxu0
    %v11618 = vadd.f32 %v11505, %v11617
    %v11619 = vpop.f32.mrf.mxu0
    %v11620 = vadd.f32 %v11507, %v11619
    %v11621 = vpop.f32.mrf.mxu0
    %v11622 = vadd.f32 %v11509, %v11621
    %v11623 = vpop.f32.mrf.mxu0
    %v11624 = vadd.f32 %v11511, %v11623
    %11625 = vmatprep.mubr.bf16.mxu0 %v2499
    %11626 = vmatmul.mubr.bf16.gmra.mxu0 %v2498
    %v11627 = vpop.f32.mrf.mxu0
    %v11628 = vadd.f32 %v11515, %v11627
    %v11629 = vpop.f32.mrf.mxu0
    %v11630 = vadd.f32 %v11517, %v11629
    %v11631 = vpop.f32.mrf.mxu0
    %v11632 = vadd.f32 %v11519, %v11631
    %v11633 = vpop.f32.mrf.mxu0
    %v11634 = vadd.f32 %v11521, %v11633
    %11635 = vmatprep.mubr.bf16.mxu0 %v2535
    %11636 = vmatmul.mubr.bf16.gmra.mxu0 %v2534
    %v11637 = vpop.f32.mrf.mxu0
    %v11638 = vadd.f32 %v11525, %v11637
    %v11639 = vpop.f32.mrf.mxu0
    %v11640 = vadd.f32 %v11527, %v11639
    %v11641 = vpop.f32.mrf.mxu0
    %v11642 = vadd.f32 %v11529, %v11641
    %v11643 = vpop.f32.mrf.mxu0
    %v11644 = vadd.f32 %v11531, %v11643
    %11645 = vmatprep.mubr.bf16.mxu0 %v2571
    %11646 = vmatmul.mubr.bf16.gmra.mxu0 %v2570
    %v11647 = vpop.f32.mrf.mxu0
    %v11648 = vadd.f32 %v11535, %v11647
    %v11649 = vpop.f32.mrf.mxu0
    %v11650 = vadd.f32 %v11537, %v11649
    %v11651 = vpop.f32.mrf.mxu0
    %v11652 = vadd.f32 %v11539, %v11651
    %v11653 = vpop.f32.mrf.mxu0
    %v11654 = vadd.f32 %v11541, %v11653
    %11655 = vmatprep.mubr.bf16.mxu0 %v2607
    %11656 = vmatmul.mubr.bf16.gmra.mxu0 %v2606
    %v11657 = vpop.f32.mrf.mxu0
    %v11658 = vadd.f32 %v11545, %v11657
    %v11659 = vpop.f32.mrf.mxu0
    %v11660 = vadd.f32 %v11547, %v11659
    %v11661 = vpop.f32.mrf.mxu0
    %v11662 = vadd.f32 %v11549, %v11661
    %v11663 = vpop.f32.mrf.mxu0
    %v11664 = vadd.f32 %v11551, %v11663
    %11665 = vmatprep.mubr.bf16.mxu0 %v2643
    %11666 = vmatmul.mubr.bf16.gmra.mxu0 %v2642
    %v11667 = vpop.f32.mrf.mxu0
    %v11668 = vadd.f32 %v11555, %v11667
    %v11669 = vpop.f32.mrf.mxu0
    %v11670 = vadd.f32 %v11557, %v11669
    %v11671 = vpop.f32.mrf.mxu0
    %v11672 = vadd.f32 %v11559, %v11671
    %v11673 = vpop.f32.mrf.mxu0
    %v11674 = vadd.f32 %v11561, %v11673
    %11675 = vmatprep.mubr.bf16.mxu0 %v2679
    %11676 = vmatmul.mubr.bf16.gmra.mxu0 %v2678
    %v11677 = vpop.f32.mrf.mxu0
    %v11678 = vadd.f32 %v11565, %v11677
    %v11679 = vpop.f32.mrf.mxu0
    %v11680 = vadd.f32 %v11567, %v11679
    %v11681 = vpop.f32.mrf.mxu0
    %v11682 = vadd.f32 %v11569, %v11681
    %v11683 = vpop.f32.mrf.mxu0
    %v11684 = vadd.f32 %v11571, %v11683
    %11685 = vdwg.mxu0
    %11686 = vmatprep.subr.bf16.mxu0 %v6987
    %11687 = vmatpush1.bf16.msra.mxu0 %v6986
    %11688 = vmatprep.subr.bf16.mxu0 %v6983
    %11689 = vmatpush1.bf16.msra.mxu0 %v6982
    %11690 = vmatprep.subr.bf16.mxu0 %v6979
    %11691 = vmatpush1.bf16.msra.mxu0 %v6978
    %11692 = vmatprep.subr.bf16.mxu0 %v6975
    %11693 = vmatpush1.bf16.msra.mxu0 %v6974
    %11694 = vmatprep.subr.bf16.mxu0 %v6971
    %11695 = vmatpush1.bf16.msra.mxu0 %v6970
    %11696 = vmatprep.subr.bf16.mxu0 %v6967
    %11697 = vmatpush1.bf16.msra.mxu0 %v6966
    %11698 = vmatprep.subr.bf16.mxu0 %v6963
    %11699 = vmatpush1.bf16.msra.mxu0 %v6962
    %11700 = vmatprep.subr.bf16.mxu0 %v6959
    %11701 = vmatpush1.bf16.msra.mxu0 %v6958
    %11702 = vmatprep.subr.bf16.mxu0 %v7019
    %11703 = vmatpush2.bf16.msra.mxu0 %v7018
    %11704 = vmatprep.subr.bf16.mxu0 %v7015
    %11705 = vmatpush2.bf16.msra.mxu0 %v7014
    %11706 = vmatprep.subr.bf16.mxu0 %v7011
    %11707 = vmatpush2.bf16.msra.mxu0 %v7010
    %11708 = vmatprep.subr.bf16.mxu0 %v7007
    %11709 = vmatpush2.bf16.msra.mxu0 %v7006
    %11710 = vmatprep.subr.bf16.mxu0 %v7003
    %11711 = vmatpush2.bf16.msra.mxu0 %v7002
    %11712 = vmatprep.subr.bf16.mxu0 %v6999
    %11713 = vmatpush2.bf16.msra.mxu0 %v6998
    %11714 = vmatprep.subr.bf16.mxu0 %v6995
    %11715 = vmatpush2.bf16.msra.mxu0 %v6994
    %11716 = vmatprep.subr.bf16.mxu0 %v6991
    %11717 = vmatpush2.bf16.msra.mxu0 %v6990
    %11718 = vmatprep.mubr.bf16.mxu0 %v2429
    %11719 = vmatmul.mubr.bf16.gmra.mxu0 %v2428
    %v11720 = vpop.f32.mrf.mxu0
    %v11721 = vadd.f32 %v11608, %v11720
    %v11722 = vpop.f32.mrf.mxu0
    %v11723 = vadd.f32 %v11610, %v11722
    %v11724 = vpop.f32.mrf.mxu0
    %v11725 = vadd.f32 %v11612, %v11724
    %v11726 = vpop.f32.mrf.mxu0
    %v11727 = vadd.f32 %v11614, %v11726
    %11728 = vmatprep.mubr.bf16.mxu0 %v2465
    %11729 = vmatmul.mubr.bf16.gmra.mxu0 %v2464
    %v11730 = vpop.f32.mrf.mxu0
    %v11731 = vadd.f32 %v11618, %v11730
    %v11732 = vpop.f32.mrf.mxu0
    %v11733 = vadd.f32 %v11620, %v11732
    %v11734 = vpop.f32.mrf.mxu0
    %v11735 = vadd.f32 %v11622, %v11734
    %v11736 = vpop.f32.mrf.mxu0
    %v11737 = vadd.f32 %v11624, %v11736
    %11738 = vmatprep.mubr.bf16.mxu0 %v2501
    %11739 = vmatmul.mubr.bf16.gmra.mxu0 %v2500
    %v11740 = vpop.f32.mrf.mxu0
    %v11741 = vadd.f32 %v11628, %v11740
    %v11742 = vpop.f32.mrf.mxu0
    %v11743 = vadd.f32 %v11630, %v11742
    %v11744 = vpop.f32.mrf.mxu0
    %v11745 = vadd.f32 %v11632, %v11744
    %v11746 = vpop.f32.mrf.mxu0
    %v11747 = vadd.f32 %v11634, %v11746
    %11748 = vmatprep.mubr.bf16.mxu0 %v2537
    %11749 = vmatmul.mubr.bf16.gmra.mxu0 %v2536
    %v11750 = vpop.f32.mrf.mxu0
    %v11751 = vadd.f32 %v11638, %v11750
    %v11752 = vpop.f32.mrf.mxu0
    %v11753 = vadd.f32 %v11640, %v11752
    %v11754 = vpop.f32.mrf.mxu0
    %v11755 = vadd.f32 %v11642, %v11754
    %v11756 = vpop.f32.mrf.mxu0
    %v11757 = vadd.f32 %v11644, %v11756
    %11758 = vmatprep.mubr.bf16.mxu0 %v2573
    %11759 = vmatmul.mubr.bf16.gmra.mxu0 %v2572
    %v11760 = vpop.f32.mrf.mxu0
    %v11761 = vadd.f32 %v11648, %v11760
    %v11762 = vpop.f32.mrf.mxu0
    %v11763 = vadd.f32 %v11650, %v11762
    %v11764 = vpop.f32.mrf.mxu0
    %v11765 = vadd.f32 %v11652, %v11764
    %v11766 = vpop.f32.mrf.mxu0
    %v11767 = vadd.f32 %v11654, %v11766
    %11768 = vmatprep.mubr.bf16.mxu0 %v2609
    %11769 = vmatmul.mubr.bf16.gmra.mxu0 %v2608
    %v11770 = vpop.f32.mrf.mxu0
    %v11771 = vadd.f32 %v11658, %v11770
    %v11772 = vpop.f32.mrf.mxu0
    %v11773 = vadd.f32 %v11660, %v11772
    %v11774 = vpop.f32.mrf.mxu0
    %v11775 = vadd.f32 %v11662, %v11774
    %v11776 = vpop.f32.mrf.mxu0
    %v11777 = vadd.f32 %v11664, %v11776
    %11778 = vmatprep.mubr.bf16.mxu0 %v2645
    %11779 = vmatmul.mubr.bf16.gmra.mxu0 %v2644
    %v11780 = vpop.f32.mrf.mxu0
    %v11781 = vadd.f32 %v11668, %v11780
    %v11782 = vpop.f32.mrf.mxu0
    %v11783 = vadd.f32 %v11670, %v11782
    %v11784 = vpop.f32.mrf.mxu0
    %v11785 = vadd.f32 %v11672, %v11784
    %v11786 = vpop.f32.mrf.mxu0
    %v11787 = vadd.f32 %v11674, %v11786
    %11788 = vmatprep.mubr.bf16.mxu0 %v2681
    %11789 = vmatmul.mubr.bf16.gmra.mxu0 %v2680
    %v11790 = vpop.f32.mrf.mxu0
    %v11791 = vadd.f32 %v11678, %v11790
    %v11792 = vpop.f32.mrf.mxu0
    %v11793 = vadd.f32 %v11680, %v11792
    %v11794 = vpop.f32.mrf.mxu0
    %v11795 = vadd.f32 %v11682, %v11794
    %v11796 = vpop.f32.mrf.mxu0
    %v11797 = vadd.f32 %v11684, %v11796
    %11798 = vdwg.mxu0
    %11799 = vmatprep.subr.bf16.mxu0 %v7051
    %11800 = vmatpush1.bf16.msra.mxu0 %v7050
    %11801 = vmatprep.subr.bf16.mxu0 %v7047
    %11802 = vmatpush1.bf16.msra.mxu0 %v7046
    %11803 = vmatprep.subr.bf16.mxu0 %v7043
    %11804 = vmatpush1.bf16.msra.mxu0 %v7042
    %11805 = vmatprep.subr.bf16.mxu0 %v7039
    %11806 = vmatpush1.bf16.msra.mxu0 %v7038
    %11807 = vmatprep.subr.bf16.mxu0 %v7035
    %11808 = vmatpush1.bf16.msra.mxu0 %v7034
    %11809 = vmatprep.subr.bf16.mxu0 %v7031
    %11810 = vmatpush1.bf16.msra.mxu0 %v7030
    %11811 = vmatprep.subr.bf16.mxu0 %v7027
    %11812 = vmatpush1.bf16.msra.mxu0 %v7026
    %11813 = vmatprep.subr.bf16.mxu0 %v7023
    %11814 = vmatpush1.bf16.msra.mxu0 %v7022
    %11815 = vmatprep.subr.bf16.mxu0 %v7083
    %11816 = vmatpush2.bf16.msra.mxu0 %v7082
    %11817 = vmatprep.subr.bf16.mxu0 %v7079
    %11818 = vmatpush2.bf16.msra.mxu0 %v7078
    %11819 = vmatprep.subr.bf16.mxu0 %v7075
    %11820 = vmatpush2.bf16.msra.mxu0 %v7074
    %11821 = vmatprep.subr.bf16.mxu0 %v7071
    %11822 = vmatpush2.bf16.msra.mxu0 %v7070
    %11823 = vmatprep.subr.bf16.mxu0 %v7067
    %11824 = vmatpush2.bf16.msra.mxu0 %v7066
    %11825 = vmatprep.subr.bf16.mxu0 %v7063
    %11826 = vmatpush2.bf16.msra.mxu0 %v7062
    %11827 = vmatprep.subr.bf16.mxu0 %v7059
    %11828 = vmatpush2.bf16.msra.mxu0 %v7058
    %11829 = vmatprep.subr.bf16.mxu0 %v7055
    %11830 = vmatpush2.bf16.msra.mxu0 %v7054
    %11831 = vmatprep.mubr.bf16.mxu0 %v2431
    %11832 = vmatmul.mubr.bf16.gmra.mxu0 %v2430
    %v11833 = vpop.f32.mrf.mxu0
    %v11834 = vadd.f32 %v11721, %v11833
    %v11835 = vpop.f32.mrf.mxu0
    %v11836 = vadd.f32 %v11723, %v11835
    %v11837 = vpop.f32.mrf.mxu0
    %v11838 = vadd.f32 %v11725, %v11837
    %v11839 = vpop.f32.mrf.mxu0
    %v11840 = vadd.f32 %v11727, %v11839
    %11841 = vmatprep.mubr.bf16.mxu0 %v2467
    %11842 = vmatmul.mubr.bf16.gmra.mxu0 %v2466
    %v11843 = vpop.f32.mrf.mxu0
    %v11844 = vadd.f32 %v11731, %v11843
    %v11845 = vpop.f32.mrf.mxu0
    %v11846 = vadd.f32 %v11733, %v11845
    %v11847 = vpop.f32.mrf.mxu0
    %v11848 = vadd.f32 %v11735, %v11847
    %v11849 = vpop.f32.mrf.mxu0
    %v11850 = vadd.f32 %v11737, %v11849
    %11851 = vmatprep.mubr.bf16.mxu0 %v2503
    %11852 = vmatmul.mubr.bf16.gmra.mxu0 %v2502
    %v11853 = vpop.f32.mrf.mxu0
    %v11854 = vadd.f32 %v11741, %v11853
    %v11855 = vpop.f32.mrf.mxu0
    %v11856 = vadd.f32 %v11743, %v11855
    %v11857 = vpop.f32.mrf.mxu0
    %v11858 = vadd.f32 %v11745, %v11857
    %v11859 = vpop.f32.mrf.mxu0
    %v11860 = vadd.f32 %v11747, %v11859
    %11861 = vmatprep.mubr.bf16.mxu0 %v2539
    %11862 = vmatmul.mubr.bf16.gmra.mxu0 %v2538
    %v11863 = vpop.f32.mrf.mxu0
    %v11864 = vadd.f32 %v11751, %v11863
    %v11865 = vpop.f32.mrf.mxu0
    %v11866 = vadd.f32 %v11753, %v11865
    %v11867 = vpop.f32.mrf.mxu0
    %v11868 = vadd.f32 %v11755, %v11867
    %v11869 = vpop.f32.mrf.mxu0
    %v11870 = vadd.f32 %v11757, %v11869
    %11871 = vmatprep.mubr.bf16.mxu0 %v2575
    %11872 = vmatmul.mubr.bf16.gmra.mxu0 %v2574
    %v11873 = vpop.f32.mrf.mxu0
    %v11874 = vadd.f32 %v11761, %v11873
    %v11875 = vpop.f32.mrf.mxu0
    %v11876 = vadd.f32 %v11763, %v11875
    %v11877 = vpop.f32.mrf.mxu0
    %v11878 = vadd.f32 %v11765, %v11877
    %v11879 = vpop.f32.mrf.mxu0
    %v11880 = vadd.f32 %v11767, %v11879
    %11881 = vmatprep.mubr.bf16.mxu0 %v2611
    %11882 = vmatmul.mubr.bf16.gmra.mxu0 %v2610
    %v11883 = vpop.f32.mrf.mxu0
    %v11884 = vadd.f32 %v11771, %v11883
    %v11885 = vpop.f32.mrf.mxu0
    %v11886 = vadd.f32 %v11773, %v11885
    %v11887 = vpop.f32.mrf.mxu0
    %v11888 = vadd.f32 %v11775, %v11887
    %v11889 = vpop.f32.mrf.mxu0
    %v11890 = vadd.f32 %v11777, %v11889
    %11891 = vmatprep.mubr.bf16.mxu0 %v2647
    %11892 = vmatmul.mubr.bf16.gmra.mxu0 %v2646
    %v11893 = vpop.f32.mrf.mxu0
    %v11894 = vadd.f32 %v11781, %v11893
    %v11895 = vpop.f32.mrf.mxu0
    %v11896 = vadd.f32 %v11783, %v11895
    %v11897 = vpop.f32.mrf.mxu0
    %v11898 = vadd.f32 %v11785, %v11897
    %v11899 = vpop.f32.mrf.mxu0
    %v11900 = vadd.f32 %v11787, %v11899
    %11901 = vmatprep.mubr.bf16.mxu0 %v2683
    %11902 = vmatmul.mubr.bf16.gmra.mxu0 %v2682
    %v11903 = vpop.f32.mrf.mxu0
    %v11904 = vadd.f32 %v11791, %v11903
    %v11905 = vpop.f32.mrf.mxu0
    %v11906 = vadd.f32 %v11793, %v11905
    %v11907 = vpop.f32.mrf.mxu0
    %v11908 = vadd.f32 %v11795, %v11907
    %v11909 = vpop.f32.mrf.mxu0
    %v11910 = vadd.f32 %v11797, %v11909
    %11911 = vdwg.mxu0
    %11912 = vmatprep.subr.bf16.mxu0 %v7115
    %11913 = vmatpush1.bf16.msra.mxu0 %v7114
    %11914 = vmatprep.subr.bf16.mxu0 %v7111
    %11915 = vmatpush1.bf16.msra.mxu0 %v7110
    %11916 = vmatprep.subr.bf16.mxu0 %v7107
    %11917 = vmatpush1.bf16.msra.mxu0 %v7106
    %11918 = vmatprep.subr.bf16.mxu0 %v7103
    %11919 = vmatpush1.bf16.msra.mxu0 %v7102
    %11920 = vmatprep.subr.bf16.mxu0 %v7099
    %11921 = vmatpush1.bf16.msra.mxu0 %v7098
    %11922 = vmatprep.subr.bf16.mxu0 %v7095
    %11923 = vmatpush1.bf16.msra.mxu0 %v7094
    %11924 = vmatprep.subr.bf16.mxu0 %v7091
    %11925 = vmatpush1.bf16.msra.mxu0 %v7090
    %11926 = vmatprep.subr.bf16.mxu0 %v7087
    %11927 = vmatpush1.bf16.msra.mxu0 %v7086
    %11928 = vmatprep.subr.bf16.mxu0 %v7147
    %11929 = vmatpush2.bf16.msra.mxu0 %v7146
    %11930 = vmatprep.subr.bf16.mxu0 %v7143
    %11931 = vmatpush2.bf16.msra.mxu0 %v7142
    %11932 = vmatprep.subr.bf16.mxu0 %v7139
    %11933 = vmatpush2.bf16.msra.mxu0 %v7138
    %11934 = vmatprep.subr.bf16.mxu0 %v7135
    %11935 = vmatpush2.bf16.msra.mxu0 %v7134
    %11936 = vmatprep.subr.bf16.mxu0 %v7131
    %11937 = vmatpush2.bf16.msra.mxu0 %v7130
    %11938 = vmatprep.subr.bf16.mxu0 %v7127
    %11939 = vmatpush2.bf16.msra.mxu0 %v7126
    %11940 = vmatprep.subr.bf16.mxu0 %v7123
    %11941 = vmatpush2.bf16.msra.mxu0 %v7122
    %11942 = vmatprep.subr.bf16.mxu0 %v7119
    %11943 = vmatpush2.bf16.msra.mxu0 %v7118
    %11944 = vmatprep.mubr.bf16.mxu0 %v2433
    %11945 = vmatmul.mubr.bf16.gmra.mxu0 %v2432
    %v11946 = vpop.f32.mrf.mxu0
    %v11947 = vadd.f32 %v11834, %v11946
    %v11948 = vpop.f32.mrf.mxu0
    %v11949 = vadd.f32 %v11836, %v11948
    %v11950 = vpop.f32.mrf.mxu0
    %v11951 = vadd.f32 %v11838, %v11950
    %v11952 = vpop.f32.mrf.mxu0
    %v11953 = vadd.f32 %v11840, %v11952
    %11954 = vmatprep.mubr.bf16.mxu0 %v2469
    %11955 = vmatmul.mubr.bf16.gmra.mxu0 %v2468
    %v11956 = vpop.f32.mrf.mxu0
    %v11957 = vadd.f32 %v11844, %v11956
    %v11958 = vpop.f32.mrf.mxu0
    %v11959 = vadd.f32 %v11846, %v11958
    %v11960 = vpop.f32.mrf.mxu0
    %v11961 = vadd.f32 %v11848, %v11960
    %v11962 = vpop.f32.mrf.mxu0
    %v11963 = vadd.f32 %v11850, %v11962
    %11964 = vmatprep.mubr.bf16.mxu0 %v2505
    %11965 = vmatmul.mubr.bf16.gmra.mxu0 %v2504
    %v11966 = vpop.f32.mrf.mxu0
    %v11967 = vadd.f32 %v11854, %v11966
    %v11968 = vpop.f32.mrf.mxu0
    %v11969 = vadd.f32 %v11856, %v11968
    %v11970 = vpop.f32.mrf.mxu0
    %v11971 = vadd.f32 %v11858, %v11970
    %v11972 = vpop.f32.mrf.mxu0
    %v11973 = vadd.f32 %v11860, %v11972
    %11974 = vmatprep.mubr.bf16.mxu0 %v2541
    %11975 = vmatmul.mubr.bf16.gmra.mxu0 %v2540
    %v11976 = vpop.f32.mrf.mxu0
    %v11977 = vadd.f32 %v11864, %v11976
    %v11978 = vpop.f32.mrf.mxu0
    %v11979 = vadd.f32 %v11866, %v11978
    %v11980 = vpop.f32.mrf.mxu0
    %v11981 = vadd.f32 %v11868, %v11980
    %v11982 = vpop.f32.mrf.mxu0
    %v11983 = vadd.f32 %v11870, %v11982
    %11984 = vmatprep.mubr.bf16.mxu0 %v2577
    %11985 = vmatmul.mubr.bf16.gmra.mxu0 %v2576
    %v11986 = vpop.f32.mrf.mxu0
    %v11987 = vadd.f32 %v11874, %v11986
    %v11988 = vpop.f32.mrf.mxu0
    %v11989 = vadd.f32 %v11876, %v11988
    %v11990 = vpop.f32.mrf.mxu0
    %v11991 = vadd.f32 %v11878, %v11990
    %v11992 = vpop.f32.mrf.mxu0
    %v11993 = vadd.f32 %v11880, %v11992
    %11994 = vmatprep.mubr.bf16.mxu0 %v2613
    %11995 = vmatmul.mubr.bf16.gmra.mxu0 %v2612
    %v11996 = vpop.f32.mrf.mxu0
    %v11997 = vadd.f32 %v11884, %v11996
    %v11998 = vpop.f32.mrf.mxu0
    %v11999 = vadd.f32 %v11886, %v11998
    %v12000 = vpop.f32.mrf.mxu0
    %v12001 = vadd.f32 %v11888, %v12000
    %v12002 = vpop.f32.mrf.mxu0
    %v12003 = vadd.f32 %v11890, %v12002
    %12004 = vmatprep.mubr.bf16.mxu0 %v2649
    %12005 = vmatmul.mubr.bf16.gmra.mxu0 %v2648
    %v12006 = vpop.f32.mrf.mxu0
    %v12007 = vadd.f32 %v11894, %v12006
    %v12008 = vpop.f32.mrf.mxu0
    %v12009 = vadd.f32 %v11896, %v12008
    %v12010 = vpop.f32.mrf.mxu0
    %v12011 = vadd.f32 %v11898, %v12010
    %v12012 = vpop.f32.mrf.mxu0
    %v12013 = vadd.f32 %v11900, %v12012
    %12014 = vmatprep.mubr.bf16.mxu0 %v2685
    %12015 = vmatmul.mubr.bf16.gmra.mxu0 %v2684
    %v12016 = vpop.f32.mrf.mxu0
    %v12017 = vadd.f32 %v11904, %v12016
    %v12018 = vpop.f32.mrf.mxu0
    %v12019 = vadd.f32 %v11906, %v12018
    %v12020 = vpop.f32.mrf.mxu0
    %v12021 = vadd.f32 %v11908, %v12020
    %v12022 = vpop.f32.mrf.mxu0
    %v12023 = vadd.f32 %v11910, %v12022
    %12024 = vdwg.mxu0
    %12025 = vmatprep.subr.bf16.mxu0 %v7179
    %12026 = vmatpush1.bf16.msra.mxu0 %v7178
    %12027 = vmatprep.subr.bf16.mxu0 %v7175
    %12028 = vmatpush1.bf16.msra.mxu0 %v7174
    %12029 = vmatprep.subr.bf16.mxu0 %v7171
    %12030 = vmatpush1.bf16.msra.mxu0 %v7170
    %12031 = vmatprep.subr.bf16.mxu0 %v7167
    %12032 = vmatpush1.bf16.msra.mxu0 %v7166
    %12033 = vmatprep.subr.bf16.mxu0 %v7163
    %12034 = vmatpush1.bf16.msra.mxu0 %v7162
    %12035 = vmatprep.subr.bf16.mxu0 %v7159
    %12036 = vmatpush1.bf16.msra.mxu0 %v7158
    %12037 = vmatprep.subr.bf16.mxu0 %v7155
    %12038 = vmatpush1.bf16.msra.mxu0 %v7154
    %12039 = vmatprep.subr.bf16.mxu0 %v7151
    %12040 = vmatpush1.bf16.msra.mxu0 %v7150
    %12041 = vmatprep.subr.bf16.mxu0 %v7211
    %12042 = vmatpush2.bf16.msra.mxu0 %v7210
    %12043 = vmatprep.subr.bf16.mxu0 %v7207
    %12044 = vmatpush2.bf16.msra.mxu0 %v7206
    %12045 = vmatprep.subr.bf16.mxu0 %v7203
    %12046 = vmatpush2.bf16.msra.mxu0 %v7202
    %12047 = vmatprep.subr.bf16.mxu0 %v7199
    %12048 = vmatpush2.bf16.msra.mxu0 %v7198
    %12049 = vmatprep.subr.bf16.mxu0 %v7195
    %12050 = vmatpush2.bf16.msra.mxu0 %v7194
    %12051 = vmatprep.subr.bf16.mxu0 %v7191
    %12052 = vmatpush2.bf16.msra.mxu0 %v7190
    %12053 = vmatprep.subr.bf16.mxu0 %v7187
    %12054 = vmatpush2.bf16.msra.mxu0 %v7186
    %12055 = vmatprep.subr.bf16.mxu0 %v7183
    %12056 = vmatpush2.bf16.msra.mxu0 %v7182
    %12057 = vmatprep.mubr.bf16.mxu0 %v2435
    %12058 = vmatmul.mubr.bf16.gmra.mxu0 %v2434
    %v12059 = vpop.f32.mrf.mxu0
    %v12060 = vadd.f32 %v11947, %v12059
    %v12061 = vpop.f32.mrf.mxu0
    %v12062 = vadd.f32 %v11949, %v12061
    %v12063 = vpop.f32.mrf.mxu0
    %v12064 = vadd.f32 %v11951, %v12063
    %v12065 = vpop.f32.mrf.mxu0
    %v12066 = vadd.f32 %v11953, %v12065
    %12067 = vmatprep.mubr.bf16.mxu0 %v2471
    %12068 = vmatmul.mubr.bf16.gmra.mxu0 %v2470
    %v12069 = vpop.f32.mrf.mxu0
    %v12070 = vadd.f32 %v11957, %v12069
    %v12071 = vpop.f32.mrf.mxu0
    %v12072 = vadd.f32 %v11959, %v12071
    %v12073 = vpop.f32.mrf.mxu0
    %v12074 = vadd.f32 %v11961, %v12073
    %v12075 = vpop.f32.mrf.mxu0
    %v12076 = vadd.f32 %v11963, %v12075
    %12077 = vmatprep.mubr.bf16.mxu0 %v2507
    %12078 = vmatmul.mubr.bf16.gmra.mxu0 %v2506
    %v12079 = vpop.f32.mrf.mxu0
    %v12080 = vadd.f32 %v11967, %v12079
    %v12081 = vpop.f32.mrf.mxu0
    %v12082 = vadd.f32 %v11969, %v12081
    %v12083 = vpop.f32.mrf.mxu0
    %v12084 = vadd.f32 %v11971, %v12083
    %v12085 = vpop.f32.mrf.mxu0
    %v12086 = vadd.f32 %v11973, %v12085
    %12087 = vmatprep.mubr.bf16.mxu0 %v2543
    %12088 = vmatmul.mubr.bf16.gmra.mxu0 %v2542
    %v12089 = vpop.f32.mrf.mxu0
    %v12090 = vadd.f32 %v11977, %v12089
    %v12091 = vpop.f32.mrf.mxu0
    %v12092 = vadd.f32 %v11979, %v12091
    %v12093 = vpop.f32.mrf.mxu0
    %v12094 = vadd.f32 %v11981, %v12093
    %v12095 = vpop.f32.mrf.mxu0
    %v12096 = vadd.f32 %v11983, %v12095
    %12097 = vmatprep.mubr.bf16.mxu0 %v2579
    %12098 = vmatmul.mubr.bf16.gmra.mxu0 %v2578
    %v12099 = vpop.f32.mrf.mxu0
    %v12100 = vadd.f32 %v11987, %v12099
    %v12101 = vpop.f32.mrf.mxu0
    %v12102 = vadd.f32 %v11989, %v12101
    %v12103 = vpop.f32.mrf.mxu0
    %v12104 = vadd.f32 %v11991, %v12103
    %v12105 = vpop.f32.mrf.mxu0
    %v12106 = vadd.f32 %v11993, %v12105
    %12107 = vmatprep.mubr.bf16.mxu0 %v2615
    %12108 = vmatmul.mubr.bf16.gmra.mxu0 %v2614
    %v12109 = vpop.f32.mrf.mxu0
    %v12110 = vadd.f32 %v11997, %v12109
    %v12111 = vpop.f32.mrf.mxu0
    %v12112 = vadd.f32 %v11999, %v12111
    %v12113 = vpop.f32.mrf.mxu0
    %v12114 = vadd.f32 %v12001, %v12113
    %v12115 = vpop.f32.mrf.mxu0
    %v12116 = vadd.f32 %v12003, %v12115
    %12117 = vmatprep.mubr.bf16.mxu0 %v2651
    %12118 = vmatmul.mubr.bf16.gmra.mxu0 %v2650
    %v12119 = vpop.f32.mrf.mxu0
    %v12120 = vadd.f32 %v12007, %v12119
    %v12121 = vpop.f32.mrf.mxu0
    %v12122 = vadd.f32 %v12009, %v12121
    %v12123 = vpop.f32.mrf.mxu0
    %v12124 = vadd.f32 %v12011, %v12123
    %v12125 = vpop.f32.mrf.mxu0
    %v12126 = vadd.f32 %v12013, %v12125
    %12127 = vmatprep.mubr.bf16.mxu0 %v2687
    %12128 = vmatmul.mubr.bf16.gmra.mxu0 %v2686
    %v12129 = vpop.f32.mrf.mxu0
    %v12130 = vadd.f32 %v12017, %v12129
    %v12131 = vpop.f32.mrf.mxu0
    %v12132 = vadd.f32 %v12019, %v12131
    %v12133 = vpop.f32.mrf.mxu0
    %v12134 = vadd.f32 %v12021, %v12133
    %v12135 = vpop.f32.mrf.mxu0
    %v12136 = vadd.f32 %v12023, %v12135
    %12137 = vdwg.mxu0
    %12138 = vmatprep.subr.bf16.mxu0 %v7243
    %12139 = vmatpush1.bf16.msra.mxu0 %v7242
    %12140 = vmatprep.subr.bf16.mxu0 %v7239
    %12141 = vmatpush1.bf16.msra.mxu0 %v7238
    %12142 = vmatprep.subr.bf16.mxu0 %v7235
    %12143 = vmatpush1.bf16.msra.mxu0 %v7234
    %12144 = vmatprep.subr.bf16.mxu0 %v7231
    %12145 = vmatpush1.bf16.msra.mxu0 %v7230
    %12146 = vmatprep.subr.bf16.mxu0 %v7227
    %12147 = vmatpush1.bf16.msra.mxu0 %v7226
    %12148 = vmatprep.subr.bf16.mxu0 %v7223
    %12149 = vmatpush1.bf16.msra.mxu0 %v7222
    %12150 = vmatprep.subr.bf16.mxu0 %v7219
    %12151 = vmatpush1.bf16.msra.mxu0 %v7218
    %12152 = vmatprep.subr.bf16.mxu0 %v7215
    %12153 = vmatpush1.bf16.msra.mxu0 %v7214
    %12154 = vmatprep.subr.bf16.mxu0 %v7275
    %12155 = vmatpush2.bf16.msra.mxu0 %v7274
    %12156 = vmatprep.subr.bf16.mxu0 %v7271
    %12157 = vmatpush2.bf16.msra.mxu0 %v7270
    %12158 = vmatprep.subr.bf16.mxu0 %v7267
    %12159 = vmatpush2.bf16.msra.mxu0 %v7266
    %12160 = vmatprep.subr.bf16.mxu0 %v7263
    %12161 = vmatpush2.bf16.msra.mxu0 %v7262
    %12162 = vmatprep.subr.bf16.mxu0 %v7259
    %12163 = vmatpush2.bf16.msra.mxu0 %v7258
    %12164 = vmatprep.subr.bf16.mxu0 %v7255
    %12165 = vmatpush2.bf16.msra.mxu0 %v7254
    %12166 = vmatprep.subr.bf16.mxu0 %v7251
    %12167 = vmatpush2.bf16.msra.mxu0 %v7250
    %12168 = vmatprep.subr.bf16.mxu0 %v7247
    %12169 = vmatpush2.bf16.msra.mxu0 %v7246
    %12170 = vmatprep.mubr.bf16.mxu0 %v2437
    %12171 = vmatmul.mubr.bf16.gmra.mxu0 %v2436
    %v12172 = vpop.f32.mrf.mxu0
    %v12173 = vadd.f32 %v12060, %v12172
    %v12174 = vpop.f32.mrf.mxu0
    %v12175 = vadd.f32 %v12062, %v12174
    %v12176 = vpop.f32.mrf.mxu0
    %v12177 = vadd.f32 %v12064, %v12176
    %v12178 = vpop.f32.mrf.mxu0
    %v12179 = vadd.f32 %v12066, %v12178
    %12180 = vmatprep.mubr.bf16.mxu0 %v2473
    %12181 = vmatmul.mubr.bf16.gmra.mxu0 %v2472
    %v12182 = vpop.f32.mrf.mxu0
    %v12183 = vadd.f32 %v12070, %v12182
    %v12184 = vpop.f32.mrf.mxu0
    %v12185 = vadd.f32 %v12072, %v12184
    %v12186 = vpop.f32.mrf.mxu0
    %v12187 = vadd.f32 %v12074, %v12186
    %v12188 = vpop.f32.mrf.mxu0
    %v12189 = vadd.f32 %v12076, %v12188
    %12190 = vmatprep.mubr.bf16.mxu0 %v2509
    %12191 = vmatmul.mubr.bf16.gmra.mxu0 %v2508
    %v12192 = vpop.f32.mrf.mxu0
    %v12193 = vadd.f32 %v12080, %v12192
    %v12194 = vpop.f32.mrf.mxu0
    %v12195 = vadd.f32 %v12082, %v12194
    %v12196 = vpop.f32.mrf.mxu0
    %v12197 = vadd.f32 %v12084, %v12196
    %v12198 = vpop.f32.mrf.mxu0
    %v12199 = vadd.f32 %v12086, %v12198
    %12200 = vmatprep.mubr.bf16.mxu0 %v2545
    %12201 = vmatmul.mubr.bf16.gmra.mxu0 %v2544
    %v12202 = vpop.f32.mrf.mxu0
    %v12203 = vadd.f32 %v12090, %v12202
    %v12204 = vpop.f32.mrf.mxu0
    %v12205 = vadd.f32 %v12092, %v12204
    %v12206 = vpop.f32.mrf.mxu0
    %v12207 = vadd.f32 %v12094, %v12206
    %v12208 = vpop.f32.mrf.mxu0
    %v12209 = vadd.f32 %v12096, %v12208
    %12210 = vmatprep.mubr.bf16.mxu0 %v2581
    %12211 = vmatmul.mubr.bf16.gmra.mxu0 %v2580
    %v12212 = vpop.f32.mrf.mxu0
    %v12213 = vadd.f32 %v12100, %v12212
    %v12214 = vpop.f32.mrf.mxu0
    %v12215 = vadd.f32 %v12102, %v12214
    %v12216 = vpop.f32.mrf.mxu0
    %v12217 = vadd.f32 %v12104, %v12216
    %v12218 = vpop.f32.mrf.mxu0
    %v12219 = vadd.f32 %v12106, %v12218
    %12220 = vmatprep.mubr.bf16.mxu0 %v2617
    %12221 = vmatmul.mubr.bf16.gmra.mxu0 %v2616
    %v12222 = vpop.f32.mrf.mxu0
    %v12223 = vadd.f32 %v12110, %v12222
    %v12224 = vpop.f32.mrf.mxu0
    %v12225 = vadd.f32 %v12112, %v12224
    %v12226 = vpop.f32.mrf.mxu0
    %v12227 = vadd.f32 %v12114, %v12226
    %v12228 = vpop.f32.mrf.mxu0
    %v12229 = vadd.f32 %v12116, %v12228
    %12230 = vmatprep.mubr.bf16.mxu0 %v2653
    %12231 = vmatmul.mubr.bf16.gmra.mxu0 %v2652
    %v12232 = vpop.f32.mrf.mxu0
    %v12233 = vadd.f32 %v12120, %v12232
    %v12234 = vpop.f32.mrf.mxu0
    %v12235 = vadd.f32 %v12122, %v12234
    %v12236 = vpop.f32.mrf.mxu0
    %v12237 = vadd.f32 %v12124, %v12236
    %v12238 = vpop.f32.mrf.mxu0
    %v12239 = vadd.f32 %v12126, %v12238
    %12240 = vmatprep.mubr.bf16.mxu0 %v2689
    %12241 = vmatmul.mubr.bf16.gmra.mxu0 %v2688
    %v12242 = vpop.f32.mrf.mxu0
    %v12243 = vadd.f32 %v12130, %v12242
    %v12244 = vpop.f32.mrf.mxu0
    %v12245 = vadd.f32 %v12132, %v12244
    %v12246 = vpop.f32.mrf.mxu0
    %v12247 = vadd.f32 %v12134, %v12246
    %v12248 = vpop.f32.mrf.mxu0
    %v12249 = vadd.f32 %v12136, %v12248
    %12250 = vdwg.mxu0
    %12251 = vmatprep.subr.bf16.mxu0 %v7307
    %12252 = vmatpush1.bf16.msra.mxu0 %v7306
    %12253 = vmatprep.subr.bf16.mxu0 %v7303
    %12254 = vmatpush1.bf16.msra.mxu0 %v7302
    %12255 = vmatprep.subr.bf16.mxu0 %v7299
    %12256 = vmatpush1.bf16.msra.mxu0 %v7298
    %12257 = vmatprep.subr.bf16.mxu0 %v7295
    %12258 = vmatpush1.bf16.msra.mxu0 %v7294
    %12259 = vmatprep.subr.bf16.mxu0 %v7291
    %12260 = vmatpush1.bf16.msra.mxu0 %v7290
    %12261 = vmatprep.subr.bf16.mxu0 %v7287
    %12262 = vmatpush1.bf16.msra.mxu0 %v7286
    %12263 = vmatprep.subr.bf16.mxu0 %v7283
    %12264 = vmatpush1.bf16.msra.mxu0 %v7282
    %12265 = vmatprep.subr.bf16.mxu0 %v7279
    %12266 = vmatpush1.bf16.msra.mxu0 %v7278
    %12267 = vmatprep.subr.bf16.mxu0 %v7339
    %12268 = vmatpush2.bf16.msra.mxu0 %v7338
    %12269 = vmatprep.subr.bf16.mxu0 %v7335
    %12270 = vmatpush2.bf16.msra.mxu0 %v7334
    %12271 = vmatprep.subr.bf16.mxu0 %v7331
    %12272 = vmatpush2.bf16.msra.mxu0 %v7330
    %12273 = vmatprep.subr.bf16.mxu0 %v7327
    %12274 = vmatpush2.bf16.msra.mxu0 %v7326
    %12275 = vmatprep.subr.bf16.mxu0 %v7323
    %12276 = vmatpush2.bf16.msra.mxu0 %v7322
    %12277 = vmatprep.subr.bf16.mxu0 %v7319
    %12278 = vmatpush2.bf16.msra.mxu0 %v7318
    %12279 = vmatprep.subr.bf16.mxu0 %v7315
    %12280 = vmatpush2.bf16.msra.mxu0 %v7314
    %12281 = vmatprep.subr.bf16.mxu0 %v7311
    %12282 = vmatpush2.bf16.msra.mxu0 %v7310
    %12283 = vmatprep.mubr.bf16.mxu0 %v2439
    %12284 = vmatmul.mubr.bf16.gmra.mxu0 %v2438
    %v12285 = vpop.f32.mrf.mxu0
    %v12286 = vadd.f32 %v12173, %v12285
    %v12287 = vpop.f32.mrf.mxu0
    %v12288 = vadd.f32 %v12175, %v12287
    %v12289 = vpop.f32.mrf.mxu0
    %v12290 = vadd.f32 %v12177, %v12289
    %v12291 = vpop.f32.mrf.mxu0
    %v12292 = vadd.f32 %v12179, %v12291
    %12293 = vmatprep.mubr.bf16.mxu0 %v2475
    %12294 = vmatmul.mubr.bf16.gmra.mxu0 %v2474
    %v12295 = vpop.f32.mrf.mxu0
    %v12296 = vadd.f32 %v12183, %v12295
    %v12297 = vpop.f32.mrf.mxu0
    %v12298 = vadd.f32 %v12185, %v12297
    %v12299 = vpop.f32.mrf.mxu0
    %v12300 = vadd.f32 %v12187, %v12299
    %v12301 = vpop.f32.mrf.mxu0
    %v12302 = vadd.f32 %v12189, %v12301
    %12303 = vmatprep.mubr.bf16.mxu0 %v2511
    %12304 = vmatmul.mubr.bf16.gmra.mxu0 %v2510
    %v12305 = vpop.f32.mrf.mxu0
    %v12306 = vadd.f32 %v12193, %v12305
    %v12307 = vpop.f32.mrf.mxu0
    %v12308 = vadd.f32 %v12195, %v12307
    %v12309 = vpop.f32.mrf.mxu0
    %v12310 = vadd.f32 %v12197, %v12309
    %v12311 = vpop.f32.mrf.mxu0
    %v12312 = vadd.f32 %v12199, %v12311
    %12313 = vmatprep.mubr.bf16.mxu0 %v2547
    %12314 = vmatmul.mubr.bf16.gmra.mxu0 %v2546
    %v12315 = vpop.f32.mrf.mxu0
    %v12316 = vadd.f32 %v12203, %v12315
    %v12317 = vpop.f32.mrf.mxu0
    %v12318 = vadd.f32 %v12205, %v12317
    %v12319 = vpop.f32.mrf.mxu0
    %v12320 = vadd.f32 %v12207, %v12319
    %v12321 = vpop.f32.mrf.mxu0
    %v12322 = vadd.f32 %v12209, %v12321
    %12323 = vmatprep.mubr.bf16.mxu0 %v2583
    %12324 = vmatmul.mubr.bf16.gmra.mxu0 %v2582
    %v12325 = vpop.f32.mrf.mxu0
    %v12326 = vadd.f32 %v12213, %v12325
    %v12327 = vpop.f32.mrf.mxu0
    %v12328 = vadd.f32 %v12215, %v12327
    %v12329 = vpop.f32.mrf.mxu0
    %v12330 = vadd.f32 %v12217, %v12329
    %v12331 = vpop.f32.mrf.mxu0
    %v12332 = vadd.f32 %v12219, %v12331
    %12333 = vmatprep.mubr.bf16.mxu0 %v2619
    %12334 = vmatmul.mubr.bf16.gmra.mxu0 %v2618
    %v12335 = vpop.f32.mrf.mxu0
    %v12336 = vadd.f32 %v12223, %v12335
    %v12337 = vpop.f32.mrf.mxu0
    %v12338 = vadd.f32 %v12225, %v12337
    %v12339 = vpop.f32.mrf.mxu0
    %v12340 = vadd.f32 %v12227, %v12339
    %v12341 = vpop.f32.mrf.mxu0
    %v12342 = vadd.f32 %v12229, %v12341
    %12343 = vmatprep.mubr.bf16.mxu0 %v2655
    %12344 = vmatmul.mubr.bf16.gmra.mxu0 %v2654
    %v12345 = vpop.f32.mrf.mxu0
    %v12346 = vadd.f32 %v12233, %v12345
    %v12347 = vpop.f32.mrf.mxu0
    %v12348 = vadd.f32 %v12235, %v12347
    %v12349 = vpop.f32.mrf.mxu0
    %v12350 = vadd.f32 %v12237, %v12349
    %v12351 = vpop.f32.mrf.mxu0
    %v12352 = vadd.f32 %v12239, %v12351
    %12353 = vmatprep.mubr.bf16.mxu0 %v2691
    %12354 = vmatmul.mubr.bf16.gmra.mxu0 %v2690
    %v12355 = vpop.f32.mrf.mxu0
    %v12356 = vadd.f32 %v12243, %v12355
    %v12357 = vpop.f32.mrf.mxu0
    %v12358 = vadd.f32 %v12245, %v12357
    %v12359 = vpop.f32.mrf.mxu0
    %v12360 = vadd.f32 %v12247, %v12359
    %v12361 = vpop.f32.mrf.mxu0
    %v12362 = vadd.f32 %v12249, %v12361
    %12363 = vdwg.mxu0
    %12364 = vmatprep.subr.bf16.mxu0 %v7371
    %12365 = vmatpush1.bf16.msra.mxu0 %v7370
    %12366 = vmatprep.subr.bf16.mxu0 %v7367
    %12367 = vmatpush1.bf16.msra.mxu0 %v7366
    %12368 = vmatprep.subr.bf16.mxu0 %v7363
    %12369 = vmatpush1.bf16.msra.mxu0 %v7362
    %12370 = vmatprep.subr.bf16.mxu0 %v7359
    %12371 = vmatpush1.bf16.msra.mxu0 %v7358
    %12372 = vmatprep.subr.bf16.mxu0 %v7355
    %12373 = vmatpush1.bf16.msra.mxu0 %v7354
    %12374 = vmatprep.subr.bf16.mxu0 %v7351
    %12375 = vmatpush1.bf16.msra.mxu0 %v7350
    %12376 = vmatprep.subr.bf16.mxu0 %v7347
    %12377 = vmatpush1.bf16.msra.mxu0 %v7346
    %12378 = vmatprep.subr.bf16.mxu0 %v7343
    %12379 = vmatpush1.bf16.msra.mxu0 %v7342
    %12380 = vmatprep.subr.bf16.mxu0 %v7403
    %12381 = vmatpush2.bf16.msra.mxu0 %v7402
    %12382 = vmatprep.subr.bf16.mxu0 %v7399
    %12383 = vmatpush2.bf16.msra.mxu0 %v7398
    %12384 = vmatprep.subr.bf16.mxu0 %v7395
    %12385 = vmatpush2.bf16.msra.mxu0 %v7394
    %12386 = vmatprep.subr.bf16.mxu0 %v7391
    %12387 = vmatpush2.bf16.msra.mxu0 %v7390
    %12388 = vmatprep.subr.bf16.mxu0 %v7387
    %12389 = vmatpush2.bf16.msra.mxu0 %v7386
    %12390 = vmatprep.subr.bf16.mxu0 %v7383
    %12391 = vmatpush2.bf16.msra.mxu0 %v7382
    %12392 = vmatprep.subr.bf16.mxu0 %v7379
    %12393 = vmatpush2.bf16.msra.mxu0 %v7378
    %12394 = vmatprep.subr.bf16.mxu0 %v7375
    %12395 = vmatpush2.bf16.msra.mxu0 %v7374
    %12396 = vmatprep.mubr.bf16.mxu0 %v2441
    %12397 = vmatmul.mubr.bf16.gmra.mxu0 %v2440
    %v12398 = vpop.f32.mrf.mxu0
    %v12399 = vadd.f32 %v12286, %v12398
    %v12400 = vpop.f32.mrf.mxu0
    %v12401 = vadd.f32 %v12288, %v12400
    %v12402 = vpop.f32.mrf.mxu0
    %v12403 = vadd.f32 %v12290, %v12402
    %v12404 = vpop.f32.mrf.mxu0
    %v12405 = vadd.f32 %v12292, %v12404
    %12406 = vmatprep.mubr.bf16.mxu0 %v2477
    %12407 = vmatmul.mubr.bf16.gmra.mxu0 %v2476
    %v12408 = vpop.f32.mrf.mxu0
    %v12409 = vadd.f32 %v12296, %v12408
    %v12410 = vpop.f32.mrf.mxu0
    %v12411 = vadd.f32 %v12298, %v12410
    %v12412 = vpop.f32.mrf.mxu0
    %v12413 = vadd.f32 %v12300, %v12412
    %v12414 = vpop.f32.mrf.mxu0
    %v12415 = vadd.f32 %v12302, %v12414
    %12416 = vmatprep.mubr.bf16.mxu0 %v2513
    %12417 = vmatmul.mubr.bf16.gmra.mxu0 %v2512
    %v12418 = vpop.f32.mrf.mxu0
    %v12419 = vadd.f32 %v12306, %v12418
    %v12420 = vpop.f32.mrf.mxu0
    %v12421 = vadd.f32 %v12308, %v12420
    %v12422 = vpop.f32.mrf.mxu0
    %v12423 = vadd.f32 %v12310, %v12422
    %v12424 = vpop.f32.mrf.mxu0
    %v12425 = vadd.f32 %v12312, %v12424
    %12426 = vmatprep.mubr.bf16.mxu0 %v2549
    %12427 = vmatmul.mubr.bf16.gmra.mxu0 %v2548
    %v12428 = vpop.f32.mrf.mxu0
    %v12429 = vadd.f32 %v12316, %v12428
    %v12430 = vpop.f32.mrf.mxu0
    %v12431 = vadd.f32 %v12318, %v12430
    %v12432 = vpop.f32.mrf.mxu0
    %v12433 = vadd.f32 %v12320, %v12432
    %v12434 = vpop.f32.mrf.mxu0
    %v12435 = vadd.f32 %v12322, %v12434
    %12436 = vmatprep.mubr.bf16.mxu0 %v2585
    %12437 = vmatmul.mubr.bf16.gmra.mxu0 %v2584
    %v12438 = vpop.f32.mrf.mxu0
    %v12439 = vadd.f32 %v12326, %v12438
    %v12440 = vpop.f32.mrf.mxu0
    %v12441 = vadd.f32 %v12328, %v12440
    %v12442 = vpop.f32.mrf.mxu0
    %v12443 = vadd.f32 %v12330, %v12442
    %v12444 = vpop.f32.mrf.mxu0
    %v12445 = vadd.f32 %v12332, %v12444
    %12446 = vmatprep.mubr.bf16.mxu0 %v2621
    %12447 = vmatmul.mubr.bf16.gmra.mxu0 %v2620
    %v12448 = vpop.f32.mrf.mxu0
    %v12449 = vadd.f32 %v12336, %v12448
    %v12450 = vpop.f32.mrf.mxu0
    %v12451 = vadd.f32 %v12338, %v12450
    %v12452 = vpop.f32.mrf.mxu0
    %v12453 = vadd.f32 %v12340, %v12452
    %v12454 = vpop.f32.mrf.mxu0
    %v12455 = vadd.f32 %v12342, %v12454
    %12456 = vmatprep.mubr.bf16.mxu0 %v2657
    %12457 = vmatmul.mubr.bf16.gmra.mxu0 %v2656
    %v12458 = vpop.f32.mrf.mxu0
    %v12459 = vadd.f32 %v12346, %v12458
    %v12460 = vpop.f32.mrf.mxu0
    %v12461 = vadd.f32 %v12348, %v12460
    %v12462 = vpop.f32.mrf.mxu0
    %v12463 = vadd.f32 %v12350, %v12462
    %v12464 = vpop.f32.mrf.mxu0
    %v12465 = vadd.f32 %v12352, %v12464
    %12466 = vmatprep.mubr.bf16.mxu0 %v2693
    %12467 = vmatmul.mubr.bf16.gmra.mxu0 %v2692
    %v12468 = vpop.f32.mrf.mxu0
    %v12469 = vadd.f32 %v12356, %v12468
    %v12470 = vpop.f32.mrf.mxu0
    %v12471 = vadd.f32 %v12358, %v12470
    %v12472 = vpop.f32.mrf.mxu0
    %v12473 = vadd.f32 %v12360, %v12472
    %v12474 = vpop.f32.mrf.mxu0
    %v12475 = vadd.f32 %v12362, %v12474
    %12476 = vdwg.mxu0
    %12477 = vmatprep.subr.bf16.mxu0 %v7435
    %12478 = vmatpush1.bf16.msra.mxu0 %v7434
    %12479 = vmatprep.subr.bf16.mxu0 %v7431
    %12480 = vmatpush1.bf16.msra.mxu0 %v7430
    %12481 = vmatprep.subr.bf16.mxu0 %v7427
    %12482 = vmatpush1.bf16.msra.mxu0 %v7426
    %12483 = vmatprep.subr.bf16.mxu0 %v7423
    %12484 = vmatpush1.bf16.msra.mxu0 %v7422
    %12485 = vmatprep.subr.bf16.mxu0 %v7419
    %12486 = vmatpush1.bf16.msra.mxu0 %v7418
    %12487 = vmatprep.subr.bf16.mxu0 %v7415
    %12488 = vmatpush1.bf16.msra.mxu0 %v7414
    %12489 = vmatprep.subr.bf16.mxu0 %v7411
    %12490 = vmatpush1.bf16.msra.mxu0 %v7410
    %12491 = vmatprep.subr.bf16.mxu0 %v7407
    %12492 = vmatpush1.bf16.msra.mxu0 %v7406
    %12493 = vmatprep.subr.bf16.mxu0 %v7467
    %12494 = vmatpush2.bf16.msra.mxu0 %v7466
    %12495 = vmatprep.subr.bf16.mxu0 %v7463
    %12496 = vmatpush2.bf16.msra.mxu0 %v7462
    %12497 = vmatprep.subr.bf16.mxu0 %v7459
    %12498 = vmatpush2.bf16.msra.mxu0 %v7458
    %12499 = vmatprep.subr.bf16.mxu0 %v7455
    %12500 = vmatpush2.bf16.msra.mxu0 %v7454
    %12501 = vmatprep.subr.bf16.mxu0 %v7451
    %12502 = vmatpush2.bf16.msra.mxu0 %v7450
    %12503 = vmatprep.subr.bf16.mxu0 %v7447
    %12504 = vmatpush2.bf16.msra.mxu0 %v7446
    %12505 = vmatprep.subr.bf16.mxu0 %v7443
    %12506 = vmatpush2.bf16.msra.mxu0 %v7442
    %12507 = vmatprep.subr.bf16.mxu0 %v7439
    %12508 = vmatpush2.bf16.msra.mxu0 %v7438
    %12509 = vmatprep.mubr.bf16.mxu0 %v2443
    %12510 = vmatmul.mubr.bf16.gmra.mxu0 %v2442
    %v12511 = vpop.f32.mrf.mxu0
    %v12512 = vadd.f32 %v12399, %v12511
    %v12513 = vpop.f32.mrf.mxu0
    %v12514 = vadd.f32 %v12401, %v12513
    %v12515 = vpop.f32.mrf.mxu0
    %v12516 = vadd.f32 %v12403, %v12515
    %v12517 = vpop.f32.mrf.mxu0
    %v12518 = vadd.f32 %v12405, %v12517
    %12519 = vmatprep.mubr.bf16.mxu0 %v2479
    %12520 = vmatmul.mubr.bf16.gmra.mxu0 %v2478
    %v12521 = vpop.f32.mrf.mxu0
    %v12522 = vadd.f32 %v12409, %v12521
    %v12523 = vpop.f32.mrf.mxu0
    %v12524 = vadd.f32 %v12411, %v12523
    %v12525 = vpop.f32.mrf.mxu0
    %v12526 = vadd.f32 %v12413, %v12525
    %v12527 = vpop.f32.mrf.mxu0
    %v12528 = vadd.f32 %v12415, %v12527
    %12529 = vmatprep.mubr.bf16.mxu0 %v2515
    %12530 = vmatmul.mubr.bf16.gmra.mxu0 %v2514
    %v12531 = vpop.f32.mrf.mxu0
    %v12532 = vadd.f32 %v12419, %v12531
    %v12533 = vpop.f32.mrf.mxu0
    %v12534 = vadd.f32 %v12421, %v12533
    %v12535 = vpop.f32.mrf.mxu0
    %v12536 = vadd.f32 %v12423, %v12535
    %v12537 = vpop.f32.mrf.mxu0
    %v12538 = vadd.f32 %v12425, %v12537
    %12539 = vmatprep.mubr.bf16.mxu0 %v2551
    %12540 = vmatmul.mubr.bf16.gmra.mxu0 %v2550
    %v12541 = vpop.f32.mrf.mxu0
    %v12542 = vadd.f32 %v12429, %v12541
    %v12543 = vpop.f32.mrf.mxu0
    %v12544 = vadd.f32 %v12431, %v12543
    %v12545 = vpop.f32.mrf.mxu0
    %v12546 = vadd.f32 %v12433, %v12545
    %v12547 = vpop.f32.mrf.mxu0
    %v12548 = vadd.f32 %v12435, %v12547
    %12549 = vmatprep.mubr.bf16.mxu0 %v2587
    %12550 = vmatmul.mubr.bf16.gmra.mxu0 %v2586
    %v12551 = vpop.f32.mrf.mxu0
    %v12552 = vadd.f32 %v12439, %v12551
    %v12553 = vpop.f32.mrf.mxu0
    %v12554 = vadd.f32 %v12441, %v12553
    %v12555 = vpop.f32.mrf.mxu0
    %v12556 = vadd.f32 %v12443, %v12555
    %v12557 = vpop.f32.mrf.mxu0
    %v12558 = vadd.f32 %v12445, %v12557
    %12559 = vmatprep.mubr.bf16.mxu0 %v2623
    %12560 = vmatmul.mubr.bf16.gmra.mxu0 %v2622
    %v12561 = vpop.f32.mrf.mxu0
    %v12562 = vadd.f32 %v12449, %v12561
    %v12563 = vpop.f32.mrf.mxu0
    %v12564 = vadd.f32 %v12451, %v12563
    %v12565 = vpop.f32.mrf.mxu0
    %v12566 = vadd.f32 %v12453, %v12565
    %v12567 = vpop.f32.mrf.mxu0
    %v12568 = vadd.f32 %v12455, %v12567
    %12569 = vmatprep.mubr.bf16.mxu0 %v2659
    %12570 = vmatmul.mubr.bf16.gmra.mxu0 %v2658
    %v12571 = vpop.f32.mrf.mxu0
    %v12572 = vadd.f32 %v12459, %v12571
    %v12573 = vpop.f32.mrf.mxu0
    %v12574 = vadd.f32 %v12461, %v12573
    %v12575 = vpop.f32.mrf.mxu0
    %v12576 = vadd.f32 %v12463, %v12575
    %v12577 = vpop.f32.mrf.mxu0
    %v12578 = vadd.f32 %v12465, %v12577
    %12579 = vmatprep.mubr.bf16.mxu0 %v2695
    %12580 = vmatmul.mubr.bf16.gmra.mxu0 %v2694
    %v12581 = vpop.f32.mrf.mxu0
    %v12582 = vadd.f32 %v12469, %v12581
    %v12583 = vpop.f32.mrf.mxu0
    %v12584 = vadd.f32 %v12471, %v12583
    %v12585 = vpop.f32.mrf.mxu0
    %v12586 = vadd.f32 %v12473, %v12585
    %v12587 = vpop.f32.mrf.mxu0
    %v12588 = vadd.f32 %v12475, %v12587
    %12589 = vdwg.mxu0
    %12590 = vmatprep.subr.bf16.mxu0 %v7499
    %12591 = vmatpush1.bf16.msra.mxu0 %v7498
    %12592 = vmatprep.subr.bf16.mxu0 %v7495
    %12593 = vmatpush1.bf16.msra.mxu0 %v7494
    %12594 = vmatprep.subr.bf16.mxu0 %v7491
    %12595 = vmatpush1.bf16.msra.mxu0 %v7490
    %12596 = vmatprep.subr.bf16.mxu0 %v7487
    %12597 = vmatpush1.bf16.msra.mxu0 %v7486
    %12598 = vmatprep.subr.bf16.mxu0 %v7483
    %12599 = vmatpush1.bf16.msra.mxu0 %v7482
    %12600 = vmatprep.subr.bf16.mxu0 %v7479
    %12601 = vmatpush1.bf16.msra.mxu0 %v7478
    %12602 = vmatprep.subr.bf16.mxu0 %v7475
    %12603 = vmatpush1.bf16.msra.mxu0 %v7474
    %12604 = vmatprep.subr.bf16.mxu0 %v7471
    %12605 = vmatpush1.bf16.msra.mxu0 %v7470
    %12606 = vmatprep.subr.bf16.mxu0 %v7531
    %12607 = vmatpush2.bf16.msra.mxu0 %v7530
    %12608 = vmatprep.subr.bf16.mxu0 %v7527
    %12609 = vmatpush2.bf16.msra.mxu0 %v7526
    %12610 = vmatprep.subr.bf16.mxu0 %v7523
    %12611 = vmatpush2.bf16.msra.mxu0 %v7522
    %12612 = vmatprep.subr.bf16.mxu0 %v7519
    %12613 = vmatpush2.bf16.msra.mxu0 %v7518
    %12614 = vmatprep.subr.bf16.mxu0 %v7515
    %12615 = vmatpush2.bf16.msra.mxu0 %v7514
    %12616 = vmatprep.subr.bf16.mxu0 %v7511
    %12617 = vmatpush2.bf16.msra.mxu0 %v7510
    %12618 = vmatprep.subr.bf16.mxu0 %v7507
    %12619 = vmatpush2.bf16.msra.mxu0 %v7506
    %12620 = vmatprep.subr.bf16.mxu0 %v7503
    %12621 = vmatpush2.bf16.msra.mxu0 %v7502
    %12622 = vmatprep.mubr.bf16.mxu0 %v2445
    %12623 = vmatmul.mubr.bf16.gmra.mxu0 %v2444
    %v12624 = vpop.f32.mrf.mxu0
    %v12625 = vadd.f32 %v12512, %v12624
    %v12626 = vpop.f32.mrf.mxu0
    %v12627 = vadd.f32 %v12514, %v12626
    %v12628 = vpop.f32.mrf.mxu0
    %v12629 = vadd.f32 %v12516, %v12628
    %v12630 = vpop.f32.mrf.mxu0
    %v12631 = vadd.f32 %v12518, %v12630
    %12632 = vmatprep.mubr.bf16.mxu0 %v2481
    %12633 = vmatmul.mubr.bf16.gmra.mxu0 %v2480
    %v12634 = vpop.f32.mrf.mxu0
    %v12635 = vadd.f32 %v12522, %v12634
    %v12636 = vpop.f32.mrf.mxu0
    %v12637 = vadd.f32 %v12524, %v12636
    %v12638 = vpop.f32.mrf.mxu0
    %v12639 = vadd.f32 %v12526, %v12638
    %v12640 = vpop.f32.mrf.mxu0
    %v12641 = vadd.f32 %v12528, %v12640
    %12642 = vmatprep.mubr.bf16.mxu0 %v2517
    %12643 = vmatmul.mubr.bf16.gmra.mxu0 %v2516
    %v12644 = vpop.f32.mrf.mxu0
    %v12645 = vadd.f32 %v12532, %v12644
    %v12646 = vpop.f32.mrf.mxu0
    %v12647 = vadd.f32 %v12534, %v12646
    %v12648 = vpop.f32.mrf.mxu0
    %v12649 = vadd.f32 %v12536, %v12648
    %v12650 = vpop.f32.mrf.mxu0
    %v12651 = vadd.f32 %v12538, %v12650
    %12652 = vmatprep.mubr.bf16.mxu0 %v2553
    %12653 = vmatmul.mubr.bf16.gmra.mxu0 %v2552
    %v12654 = vpop.f32.mrf.mxu0
    %v12655 = vadd.f32 %v12542, %v12654
    %v12656 = vpop.f32.mrf.mxu0
    %v12657 = vadd.f32 %v12544, %v12656
    %v12658 = vpop.f32.mrf.mxu0
    %v12659 = vadd.f32 %v12546, %v12658
    %v12660 = vpop.f32.mrf.mxu0
    %v12661 = vadd.f32 %v12548, %v12660
    %12662 = vmatprep.mubr.bf16.mxu0 %v2589
    %12663 = vmatmul.mubr.bf16.gmra.mxu0 %v2588
    %v12664 = vpop.f32.mrf.mxu0
    %v12665 = vadd.f32 %v12552, %v12664
    %v12666 = vpop.f32.mrf.mxu0
    %v12667 = vadd.f32 %v12554, %v12666
    %v12668 = vpop.f32.mrf.mxu0
    %v12669 = vadd.f32 %v12556, %v12668
    %v12670 = vpop.f32.mrf.mxu0
    %v12671 = vadd.f32 %v12558, %v12670
    %12672 = vmatprep.mubr.bf16.mxu0 %v2625
    %12673 = vmatmul.mubr.bf16.gmra.mxu0 %v2624
    %v12674 = vpop.f32.mrf.mxu0
    %v12675 = vadd.f32 %v12562, %v12674
    %v12676 = vpop.f32.mrf.mxu0
    %v12677 = vadd.f32 %v12564, %v12676
    %v12678 = vpop.f32.mrf.mxu0
    %v12679 = vadd.f32 %v12566, %v12678
    %v12680 = vpop.f32.mrf.mxu0
    %v12681 = vadd.f32 %v12568, %v12680
    %12682 = vmatprep.mubr.bf16.mxu0 %v2661
    %12683 = vmatmul.mubr.bf16.gmra.mxu0 %v2660
    %v12684 = vpop.f32.mrf.mxu0
    %v12685 = vadd.f32 %v12572, %v12684
    %v12686 = vpop.f32.mrf.mxu0
    %v12687 = vadd.f32 %v12574, %v12686
    %v12688 = vpop.f32.mrf.mxu0
    %v12689 = vadd.f32 %v12576, %v12688
    %v12690 = vpop.f32.mrf.mxu0
    %v12691 = vadd.f32 %v12578, %v12690
    %12692 = vmatprep.mubr.bf16.mxu0 %v2697
    %12693 = vmatmul.mubr.bf16.gmra.mxu0 %v2696
    %v12694 = vpop.f32.mrf.mxu0
    %v12695 = vadd.f32 %v12582, %v12694
    %v12696 = vpop.f32.mrf.mxu0
    %v12697 = vadd.f32 %v12584, %v12696
    %v12698 = vpop.f32.mrf.mxu0
    %v12699 = vadd.f32 %v12586, %v12698
    %v12700 = vpop.f32.mrf.mxu0
    %v12701 = vadd.f32 %v12588, %v12700
    %12702 = vdwg.mxu0
    %12703 = vmatprep.subr.bf16.mxu0 %v7563
    %12704 = vmatpush1.bf16.msra.mxu0 %v7562
    %12705 = vmatprep.subr.bf16.mxu0 %v7559
    %12706 = vmatpush1.bf16.msra.mxu0 %v7558
    %12707 = vmatprep.subr.bf16.mxu0 %v7555
    %12708 = vmatpush1.bf16.msra.mxu0 %v7554
    %12709 = vmatprep.subr.bf16.mxu0 %v7551
    %12710 = vmatpush1.bf16.msra.mxu0 %v7550
    %12711 = vmatprep.subr.bf16.mxu0 %v7547
    %12712 = vmatpush1.bf16.msra.mxu0 %v7546
    %12713 = vmatprep.subr.bf16.mxu0 %v7543
    %12714 = vmatpush1.bf16.msra.mxu0 %v7542
    %12715 = vmatprep.subr.bf16.mxu0 %v7539
    %12716 = vmatpush1.bf16.msra.mxu0 %v7538
    %12717 = vmatprep.subr.bf16.mxu0 %v7535
    %12718 = vmatpush1.bf16.msra.mxu0 %v7534
    %12719 = vmatprep.subr.bf16.mxu0 %v7595
    %12720 = vmatpush2.bf16.msra.mxu0 %v7594
    %12721 = vmatprep.subr.bf16.mxu0 %v7591
    %12722 = vmatpush2.bf16.msra.mxu0 %v7590
    %12723 = vmatprep.subr.bf16.mxu0 %v7587
    %12724 = vmatpush2.bf16.msra.mxu0 %v7586
    %12725 = vmatprep.subr.bf16.mxu0 %v7583
    %12726 = vmatpush2.bf16.msra.mxu0 %v7582
    %12727 = vmatprep.subr.bf16.mxu0 %v7579
    %12728 = vmatpush2.bf16.msra.mxu0 %v7578
    %12729 = vmatprep.subr.bf16.mxu0 %v7575
    %12730 = vmatpush2.bf16.msra.mxu0 %v7574
    %12731 = vmatprep.subr.bf16.mxu0 %v7571
    %12732 = vmatpush2.bf16.msra.mxu0 %v7570
    %12733 = vmatprep.subr.bf16.mxu0 %v7567
    %12734 = vmatpush2.bf16.msra.mxu0 %v7566
    %12735 = vmatprep.mubr.bf16.mxu0 %v2447
    %12736 = vmatmul.mubr.bf16.gmra.mxu0 %v2446
    %v12737 = vpop.f32.mrf.mxu0
    %v12738 = vadd.f32 %v12625, %v12737
    %v12739 = vpop.f32.mrf.mxu0
    %v12740 = vadd.f32 %v12627, %v12739
    %v12741 = vpop.f32.mrf.mxu0
    %v12742 = vadd.f32 %v12629, %v12741
    %v12743 = vpop.f32.mrf.mxu0
    %v12744 = vadd.f32 %v12631, %v12743
    %12745 = vmatprep.mubr.bf16.mxu0 %v2483
    %12746 = vmatmul.mubr.bf16.gmra.mxu0 %v2482
    %v12747 = vpop.f32.mrf.mxu0
    %v12748 = vadd.f32 %v12635, %v12747
    %v12749 = vpop.f32.mrf.mxu0
    %v12750 = vadd.f32 %v12637, %v12749
    %v12751 = vpop.f32.mrf.mxu0
    %v12752 = vadd.f32 %v12639, %v12751
    %v12753 = vpop.f32.mrf.mxu0
    %v12754 = vadd.f32 %v12641, %v12753
    %12755 = vmatprep.mubr.bf16.mxu0 %v2519
    %12756 = vmatmul.mubr.bf16.gmra.mxu0 %v2518
    %v12757 = vpop.f32.mrf.mxu0
    %v12758 = vadd.f32 %v12645, %v12757
    %v12759 = vpop.f32.mrf.mxu0
    %v12760 = vadd.f32 %v12647, %v12759
    %v12761 = vpop.f32.mrf.mxu0
    %v12762 = vadd.f32 %v12649, %v12761
    %v12763 = vpop.f32.mrf.mxu0
    %v12764 = vadd.f32 %v12651, %v12763
    %12765 = vmatprep.mubr.bf16.mxu0 %v2555
    %12766 = vmatmul.mubr.bf16.gmra.mxu0 %v2554
    %v12767 = vpop.f32.mrf.mxu0
    %v12768 = vadd.f32 %v12655, %v12767
    %v12769 = vpop.f32.mrf.mxu0
    %v12770 = vadd.f32 %v12657, %v12769
    %v12771 = vpop.f32.mrf.mxu0
    %v12772 = vadd.f32 %v12659, %v12771
    %v12773 = vpop.f32.mrf.mxu0
    %v12774 = vadd.f32 %v12661, %v12773
    %12775 = vmatprep.mubr.bf16.mxu0 %v2591
    %12776 = vmatmul.mubr.bf16.gmra.mxu0 %v2590
    %v12777 = vpop.f32.mrf.mxu0
    %v12778 = vadd.f32 %v12665, %v12777
    %v12779 = vpop.f32.mrf.mxu0
    %v12780 = vadd.f32 %v12667, %v12779
    %v12781 = vpop.f32.mrf.mxu0
    %v12782 = vadd.f32 %v12669, %v12781
    %v12783 = vpop.f32.mrf.mxu0
    %v12784 = vadd.f32 %v12671, %v12783
    %12785 = vmatprep.mubr.bf16.mxu0 %v2627
    %12786 = vmatmul.mubr.bf16.gmra.mxu0 %v2626
    %v12787 = vpop.f32.mrf.mxu0
    %v12788 = vadd.f32 %v12675, %v12787
    %v12789 = vpop.f32.mrf.mxu0
    %v12790 = vadd.f32 %v12677, %v12789
    %v12791 = vpop.f32.mrf.mxu0
    %v12792 = vadd.f32 %v12679, %v12791
    %v12793 = vpop.f32.mrf.mxu0
    %v12794 = vadd.f32 %v12681, %v12793
    %12795 = vmatprep.mubr.bf16.mxu0 %v2663
    %12796 = vmatmul.mubr.bf16.gmra.mxu0 %v2662
    %v12797 = vpop.f32.mrf.mxu0
    %v12798 = vadd.f32 %v12685, %v12797
    %v12799 = vpop.f32.mrf.mxu0
    %v12800 = vadd.f32 %v12687, %v12799
    %v12801 = vpop.f32.mrf.mxu0
    %v12802 = vadd.f32 %v12689, %v12801
    %v12803 = vpop.f32.mrf.mxu0
    %v12804 = vadd.f32 %v12691, %v12803
    %12805 = vmatprep.mubr.bf16.mxu0 %v2699
    %12806 = vmatmul.mubr.bf16.gmra.mxu0 %v2698
    %v12807 = vpop.f32.mrf.mxu0
    %v12808 = vadd.f32 %v12695, %v12807
    %v12809 = vpop.f32.mrf.mxu0
    %v12810 = vadd.f32 %v12697, %v12809
    %v12811 = vpop.f32.mrf.mxu0
    %v12812 = vadd.f32 %v12699, %v12811
    %v12813 = vpop.f32.mrf.mxu0
    %v12814 = vadd.f32 %v12701, %v12813
    %12815 = vdwg.mxu0
    %v12816 = vmax.f32 %v10704, 0.0
    %v12817 = vmax.f32 %v10706, 0.0
    %v12818 = vmax.f32 %v12738, 0.0
    %v12819 = vmax.f32 %v12740, 0.0
    %v12820 = vmax.f32 %v10708, 0.0
    %v12821 = vmax.f32 %v10710, 0.0
    %v12822 = vmax.f32 %v12742, 0.0
    %v12823 = vmax.f32 %v12744, 0.0
    %v12824 = vmax.f32 %v10714, 0.0
    %v12825 = vmax.f32 %v10716, 0.0
    %v12826 = vmax.f32 %v12748, 0.0
    %v12827 = vmax.f32 %v12750, 0.0
    %v12828 = vmax.f32 %v10718, 0.0
    %v12829 = vmax.f32 %v10720, 0.0
    %v12830 = vmax.f32 %v12752, 0.0
    %v12831 = vmax.f32 %v12754, 0.0
    %v12832 = vmax.f32 %v10724, 0.0
    %v12833 = vmax.f32 %v10726, 0.0
    %v12834 = vmax.f32 %v12758, 0.0
    %v12835 = vmax.f32 %v12760, 0.0
    %v12836 = vmax.f32 %v10728, 0.0
    %v12837 = vmax.f32 %v10730, 0.0
    %v12838 = vmax.f32 %v12762, 0.0
    %v12839 = vmax.f32 %v12764, 0.0
    %v12840 = vmax.f32 %v10734, 0.0
    %v12841 = vmax.f32 %v10736, 0.0
    %v12842 = vmax.f32 %v12768, 0.0
    %v12843 = vmax.f32 %v12770, 0.0
    %v12844 = vmax.f32 %v10738, 0.0
    %v12845 = vmax.f32 %v10740, 0.0
    %v12846 = vmax.f32 %v12772, 0.0
    %v12847 = vmax.f32 %v12774, 0.0
    %v12848 = vmax.f32 %v10744, 0.0
    %v12849 = vmax.f32 %v10746, 0.0
    %v12850 = vmax.f32 %v12778, 0.0
    %v12851 = vmax.f32 %v12780, 0.0
    %v12852 = vmax.f32 %v10748, 0.0
    %v12853 = vmax.f32 %v10750, 0.0
    %v12854 = vmax.f32 %v12782, 0.0
    %v12855 = vmax.f32 %v12784, 0.0
    %v12856 = vmax.f32 %v10754, 0.0
    %v12857 = vmax.f32 %v10756, 0.0
    %v12858 = vmax.f32 %v12788, 0.0
    %v12859 = vmax.f32 %v12790, 0.0
    %v12860 = vmax.f32 %v10758, 0.0
    %v12861 = vmax.f32 %v10760, 0.0
    %v12862 = vmax.f32 %v12792, 0.0
    %v12863 = vmax.f32 %v12794, 0.0
    %v12864 = vmax.f32 %v10764, 0.0
    %v12865 = vmax.f32 %v10766, 0.0
    %v12866 = vmax.f32 %v12798, 0.0
    %v12867 = vmax.f32 %v12800, 0.0
    %v12868 = vmax.f32 %v10768, 0.0
    %v12869 = vmax.f32 %v10770, 0.0
    %v12870 = vmax.f32 %v12802, 0.0
    %v12871 = vmax.f32 %v12804, 0.0
    %v12872 = vmax.f32 %v10774, 0.0
    %v12873 = vmax.f32 %v10776, 0.0
    %v12874 = vmax.f32 %v12808, 0.0
    %v12875 = vmax.f32 %v12810, 0.0
    %v12876 = vmax.f32 %v10778, 0.0
    %v12877 = vmax.f32 %v10780, 0.0
    %v12878 = vmax.f32 %v12812, 0.0
    %v12879 = vmax.f32 %v12814, 0.0
    %v12880 = vpack.c.bf16 %v12820, %v12816
    %v12881 = vpack.c.bf16 %v12821, %v12817
    %v12882 = vpack.c.bf16 %v12822, %v12818
    %v12883 = vpack.c.bf16 %v12823, %v12819
    %v12884 = vpack.c.bf16 %v12828, %v12824
    %v12885 = vpack.c.bf16 %v12829, %v12825
    %v12886 = vpack.c.bf16 %v12830, %v12826
    %v12887 = vpack.c.bf16 %v12831, %v12827
    %v12888 = vpack.c.bf16 %v12836, %v12832
    %v12889 = vpack.c.bf16 %v12837, %v12833
    %v12890 = vpack.c.bf16 %v12838, %v12834
    %v12891 = vpack.c.bf16 %v12839, %v12835
    %v12892 = vpack.c.bf16 %v12844, %v12840
    %v12893 = vpack.c.bf16 %v12845, %v12841
    %v12894 = vpack.c.bf16 %v12846, %v12842
    %v12895 = vpack.c.bf16 %v12847, %v12843
    %v12896 = vpack.c.bf16 %v12852, %v12848
    %v12897 = vpack.c.bf16 %v12853, %v12849
    %v12898 = vpack.c.bf16 %v12854, %v12850
    %v12899 = vpack.c.bf16 %v12855, %v12851
    %v12900 = vpack.c.bf16 %v12860, %v12856
    %v12901 = vpack.c.bf16 %v12861, %v12857
    %v12902 = vpack.c.bf16 %v12862, %v12858
    %v12903 = vpack.c.bf16 %v12863, %v12859
    %v12904 = vpack.c.bf16 %v12868, %v12864
    %v12905 = vpack.c.bf16 %v12869, %v12865
    %v12906 = vpack.c.bf16 %v12870, %v12866
    %v12907 = vpack.c.bf16 %v12871, %v12867
    %v12908 = vpack.c.bf16 %v12876, %v12872
    %v12909 = vpack.c.bf16 %v12877, %v12873
    %v12910 = vpack.c.bf16 %v12878, %v12874
    %v12911 = vpack.c.bf16 %v12879, %v12875
    %v12912 = vld [vmem:[#allocation8] sm:$0xf]
    %v12913 = vld [vmem:[#allocation8 + $0x4] sm:$0xf]
    %v12914 = vld [vmem:[#allocation8 + $0x8] sm:$0xf]
    %v12915 = vld [vmem:[#allocation8 + $0xc] sm:$0xf]
    %v12916 = vld [vmem:[#allocation8 + $0x10] sm:$0xf]
    %v12917 = vld [vmem:[#allocation8 + $0x14] sm:$0xf]
    %v12918 = vld [vmem:[#allocation8 + $0x18] sm:$0xf]
    %v12919 = vld [vmem:[#allocation8 + $0x1c] sm:$0xf]
    %v12920 = vld [vmem:[#allocation8 + $0x20] sm:$0xf]
    %v12921 = vld [vmem:[#allocation8 + $0x24] sm:$0xf]
    %v12922 = vld [vmem:[#allocation8 + $0x28] sm:$0xf]
    %v12923 = vld [vmem:[#allocation8 + $0x2c] sm:$0xf]
    %v12924 = vld [vmem:[#allocation8 + $0x30] sm:$0xf]
    %v12925 = vld [vmem:[#allocation8 + $0x34] sm:$0xf]
    %v12926 = vld [vmem:[#allocation8 + $0x38] sm:$0xf]
    %v12927 = vld [vmem:[#allocation8 + $0x3c] sm:$0xf]
    %v12928 = vld [vmem:[#allocation8 + $0x40] sm:$0xf]
    %v12929 = vld [vmem:[#allocation8 + $0x44] sm:$0xf]
    %v12930 = vld [vmem:[#allocation8 + $0x48] sm:$0xf]
    %v12931 = vld [vmem:[#allocation8 + $0x4c] sm:$0xf]
    %v12932 = vld [vmem:[#allocation8 + $0x50] sm:$0xf]
    %v12933 = vld [vmem:[#allocation8 + $0x54] sm:$0xf]
    %v12934 = vld [vmem:[#allocation8 + $0x58] sm:$0xf]
    %v12935 = vld [vmem:[#allocation8 + $0x5c] sm:$0xf]
    %v12936 = vld [vmem:[#allocation8 + $0x60] sm:$0xf]
    %v12937 = vld [vmem:[#allocation8 + $0x64] sm:$0xf]
    %v12938 = vld [vmem:[#allocation8 + $0x68] sm:$0xf]
    %v12939 = vld [vmem:[#allocation8 + $0x6c] sm:$0xf]
    %v12940 = vld [vmem:[#allocation8 + $0x70] sm:$0xf]
    %v12941 = vld [vmem:[#allocation8 + $0x74] sm:$0xf]
    %v12942 = vld [vmem:[#allocation8 + $0x78] sm:$0xf]
    %v12943 = vld [vmem:[#allocation8 + $0x7c] sm:$0xf]
    %v12944 = vld [vmem:[#allocation8 + $0x80] sm:$0xf]
    %v12945 = vld [vmem:[#allocation8 + $0x84] sm:$0xf]
    %v12946 = vld [vmem:[#allocation8 + $0x88] sm:$0xf]
    %v12947 = vld [vmem:[#allocation8 + $0x8c] sm:$0xf]
    %v12948 = vld [vmem:[#allocation8 + $0x90] sm:$0xf]
    %v12949 = vld [vmem:[#allocation8 + $0x94] sm:$0xf]
    %v12950 = vld [vmem:[#allocation8 + $0x98] sm:$0xf]
    %v12951 = vld [vmem:[#allocation8 + $0x9c] sm:$0xf]
    %v12952 = vld [vmem:[#allocation8 + $0xa0] sm:$0xf]
    %v12953 = vld [vmem:[#allocation8 + $0xa4] sm:$0xf]
    %v12954 = vld [vmem:[#allocation8 + $0xa8] sm:$0xf]
    %v12955 = vld [vmem:[#allocation8 + $0xac] sm:$0xf]
    %v12956 = vld [vmem:[#allocation8 + $0xb0] sm:$0xf]
    %v12957 = vld [vmem:[#allocation8 + $0xb4] sm:$0xf]
    %v12958 = vld [vmem:[#allocation8 + $0xb8] sm:$0xf]
    %v12959 = vld [vmem:[#allocation8 + $0xbc] sm:$0xf]
    %v12960 = vld [vmem:[#allocation8 + $0xc0] sm:$0xf]
    %v12961 = vld [vmem:[#allocation8 + $0xc4] sm:$0xf]
    %v12962 = vld [vmem:[#allocation8 + $0xc8] sm:$0xf]
    %v12963 = vld [vmem:[#allocation8 + $0xcc] sm:$0xf]
    %v12964 = vld [vmem:[#allocation8 + $0xd0] sm:$0xf]
    %v12965 = vld [vmem:[#allocation8 + $0xd4] sm:$0xf]
    %v12966 = vld [vmem:[#allocation8 + $0xd8] sm:$0xf]
    %v12967 = vld [vmem:[#allocation8 + $0xdc] sm:$0xf]
    %v12968 = vld [vmem:[#allocation8 + $0xe0] sm:$0xf]
    %v12969 = vld [vmem:[#allocation8 + $0xe4] sm:$0xf]
    %v12970 = vld [vmem:[#allocation8 + $0xe8] sm:$0xf]
    %v12971 = vld [vmem:[#allocation8 + $0xec] sm:$0xf]
    %v12972 = vld [vmem:[#allocation8 + $0xf0] sm:$0xf]
    %v12973 = vld [vmem:[#allocation8 + $0xf4] sm:$0xf]
    %v12974 = vld [vmem:[#allocation8 + $0xf8] sm:$0xf]
    %v12975 = vld [vmem:[#allocation8 + $0xfc] sm:$0xf]
    %v12976 = vld [vmem:[#allocation10] sm:$0x1]
    %v12978 = vlaneseq
    %v12979 = vshrl.u32 %v12978, 7
    %v12980 = vsub.s32 0, %v12979
    %v12981 = vrot.slane %v12976, %v12980
    %v13047 = vunpack.c.l.b16 %v12912
    %v13048 = vunpack.c.l.b16 %v12913
    %v13049 = vunpack.c.l.b16 %v12914
    %v13050 = vunpack.c.l.b16 %v12915
    %v13051 = vunpack.c.l.b16 %v12916
    %v13052 = vunpack.c.l.b16 %v12917
    %v13053 = vunpack.c.l.b16 %v12918
    %v13054 = vunpack.c.l.b16 %v12919
    %v13055 = vunpack.c.l.b16 %v12920
    %v13056 = vunpack.c.l.b16 %v12921
    %v13057 = vunpack.c.l.b16 %v12922
    %v13058 = vunpack.c.l.b16 %v12923
    %v13059 = vunpack.c.l.b16 %v12924
    %v13060 = vunpack.c.l.b16 %v12925
    %v13061 = vunpack.c.l.b16 %v12926
    %v13062 = vunpack.c.l.b16 %v12927
    %v13063 = vunpack.c.l.b16 %v12928
    %v13064 = vunpack.c.l.b16 %v12929
    %v13065 = vunpack.c.l.b16 %v12930
    %v13066 = vunpack.c.l.b16 %v12931
    %v13067 = vunpack.c.l.b16 %v12932
    %v13068 = vunpack.c.l.b16 %v12933
    %v13069 = vunpack.c.l.b16 %v12934
    %v13070 = vunpack.c.l.b16 %v12935
    %v13071 = vunpack.c.l.b16 %v12936
    %v13072 = vunpack.c.l.b16 %v12937
    %v13073 = vunpack.c.l.b16 %v12938
    %v13074 = vunpack.c.l.b16 %v12939
    %v13075 = vunpack.c.l.b16 %v12940
    %v13076 = vunpack.c.l.b16 %v12941
    %v13077 = vunpack.c.l.b16 %v12942
    %v13078 = vunpack.c.l.b16 %v12943
    %v13079 = vunpack.c.l.b16 %v12944
    %v13080 = vunpack.c.l.b16 %v12945
    %v13081 = vunpack.c.l.b16 %v12946
    %v13082 = vunpack.c.l.b16 %v12947
    %v13083 = vunpack.c.l.b16 %v12948
    %v13084 = vunpack.c.l.b16 %v12949
    %v13085 = vunpack.c.l.b16 %v12950
    %v13086 = vunpack.c.l.b16 %v12951
    %v13087 = vunpack.c.l.b16 %v12952
    %v13088 = vunpack.c.l.b16 %v12953
    %v13089 = vunpack.c.l.b16 %v12954
    %v13090 = vunpack.c.l.b16 %v12955
    %v13091 = vunpack.c.l.b16 %v12956
    %v13092 = vunpack.c.l.b16 %v12957
    %v13093 = vunpack.c.l.b16 %v12958
    %v13094 = vunpack.c.l.b16 %v12959
    %v13095 = vunpack.c.l.b16 %v12960
    %v13096 = vunpack.c.l.b16 %v12961
    %v13097 = vunpack.c.l.b16 %v12962
    %v13098 = vunpack.c.l.b16 %v12963
    %v13099 = vunpack.c.l.b16 %v12964
    %v13100 = vunpack.c.l.b16 %v12965
    %v13101 = vunpack.c.l.b16 %v12966
    %v13102 = vunpack.c.l.b16 %v12967
    %v13103 = vunpack.c.l.b16 %v12968
    %v13104 = vunpack.c.l.b16 %v12969
    %v13105 = vunpack.c.l.b16 %v12970
    %v13106 = vunpack.c.l.b16 %v12971
    %v13107 = vunpack.c.l.b16 %v12972
    %v13108 = vunpack.c.l.b16 %v12973
    %v13109 = vunpack.c.l.b16 %v12974
    %v13110 = vunpack.c.l.b16 %v12975
    %v13111 = vpack.c.b16 %v13048, %v13047
    %v13112 = vpack.c.b16 %v13050, %v13049
    %v13113 = vpack.c.b16 %v13052, %v13051
    %v13114 = vpack.c.b16 %v13054, %v13053
    %v13115 = vpack.c.b16 %v13056, %v13055
    %v13116 = vpack.c.b16 %v13058, %v13057
    %v13117 = vpack.c.b16 %v13060, %v13059
    %v13118 = vpack.c.b16 %v13062, %v13061
    %v13119 = vpack.c.b16 %v13064, %v13063
    %v13120 = vpack.c.b16 %v13066, %v13065
    %v13121 = vpack.c.b16 %v13068, %v13067
    %v13122 = vpack.c.b16 %v13070, %v13069
    %v13123 = vpack.c.b16 %v13072, %v13071
    %v13124 = vpack.c.b16 %v13074, %v13073
    %v13125 = vpack.c.b16 %v13076, %v13075
    %v13126 = vpack.c.b16 %v13078, %v13077
    %v13127 = vpack.c.b16 %v13080, %v13079
    %v13128 = vpack.c.b16 %v13082, %v13081
    %v13129 = vpack.c.b16 %v13084, %v13083
    %v13130 = vpack.c.b16 %v13086, %v13085
    %v13131 = vpack.c.b16 %v13088, %v13087
    %v13132 = vpack.c.b16 %v13090, %v13089
    %v13133 = vpack.c.b16 %v13092, %v13091
    %v13134 = vpack.c.b16 %v13094, %v13093
    %v13135 = vpack.c.b16 %v13096, %v13095
    %v13136 = vpack.c.b16 %v13098, %v13097
    %v13137 = vpack.c.b16 %v13100, %v13099
    %v13138 = vpack.c.b16 %v13102, %v13101
    %v13139 = vpack.c.b16 %v13104, %v13103
    %v13140 = vpack.c.b16 %v13106, %v13105
    %v13141 = vpack.c.b16 %v13108, %v13107
    %v13142 = vpack.c.b16 %v13110, %v13109
    %13175 = vmatprep.subr.bf16.mxu0 0
    %13176 = vmatpush1.bf16.msra.mxu0 %v13118
    %13177 = vmatprep.subr.bf16.mxu0 0
    %13178 = vmatpush1.bf16.msra.mxu0 %v13117
    %13179 = vmatprep.subr.bf16.mxu0 0
    %13180 = vmatpush1.bf16.msra.mxu0 %v13116
    %13181 = vmatprep.subr.bf16.mxu0 0
    %13182 = vmatpush1.bf16.msra.mxu0 %v13115
    %13183 = vmatprep.subr.bf16.mxu0 0
    %13184 = vmatpush1.bf16.msra.mxu0 %v13114
    %13185 = vmatprep.subr.bf16.mxu0 0
    %13186 = vmatpush1.bf16.msra.mxu0 %v13113
    %13187 = vmatprep.subr.bf16.mxu0 0
    %13188 = vmatpush1.bf16.msra.mxu0 %v13112
    %13189 = vmatprep.subr.bf16.mxu0 0
    %13190 = vmatpush1.bf16.msra.mxu0 %v13111
    %13191 = vmatprep.subr.bf16.mxu0 0
    %13192 = vmatpush2.bf16.msra.mxu0 %v13126
    %13193 = vmatprep.subr.bf16.mxu0 0
    %13194 = vmatpush2.bf16.msra.mxu0 %v13125
    %13195 = vmatprep.subr.bf16.mxu0 0
    %13196 = vmatpush2.bf16.msra.mxu0 %v13124
    %13197 = vmatprep.subr.bf16.mxu0 0
    %13198 = vmatpush2.bf16.msra.mxu0 %v13123
    %13199 = vmatprep.subr.bf16.mxu0 0
    %13200 = vmatpush2.bf16.msra.mxu0 %v13122
    %13201 = vmatprep.subr.bf16.mxu0 0
    %13202 = vmatpush2.bf16.msra.mxu0 %v13121
    %13203 = vmatprep.subr.bf16.mxu0 0
    %13204 = vmatpush2.bf16.msra.mxu0 %v13120
    %13205 = vmatprep.subr.bf16.mxu0 0
    %13206 = vmatpush2.bf16.msra.mxu0 %v13119
    %13207 = vmatprep.mubr.bf16.mxu0 %v12881
    %13208 = vmatmul.mubr.bf16.gmra.mxu0 %v12880
    %v13209 = vpop.f32.mrf.mxu0
    %v13210 = vadd.f32 %v12981, %v13209
    %v13211 = vpop.f32.mrf.mxu0
    %v13212 = vpop.f32.mrf.mxu0
    %v13213 = vadd.f32 %v12981, %v13212
    %v13214 = vpop.f32.mrf.mxu0
    %13215 = vmatprep.mubr.bf16.mxu0 %v12885
    %13216 = vmatmul.mubr.bf16.gmra.mxu0 %v12884
    %v13217 = vpop.f32.mrf.mxu0
    %v13218 = vadd.f32 %v12981, %v13217
    %v13219 = vpop.f32.mrf.mxu0
    %v13220 = vpop.f32.mrf.mxu0
    %v13221 = vadd.f32 %v12981, %v13220
    %v13222 = vpop.f32.mrf.mxu0
    %13223 = vmatprep.mubr.bf16.mxu0 %v12889
    %13224 = vmatmul.mubr.bf16.gmra.mxu0 %v12888
    %v13225 = vpop.f32.mrf.mxu0
    %v13226 = vadd.f32 %v12981, %v13225
    %v13227 = vpop.f32.mrf.mxu0
    %v13228 = vpop.f32.mrf.mxu0
    %v13229 = vadd.f32 %v12981, %v13228
    %v13230 = vpop.f32.mrf.mxu0
    %13231 = vmatprep.mubr.bf16.mxu0 %v12893
    %13232 = vmatmul.mubr.bf16.gmra.mxu0 %v12892
    %v13233 = vpop.f32.mrf.mxu0
    %v13234 = vadd.f32 %v12981, %v13233
    %v13235 = vpop.f32.mrf.mxu0
    %v13236 = vpop.f32.mrf.mxu0
    %v13237 = vadd.f32 %v12981, %v13236
    %v13238 = vpop.f32.mrf.mxu0
    %13239 = vmatprep.mubr.bf16.mxu0 %v12897
    %13240 = vmatmul.mubr.bf16.gmra.mxu0 %v12896
    %v13241 = vpop.f32.mrf.mxu0
    %v13242 = vadd.f32 %v12981, %v13241
    %v13243 = vpop.f32.mrf.mxu0
    %v13244 = vpop.f32.mrf.mxu0
    %v13245 = vadd.f32 %v12981, %v13244
    %v13246 = vpop.f32.mrf.mxu0
    %13247 = vmatprep.mubr.bf16.mxu0 %v12901
    %13248 = vmatmul.mubr.bf16.gmra.mxu0 %v12900
    %v13249 = vpop.f32.mrf.mxu0
    %v13250 = vadd.f32 %v12981, %v13249
    %v13251 = vpop.f32.mrf.mxu0
    %v13252 = vpop.f32.mrf.mxu0
    %v13253 = vadd.f32 %v12981, %v13252
    %v13254 = vpop.f32.mrf.mxu0
    %13255 = vmatprep.mubr.bf16.mxu0 %v12905
    %13256 = vmatmul.mubr.bf16.gmra.mxu0 %v12904
    %v13257 = vpop.f32.mrf.mxu0
    %v13258 = vadd.f32 %v12981, %v13257
    %v13259 = vpop.f32.mrf.mxu0
    %v13260 = vpop.f32.mrf.mxu0
    %v13261 = vadd.f32 %v12981, %v13260
    %v13262 = vpop.f32.mrf.mxu0
    %13263 = vmatprep.mubr.bf16.mxu0 %v12909
    %13264 = vmatmul.mubr.bf16.gmra.mxu0 %v12908
    %v13265 = vpop.f32.mrf.mxu0
    %v13266 = vadd.f32 %v12981, %v13265
    %v13267 = vpop.f32.mrf.mxu0
    %v13268 = vpop.f32.mrf.mxu0
    %v13269 = vadd.f32 %v12981, %v13268
    %v13270 = vpop.f32.mrf.mxu0
    %13271 = vdwg.mxu0
    %13272 = vmatprep.subr.bf16.mxu0 0
    %13273 = vmatpush1.bf16.msra.mxu0 %v13134
    %13274 = vmatprep.subr.bf16.mxu0 0
    %13275 = vmatpush1.bf16.msra.mxu0 %v13133
    %13276 = vmatprep.subr.bf16.mxu0 0
    %13277 = vmatpush1.bf16.msra.mxu0 %v13132
    %13278 = vmatprep.subr.bf16.mxu0 0
    %13279 = vmatpush1.bf16.msra.mxu0 %v13131
    %13280 = vmatprep.subr.bf16.mxu0 0
    %13281 = vmatpush1.bf16.msra.mxu0 %v13130
    %13282 = vmatprep.subr.bf16.mxu0 0
    %13283 = vmatpush1.bf16.msra.mxu0 %v13129
    %13284 = vmatprep.subr.bf16.mxu0 0
    %13285 = vmatpush1.bf16.msra.mxu0 %v13128
    %13286 = vmatprep.subr.bf16.mxu0 0
    %13287 = vmatpush1.bf16.msra.mxu0 %v13127
    %13288 = vmatprep.subr.bf16.mxu0 0
    %13289 = vmatpush2.bf16.msra.mxu0 %v13142
    %13290 = vmatprep.subr.bf16.mxu0 0
    %13291 = vmatpush2.bf16.msra.mxu0 %v13141
    %13292 = vmatprep.subr.bf16.mxu0 0
    %13293 = vmatpush2.bf16.msra.mxu0 %v13140
    %13294 = vmatprep.subr.bf16.mxu0 0
    %13295 = vmatpush2.bf16.msra.mxu0 %v13139
    %13296 = vmatprep.subr.bf16.mxu0 0
    %13297 = vmatpush2.bf16.msra.mxu0 %v13138
    %13298 = vmatprep.subr.bf16.mxu0 0
    %13299 = vmatpush2.bf16.msra.mxu0 %v13137
    %13300 = vmatprep.subr.bf16.mxu0 0
    %13301 = vmatpush2.bf16.msra.mxu0 %v13136
    %13302 = vmatprep.subr.bf16.mxu0 0
    %13303 = vmatpush2.bf16.msra.mxu0 %v13135
    %13304 = vmatprep.mubr.bf16.mxu0 %v12883
    %13305 = vmatmul.mubr.bf16.gmra.mxu0 %v12882
    %v13306 = vpop.f32.mrf.mxu0
    %v13307 = vadd.f32 %v13210, %v13306
    %v13308 = vpop.f32.mrf.mxu0
    %v13309 = vpop.f32.mrf.mxu0
    %v13310 = vadd.f32 %v13213, %v13309
    %v13311 = vpop.f32.mrf.mxu0
    %13312 = vmatprep.mubr.bf16.mxu0 %v12887
    %13313 = vmatmul.mubr.bf16.gmra.mxu0 %v12886
    %v13314 = vpop.f32.mrf.mxu0
    %v13315 = vadd.f32 %v13218, %v13314
    %v13316 = vpop.f32.mrf.mxu0
    %v13317 = vpop.f32.mrf.mxu0
    %v13318 = vadd.f32 %v13221, %v13317
    %v13319 = vpop.f32.mrf.mxu0
    %13320 = vmatprep.mubr.bf16.mxu0 %v12891
    %13321 = vmatmul.mubr.bf16.gmra.mxu0 %v12890
    %v13322 = vpop.f32.mrf.mxu0
    %v13323 = vadd.f32 %v13226, %v13322
    %v13324 = vpop.f32.mrf.mxu0
    %v13325 = vpop.f32.mrf.mxu0
    %v13326 = vadd.f32 %v13229, %v13325
    %v13327 = vpop.f32.mrf.mxu0
    %13328 = vmatprep.mubr.bf16.mxu0 %v12895
    %13329 = vmatmul.mubr.bf16.gmra.mxu0 %v12894
    %v13330 = vpop.f32.mrf.mxu0
    %v13331 = vadd.f32 %v13234, %v13330
    %v13332 = vpop.f32.mrf.mxu0
    %v13333 = vpop.f32.mrf.mxu0
    %v13334 = vadd.f32 %v13237, %v13333
    %v13335 = vpop.f32.mrf.mxu0
    %13336 = vmatprep.mubr.bf16.mxu0 %v12899
    %13337 = vmatmul.mubr.bf16.gmra.mxu0 %v12898
    %v13338 = vpop.f32.mrf.mxu0
    %v13339 = vadd.f32 %v13242, %v13338
    %v13340 = vpop.f32.mrf.mxu0
    %v13341 = vpop.f32.mrf.mxu0
    %v13342 = vadd.f32 %v13245, %v13341
    %v13343 = vpop.f32.mrf.mxu0
    %13344 = vmatprep.mubr.bf16.mxu0 %v12903
    %13345 = vmatmul.mubr.bf16.gmra.mxu0 %v12902
    %v13346 = vpop.f32.mrf.mxu0
    %v13347 = vadd.f32 %v13250, %v13346
    %v13348 = vpop.f32.mrf.mxu0
    %v13349 = vpop.f32.mrf.mxu0
    %v13350 = vadd.f32 %v13253, %v13349
    %v13351 = vpop.f32.mrf.mxu0
    %13352 = vmatprep.mubr.bf16.mxu0 %v12907
    %13353 = vmatmul.mubr.bf16.gmra.mxu0 %v12906
    %v13354 = vpop.f32.mrf.mxu0
    %v13355 = vadd.f32 %v13258, %v13354
    %v13356 = vpop.f32.mrf.mxu0
    %v13357 = vpop.f32.mrf.mxu0
    %v13358 = vadd.f32 %v13261, %v13357
    %v13359 = vpop.f32.mrf.mxu0
    %13360 = vmatprep.mubr.bf16.mxu0 %v12911
    %13361 = vmatmul.mubr.bf16.gmra.mxu0 %v12910
    %v13362 = vpop.f32.mrf.mxu0
    %v13363 = vadd.f32 %v13266, %v13362
    %v13364 = vpop.f32.mrf.mxu0
    %v13365 = vpop.f32.mrf.mxu0
    %v13366 = vadd.f32 %v13269, %v13365
    %v13367 = vpop.f32.mrf.mxu0
    %13368 = vdwg.mxu0
    %13369 = vst [vmem:[#allocation11] sm:$0xff] %v13307
    %13370 = vst [vmem:[#allocation11 + $0x8] sm:$0xff] %v13310
    %13371 = vst [vmem:[#allocation11 + $0x10] sm:$0xff] %v13315
    %13372 = vst [vmem:[#allocation11 + $0x18] sm:$0xff] %v13318
    %13373 = vst [vmem:[#allocation11 + $0x20] sm:$0xff] %v13323
    %13374 = vst [vmem:[#allocation11 + $0x28] sm:$0xff] %v13326
    %13375 = vst [vmem:[#allocation11 + $0x30] sm:$0xff] %v13331
    %13376 = vst [vmem:[#allocation11 + $0x38] sm:$0xff] %v13334
    %13377 = vst [vmem:[#allocation11 + $0x40] sm:$0xff] %v13339
    %13378 = vst [vmem:[#allocation11 + $0x48] sm:$0xff] %v13342
    %13379 = vst [vmem:[#allocation11 + $0x50] sm:$0xff] %v13347
    %13380 = vst [vmem:[#allocation11 + $0x58] sm:$0xff] %v13350
    %13381 = vst [vmem:[#allocation11 + $0x60] sm:$0xff] %v13355
    %13382 = vst [vmem:[#allocation11 + $0x68] sm:$0xff] %v13358
    %13383 = vst [vmem:[#allocation11 + $0x70] sm:$0xff] %v13363
    %13384 = vst [vmem:[#allocation11 + $0x78] sm:$0xff] %v13366
    // Predicated region
    $region42: #{tpu_custom_call.1} parent=1 // pred_check
      _
    $region43: #{tpu_custom_call.1} parent=1 // pred_check_branch
      %13386 = sbr.rel (0) target = $region45
    $region44: #{tpu_custom_call.1} parent=1 // pred_region
      %s13388 = ssub.s32 2048, 2048
      %13389 = vsyncadd [#allocation4], %s13388
      %s13390 = sshll.u32 [#allocation11], 4
      %s13391 = int_to_ptr.vmem [resolvable:$true] %s13390
      %13396 = dma.vmem_to_hbm [thread:$0]  %s13391, 2048, %s5, [#allocation4], 128, 128, 8
    $region45: #{tpu_custom_call.1} parent=1 // pred_fallthru
      _
    // Predicated region
    $region46: #{tpu_custom_call.1} parent=1 // pred_check
      _
    $region47: #{tpu_custom_call.1} parent=1 // pred_check_branch
      %13398 = sbr.rel (0) target = $region49
    $region48: #{tpu_custom_call.1} parent=1 // pred_region
      %13399 = dma.done [#allocation4], 2048
    $region49: #{tpu_custom_call.1} parent=1 // pred_fallthru
      _
    %13400 = vsyncpa [#allocation3], 1
    %13401 = vsyncpa [#allocation6], 1
    %13402 = vsyncpa [#allocation9], 1
    %13403 = vsyncpa [#allocation4], 1

</llo_original>
